<compile_context>
chip_gen: v6e
topology: v6e:2x2x1
jax: 0.10.0
libtpu: 0.0.40
codegen_flags: <defaults>
</compile_context>

<pallas_src>
import math

import jax
import jax.numpy as jnp
from jax.experimental import pallas as pl
from jax.experimental.pallas import tpu as pltpu

# ---------------- small synthetic deit/ViT config ----------------
BATCH = 2
IN_CH = 3
IMG = 16
PATCH = 8
EMBED = 64
HEADS = 4
HEAD_DIM = EMBED // HEADS
MLP_HIDDEN = 4 * EMBED
DEPTH = 2
NUM_CLASSES = 16
NUM_PATCHES = (IMG // PATCH) ** 2
TOKENS = NUM_PATCHES + 1
PATCH_DIM = IN_CH * PATCH * PATCH
LN_EPS = 1e-6  # timm ViT uses LayerNorm(eps=1e-6)


# ---------------- in-kernel helpers (operate on traced VMEM values) ----------------
def _layernorm(x, g, b):
    mean = jnp.mean(x, axis=-1, keepdims=True)
    cent = x - mean
    var = jnp.mean(cent * cent, axis=-1, keepdims=True)   # biased var, like torch LN
    return cent * jax.lax.rsqrt(var + LN_EPS) * g + b


def _gelu(x):
    # TODO(synk): timm nn.GELU is exact erf-GELU; using the tanh approximation
    # since erf is not guaranteed to lower in Mosaic (deviation ~1e-3 relative).
    c = jnp.float32(math.sqrt(2.0 / math.pi))
    return 0.5 * x * (1.0 + jnp.tanh(c * (x + 0.044715 * x * x * x)))


# ---------------- the single fused kernel (one batch element per grid step) ----------------
def _deit_fused_kernel(
    patches_ref, pw_ref, clspos_ref, pospatch_ref,
    qw_ref, qb_ref, kw_ref, kb_ref, vw_ref, vb_ref,
    projw_ref, projb_ref,
    ln1g_ref, ln1b_ref, ln2g_ref, ln2b_ref,
    fc1w_ref, fc1b_ref, fc2w_ref, fc2b_ref,
    ng_ref, nb_ref, hw_ref, hb_ref,
    out_ref, tok_scr):
    f32 = jnp.float32

    # ---- patch embedding: Conv2d(k=P, s=P) == matmul on unfolded patches ----
    # (patch bias + positional embedding already folded into pospatch_ref)
    z_patch = jnp.dot(patches_ref[0], pw_ref[...], preferred_element_type=f32)   # (Np, E)

    # ---- assemble tokens (cls + patches) in VMEM ----
    tok_scr[0:1, :] = clspos_ref[...]                   # cls token (pos already folded in)
    tok_scr[1:TOKENS, :] = z_patch + pospatch_ref[...]
    z = tok_scr[...]                                    # (T, E)

    for d in range(DEPTH):
        # --- attention sub-block ---
        h = _layernorm(z, ln1g_ref[d], ln1b_ref[d])
        attn = jnp.zeros((TOKENS, EMBED), f32) + projb_ref[d]   # proj bias folded into acc
        for hh in range(HEADS):  # head split/merge stays in VMEM via per-head weight slabs
            # q weights already carry the 1/sqrt(Dh) scale
            q = jnp.dot(h, qw_ref[d, hh], preferred_element_type=f32) + qb_ref[d, hh]
            k = jnp.dot(h, kw_ref[d, hh], preferred_element_type=f32) + kb_ref[d, hh]
            v = jnp.dot(h, vw_ref[d, hh], preferred_element_type=f32) + vb_ref[d, hh]
            s = jnp.dot(q, k.T, preferred_element_type=f32)                  # (T, T)
            s = s - jnp.max(s, axis=-1, keepdims=True)
            e = jnp.exp(s)
            p = e * pl.reciprocal(jnp.sum(e, axis=-1, keepdims=True), approx=True)
            o = jnp.dot(p, v, preferred_element_type=f32)                    # (T, Dh)
            # head-merge fused into the output projection: lane-dense (T, E) accumulate
            attn = attn + jnp.dot(o, projw_ref[d, hh], preferred_element_type=f32)
        z = z + attn

        # --- MLP sub-block ---
        h = _layernorm(z, ln2g_ref[d], ln2b_ref[d])
        h = jnp.dot(h, fc1w_ref[d], preferred_element_type=f32) + fc1b_ref[d]
        h = _gelu(h)
        h = jnp.dot(h, fc2w_ref[d], preferred_element_type=f32) + fc2b_ref[d]
        z = z + h

    # --- final LN, then forward_head: take cls token (x[:, 0]) and apply head ---
    z = _layernorm(z, ng_ref[...], nb_ref[...])
    cls_out = z[0:1, :]
    out_ref[0] = jnp.dot(cls_out, hw_ref[...], preferred_element_type=f32) + hb_ref[...]


# ---------------- parameters (deterministic synthetic init, canonical timm layout) ----------------
def init_params(key):
    k = key

    def nxt():
        nonlocal k
        k, sub = jax.random.split(k)
        return sub

    w_scale = 0.02
    params = {
        "patch_w": w_scale * jax.random.normal(nxt(), (PATCH_DIM, EMBED), jnp.float32),
        "patch_b": jnp.zeros((EMBED,), jnp.float32),
        "cls_token": w_scale * jax.random.normal(nxt(), (1, 1, EMBED), jnp.float32),
        "pos_embed": w_scale * jax.random.normal(nxt(), (1, TOKENS, EMBED), jnp.float32),
        "norm_g": jnp.ones((EMBED,), jnp.float32),
        "norm_b": jnp.zeros((EMBED,), jnp.float32),
        "head_w": w_scale * jax.random.normal(nxt(), (EMBED, NUM_CLASSES), jnp.float32),
        "head_b": jnp.zeros((NUM_CLASSES,), jnp.float32),
    }
    blocks = []
    for _ in range(DEPTH):
        blocks.append({
            "ln1_g": jnp.ones((EMBED,), jnp.float32),
            "ln1_b": jnp.zeros((EMBED,), jnp.float32),
            "qkv_w": w_scale * jax.random.normal(nxt(), (EMBED, 3 * EMBED), jnp.float32),
            "qkv_b": jnp.zeros((3 * EMBED,), jnp.float32),
            "proj_w": w_scale * jax.random.normal(nxt(), (EMBED, EMBED), jnp.float32),
            "proj_b": jnp.zeros((EMBED,), jnp.float32),
            "ln2_g": jnp.ones((EMBED,), jnp.float32),
            "ln2_b": jnp.zeros((EMBED,), jnp.float32),
            "fc1_w": w_scale * jax.random.normal(nxt(), (EMBED, MLP_HIDDEN), jnp.float32),
            "fc1_b": jnp.zeros((MLP_HIDDEN,), jnp.float32),
            "fc2_w": w_scale * jax.random.normal(nxt(), (MLP_HIDDEN, EMBED), jnp.float32),
            "fc2_b": jnp.zeros((EMBED,), jnp.float32),
        })
    params["blocks"] = blocks
    return params


# ---------------- forward pass (deit.forward == self.model(x)) ----------------
def deit_forward(params, x):
    B, C, H, W = x.shape
    P = PATCH
    gh, gw = H // P, W // P
    Np = gh * gw

    # TODO(synk): patch unfold kept as one tiny JAX transpose (~3 KiB total); folding
    # it into the kernel would need an in-kernel relayout with no measurable win here.
    patches = x.reshape(B, C, gh, P, gw, P).transpose(0, 2, 4, 1, 3, 5)
    patches = patches.reshape(B, Np, C * P * P)

    # Repack canonical (timm-layout) weights into kernel-friendly per-head slabs,
    # folding the attention scale into Q and the patch bias into the pos embedding.
    # These are tiny one-time XLA reshapes on <1 MiB of parameters.
    def stack(key):
        return jnp.stack([blk[key] for blk in params["blocks"]], axis=0)

    scale = 1.0 / math.sqrt(HEAD_DIM)
    qkv_w = stack("qkv_w").reshape(DEPTH, EMBED, 3, HEADS, HEAD_DIM).transpose(0, 2, 3, 1, 4)
    qw, kw, vw = qkv_w[:, 0] * scale, qkv_w[:, 1], qkv_w[:, 2]         # (D, H, E, Dh)
    qkv_b = stack("qkv_b").reshape(DEPTH, 3, HEADS, 1, HEAD_DIM)
    qb, kb, vb = qkv_b[:, 0] * scale, qkv_b[:, 1], qkv_b[:, 2]         # (D, H, 1, Dh)
    projw = stack("proj_w").reshape(DEPTH, HEADS, HEAD_DIM, EMBED)     # rows split per head
    projb = stack("proj_b").reshape(DEPTH, 1, EMBED)
    ln1g = stack("ln1_g").reshape(DEPTH, 1, EMBED)
    ln1b = stack("ln1_b").reshape(DEPTH, 1, EMBED)
    ln2g = stack("ln2_g").reshape(DEPTH, 1, EMBED)
    ln2b = stack("ln2_b").reshape(DEPTH, 1, EMBED)
    fc1w = stack("fc1_w")                                              # (D, E, M)
    fc1b = stack("fc1_b").reshape(DEPTH, 1, MLP_HIDDEN)
    fc2w = stack("fc2_w")                                              # (D, M, E)
    fc2b = stack("fc2_b").reshape(DEPTH, 1, EMBED)

    clspos = params["cls_token"].reshape(1, EMBED) + params["pos_embed"][0, 0:1, :]
    # patch positions: pos_embed + patch-embed bias, folded once here
    pospatch = params["pos_embed"][0, 1:, :] + params["patch_b"].reshape(1, EMBED)

    weights = [
        params["patch_w"], clspos, pospatch,
        qw, qb, kw, kb, vw, vb, projw, projb,
        ln1g, ln1b, ln2g, ln2b, fc1w, fc1b, fc2w, fc2b,
        params["norm_g"].reshape(1, EMBED), params["norm_b"].reshape(1, EMBED),
        params["head_w"], params["head_b"].reshape(1, NUM_CLASSES),
    ]

    def replicated(shape):
        # same (whole-array) block for every grid step -> stays resident in VMEM
        return pl.BlockSpec(shape, lambda b: (0,) * len(shape))

    logits = pl.pallas_call(
        _deit_fused_kernel,
        out_shape=jax.ShapeDtypeStruct((B, 1, NUM_CLASSES), jnp.float32),
        grid=(B,),
        in_specs=[pl.BlockSpec((1, Np, C * P * P), lambda b: (b, 0, 0))]
                 + [replicated(w.shape) for w in weights],
        out_specs=pl.BlockSpec((1, 1, NUM_CLASSES), lambda b: (b, 0, 0)),
        scratch_shapes=[pltpu.VMEM((TOKENS, EMBED), jnp.float32)],
        compiler_params=pltpu.CompilerParams(dimension_semantics=("parallel",)),
    )(patches, *weights)
    return logits.reshape(B, NUM_CLASSES)


if __name__ == "__main__":
    key = jax.random.PRNGKey(0)
    pkey, xkey = jax.random.split(key)
    params = init_params(pkey)
    x = jax.random.normal(xkey, (BATCH, IN_CH, IMG, IMG), jnp.float32)  # NCHW
    logits = jax.jit(deit_forward)(params, x)
    jax.block_until_ready(logits)
    assert logits.shape == (BATCH, NUM_CLASSES)
    assert bool(jnp.all(jnp.isfinite(logits)))
    print("KERNEL_OK")
</pallas_src>

<mosaic_0001>
module attributes {stable_mosaic.version = 11 : i64} {
  func.func @_deit_fused_kernel(%arg0: i32, %arg1: memref<1x4x192xf32, #tpu.memory_space<vmem>>, %arg2: memref<192x64xf32, #tpu.memory_space<vmem>>, %arg3: memref<1x64xf32, #tpu.memory_space<vmem>>, %arg4: memref<4x64xf32, #tpu.memory_space<vmem>>, %arg5: memref<2x4x64x16xf32, #tpu.memory_space<vmem>>, %arg6: memref<2x4x1x16xf32, #tpu.memory_space<vmem>>, %arg7: memref<2x4x64x16xf32, #tpu.memory_space<vmem>>, %arg8: memref<2x4x1x16xf32, #tpu.memory_space<vmem>>, %arg9: memref<2x4x64x16xf32, #tpu.memory_space<vmem>>, %arg10: memref<2x4x1x16xf32, #tpu.memory_space<vmem>>, %arg11: memref<2x4x16x64xf32, #tpu.memory_space<vmem>>, %arg12: memref<2x1x64xf32, #tpu.memory_space<vmem>>, %arg13: memref<2x1x64xf32, #tpu.memory_space<vmem>>, %arg14: memref<2x1x64xf32, #tpu.memory_space<vmem>>, %arg15: memref<2x1x64xf32, #tpu.memory_space<vmem>>, %arg16: memref<2x1x64xf32, #tpu.memory_space<vmem>>, %arg17: memref<2x64x256xf32, #tpu.memory_space<vmem>>, %arg18: memref<2x1x256xf32, #tpu.memory_space<vmem>>, %arg19: memref<2x256x64xf32, #tpu.memory_space<vmem>>, %arg20: memref<2x1x64xf32, #tpu.memory_space<vmem>>, %arg21: memref<1x64xf32, #tpu.memory_space<vmem>>, %arg22: memref<1x64xf32, #tpu.memory_space<vmem>>, %arg23: memref<64x16xf32, #tpu.memory_space<vmem>>, %arg24: memref<1x16xf32, #tpu.memory_space<vmem>>, %arg25: memref<1x1x16xf32, #tpu.memory_space<vmem>>, %arg26: memref<5x64xf32, #tpu.memory_space<vmem>>) attributes {dimension_semantics = [#tpu.dimension_semantics<parallel>], iteration_bounds = array<i64: 2>, scalar_prefetch = 0 : i64, scratch_operands = 1 : i64, tpu.core_type = #tpu.core_type<tc>, window_params = [{transform_indices = @transform_0, window_bounds = array<i64: 1, 4, 192>}, {pipeline_mode = #tpu.pipeline_mode<synchronous>, transform_indices = @transform_1, window_bounds = array<i64: 192, 64>}, {pipeline_mode = #tpu.pipeline_mode<synchronous>, transform_indices = @transform_2, window_bounds = array<i64: 1, 64>}, {pipeline_mode = #tpu.pipeline_mode<synchronous>, transform_indices = @transform_3, window_bounds = array<i64: 4, 64>}, {pipeline_mode = #tpu.pipeline_mode<synchronous>, transform_indices = @transform_4, window_bounds = array<i64: 2, 4, 64, 16>}, {pipeline_mode = #tpu.pipeline_mode<synchronous>, transform_indices = @transform_5, window_bounds = array<i64: 2, 4, 1, 16>}, {pipeline_mode = #tpu.pipeline_mode<synchronous>, transform_indices = @transform_6, window_bounds = array<i64: 2, 4, 64, 16>}, {pipeline_mode = #tpu.pipeline_mode<synchronous>, transform_indices = @transform_7, window_bounds = array<i64: 2, 4, 1, 16>}, {pipeline_mode = #tpu.pipeline_mode<synchronous>, transform_indices = @transform_8, window_bounds = array<i64: 2, 4, 64, 16>}, {pipeline_mode = #tpu.pipeline_mode<synchronous>, transform_indices = @transform_9, window_bounds = array<i64: 2, 4, 1, 16>}, {pipeline_mode = #tpu.pipeline_mode<synchronous>, transform_indices = @transform_10, window_bounds = array<i64: 2, 4, 16, 64>}, {pipeline_mode = #tpu.pipeline_mode<synchronous>, transform_indices = @transform_11, window_bounds = array<i64: 2, 1, 64>}, {pipeline_mode = #tpu.pipeline_mode<synchronous>, transform_indices = @transform_12, window_bounds = array<i64: 2, 1, 64>}, {pipeline_mode = #tpu.pipeline_mode<synchronous>, transform_indices = @transform_13, window_bounds = array<i64: 2, 1, 64>}, {pipeline_mode = #tpu.pipeline_mode<synchronous>, transform_indices = @transform_14, window_bounds = array<i64: 2, 1, 64>}, {pipeline_mode = #tpu.pipeline_mode<synchronous>, transform_indices = @transform_15, window_bounds = array<i64: 2, 1, 64>}, {pipeline_mode = #tpu.pipeline_mode<synchronous>, transform_indices = @transform_16, window_bounds = array<i64: 2, 64, 256>}, {pipeline_mode = #tpu.pipeline_mode<synchronous>, transform_indices = @transform_17, window_bounds = array<i64: 2, 1, 256>}, {pipeline_mode = #tpu.pipeline_mode<synchronous>, transform_indices = @transform_18, window_bounds = array<i64: 2, 256, 64>}, {pipeline_mode = #tpu.pipeline_mode<synchronous>, transform_indices = @transform_19, window_bounds = array<i64: 2, 1, 64>}, {pipeline_mode = #tpu.pipeline_mode<synchronous>, transform_indices = @transform_20, window_bounds = array<i64: 1, 64>}, {pipeline_mode = #tpu.pipeline_mode<synchronous>, transform_indices = @transform_21, window_bounds = array<i64: 1, 64>}, {pipeline_mode = #tpu.pipeline_mode<synchronous>, transform_indices = @transform_22, window_bounds = array<i64: 64, 16>}, {pipeline_mode = #tpu.pipeline_mode<synchronous>, transform_indices = @transform_23, window_bounds = array<i64: 1, 16>}, {transform_indices = @transform_24, window_bounds = array<i64: 1, 1, 16>}]} {
    %c0 = arith.constant 0 : index
    %c0_0 = arith.constant 0 : index
    %c0_1 = arith.constant 0 : index
    %0 = vector.load %arg1[%c0, %c0_0, %c0_1] : memref<1x4x192xf32, #tpu.memory_space<vmem>>, vector<1x4x192xf32>
    %1 = vector.shape_cast %0 : vector<1x4x192xf32> to vector<4x192xf32>
    %c0_2 = arith.constant 0 : index
    %c0_3 = arith.constant 0 : index
    %2 = vector.load %arg2[%c0_2, %c0_3] : memref<192x64xf32, #tpu.memory_space<vmem>>, vector<192x64xf32>
    %cst = arith.constant dense<0.000000e+00> : vector<4x64xf32>
    %3 = tpu.matmul %1, %2, %cst {dimension_numbers = #tpu.dot_dimension_numbers<[1], [0], [0], [1], [0, 0, 1, 1], [], []>} : vector<4x192xf32>, vector<192x64xf32>, vector<4x64xf32> -> vector<4x64xf32>
    %c0_4 = arith.constant 0 : index
    %c0_5 = arith.constant 0 : index
    %4 = vector.load %arg3[%c0_4, %c0_5] : memref<1x64xf32, #tpu.memory_space<vmem>>, vector<1x64xf32>
    %c0_6 = arith.constant 0 : index
    %c0_7 = arith.constant 0 : index
    %5 = vector.load %arg26[%c0_6, %c0_7] : memref<5x64xf32, #tpu.memory_space<vmem>>, vector<1x64xf32>
    tpu.vector_store %arg26[%c0_6, %c0_7], %4 {strides = array<i32>} : memref<5x64xf32, #tpu.memory_space<vmem>>, vector<1x64xf32>,
    %c0_8 = arith.constant 0 : index
    %c0_9 = arith.constant 0 : index
    %6 = vector.load %arg4[%c0_8, %c0_9] : memref<4x64xf32, #tpu.memory_space<vmem>>, vector<4x64xf32>
    %7 = arith.addf %3, %6 : vector<4x64xf32>
    %c1 = arith.constant 1 : index
    %c0_10 = arith.constant 0 : index
    %8 = vector.load %arg26[%c1, %c0_10] : memref<5x64xf32, #tpu.memory_space<vmem>>, vector<4x64xf32>
    tpu.vector_store %arg26[%c1, %c0_10], %7 {strides = array<i32>} : memref<5x64xf32, #tpu.memory_space<vmem>>, vector<4x64xf32>,
    %c0_11 = arith.constant 0 : index
    %c0_12 = arith.constant 0 : index
    %9 = vector.load %arg26[%c0_11, %c0_12] : memref<5x64xf32, #tpu.memory_space<vmem>>, vector<5x64xf32>
    %c0_13 = arith.constant 0 : index
    %c0_14 = arith.constant 0 : index
    %c0_15 = arith.constant 0 : index
    %10 = vector.load %arg13[%c0_13, %c0_14, %c0_15] : memref<2x1x64xf32, #tpu.memory_space<vmem>>, vector<1x1x64xf32>
    %11 = vector.shape_cast %10 : vector<1x1x64xf32> to vector<1x64xf32>
    %c0_16 = arith.constant 0 : index
    %c0_17 = arith.constant 0 : index
    %c0_18 = arith.constant 0 : index
    %12 = vector.load %arg14[%c0_16, %c0_17, %c0_18] : memref<2x1x64xf32, #tpu.memory_space<vmem>>, vector<1x1x64xf32>
    %13 = vector.shape_cast %12 : vector<1x1x64xf32> to vector<1x64xf32>
    %cst_19 = arith.constant dense<0.000000e+00> : vector<5xf32>
    %14 = vector.multi_reduction <add>, %9, %cst_19 [1] : vector<5x64xf32> to vector<5xf32>
    %15 = vector.shape_cast %14 : vector<5xf32> to vector<5x1xf32>
    %cst_20 = arith.constant 6.400000e+01 : f32
    %16 = vector.broadcast %cst_20 : f32 to vector<5x1xf32>
    %17 = arith.divf %15, %16 : vector<5x1xf32>
    %18 = vector.broadcast %17 : vector<5x1xf32> to vector<5x64xf32>
    %19 = arith.subf %9, %18 : vector<5x64xf32>
    %20 = arith.mulf %19, %19 : vector<5x64xf32>
    %cst_21 = arith.constant dense<0.000000e+00> : vector<5xf32>
    %21 = vector.multi_reduction <add>, %20, %cst_21 [1] : vector<5x64xf32> to vector<5xf32>
    %22 = vector.shape_cast %21 : vector<5xf32> to vector<5x1xf32>
    %cst_22 = arith.constant 6.400000e+01 : f32
    %23 = vector.broadcast %cst_22 : f32 to vector<5x1xf32>
    %24 = arith.divf %22, %23 : vector<5x1xf32>
    %cst_23 = arith.constant 9.99999997E-7 : f32
    %25 = vector.broadcast %cst_23 : f32 to vector<5x1xf32>
    %26 = arith.addf %24, %25 : vector<5x1xf32>
    %27 = math.rsqrt %26 : vector<5x1xf32>
    %28 = vector.broadcast %27 : vector<5x1xf32> to vector<5x64xf32>
    %29 = arith.mulf %19, %28 : vector<5x64xf32>
    %30 = vector.broadcast %11 : vector<1x64xf32> to vector<5x64xf32>
    %31 = arith.mulf %29, %30 : vector<5x64xf32>
    %32 = vector.broadcast %13 : vector<1x64xf32> to vector<5x64xf32>
    %33 = arith.addf %31, %32 : vector<5x64xf32>
    %cst_24 = arith.constant 0.000000e+00 : f32
    %34 = vector.broadcast %cst_24 : f32 to vector<5x64xf32>
    %c0_25 = arith.constant 0 : index
    %c0_26 = arith.constant 0 : index
    %c0_27 = arith.constant 0 : index
    %35 = vector.load %arg12[%c0_25, %c0_26, %c0_27] : memref<2x1x64xf32, #tpu.memory_space<vmem>>, vector<1x1x64xf32>
    %36 = vector.shape_cast %35 : vector<1x1x64xf32> to vector<1x64xf32>
    %37 = vector.broadcast %36 : vector<1x64xf32> to vector<5x64xf32>
    %38 = arith.addf %34, %37 : vector<5x64xf32>
    %c0_28 = arith.constant 0 : index
    %c0_29 = arith.constant 0 : index
    %c0_30 = arith.constant 0 : index
    %c0_31 = arith.constant 0 : index
    %39 = vector.load %arg5[%c0_28, %c0_29, %c0_30, %c0_31] : memref<2x4x64x16xf32, #tpu.memory_space<vmem>>, vector<1x1x64x16xf32>
    %40 = vector.shape_cast %39 : vector<1x1x64x16xf32> to vector<64x16xf32>
    %cst_32 = arith.constant dense<0.000000e+00> : vector<5x16xf32>
    %41 = tpu.matmul %33, %40, %cst_32 {dimension_numbers = #tpu.dot_dimension_numbers<[1], [0], [0], [1], [0, 0, 1, 1], [], []>} : vector<5x64xf32>, vector<64x16xf32>, vector<5x16xf32> -> vector<5x16xf32>
    %c0_33 = arith.constant 0 : index
    %c0_34 = arith.constant 0 : index
    %c0_35 = arith.constant 0 : index
    %c0_36 = arith.constant 0 : index
    %42 = vector.load %arg6[%c0_33, %c0_34, %c0_35, %c0_36] : memref<2x4x1x16xf32, #tpu.memory_space<vmem>>, vector<1x1x1x16xf32>
    %43 = vector.shape_cast %42 : vector<1x1x1x16xf32> to vector<1x16xf32>
    %44 = vector.broadcast %43 : vector<1x16xf32> to vector<5x16xf32>
    %45 = arith.addf %41, %44 : vector<5x16xf32>
    %c0_37 = arith.constant 0 : index
    %c0_38 = arith.constant 0 : index
    %c0_39 = arith.constant 0 : index
    %c0_40 = arith.constant 0 : index
    %46 = vector.load %arg7[%c0_37, %c0_38, %c0_39, %c0_40] : memref<2x4x64x16xf32, #tpu.memory_space<vmem>>, vector<1x1x64x16xf32>
    %47 = vector.shape_cast %46 : vector<1x1x64x16xf32> to vector<64x16xf32>
    %cst_41 = arith.constant dense<0.000000e+00> : vector<5x16xf32>
    %48 = tpu.matmul %33, %47, %cst_41 {dimension_numbers = #tpu.dot_dimension_numbers<[1], [0], [0], [1], [0, 0, 1, 1], [], []>} : vector<5x64xf32>, vector<64x16xf32>, vector<5x16xf32> -> vector<5x16xf32>
    %c0_42 = arith.constant 0 : index
    %c0_43 = arith.constant 0 : index
    %c0_44 = arith.constant 0 : index
    %c0_45 = arith.constant 0 : index
    %49 = vector.load %arg8[%c0_42, %c0_43, %c0_44, %c0_45] : memref<2x4x1x16xf32, #tpu.memory_space<vmem>>, vector<1x1x1x16xf32>
    %50 = vector.shape_cast %49 : vector<1x1x1x16xf32> to vector<1x16xf32>
    %51 = vector.broadcast %50 : vector<1x16xf32> to vector<5x16xf32>
    %52 = arith.addf %48, %51 : vector<5x16xf32>
    %c0_46 = arith.constant 0 : index
    %c0_47 = arith.constant 0 : index
    %c0_48 = arith.constant 0 : index
    %c0_49 = arith.constant 0 : index
    %53 = vector.load %arg9[%c0_46, %c0_47, %c0_48, %c0_49] : memref<2x4x64x16xf32, #tpu.memory_space<vmem>>, vector<1x1x64x16xf32>
    %54 = vector.shape_cast %53 : vector<1x1x64x16xf32> to vector<64x16xf32>
    %cst_50 = arith.constant dense<0.000000e+00> : vector<5x16xf32>
    %55 = tpu.matmul %33, %54, %cst_50 {dimension_numbers = #tpu.dot_dimension_numbers<[1], [0], [0], [1], [0, 0, 1, 1], [], []>} : vector<5x64xf32>, vector<64x16xf32>, vector<5x16xf32> -> vector<5x16xf32>
    %c0_51 = arith.constant 0 : index
    %c0_52 = arith.constant 0 : index
    %c0_53 = arith.constant 0 : index
    %c0_54 = arith.constant 0 : index
    %56 = vector.load %arg10[%c0_51, %c0_52, %c0_53, %c0_54] : memref<2x4x1x16xf32, #tpu.memory_space<vmem>>, vector<1x1x1x16xf32>
    %57 = vector.shape_cast %56 : vector<1x1x1x16xf32> to vector<1x16xf32>
    %58 = vector.broadcast %57 : vector<1x16xf32> to vector<5x16xf32>
    %59 = arith.addf %55, %58 : vector<5x16xf32>
    %60 = tpu.transpose %52, [1, 0] : vector<5x16xf32> -> vector<16x5xf32>
    %cst_55 = arith.constant dense<0.000000e+00> : vector<5x5xf32>
    %61 = tpu.matmul %45, %60, %cst_55 {dimension_numbers = #tpu.dot_dimension_numbers<[1], [0], [0], [1], [0, 0, 1, 1], [], []>} : vector<5x16xf32>, vector<16x5xf32>, vector<5x5xf32> -> vector<5x5xf32>
    %cst_56 = arith.constant dense<0xFF800000> : vector<5xf32>
    %62 = vector.multi_reduction <maximumf>, %61, %cst_56 [1] : vector<5x5xf32> to vector<5xf32>
    %63 = vector.shape_cast %62 : vector<5xf32> to vector<5x1xf32>
    %64 = vector.broadcast %63 : vector<5x1xf32> to vector<5x5xf32>
    %65 = arith.subf %61, %64 : vector<5x5xf32>
    %66 = math.exp %65 : vector<5x5xf32>
    %cst_57 = arith.constant dense<0.000000e+00> : vector<5xf32>
    %67 = vector.multi_reduction <add>, %66, %cst_57 [1] : vector<5x5xf32> to vector<5xf32>
    %68 = vector.shape_cast %67 : vector<5xf32> to vector<5x1xf32>
    %69 = tpu.reciprocal %68 {approx = true} : vector<5x1xf32> -> vector<5x1xf32>
    %70 = vector.broadcast %69 : vector<5x1xf32> to vector<5x5xf32>
    %71 = arith.mulf %66, %70 : vector<5x5xf32>
    %cst_58 = arith.constant dense<0.000000e+00> : vector<5x16xf32>
    %72 = tpu.matmul %71, %59, %cst_58 {dimension_numbers = #tpu.dot_dimension_numbers<[1], [0], [0], [1], [0, 0, 1, 1], [], []>} : vector<5x5xf32>, vector<5x16xf32>, vector<5x16xf32> -> vector<5x16xf32>
    %c0_59 = arith.constant 0 : index
    %c0_60 = arith.constant 0 : index
    %c0_61 = arith.constant 0 : index
    %c0_62 = arith.constant 0 : index
    %73 = vector.load %arg11[%c0_59, %c0_60, %c0_61, %c0_62] : memref<2x4x16x64xf32, #tpu.memory_space<vmem>>, vector<1x1x16x64xf32>
    %74 = vector.shape_cast %73 : vector<1x1x16x64xf32> to vector<16x64xf32>
    %cst_63 = arith.constant dense<0.000000e+00> : vector<5x64xf32>
    %75 = tpu.matmul %72, %74, %cst_63 {dimension_numbers = #tpu.dot_dimension_numbers<[1], [0], [0], [1], [0, 0, 1, 1], [], []>} : vector<5x16xf32>, vector<16x64xf32>, vector<5x64xf32> -> vector<5x64xf32>
    %76 = arith.addf %38, %75 : vector<5x64xf32>
    %c0_64 = arith.constant 0 : index
    %c1_65 = arith.constant 1 : index
    %c0_66 = arith.constant 0 : index
    %c0_67 = arith.constant 0 : index
    %77 = vector.load %arg5[%c0_64, %c1_65, %c0_66, %c0_67] : memref<2x4x64x16xf32, #tpu.memory_space<vmem>>, vector<1x1x64x16xf32>
    %78 = vector.shape_cast %77 : vector<1x1x64x16xf32> to vector<64x16xf32>
    %cst_68 = arith.constant dense<0.000000e+00> : vector<5x16xf32>
    %79 = tpu.matmul %33, %78, %cst_68 {dimension_numbers = #tpu.dot_dimension_numbers<[1], [0], [0], [1], [0, 0, 1, 1], [], []>} : vector<5x64xf32>, vector<64x16xf32>, vector<5x16xf32> -> vector<5x16xf32>
    %c0_69 = arith.constant 0 : index
    %c1_70 = arith.constant 1 : index
    %c0_71 = arith.constant 0 : index
    %c0_72 = arith.constant 0 : index
    %80 = vector.load %arg6[%c0_69, %c1_70, %c0_71, %c0_72] : memref<2x4x1x16xf32, #tpu.memory_space<vmem>>, vector<1x1x1x16xf32>
    %81 = vector.shape_cast %80 : vector<1x1x1x16xf32> to vector<1x16xf32>
    %82 = vector.broadcast %81 : vector<1x16xf32> to vector<5x16xf32>
    %83 = arith.addf %79, %82 : vector<5x16xf32>
    %c0_73 = arith.constant 0 : index
    %c1_74 = arith.constant 1 : index
    %c0_75 = arith.constant 0 : index
    %c0_76 = arith.constant 0 : index
    %84 = vector.load %arg7[%c0_73, %c1_74, %c0_75, %c0_76] : memref<2x4x64x16xf32, #tpu.memory_space<vmem>>, vector<1x1x64x16xf32>
    %85 = vector.shape_cast %84 : vector<1x1x64x16xf32> to vector<64x16xf32>
    %cst_77 = arith.constant dense<0.000000e+00> : vector<5x16xf32>
    %86 = tpu.matmul %33, %85, %cst_77 {dimension_numbers = #tpu.dot_dimension_numbers<[1], [0], [0], [1], [0, 0, 1, 1], [], []>} : vector<5x64xf32>, vector<64x16xf32>, vector<5x16xf32> -> vector<5x16xf32>
    %c0_78 = arith.constant 0 : index
    %c1_79 = arith.constant 1 : index
    %c0_80 = arith.constant 0 : index
    %c0_81 = arith.constant 0 : index
    %87 = vector.load %arg8[%c0_78, %c1_79, %c0_80, %c0_81] : memref<2x4x1x16xf32, #tpu.memory_space<vmem>>, vector<1x1x1x16xf32>
    %88 = vector.shape_cast %87 : vector<1x1x1x16xf32> to vector<1x16xf32>
    %89 = vector.broadcast %88 : vector<1x16xf32> to vector<5x16xf32>
    %90 = arith.addf %86, %89 : vector<5x16xf32>
    %c0_82 = arith.constant 0 : index
    %c1_83 = arith.constant 1 : index
    %c0_84 = arith.constant 0 : index
    %c0_85 = arith.constant 0 : index
    %91 = vector.load %arg9[%c0_82, %c1_83, %c0_84, %c0_85] : memref<2x4x64x16xf32, #tpu.memory_space<vmem>>, vector<1x1x64x16xf32>
    %92 = vector.shape_cast %91 : vector<1x1x64x16xf32> to vector<64x16xf32>
    %cst_86 = arith.constant dense<0.000000e+00> : vector<5x16xf32>
    %93 = tpu.matmul %33, %92, %cst_86 {dimension_numbers = #tpu.dot_dimension_numbers<[1], [0], [0], [1], [0, 0, 1, 1], [], []>} : vector<5x64xf32>, vector<64x16xf32>, vector<5x16xf32> -> vector<5x16xf32>
    %c0_87 = arith.constant 0 : index
    %c1_88 = arith.constant 1 : index
    %c0_89 = arith.constant 0 : index
    %c0_90 = arith.constant 0 : index
    %94 = vector.load %arg10[%c0_87, %c1_88, %c0_89, %c0_90] : memref<2x4x1x16xf32, #tpu.memory_space<vmem>>, vector<1x1x1x16xf32>
    %95 = vector.shape_cast %94 : vector<1x1x1x16xf32> to vector<1x16xf32>
    %96 = vector.broadcast %95 : vector<1x16xf32> to vector<5x16xf32>
    %97 = arith.addf %93, %96 : vector<5x16xf32>
    %98 = tpu.transpose %90, [1, 0] : vector<5x16xf32> -> vector<16x5xf32>
    %cst_91 = arith.constant dense<0.000000e+00> : vector<5x5xf32>
    %99 = tpu.matmul %83, %98, %cst_91 {dimension_numbers = #tpu.dot_dimension_numbers<[1], [0], [0], [1], [0, 0, 1, 1], [], []>} : vector<5x16xf32>, vector<16x5xf32>, vector<5x5xf32> -> vector<5x5xf32>
    %cst_92 = arith.constant dense<0xFF800000> : vector<5xf32>
    %100 = vector.multi_reduction <maximumf>, %99, %cst_92 [1] : vector<5x5xf32> to vector<5xf32>
    %101 = vector.shape_cast %100 : vector<5xf32> to vector<5x1xf32>
    %102 = vector.broadcast %101 : vector<5x1xf32> to vector<5x5xf32>
    %103 = arith.subf %99, %102 : vector<5x5xf32>
    %104 = math.exp %103 : vector<5x5xf32>
    %cst_93 = arith.constant dense<0.000000e+00> : vector<5xf32>
    %105 = vector.multi_reduction <add>, %104, %cst_93 [1] : vector<5x5xf32> to vector<5xf32>
    %106 = vector.shape_cast %105 : vector<5xf32> to vector<5x1xf32>
    %107 = tpu.reciprocal %106 {approx = true} : vector<5x1xf32> -> vector<5x1xf32>
    %108 = vector.broadcast %107 : vector<5x1xf32> to vector<5x5xf32>
    %109 = arith.mulf %104, %108 : vector<5x5xf32>
    %cst_94 = arith.constant dense<0.000000e+00> : vector<5x16xf32>
    %110 = tpu.matmul %109, %97, %cst_94 {dimension_numbers = #tpu.dot_dimension_numbers<[1], [0], [0], [1], [0, 0, 1, 1], [], []>} : vector<5x5xf32>, vector<5x16xf32>, vector<5x16xf32> -> vector<5x16xf32>
    %c0_95 = arith.constant 0 : index
    %c1_96 = arith.constant 1 : index
    %c0_97 = arith.constant 0 : index
    %c0_98 = arith.constant 0 : index
    %111 = vector.load %arg11[%c0_95, %c1_96, %c0_97, %c0_98] : memref<2x4x16x64xf32, #tpu.memory_space<vmem>>, vector<1x1x16x64xf32>
    %112 = vector.shape_cast %111 : vector<1x1x16x64xf32> to vector<16x64xf32>
    %cst_99 = arith.constant dense<0.000000e+00> : vector<5x64xf32>
    %113 = tpu.matmul %110, %112, %cst_99 {dimension_numbers = #tpu.dot_dimension_numbers<[1], [0], [0], [1], [0, 0, 1, 1], [], []>} : vector<5x16xf32>, vector<16x64xf32>, vector<5x64xf32> -> vector<5x64xf32>
    %114 = arith.addf %76, %113 : vector<5x64xf32>
    %c0_100 = arith.constant 0 : index
    %c2 = arith.constant 2 : index
    %c0_101 = arith.constant 0 : index
    %c0_102 = arith.constant 0 : index
    %115 = vector.load %arg5[%c0_100, %c2, %c0_101, %c0_102] : memref<2x4x64x16xf32, #tpu.memory_space<vmem>>, vector<1x1x64x16xf32>
    %116 = vector.shape_cast %115 : vector<1x1x64x16xf32> to vector<64x16xf32>
    %cst_103 = arith.constant dense<0.000000e+00> : vector<5x16xf32>
    %117 = tpu.matmul %33, %116, %cst_103 {dimension_numbers = #tpu.dot_dimension_numbers<[1], [0], [0], [1], [0, 0, 1, 1], [], []>} : vector<5x64xf32>, vector<64x16xf32>, vector<5x16xf32> -> vector<5x16xf32>
    %c0_104 = arith.constant 0 : index
    %c2_105 = arith.constant 2 : index
    %c0_106 = arith.constant 0 : index
    %c0_107 = arith.constant 0 : index
    %118 = vector.load %arg6[%c0_104, %c2_105, %c0_106, %c0_107] : memref<2x4x1x16xf32, #tpu.memory_space<vmem>>, vector<1x1x1x16xf32>
    %119 = vector.shape_cast %118 : vector<1x1x1x16xf32> to vector<1x16xf32>
    %120 = vector.broadcast %119 : vector<1x16xf32> to vector<5x16xf32>
    %121 = arith.addf %117, %120 : vector<5x16xf32>
    %c0_108 = arith.constant 0 : index
    %c2_109 = arith.constant 2 : index
    %c0_110 = arith.constant 0 : index
    %c0_111 = arith.constant 0 : index
    %122 = vector.load %arg7[%c0_108, %c2_109, %c0_110, %c0_111] : memref<2x4x64x16xf32, #tpu.memory_space<vmem>>, vector<1x1x64x16xf32>
    %123 = vector.shape_cast %122 : vector<1x1x64x16xf32> to vector<64x16xf32>
    %cst_112 = arith.constant dense<0.000000e+00> : vector<5x16xf32>
    %124 = tpu.matmul %33, %123, %cst_112 {dimension_numbers = #tpu.dot_dimension_numbers<[1], [0], [0], [1], [0, 0, 1, 1], [], []>} : vector<5x64xf32>, vector<64x16xf32>, vector<5x16xf32> -> vector<5x16xf32>
    %c0_113 = arith.constant 0 : index
    %c2_114 = arith.constant 2 : index
    %c0_115 = arith.constant 0 : index
    %c0_116 = arith.constant 0 : index
    %125 = vector.load %arg8[%c0_113, %c2_114, %c0_115, %c0_116] : memref<2x4x1x16xf32, #tpu.memory_space<vmem>>, vector<1x1x1x16xf32>
    %126 = vector.shape_cast %125 : vector<1x1x1x16xf32> to vector<1x16xf32>
    %127 = vector.broadcast %126 : vector<1x16xf32> to vector<5x16xf32>
    %128 = arith.addf %124, %127 : vector<5x16xf32>
    %c0_117 = arith.constant 0 : index
    %c2_118 = arith.constant 2 : index
    %c0_119 = arith.constant 0 : index
    %c0_120 = arith.constant 0 : index
    %129 = vector.load %arg9[%c0_117, %c2_118, %c0_119, %c0_120] : memref<2x4x64x16xf32, #tpu.memory_space<vmem>>, vector<1x1x64x16xf32>
    %130 = vector.shape_cast %129 : vector<1x1x64x16xf32> to vector<64x16xf32>
    %cst_121 = arith.constant dense<0.000000e+00> : vector<5x16xf32>
    %131 = tpu.matmul %33, %130, %cst_121 {dimension_numbers = #tpu.dot_dimension_numbers<[1], [0], [0], [1], [0, 0, 1, 1], [], []>} : vector<5x64xf32>, vector<64x16xf32>, vector<5x16xf32> -> vector<5x16xf32>
    %c0_122 = arith.constant 0 : index
    %c2_123 = arith.constant 2 : index
    %c0_124 = arith.constant 0 : index
    %c0_125 = arith.constant 0 : index
    %132 = vector.load %arg10[%c0_122, %c2_123, %c0_124, %c0_125] : memref<2x4x1x16xf32, #tpu.memory_space<vmem>>, vector<1x1x1x16xf32>
    %133 = vector.shape_cast %132 : vector<1x1x1x16xf32> to vector<1x16xf32>
    %134 = vector.broadcast %133 : vector<1x16xf32> to vector<5x16xf32>
    %135 = arith.addf %131, %134 : vector<5x16xf32>
    %136 = tpu.transpose %128, [1, 0] : vector<5x16xf32> -> vector<16x5xf32>
    %cst_126 = arith.constant dense<0.000000e+00> : vector<5x5xf32>
    %137 = tpu.matmul %121, %136, %cst_126 {dimension_numbers = #tpu.dot_dimension_numbers<[1], [0], [0], [1], [0, 0, 1, 1], [], []>} : vector<5x16xf32>, vector<16x5xf32>, vector<5x5xf32> -> vector<5x5xf32>
    %cst_127 = arith.constant dense<0xFF800000> : vector<5xf32>
    %138 = vector.multi_reduction <maximumf>, %137, %cst_127 [1] : vector<5x5xf32> to vector<5xf32>
    %139 = vector.shape_cast %138 : vector<5xf32> to vector<5x1xf32>
    %140 = vector.broadcast %139 : vector<5x1xf32> to vector<5x5xf32>
    %141 = arith.subf %137, %140 : vector<5x5xf32>
    %142 = math.exp %141 : vector<5x5xf32>
    %cst_128 = arith.constant dense<0.000000e+00> : vector<5xf32>
    %143 = vector.multi_reduction <add>, %142, %cst_128 [1] : vector<5x5xf32> to vector<5xf32>
    %144 = vector.shape_cast %143 : vector<5xf32> to vector<5x1xf32>
    %145 = tpu.reciprocal %144 {approx = true} : vector<5x1xf32> -> vector<5x1xf32>
    %146 = vector.broadcast %145 : vector<5x1xf32> to vector<5x5xf32>
    %147 = arith.mulf %142, %146 : vector<5x5xf32>
    %cst_129 = arith.constant dense<0.000000e+00> : vector<5x16xf32>
    %148 = tpu.matmul %147, %135, %cst_129 {dimension_numbers = #tpu.dot_dimension_numbers<[1], [0], [0], [1], [0, 0, 1, 1], [], []>} : vector<5x5xf32>, vector<5x16xf32>, vector<5x16xf32> -> vector<5x16xf32>
    %c0_130 = arith.constant 0 : index
    %c2_131 = arith.constant 2 : index
    %c0_132 = arith.constant 0 : index
    %c0_133 = arith.constant 0 : index
    %149 = vector.load %arg11[%c0_130, %c2_131, %c0_132, %c0_133] : memref<2x4x16x64xf32, #tpu.memory_space<vmem>>, vector<1x1x16x64xf32>
    %150 = vector.shape_cast %149 : vector<1x1x16x64xf32> to vector<16x64xf32>
    %cst_134 = arith.constant dense<0.000000e+00> : vector<5x64xf32>
    %151 = tpu.matmul %148, %150, %cst_134 {dimension_numbers = #tpu.dot_dimension_numbers<[1], [0], [0], [1], [0, 0, 1, 1], [], []>} : vector<5x16xf32>, vector<16x64xf32>, vector<5x64xf32> -> vector<5x64xf32>
    %152 = arith.addf %114, %151 : vector<5x64xf32>
    %c0_135 = arith.constant 0 : index
    %c3 = arith.constant 3 : index
    %c0_136 = arith.constant 0 : index
    %c0_137 = arith.constant 0 : index
    %153 = vector.load %arg5[%c0_135, %c3, %c0_136, %c0_137] : memref<2x4x64x16xf32, #tpu.memory_space<vmem>>, vector<1x1x64x16xf32>
    %154 = vector.shape_cast %153 : vector<1x1x64x16xf32> to vector<64x16xf32>
    %cst_138 = arith.constant dense<0.000000e+00> : vector<5x16xf32>
    %155 = tpu.matmul %33, %154, %cst_138 {dimension_numbers = #tpu.dot_dimension_numbers<[1], [0], [0], [1], [0, 0, 1, 1], [], []>} : vector<5x64xf32>, vector<64x16xf32>, vector<5x16xf32> -> vector<5x16xf32>
    %c0_139 = arith.constant 0 : index
    %c3_140 = arith.constant 3 : index
    %c0_141 = arith.constant 0 : index
    %c0_142 = arith.constant 0 : index
    %156 = vector.load %arg6[%c0_139, %c3_140, %c0_141, %c0_142] : memref<2x4x1x16xf32, #tpu.memory_space<vmem>>, vector<1x1x1x16xf32>
    %157 = vector.shape_cast %156 : vector<1x1x1x16xf32> to vector<1x16xf32>
    %158 = vector.broadcast %157 : vector<1x16xf32> to vector<5x16xf32>
    %159 = arith.addf %155, %158 : vector<5x16xf32>
    %c0_143 = arith.constant 0 : index
    %c3_144 = arith.constant 3 : index
    %c0_145 = arith.constant 0 : index
    %c0_146 = arith.constant 0 : index
    %160 = vector.load %arg7[%c0_143, %c3_144, %c0_145, %c0_146] : memref<2x4x64x16xf32, #tpu.memory_space<vmem>>, vector<1x1x64x16xf32>
    %161 = vector.shape_cast %160 : vector<1x1x64x16xf32> to vector<64x16xf32>
    %cst_147 = arith.constant dense<0.000000e+00> : vector<5x16xf32>
    %162 = tpu.matmul %33, %161, %cst_147 {dimension_numbers = #tpu.dot_dimension_numbers<[1], [0], [0], [1], [0, 0, 1, 1], [], []>} : vector<5x64xf32>, vector<64x16xf32>, vector<5x16xf32> -> vector<5x16xf32>
    %c0_148 = arith.constant 0 : index
    %c3_149 = arith.constant 3 : index
    %c0_150 = arith.constant 0 : index
    %c0_151 = arith.constant 0 : index
    %163 = vector.load %arg8[%c0_148, %c3_149, %c0_150, %c0_151] : memref<2x4x1x16xf32, #tpu.memory_space<vmem>>, vector<1x1x1x16xf32>
    %164 = vector.shape_cast %163 : vector<1x1x1x16xf32> to vector<1x16xf32>
    %165 = vector.broadcast %164 : vector<1x16xf32> to vector<5x16xf32>
    %166 = arith.addf %162, %165 : vector<5x16xf32>
    %c0_152 = arith.constant 0 : index
    %c3_153 = arith.constant 3 : index
    %c0_154 = arith.constant 0 : index
    %c0_155 = arith.constant 0 : index
    %167 = vector.load %arg9[%c0_152, %c3_153, %c0_154, %c0_155] : memref<2x4x64x16xf32, #tpu.memory_space<vmem>>, vector<1x1x64x16xf32>
    %168 = vector.shape_cast %167 : vector<1x1x64x16xf32> to vector<64x16xf32>
    %cst_156 = arith.constant dense<0.000000e+00> : vector<5x16xf32>
    %169 = tpu.matmul %33, %168, %cst_156 {dimension_numbers = #tpu.dot_dimension_numbers<[1], [0], [0], [1], [0, 0, 1, 1], [], []>} : vector<5x64xf32>, vector<64x16xf32>, vector<5x16xf32> -> vector<5x16xf32>
    %c0_157 = arith.constant 0 : index
    %c3_158 = arith.constant 3 : index
    %c0_159 = arith.constant 0 : index
    %c0_160 = arith.constant 0 : index
    %170 = vector.load %arg10[%c0_157, %c3_158, %c0_159, %c0_160] : memref<2x4x1x16xf32, #tpu.memory_space<vmem>>, vector<1x1x1x16xf32>
    %171 = vector.shape_cast %170 : vector<1x1x1x16xf32> to vector<1x16xf32>
    %172 = vector.broadcast %171 : vector<1x16xf32> to vector<5x16xf32>
    %173 = arith.addf %169, %172 : vector<5x16xf32>
    %174 = tpu.transpose %166, [1, 0] : vector<5x16xf32> -> vector<16x5xf32>
    %cst_161 = arith.constant dense<0.000000e+00> : vector<5x5xf32>
    %175 = tpu.matmul %159, %174, %cst_161 {dimension_numbers = #tpu.dot_dimension_numbers<[1], [0], [0], [1], [0, 0, 1, 1], [], []>} : vector<5x16xf32>, vector<16x5xf32>, vector<5x5xf32> -> vector<5x5xf32>
    %cst_162 = arith.constant dense<0xFF800000> : vector<5xf32>
    %176 = vector.multi_reduction <maximumf>, %175, %cst_162 [1] : vector<5x5xf32> to vector<5xf32>
    %177 = vector.shape_cast %176 : vector<5xf32> to vector<5x1xf32>
    %178 = vector.broadcast %177 : vector<5x1xf32> to vector<5x5xf32>
    %179 = arith.subf %175, %178 : vector<5x5xf32>
    %180 = math.exp %179 : vector<5x5xf32>
    %cst_163 = arith.constant dense<0.000000e+00> : vector<5xf32>
    %181 = vector.multi_reduction <add>, %180, %cst_163 [1] : vector<5x5xf32> to vector<5xf32>
    %182 = vector.shape_cast %181 : vector<5xf32> to vector<5x1xf32>
    %183 = tpu.reciprocal %182 {approx = true} : vector<5x1xf32> -> vector<5x1xf32>
    %184 = vector.broadcast %183 : vector<5x1xf32> to vector<5x5xf32>
    %185 = arith.mulf %180, %184 : vector<5x5xf32>
    %cst_164 = arith.constant dense<0.000000e+00> : vector<5x16xf32>
    %186 = tpu.matmul %185, %173, %cst_164 {dimension_numbers = #tpu.dot_dimension_numbers<[1], [0], [0], [1], [0, 0, 1, 1], [], []>} : vector<5x5xf32>, vector<5x16xf32>, vector<5x16xf32> -> vector<5x16xf32>
    %c0_165 = arith.constant 0 : index
    %c3_166 = arith.constant 3 : index
    %c0_167 = arith.constant 0 : index
    %c0_168 = arith.constant 0 : index
    %187 = vector.load %arg11[%c0_165, %c3_166, %c0_167, %c0_168] : memref<2x4x16x64xf32, #tpu.memory_space<vmem>>, vector<1x1x16x64xf32>
    %188 = vector.shape_cast %187 : vector<1x1x16x64xf32> to vector<16x64xf32>
    %cst_169 = arith.constant dense<0.000000e+00> : vector<5x64xf32>
    %189 = tpu.matmul %186, %188, %cst_169 {dimension_numbers = #tpu.dot_dimension_numbers<[1], [0], [0], [1], [0, 0, 1, 1], [], []>} : vector<5x16xf32>, vector<16x64xf32>, vector<5x64xf32> -> vector<5x64xf32>
    %190 = arith.addf %152, %189 : vector<5x64xf32>
    %191 = arith.addf %9, %190 : vector<5x64xf32>
    %c0_170 = arith.constant 0 : index
    %c0_171 = arith.constant 0 : index
    %c0_172 = arith.constant 0 : index
    %192 = vector.load %arg15[%c0_170, %c0_171, %c0_172] : memref<2x1x64xf32, #tpu.memory_space<vmem>>, vector<1x1x64xf32>
    %193 = vector.shape_cast %192 : vector<1x1x64xf32> to vector<1x64xf32>
    %c0_173 = arith.constant 0 : index
    %c0_174 = arith.constant 0 : index
    %c0_175 = arith.constant 0 : index
    %194 = vector.load %arg16[%c0_173, %c0_174, %c0_175] : memref<2x1x64xf32, #tpu.memory_space<vmem>>, vector<1x1x64xf32>
    %195 = vector.shape_cast %194 : vector<1x1x64xf32> to vector<1x64xf32>
    %cst_176 = arith.constant dense<0.000000e+00> : vector<5xf32>
    %196 = vector.multi_reduction <add>, %191, %cst_176 [1] : vector<5x64xf32> to vector<5xf32>
    %197 = vector.shape_cast %196 : vector<5xf32> to vector<5x1xf32>
    %cst_177 = arith.constant 6.400000e+01 : f32
    %198 = vector.broadcast %cst_177 : f32 to vector<5x1xf32>
    %199 = arith.divf %197, %198 : vector<5x1xf32>
    %200 = vector.broadcast %199 : vector<5x1xf32> to vector<5x64xf32>
    %201 = arith.subf %191, %200 : vector<5x64xf32>
    %202 = arith.mulf %201, %201 : vector<5x64xf32>
    %cst_178 = arith.constant dense<0.000000e+00> : vector<5xf32>
    %203 = vector.multi_reduction <add>, %202, %cst_178 [1] : vector<5x64xf32> to vector<5xf32>
    %204 = vector.shape_cast %203 : vector<5xf32> to vector<5x1xf32>
    %cst_179 = arith.constant 6.400000e+01 : f32
    %205 = vector.broadcast %cst_179 : f32 to vector<5x1xf32>
    %206 = arith.divf %204, %205 : vector<5x1xf32>
    %cst_180 = arith.constant 9.99999997E-7 : f32
    %207 = vector.broadcast %cst_180 : f32 to vector<5x1xf32>
    %208 = arith.addf %206, %207 : vector<5x1xf32>
    %209 = math.rsqrt %208 : vector<5x1xf32>
    %210 = vector.broadcast %209 : vector<5x1xf32> to vector<5x64xf32>
    %211 = arith.mulf %201, %210 : vector<5x64xf32>
    %212 = vector.broadcast %193 : vector<1x64xf32> to vector<5x64xf32>
    %213 = arith.mulf %211, %212 : vector<5x64xf32>
    %214 = vector.broadcast %195 : vector<1x64xf32> to vector<5x64xf32>
    %215 = arith.addf %213, %214 : vector<5x64xf32>
    %c0_181 = arith.constant 0 : index
    %c0_182 = arith.constant 0 : index
    %c0_183 = arith.constant 0 : index
    %216 = vector.load %arg17[%c0_181, %c0_182, %c0_183] : memref<2x64x256xf32, #tpu.memory_space<vmem>>, vector<1x64x256xf32>
    %217 = vector.shape_cast %216 : vector<1x64x256xf32> to vector<64x256xf32>
    %cst_184 = arith.constant dense<0.000000e+00> : vector<5x256xf32>
    %218 = tpu.matmul %215, %217, %cst_184 {dimension_numbers = #tpu.dot_dimension_numbers<[1], [0], [0], [1], [0, 0, 1, 1], [], []>} : vector<5x64xf32>, vector<64x256xf32>, vector<5x256xf32> -> vector<5x256xf32>
    %c0_185 = arith.constant 0 : index
    %c0_186 = arith.constant 0 : index
    %c0_187 = arith.constant 0 : index
    %219 = vector.load %arg18[%c0_185, %c0_186, %c0_187] : memref<2x1x256xf32, #tpu.memory_space<vmem>>, vector<1x1x256xf32>
    %220 = vector.shape_cast %219 : vector<1x1x256xf32> to vector<1x256xf32>
    %221 = vector.broadcast %220 : vector<1x256xf32> to vector<5x256xf32>
    %222 = arith.addf %218, %221 : vector<5x256xf32>
    %cst_188 = arith.constant 5.000000e-01 : f32
    %223 = vector.broadcast %cst_188 : f32 to vector<5x256xf32>
    %224 = arith.mulf %223, %222 : vector<5x256xf32>
    %cst_189 = arith.constant 4.471500e-02 : f32
    %225 = vector.broadcast %cst_189 : f32 to vector<5x256xf32>
    %226 = arith.mulf %225, %222 : vector<5x256xf32>
    %227 = arith.mulf %226, %222 : vector<5x256xf32>
    %228 = arith.mulf %227, %222 : vector<5x256xf32>
    %229 = arith.addf %222, %228 : vector<5x256xf32>
    %cst_190 = arith.constant 0.797884583 : f32
    %230 = vector.broadcast %cst_190 : f32 to vector<5x256xf32>
    %231 = arith.mulf %230, %229 : vector<5x256xf32>
    %232 = math.tanh %231 : vector<5x256xf32>
    %cst_191 = arith.constant 1.000000e+00 : f32
    %233 = vector.broadcast %cst_191 : f32 to vector<5x256xf32>
    %234 = arith.addf %233, %232 : vector<5x256xf32>
    %235 = arith.mulf %224, %234 : vector<5x256xf32>
    %c0_192 = arith.constant 0 : index
    %c0_193 = arith.constant 0 : index
    %c0_194 = arith.constant 0 : index
    %236 = vector.load %arg19[%c0_192, %c0_193, %c0_194] : memref<2x256x64xf32, #tpu.memory_space<vmem>>, vector<1x256x64xf32>
    %237 = vector.shape_cast %236 : vector<1x256x64xf32> to vector<256x64xf32>
    %cst_195 = arith.constant dense<0.000000e+00> : vector<5x64xf32>
    %238 = tpu.matmul %235, %237, %cst_195 {dimension_numbers = #tpu.dot_dimension_numbers<[1], [0], [0], [1], [0, 0, 1, 1], [], []>} : vector<5x256xf32>, vector<256x64xf32>, vector<5x64xf32> -> vector<5x64xf32>
    %c0_196 = arith.constant 0 : index
    %c0_197 = arith.constant 0 : index
    %c0_198 = arith.constant 0 : index
    %239 = vector.load %arg20[%c0_196, %c0_197, %c0_198] : memref<2x1x64xf32, #tpu.memory_space<vmem>>, vector<1x1x64xf32>
    %240 = vector.shape_cast %239 : vector<1x1x64xf32> to vector<1x64xf32>
    %241 = vector.broadcast %240 : vector<1x64xf32> to vector<5x64xf32>
    %242 = arith.addf %238, %241 : vector<5x64xf32>
    %243 = arith.addf %191, %242 : vector<5x64xf32>
    %c1_199 = arith.constant 1 : index
    %c0_200 = arith.constant 0 : index
    %c0_201 = arith.constant 0 : index
    %244 = vector.load %arg13[%c1_199, %c0_200, %c0_201] : memref<2x1x64xf32, #tpu.memory_space<vmem>>, vector<1x1x64xf32>
    %245 = vector.shape_cast %244 : vector<1x1x64xf32> to vector<1x64xf32>
    %c1_202 = arith.constant 1 : index
    %c0_203 = arith.constant 0 : index
    %c0_204 = arith.constant 0 : index
    %246 = vector.load %arg14[%c1_202, %c0_203, %c0_204] : memref<2x1x64xf32, #tpu.memory_space<vmem>>, vector<1x1x64xf32>
    %247 = vector.shape_cast %246 : vector<1x1x64xf32> to vector<1x64xf32>
    %cst_205 = arith.constant dense<0.000000e+00> : vector<5xf32>
    %248 = vector.multi_reduction <add>, %243, %cst_205 [1] : vector<5x64xf32> to vector<5xf32>
    %249 = vector.shape_cast %248 : vector<5xf32> to vector<5x1xf32>
    %cst_206 = arith.constant 6.400000e+01 : f32
    %250 = vector.broadcast %cst_206 : f32 to vector<5x1xf32>
    %251 = arith.divf %249, %250 : vector<5x1xf32>
    %252 = vector.broadcast %251 : vector<5x1xf32> to vector<5x64xf32>
    %253 = arith.subf %243, %252 : vector<5x64xf32>
    %254 = arith.mulf %253, %253 : vector<5x64xf32>
    %cst_207 = arith.constant dense<0.000000e+00> : vector<5xf32>
    %255 = vector.multi_reduction <add>, %254, %cst_207 [1] : vector<5x64xf32> to vector<5xf32>
    %256 = vector.shape_cast %255 : vector<5xf32> to vector<5x1xf32>
    %cst_208 = arith.constant 6.400000e+01 : f32
    %257 = vector.broadcast %cst_208 : f32 to vector<5x1xf32>
    %258 = arith.divf %256, %257 : vector<5x1xf32>
    %cst_209 = arith.constant 9.99999997E-7 : f32
    %259 = vector.broadcast %cst_209 : f32 to vector<5x1xf32>
    %260 = arith.addf %258, %259 : vector<5x1xf32>
    %261 = math.rsqrt %260 : vector<5x1xf32>
    %262 = vector.broadcast %261 : vector<5x1xf32> to vector<5x64xf32>
    %263 = arith.mulf %253, %262 : vector<5x64xf32>
    %264 = vector.broadcast %245 : vector<1x64xf32> to vector<5x64xf32>
    %265 = arith.mulf %263, %264 : vector<5x64xf32>
    %266 = vector.broadcast %247 : vector<1x64xf32> to vector<5x64xf32>
    %267 = arith.addf %265, %266 : vector<5x64xf32>
    %cst_210 = arith.constant 0.000000e+00 : f32
    %268 = vector.broadcast %cst_210 : f32 to vector<5x64xf32>
    %c1_211 = arith.constant 1 : index
    %c0_212 = arith.constant 0 : index
    %c0_213 = arith.constant 0 : index
    %269 = vector.load %arg12[%c1_211, %c0_212, %c0_213] : memref<2x1x64xf32, #tpu.memory_space<vmem>>, vector<1x1x64xf32>
    %270 = vector.shape_cast %269 : vector<1x1x64xf32> to vector<1x64xf32>
    %271 = vector.broadcast %270 : vector<1x64xf32> to vector<5x64xf32>
    %272 = arith.addf %268, %271 : vector<5x64xf32>
    %c1_214 = arith.constant 1 : index
    %c0_215 = arith.constant 0 : index
    %c0_216 = arith.constant 0 : index
    %c0_217 = arith.constant 0 : index
    %273 = vector.load %arg5[%c1_214, %c0_215, %c0_216, %c0_217] : memref<2x4x64x16xf32, #tpu.memory_space<vmem>>, vector<1x1x64x16xf32>
    %274 = vector.shape_cast %273 : vector<1x1x64x16xf32> to vector<64x16xf32>
    %cst_218 = arith.constant dense<0.000000e+00> : vector<5x16xf32>
    %275 = tpu.matmul %267, %274, %cst_218 {dimension_numbers = #tpu.dot_dimension_numbers<[1], [0], [0], [1], [0, 0, 1, 1], [], []>} : vector<5x64xf32>, vector<64x16xf32>, vector<5x16xf32> -> vector<5x16xf32>
    %c1_219 = arith.constant 1 : index
    %c0_220 = arith.constant 0 : index
    %c0_221 = arith.constant 0 : index
    %c0_222 = arith.constant 0 : index
    %276 = vector.load %arg6[%c1_219, %c0_220, %c0_221, %c0_222] : memref<2x4x1x16xf32, #tpu.memory_space<vmem>>, vector<1x1x1x16xf32>
    %277 = vector.shape_cast %276 : vector<1x1x1x16xf32> to vector<1x16xf32>
    %278 = vector.broadcast %277 : vector<1x16xf32> to vector<5x16xf32>
    %279 = arith.addf %275, %278 : vector<5x16xf32>
    %c1_223 = arith.constant 1 : index
    %c0_224 = arith.constant 0 : index
    %c0_225 = arith.constant 0 : index
    %c0_226 = arith.constant 0 : index
    %280 = vector.load %arg7[%c1_223, %c0_224, %c0_225, %c0_226] : memref<2x4x64x16xf32, #tpu.memory_space<vmem>>, vector<1x1x64x16xf32>
    %281 = vector.shape_cast %280 : vector<1x1x64x16xf32> to vector<64x16xf32>
    %cst_227 = arith.constant dense<0.000000e+00> : vector<5x16xf32>
    %282 = tpu.matmul %267, %281, %cst_227 {dimension_numbers = #tpu.dot_dimension_numbers<[1], [0], [0], [1], [0, 0, 1, 1], [], []>} : vector<5x64xf32>, vector<64x16xf32>, vector<5x16xf32> -> vector<5x16xf32>
    %c1_228 = arith.constant 1 : index
    %c0_229 = arith.constant 0 : index
    %c0_230 = arith.constant 0 : index
    %c0_231 = arith.constant 0 : index
    %283 = vector.load %arg8[%c1_228, %c0_229, %c0_230, %c0_231] : memref<2x4x1x16xf32, #tpu.memory_space<vmem>>, vector<1x1x1x16xf32>
    %284 = vector.shape_cast %283 : vector<1x1x1x16xf32> to vector<1x16xf32>
    %285 = vector.broadcast %284 : vector<1x16xf32> to vector<5x16xf32>
    %286 = arith.addf %282, %285 : vector<5x16xf32>
    %c1_232 = arith.constant 1 : index
    %c0_233 = arith.constant 0 : index
    %c0_234 = arith.constant 0 : index
    %c0_235 = arith.constant 0 : index
    %287 = vector.load %arg9[%c1_232, %c0_233, %c0_234, %c0_235] : memref<2x4x64x16xf32, #tpu.memory_space<vmem>>, vector<1x1x64x16xf32>
    %288 = vector.shape_cast %287 : vector<1x1x64x16xf32> to vector<64x16xf32>
    %cst_236 = arith.constant dense<0.000000e+00> : vector<5x16xf32>
    %289 = tpu.matmul %267, %288, %cst_236 {dimension_numbers = #tpu.dot_dimension_numbers<[1], [0], [0], [1], [0, 0, 1, 1], [], []>} : vector<5x64xf32>, vector<64x16xf32>, vector<5x16xf32> -> vector<5x16xf32>
    %c1_237 = arith.constant 1 : index
    %c0_238 = arith.constant 0 : index
    %c0_239 = arith.constant 0 : index
    %c0_240 = arith.constant 0 : index
    %290 = vector.load %arg10[%c1_237, %c0_238, %c0_239, %c0_240] : memref<2x4x1x16xf32, #tpu.memory_space<vmem>>, vector<1x1x1x16xf32>
    %291 = vector.shape_cast %290 : vector<1x1x1x16xf32> to vector<1x16xf32>
    %292 = vector.broadcast %291 : vector<1x16xf32> to vector<5x16xf32>
    %293 = arith.addf %289, %292 : vector<5x16xf32>
    %294 = tpu.transpose %286, [1, 0] : vector<5x16xf32> -> vector<16x5xf32>
    %cst_241 = arith.constant dense<0.000000e+00> : vector<5x5xf32>
    %295 = tpu.matmul %279, %294, %cst_241 {dimension_numbers = #tpu.dot_dimension_numbers<[1], [0], [0], [1], [0, 0, 1, 1], [], []>} : vector<5x16xf32>, vector<16x5xf32>, vector<5x5xf32> -> vector<5x5xf32>
    %cst_242 = arith.constant dense<0xFF800000> : vector<5xf32>
    %296 = vector.multi_reduction <maximumf>, %295, %cst_242 [1] : vector<5x5xf32> to vector<5xf32>
    %297 = vector.shape_cast %296 : vector<5xf32> to vector<5x1xf32>
    %298 = vector.broadcast %297 : vector<5x1xf32> to vector<5x5xf32>
    %299 = arith.subf %295, %298 : vector<5x5xf32>
    %300 = math.exp %299 : vector<5x5xf32>
    %cst_243 = arith.constant dense<0.000000e+00> : vector<5xf32>
    %301 = vector.multi_reduction <add>, %300, %cst_243 [1] : vector<5x5xf32> to vector<5xf32>
    %302 = vector.shape_cast %301 : vector<5xf32> to vector<5x1xf32>
    %303 = tpu.reciprocal %302 {approx = true} : vector<5x1xf32> -> vector<5x1xf32>
    %304 = vector.broadcast %303 : vector<5x1xf32> to vector<5x5xf32>
    %305 = arith.mulf %300, %304 : vector<5x5xf32>
    %cst_244 = arith.constant dense<0.000000e+00> : vector<5x16xf32>
    %306 = tpu.matmul %305, %293, %cst_244 {dimension_numbers = #tpu.dot_dimension_numbers<[1], [0], [0], [1], [0, 0, 1, 1], [], []>} : vector<5x5xf32>, vector<5x16xf32>, vector<5x16xf32> -> vector<5x16xf32>
    %c1_245 = arith.constant 1 : index
    %c0_246 = arith.constant 0 : index
    %c0_247 = arith.constant 0 : index
    %c0_248 = arith.constant 0 : index
    %307 = vector.load %arg11[%c1_245, %c0_246, %c0_247, %c0_248] : memref<2x4x16x64xf32, #tpu.memory_space<vmem>>, vector<1x1x16x64xf32>
    %308 = vector.shape_cast %307 : vector<1x1x16x64xf32> to vector<16x64xf32>
    %cst_249 = arith.constant dense<0.000000e+00> : vector<5x64xf32>
    %309 = tpu.matmul %306, %308, %cst_249 {dimension_numbers = #tpu.dot_dimension_numbers<[1], [0], [0], [1], [0, 0, 1, 1], [], []>} : vector<5x16xf32>, vector<16x64xf32>, vector<5x64xf32> -> vector<5x64xf32>
    %310 = arith.addf %272, %309 : vector<5x64xf32>
    %c1_250 = arith.constant 1 : index
    %c1_251 = arith.constant 1 : index
    %c0_252 = arith.constant 0 : index
    %c0_253 = arith.constant 0 : index
    %311 = vector.load %arg5[%c1_250, %c1_251, %c0_252, %c0_253] : memref<2x4x64x16xf32, #tpu.memory_space<vmem>>, vector<1x1x64x16xf32>
    %312 = vector.shape_cast %311 : vector<1x1x64x16xf32> to vector<64x16xf32>
    %cst_254 = arith.constant dense<0.000000e+00> : vector<5x16xf32>
    %313 = tpu.matmul %267, %312, %cst_254 {dimension_numbers = #tpu.dot_dimension_numbers<[1], [0], [0], [1], [0, 0, 1, 1], [], []>} : vector<5x64xf32>, vector<64x16xf32>, vector<5x16xf32> -> vector<5x16xf32>
    %c1_255 = arith.constant 1 : index
    %c1_256 = arith.constant 1 : index
    %c0_257 = arith.constant 0 : index
    %c0_258 = arith.constant 0 : index
    %314 = vector.load %arg6[%c1_255, %c1_256, %c0_257, %c0_258] : memref<2x4x1x16xf32, #tpu.memory_space<vmem>>, vector<1x1x1x16xf32>
    %315 = vector.shape_cast %314 : vector<1x1x1x16xf32> to vector<1x16xf32>
    %316 = vector.broadcast %315 : vector<1x16xf32> to vector<5x16xf32>
    %317 = arith.addf %313, %316 : vector<5x16xf32>
    %c1_259 = arith.constant 1 : index
    %c1_260 = arith.constant 1 : index
    %c0_261 = arith.constant 0 : index
    %c0_262 = arith.constant 0 : index
    %318 = vector.load %arg7[%c1_259, %c1_260, %c0_261, %c0_262] : memref<2x4x64x16xf32, #tpu.memory_space<vmem>>, vector<1x1x64x16xf32>
    %319 = vector.shape_cast %318 : vector<1x1x64x16xf32> to vector<64x16xf32>
    %cst_263 = arith.constant dense<0.000000e+00> : vector<5x16xf32>
    %320 = tpu.matmul %267, %319, %cst_263 {dimension_numbers = #tpu.dot_dimension_numbers<[1], [0], [0], [1], [0, 0, 1, 1], [], []>} : vector<5x64xf32>, vector<64x16xf32>, vector<5x16xf32> -> vector<5x16xf32>
    %c1_264 = arith.constant 1 : index
    %c1_265 = arith.constant 1 : index
    %c0_266 = arith.constant 0 : index
    %c0_267 = arith.constant 0 : index
    %321 = vector.load %arg8[%c1_264, %c1_265, %c0_266, %c0_267] : memref<2x4x1x16xf32, #tpu.memory_space<vmem>>, vector<1x1x1x16xf32>
    %322 = vector.shape_cast %321 : vector<1x1x1x16xf32> to vector<1x16xf32>
    %323 = vector.broadcast %322 : vector<1x16xf32> to vector<5x16xf32>
    %324 = arith.addf %320, %323 : vector<5x16xf32>
    %c1_268 = arith.constant 1 : index
    %c1_269 = arith.constant 1 : index
    %c0_270 = arith.constant 0 : index
    %c0_271 = arith.constant 0 : index
    %325 = vector.load %arg9[%c1_268, %c1_269, %c0_270, %c0_271] : memref<2x4x64x16xf32, #tpu.memory_space<vmem>>, vector<1x1x64x16xf32>
    %326 = vector.shape_cast %325 : vector<1x1x64x16xf32> to vector<64x16xf32>
    %cst_272 = arith.constant dense<0.000000e+00> : vector<5x16xf32>
    %327 = tpu.matmul %267, %326, %cst_272 {dimension_numbers = #tpu.dot_dimension_numbers<[1], [0], [0], [1], [0, 0, 1, 1], [], []>} : vector<5x64xf32>, vector<64x16xf32>, vector<5x16xf32> -> vector<5x16xf32>
    %c1_273 = arith.constant 1 : index
    %c1_274 = arith.constant 1 : index
    %c0_275 = arith.constant 0 : index
    %c0_276 = arith.constant 0 : index
    %328 = vector.load %arg10[%c1_273, %c1_274, %c0_275, %c0_276] : memref<2x4x1x16xf32, #tpu.memory_space<vmem>>, vector<1x1x1x16xf32>
    %329 = vector.shape_cast %328 : vector<1x1x1x16xf32> to vector<1x16xf32>
    %330 = vector.broadcast %329 : vector<1x16xf32> to vector<5x16xf32>
    %331 = arith.addf %327, %330 : vector<5x16xf32>
    %332 = tpu.transpose %324, [1, 0] : vector<5x16xf32> -> vector<16x5xf32>
    %cst_277 = arith.constant dense<0.000000e+00> : vector<5x5xf32>
    %333 = tpu.matmul %317, %332, %cst_277 {dimension_numbers = #tpu.dot_dimension_numbers<[1], [0], [0], [1], [0, 0, 1, 1], [], []>} : vector<5x16xf32>, vector<16x5xf32>, vector<5x5xf32> -> vector<5x5xf32>
    %cst_278 = arith.constant dense<0xFF800000> : vector<5xf32>
    %334 = vector.multi_reduction <maximumf>, %333, %cst_278 [1] : vector<5x5xf32> to vector<5xf32>
    %335 = vector.shape_cast %334 : vector<5xf32> to vector<5x1xf32>
    %336 = vector.broadcast %335 : vector<5x1xf32> to vector<5x5xf32>
    %337 = arith.subf %333, %336 : vector<5x5xf32>
    %338 = math.exp %337 : vector<5x5xf32>
    %cst_279 = arith.constant dense<0.000000e+00> : vector<5xf32>
    %339 = vector.multi_reduction <add>, %338, %cst_279 [1] : vector<5x5xf32> to vector<5xf32>
    %340 = vector.shape_cast %339 : vector<5xf32> to vector<5x1xf32>
    %341 = tpu.reciprocal %340 {approx = true} : vector<5x1xf32> -> vector<5x1xf32>
    %342 = vector.broadcast %341 : vector<5x1xf32> to vector<5x5xf32>
    %343 = arith.mulf %338, %342 : vector<5x5xf32>
    %cst_280 = arith.constant dense<0.000000e+00> : vector<5x16xf32>
    %344 = tpu.matmul %343, %331, %cst_280 {dimension_numbers = #tpu.dot_dimension_numbers<[1], [0], [0], [1], [0, 0, 1, 1], [], []>} : vector<5x5xf32>, vector<5x16xf32>, vector<5x16xf32> -> vector<5x16xf32>
    %c1_281 = arith.constant 1 : index
    %c1_282 = arith.constant 1 : index
    %c0_283 = arith.constant 0 : index
    %c0_284 = arith.constant 0 : index
    %345 = vector.load %arg11[%c1_281, %c1_282, %c0_283, %c0_284] : memref<2x4x16x64xf32, #tpu.memory_space<vmem>>, vector<1x1x16x64xf32>
    %346 = vector.shape_cast %345 : vector<1x1x16x64xf32> to vector<16x64xf32>
    %cst_285 = arith.constant dense<0.000000e+00> : vector<5x64xf32>
    %347 = tpu.matmul %344, %346, %cst_285 {dimension_numbers = #tpu.dot_dimension_numbers<[1], [0], [0], [1], [0, 0, 1, 1], [], []>} : vector<5x16xf32>, vector<16x64xf32>, vector<5x64xf32> -> vector<5x64xf32>
    %348 = arith.addf %310, %347 : vector<5x64xf32>
    %c1_286 = arith.constant 1 : index
    %c2_287 = arith.constant 2 : index
    %c0_288 = arith.constant 0 : index
    %c0_289 = arith.constant 0 : index
    %349 = vector.load %arg5[%c1_286, %c2_287, %c0_288, %c0_289] : memref<2x4x64x16xf32, #tpu.memory_space<vmem>>, vector<1x1x64x16xf32>
    %350 = vector.shape_cast %349 : vector<1x1x64x16xf32> to vector<64x16xf32>
    %cst_290 = arith.constant dense<0.000000e+00> : vector<5x16xf32>
    %351 = tpu.matmul %267, %350, %cst_290 {dimension_numbers = #tpu.dot_dimension_numbers<[1], [0], [0], [1], [0, 0, 1, 1], [], []>} : vector<5x64xf32>, vector<64x16xf32>, vector<5x16xf32> -> vector<5x16xf32>
    %c1_291 = arith.constant 1 : index
    %c2_292 = arith.constant 2 : index
    %c0_293 = arith.constant 0 : index
    %c0_294 = arith.constant 0 : index
    %352 = vector.load %arg6[%c1_291, %c2_292, %c0_293, %c0_294] : memref<2x4x1x16xf32, #tpu.memory_space<vmem>>, vector<1x1x1x16xf32>
    %353 = vector.shape_cast %352 : vector<1x1x1x16xf32> to vector<1x16xf32>
    %354 = vector.broadcast %353 : vector<1x16xf32> to vector<5x16xf32>
    %355 = arith.addf %351, %354 : vector<5x16xf32>
    %c1_295 = arith.constant 1 : index
    %c2_296 = arith.constant 2 : index
    %c0_297 = arith.constant 0 : index
    %c0_298 = arith.constant 0 : index
    %356 = vector.load %arg7[%c1_295, %c2_296, %c0_297, %c0_298] : memref<2x4x64x16xf32, #tpu.memory_space<vmem>>, vector<1x1x64x16xf32>
    %357 = vector.shape_cast %356 : vector<1x1x64x16xf32> to vector<64x16xf32>
    %cst_299 = arith.constant dense<0.000000e+00> : vector<5x16xf32>
    %358 = tpu.matmul %267, %357, %cst_299 {dimension_numbers = #tpu.dot_dimension_numbers<[1], [0], [0], [1], [0, 0, 1, 1], [], []>} : vector<5x64xf32>, vector<64x16xf32>, vector<5x16xf32> -> vector<5x16xf32>
    %c1_300 = arith.constant 1 : index
    %c2_301 = arith.constant 2 : index
    %c0_302 = arith.constant 0 : index
    %c0_303 = arith.constant 0 : index
    %359 = vector.load %arg8[%c1_300, %c2_301, %c0_302, %c0_303] : memref<2x4x1x16xf32, #tpu.memory_space<vmem>>, vector<1x1x1x16xf32>
    %360 = vector.shape_cast %359 : vector<1x1x1x16xf32> to vector<1x16xf32>
    %361 = vector.broadcast %360 : vector<1x16xf32> to vector<5x16xf32>
    %362 = arith.addf %358, %361 : vector<5x16xf32>
    %c1_304 = arith.constant 1 : index
    %c2_305 = arith.constant 2 : index
    %c0_306 = arith.constant 0 : index
    %c0_307 = arith.constant 0 : index
    %363 = vector.load %arg9[%c1_304, %c2_305, %c0_306, %c0_307] : memref<2x4x64x16xf32, #tpu.memory_space<vmem>>, vector<1x1x64x16xf32>
    %364 = vector.shape_cast %363 : vector<1x1x64x16xf32> to vector<64x16xf32>
    %cst_308 = arith.constant dense<0.000000e+00> : vector<5x16xf32>
    %365 = tpu.matmul %267, %364, %cst_308 {dimension_numbers = #tpu.dot_dimension_numbers<[1], [0], [0], [1], [0, 0, 1, 1], [], []>} : vector<5x64xf32>, vector<64x16xf32>, vector<5x16xf32> -> vector<5x16xf32>
    %c1_309 = arith.constant 1 : index
    %c2_310 = arith.constant 2 : index
    %c0_311 = arith.constant 0 : index
    %c0_312 = arith.constant 0 : index
    %366 = vector.load %arg10[%c1_309, %c2_310, %c0_311, %c0_312] : memref<2x4x1x16xf32, #tpu.memory_space<vmem>>, vector<1x1x1x16xf32>
    %367 = vector.shape_cast %366 : vector<1x1x1x16xf32> to vector<1x16xf32>
    %368 = vector.broadcast %367 : vector<1x16xf32> to vector<5x16xf32>
    %369 = arith.addf %365, %368 : vector<5x16xf32>
    %370 = tpu.transpose %362, [1, 0] : vector<5x16xf32> -> vector<16x5xf32>
    %cst_313 = arith.constant dense<0.000000e+00> : vector<5x5xf32>
    %371 = tpu.matmul %355, %370, %cst_313 {dimension_numbers = #tpu.dot_dimension_numbers<[1], [0], [0], [1], [0, 0, 1, 1], [], []>} : vector<5x16xf32>, vector<16x5xf32>, vector<5x5xf32> -> vector<5x5xf32>
    %cst_314 = arith.constant dense<0xFF800000> : vector<5xf32>
    %372 = vector.multi_reduction <maximumf>, %371, %cst_314 [1] : vector<5x5xf32> to vector<5xf32>
    %373 = vector.shape_cast %372 : vector<5xf32> to vector<5x1xf32>
    %374 = vector.broadcast %373 : vector<5x1xf32> to vector<5x5xf32>
    %375 = arith.subf %371, %374 : vector<5x5xf32>
    %376 = math.exp %375 : vector<5x5xf32>
    %cst_315 = arith.constant dense<0.000000e+00> : vector<5xf32>
    %377 = vector.multi_reduction <add>, %376, %cst_315 [1] : vector<5x5xf32> to vector<5xf32>
    %378 = vector.shape_cast %377 : vector<5xf32> to vector<5x1xf32>
    %379 = tpu.reciprocal %378 {approx = true} : vector<5x1xf32> -> vector<5x1xf32>
    %380 = vector.broadcast %379 : vector<5x1xf32> to vector<5x5xf32>
    %381 = arith.mulf %376, %380 : vector<5x5xf32>
    %cst_316 = arith.constant dense<0.000000e+00> : vector<5x16xf32>
    %382 = tpu.matmul %381, %369, %cst_316 {dimension_numbers = #tpu.dot_dimension_numbers<[1], [0], [0], [1], [0, 0, 1, 1], [], []>} : vector<5x5xf32>, vector<5x16xf32>, vector<5x16xf32> -> vector<5x16xf32>
    %c1_317 = arith.constant 1 : index
    %c2_318 = arith.constant 2 : index
    %c0_319 = arith.constant 0 : index
    %c0_320 = arith.constant 0 : index
    %383 = vector.load %arg11[%c1_317, %c2_318, %c0_319, %c0_320] : memref<2x4x16x64xf32, #tpu.memory_space<vmem>>, vector<1x1x16x64xf32>
    %384 = vector.shape_cast %383 : vector<1x1x16x64xf32> to vector<16x64xf32>
    %cst_321 = arith.constant dense<0.000000e+00> : vector<5x64xf32>
    %385 = tpu.matmul %382, %384, %cst_321 {dimension_numbers = #tpu.dot_dimension_numbers<[1], [0], [0], [1], [0, 0, 1, 1], [], []>} : vector<5x16xf32>, vector<16x64xf32>, vector<5x64xf32> -> vector<5x64xf32>
    %386 = arith.addf %348, %385 : vector<5x64xf32>
    %c1_322 = arith.constant 1 : index
    %c3_323 = arith.constant 3 : index
    %c0_324 = arith.constant 0 : index
    %c0_325 = arith.constant 0 : index
    %387 = vector.load %arg5[%c1_322, %c3_323, %c0_324, %c0_325] : memref<2x4x64x16xf32, #tpu.memory_space<vmem>>, vector<1x1x64x16xf32>
    %388 = vector.shape_cast %387 : vector<1x1x64x16xf32> to vector<64x16xf32>
    %cst_326 = arith.constant dense<0.000000e+00> : vector<5x16xf32>
    %389 = tpu.matmul %267, %388, %cst_326 {dimension_numbers = #tpu.dot_dimension_numbers<[1], [0], [0], [1], [0, 0, 1, 1], [], []>} : vector<5x64xf32>, vector<64x16xf32>, vector<5x16xf32> -> vector<5x16xf32>
    %c1_327 = arith.constant 1 : index
    %c3_328 = arith.constant 3 : index
    %c0_329 = arith.constant 0 : index
    %c0_330 = arith.constant 0 : index
    %390 = vector.load %arg6[%c1_327, %c3_328, %c0_329, %c0_330] : memref<2x4x1x16xf32, #tpu.memory_space<vmem>>, vector<1x1x1x16xf32>
    %391 = vector.shape_cast %390 : vector<1x1x1x16xf32> to vector<1x16xf32>
    %392 = vector.broadcast %391 : vector<1x16xf32> to vector<5x16xf32>
    %393 = arith.addf %389, %392 : vector<5x16xf32>
    %c1_331 = arith.constant 1 : index
    %c3_332 = arith.constant 3 : index
    %c0_333 = arith.constant 0 : index
    %c0_334 = arith.constant 0 : index
    %394 = vector.load %arg7[%c1_331, %c3_332, %c0_333, %c0_334] : memref<2x4x64x16xf32, #tpu.memory_space<vmem>>, vector<1x1x64x16xf32>
    %395 = vector.shape_cast %394 : vector<1x1x64x16xf32> to vector<64x16xf32>
    %cst_335 = arith.constant dense<0.000000e+00> : vector<5x16xf32>
    %396 = tpu.matmul %267, %395, %cst_335 {dimension_numbers = #tpu.dot_dimension_numbers<[1], [0], [0], [1], [0, 0, 1, 1], [], []>} : vector<5x64xf32>, vector<64x16xf32>, vector<5x16xf32> -> vector<5x16xf32>
    %c1_336 = arith.constant 1 : index
    %c3_337 = arith.constant 3 : index
    %c0_338 = arith.constant 0 : index
    %c0_339 = arith.constant 0 : index
    %397 = vector.load %arg8[%c1_336, %c3_337, %c0_338, %c0_339] : memref<2x4x1x16xf32, #tpu.memory_space<vmem>>, vector<1x1x1x16xf32>
    %398 = vector.shape_cast %397 : vector<1x1x1x16xf32> to vector<1x16xf32>
    %399 = vector.broadcast %398 : vector<1x16xf32> to vector<5x16xf32>
    %400 = arith.addf %396, %399 : vector<5x16xf32>
    %c1_340 = arith.constant 1 : index
    %c3_341 = arith.constant 3 : index
    %c0_342 = arith.constant 0 : index
    %c0_343 = arith.constant 0 : index
    %401 = vector.load %arg9[%c1_340, %c3_341, %c0_342, %c0_343] : memref<2x4x64x16xf32, #tpu.memory_space<vmem>>, vector<1x1x64x16xf32>
    %402 = vector.shape_cast %401 : vector<1x1x64x16xf32> to vector<64x16xf32>
    %cst_344 = arith.constant dense<0.000000e+00> : vector<5x16xf32>
    %403 = tpu.matmul %267, %402, %cst_344 {dimension_numbers = #tpu.dot_dimension_numbers<[1], [0], [0], [1], [0, 0, 1, 1], [], []>} : vector<5x64xf32>, vector<64x16xf32>, vector<5x16xf32> -> vector<5x16xf32>
    %c1_345 = arith.constant 1 : index
    %c3_346 = arith.constant 3 : index
    %c0_347 = arith.constant 0 : index
    %c0_348 = arith.constant 0 : index
    %404 = vector.load %arg10[%c1_345, %c3_346, %c0_347, %c0_348] : memref<2x4x1x16xf32, #tpu.memory_space<vmem>>, vector<1x1x1x16xf32>
    %405 = vector.shape_cast %404 : vector<1x1x1x16xf32> to vector<1x16xf32>
    %406 = vector.broadcast %405 : vector<1x16xf32> to vector<5x16xf32>
    %407 = arith.addf %403, %406 : vector<5x16xf32>
    %408 = tpu.transpose %400, [1, 0] : vector<5x16xf32> -> vector<16x5xf32>
    %cst_349 = arith.constant dense<0.000000e+00> : vector<5x5xf32>
    %409 = tpu.matmul %393, %408, %cst_349 {dimension_numbers = #tpu.dot_dimension_numbers<[1], [0], [0], [1], [0, 0, 1, 1], [], []>} : vector<5x16xf32>, vector<16x5xf32>, vector<5x5xf32> -> vector<5x5xf32>
    %cst_350 = arith.constant dense<0xFF800000> : vector<5xf32>
    %410 = vector.multi_reduction <maximumf>, %409, %cst_350 [1] : vector<5x5xf32> to vector<5xf32>
    %411 = vector.shape_cast %410 : vector<5xf32> to vector<5x1xf32>
    %412 = vector.broadcast %411 : vector<5x1xf32> to vector<5x5xf32>
    %413 = arith.subf %409, %412 : vector<5x5xf32>
    %414 = math.exp %413 : vector<5x5xf32>
    %cst_351 = arith.constant dense<0.000000e+00> : vector<5xf32>
    %415 = vector.multi_reduction <add>, %414, %cst_351 [1] : vector<5x5xf32> to vector<5xf32>
    %416 = vector.shape_cast %415 : vector<5xf32> to vector<5x1xf32>
    %417 = tpu.reciprocal %416 {approx = true} : vector<5x1xf32> -> vector<5x1xf32>
    %418 = vector.broadcast %417 : vector<5x1xf32> to vector<5x5xf32>
    %419 = arith.mulf %414, %418 : vector<5x5xf32>
    %cst_352 = arith.constant dense<0.000000e+00> : vector<5x16xf32>
    %420 = tpu.matmul %419, %407, %cst_352 {dimension_numbers = #tpu.dot_dimension_numbers<[1], [0], [0], [1], [0, 0, 1, 1], [], []>} : vector<5x5xf32>, vector<5x16xf32>, vector<5x16xf32> -> vector<5x16xf32>
    %c1_353 = arith.constant 1 : index
    %c3_354 = arith.constant 3 : index
    %c0_355 = arith.constant 0 : index
    %c0_356 = arith.constant 0 : index
    %421 = vector.load %arg11[%c1_353, %c3_354, %c0_355, %c0_356] : memref<2x4x16x64xf32, #tpu.memory_space<vmem>>, vector<1x1x16x64xf32>
    %422 = vector.shape_cast %421 : vector<1x1x16x64xf32> to vector<16x64xf32>
    %cst_357 = arith.constant dense<0.000000e+00> : vector<5x64xf32>
    %423 = tpu.matmul %420, %422, %cst_357 {dimension_numbers = #tpu.dot_dimension_numbers<[1], [0], [0], [1], [0, 0, 1, 1], [], []>} : vector<5x16xf32>, vector<16x64xf32>, vector<5x64xf32> -> vector<5x64xf32>
    %424 = arith.addf %386, %423 : vector<5x64xf32>
    %425 = arith.addf %243, %424 : vector<5x64xf32>
    %c1_358 = arith.constant 1 : index
    %c0_359 = arith.constant 0 : index
    %c0_360 = arith.constant 0 : index
    %426 = vector.load %arg15[%c1_358, %c0_359, %c0_360] : memref<2x1x64xf32, #tpu.memory_space<vmem>>, vector<1x1x64xf32>
    %427 = vector.shape_cast %426 : vector<1x1x64xf32> to vector<1x64xf32>
    %c1_361 = arith.constant 1 : index
    %c0_362 = arith.constant 0 : index
    %c0_363 = arith.constant 0 : index
    %428 = vector.load %arg16[%c1_361, %c0_362, %c0_363] : memref<2x1x64xf32, #tpu.memory_space<vmem>>, vector<1x1x64xf32>
    %429 = vector.shape_cast %428 : vector<1x1x64xf32> to vector<1x64xf32>
    %cst_364 = arith.constant dense<0.000000e+00> : vector<5xf32>
    %430 = vector.multi_reduction <add>, %425, %cst_364 [1] : vector<5x64xf32> to vector<5xf32>
    %431 = vector.shape_cast %430 : vector<5xf32> to vector<5x1xf32>
    %cst_365 = arith.constant 6.400000e+01 : f32
    %432 = vector.broadcast %cst_365 : f32 to vector<5x1xf32>
    %433 = arith.divf %431, %432 : vector<5x1xf32>
    %434 = vector.broadcast %433 : vector<5x1xf32> to vector<5x64xf32>
    %435 = arith.subf %425, %434 : vector<5x64xf32>
    %436 = arith.mulf %435, %435 : vector<5x64xf32>
    %cst_366 = arith.constant dense<0.000000e+00> : vector<5xf32>
    %437 = vector.multi_reduction <add>, %436, %cst_366 [1] : vector<5x64xf32> to vector<5xf32>
    %438 = vector.shape_cast %437 : vector<5xf32> to vector<5x1xf32>
    %cst_367 = arith.constant 6.400000e+01 : f32
    %439 = vector.broadcast %cst_367 : f32 to vector<5x1xf32>
    %440 = arith.divf %438, %439 : vector<5x1xf32>
    %cst_368 = arith.constant 9.99999997E-7 : f32
    %441 = vector.broadcast %cst_368 : f32 to vector<5x1xf32>
    %442 = arith.addf %440, %441 : vector<5x1xf32>
    %443 = math.rsqrt %442 : vector<5x1xf32>
    %444 = vector.broadcast %443 : vector<5x1xf32> to vector<5x64xf32>
    %445 = arith.mulf %435, %444 : vector<5x64xf32>
    %446 = vector.broadcast %427 : vector<1x64xf32> to vector<5x64xf32>
    %447 = arith.mulf %445, %446 : vector<5x64xf32>
    %448 = vector.broadcast %429 : vector<1x64xf32> to vector<5x64xf32>
    %449 = arith.addf %447, %448 : vector<5x64xf32>
    %c1_369 = arith.constant 1 : index
    %c0_370 = arith.constant 0 : index
    %c0_371 = arith.constant 0 : index
    %450 = vector.load %arg17[%c1_369, %c0_370, %c0_371] : memref<2x64x256xf32, #tpu.memory_space<vmem>>, vector<1x64x256xf32>
    %451 = vector.shape_cast %450 : vector<1x64x256xf32> to vector<64x256xf32>
    %cst_372 = arith.constant dense<0.000000e+00> : vector<5x256xf32>
    %452 = tpu.matmul %449, %451, %cst_372 {dimension_numbers = #tpu.dot_dimension_numbers<[1], [0], [0], [1], [0, 0, 1, 1], [], []>} : vector<5x64xf32>, vector<64x256xf32>, vector<5x256xf32> -> vector<5x256xf32>
    %c1_373 = arith.constant 1 : index
    %c0_374 = arith.constant 0 : index
    %c0_375 = arith.constant 0 : index
    %453 = vector.load %arg18[%c1_373, %c0_374, %c0_375] : memref<2x1x256xf32, #tpu.memory_space<vmem>>, vector<1x1x256xf32>
    %454 = vector.shape_cast %453 : vector<1x1x256xf32> to vector<1x256xf32>
    %455 = vector.broadcast %454 : vector<1x256xf32> to vector<5x256xf32>
    %456 = arith.addf %452, %455 : vector<5x256xf32>
    %cst_376 = arith.constant 5.000000e-01 : f32
    %457 = vector.broadcast %cst_376 : f32 to vector<5x256xf32>
    %458 = arith.mulf %457, %456 : vector<5x256xf32>
    %cst_377 = arith.constant 4.471500e-02 : f32
    %459 = vector.broadcast %cst_377 : f32 to vector<5x256xf32>
    %460 = arith.mulf %459, %456 : vector<5x256xf32>
    %461 = arith.mulf %460, %456 : vector<5x256xf32>
    %462 = arith.mulf %461, %456 : vector<5x256xf32>
    %463 = arith.addf %456, %462 : vector<5x256xf32>
    %cst_378 = arith.constant 0.797884583 : f32
    %464 = vector.broadcast %cst_378 : f32 to vector<5x256xf32>
    %465 = arith.mulf %464, %463 : vector<5x256xf32>
    %466 = math.tanh %465 : vector<5x256xf32>
    %cst_379 = arith.constant 1.000000e+00 : f32
    %467 = vector.broadcast %cst_379 : f32 to vector<5x256xf32>
    %468 = arith.addf %467, %466 : vector<5x256xf32>
    %469 = arith.mulf %458, %468 : vector<5x256xf32>
    %c1_380 = arith.constant 1 : index
    %c0_381 = arith.constant 0 : index
    %c0_382 = arith.constant 0 : index
    %470 = vector.load %arg19[%c1_380, %c0_381, %c0_382] : memref<2x256x64xf32, #tpu.memory_space<vmem>>, vector<1x256x64xf32>
    %471 = vector.shape_cast %470 : vector<1x256x64xf32> to vector<256x64xf32>
    %cst_383 = arith.constant dense<0.000000e+00> : vector<5x64xf32>
    %472 = tpu.matmul %469, %471, %cst_383 {dimension_numbers = #tpu.dot_dimension_numbers<[1], [0], [0], [1], [0, 0, 1, 1], [], []>} : vector<5x256xf32>, vector<256x64xf32>, vector<5x64xf32> -> vector<5x64xf32>
    %c1_384 = arith.constant 1 : index
    %c0_385 = arith.constant 0 : index
    %c0_386 = arith.constant 0 : index
    %473 = vector.load %arg20[%c1_384, %c0_385, %c0_386] : memref<2x1x64xf32, #tpu.memory_space<vmem>>, vector<1x1x64xf32>
    %474 = vector.shape_cast %473 : vector<1x1x64xf32> to vector<1x64xf32>
    %475 = vector.broadcast %474 : vector<1x64xf32> to vector<5x64xf32>
    %476 = arith.addf %472, %475 : vector<5x64xf32>
    %477 = arith.addf %425, %476 : vector<5x64xf32>
    %c0_387 = arith.constant 0 : index
    %c0_388 = arith.constant 0 : index
    %478 = vector.load %arg21[%c0_387, %c0_388] : memref<1x64xf32, #tpu.memory_space<vmem>>, vector<1x64xf32>
    %c0_389 = arith.constant 0 : index
    %c0_390 = arith.constant 0 : index
    %479 = vector.load %arg22[%c0_389, %c0_390] : memref<1x64xf32, #tpu.memory_space<vmem>>, vector<1x64xf32>
    %cst_391 = arith.constant dense<0.000000e+00> : vector<5xf32>
    %480 = vector.multi_reduction <add>, %477, %cst_391 [1] : vector<5x64xf32> to vector<5xf32>
    %481 = vector.shape_cast %480 : vector<5xf32> to vector<5x1xf32>
    %cst_392 = arith.constant 6.400000e+01 : f32
    %482 = vector.broadcast %cst_392 : f32 to vector<5x1xf32>
    %483 = arith.divf %481, %482 : vector<5x1xf32>
    %484 = vector.broadcast %483 : vector<5x1xf32> to vector<5x64xf32>
    %485 = arith.subf %477, %484 : vector<5x64xf32>
    %486 = arith.mulf %485, %485 : vector<5x64xf32>
    %cst_393 = arith.constant dense<0.000000e+00> : vector<5xf32>
    %487 = vector.multi_reduction <add>, %486, %cst_393 [1] : vector<5x64xf32> to vector<5xf32>
    %488 = vector.shape_cast %487 : vector<5xf32> to vector<5x1xf32>
    %cst_394 = arith.constant 6.400000e+01 : f32
    %489 = vector.broadcast %cst_394 : f32 to vector<5x1xf32>
    %490 = arith.divf %488, %489 : vector<5x1xf32>
    %cst_395 = arith.constant 9.99999997E-7 : f32
    %491 = vector.broadcast %cst_395 : f32 to vector<5x1xf32>
    %492 = arith.addf %490, %491 : vector<5x1xf32>
    %493 = math.rsqrt %492 : vector<5x1xf32>
    %494 = vector.broadcast %493 : vector<5x1xf32> to vector<5x64xf32>
    %495 = arith.mulf %485, %494 : vector<5x64xf32>
    %496 = vector.broadcast %478 : vector<1x64xf32> to vector<5x64xf32>
    %497 = arith.mulf %495, %496 : vector<5x64xf32>
    %498 = vector.broadcast %479 : vector<1x64xf32> to vector<5x64xf32>
    %499 = arith.addf %497, %498 : vector<5x64xf32>
    %500 = vector.extract_strided_slice %499 {offsets = [0, 0], sizes = [1, 64], strides = [1, 1]} : vector<5x64xf32> to vector<1x64xf32>
    %c0_396 = arith.constant 0 : index
    %c0_397 = arith.constant 0 : index
    %501 = vector.load %arg23[%c0_396, %c0_397] : memref<64x16xf32, #tpu.memory_space<vmem>>, vector<64x16xf32>
    %cst_398 = arith.constant dense<0.000000e+00> : vector<1x16xf32>
    %502 = tpu.matmul %500, %501, %cst_398 {dimension_numbers = #tpu.dot_dimension_numbers<[1], [0], [0], [1], [0, 0, 1, 1], [], []>} : vector<1x64xf32>, vector<64x16xf32>, vector<1x16xf32> -> vector<1x16xf32>
    %c0_399 = arith.constant 0 : index
    %c0_400 = arith.constant 0 : index
    %503 = vector.load %arg24[%c0_399, %c0_400] : memref<1x16xf32, #tpu.memory_space<vmem>>, vector<1x16xf32>
    %504 = arith.addf %502, %503 : vector<1x16xf32>
    %c0_401 = arith.constant 0 : index
    %c0_402 = arith.constant 0 : index
    %c0_403 = arith.constant 0 : index
    %505 = vector.load %arg25[%c0_401, %c0_402, %c0_403] : memref<1x1x16xf32, #tpu.memory_space<vmem>>, vector<1x1x16xf32>
    %506 = vector.shape_cast %505 : vector<1x1x16xf32> to vector<1x16xf32>
    %507 = vector.shape_cast %504 : vector<1x16xf32> to vector<1x1x16xf32>
    tpu.vector_store %arg25[%c0_401, %c0_402, %c0_403], %507 {strides = array<i32>} : memref<1x1x16xf32, #tpu.memory_space<vmem>>, vector<1x1x16xf32>,
    return
  }
  func.func @transform_0(%arg0: i32) -> (i32, i32, i32) {
    %c0_i32 = arith.constant 0 : i32
    %c0_i32_0 = arith.constant 0 : i32
    %c0_i32_1 = arith.constant 0 : i32
    return %arg0, %c0_i32, %c0_i32_0 : i32, i32, i32
  }
  func.func @transform_1(%arg0: i32) -> (i32, i32) {
    %c0_i32 = arith.constant 0 : i32
    %c0_i32_0 = arith.constant 0 : i32
    %c0_i32_1 = arith.constant 0 : i32
    return %c0_i32, %c0_i32_0 : i32, i32
  }
  func.func @transform_2(%arg0: i32) -> (i32, i32) {
    %c0_i32 = arith.constant 0 : i32
    %c0_i32_0 = arith.constant 0 : i32
    %c0_i32_1 = arith.constant 0 : i32
    return %c0_i32, %c0_i32_0 : i32, i32
  }
  func.func @transform_3(%arg0: i32) -> (i32, i32) {
    %c0_i32 = arith.constant 0 : i32
    %c0_i32_0 = arith.constant 0 : i32
    %c0_i32_1 = arith.constant 0 : i32
    return %c0_i32, %c0_i32_0 : i32, i32
  }
  func.func @transform_4(%arg0: i32) -> (i32, i32, i32, i32) {
    %c0_i32 = arith.constant 0 : i32
    %c0_i32_0 = arith.constant 0 : i32
    %c0_i32_1 = arith.constant 0 : i32
    %c0_i32_2 = arith.constant 0 : i32
    %c0_i32_3 = arith.constant 0 : i32
    return %c0_i32, %c0_i32_0, %c0_i32_1, %c0_i32_2 : i32, i32, i32, i32
  }
  func.func @transform_5(%arg0: i32) -> (i32, i32, i32, i32) {
    %c0_i32 = arith.constant 0 : i32
    %c0_i32_0 = arith.constant 0 : i32
    %c0_i32_1 = arith.constant 0 : i32
    %c0_i32_2 = arith.constant 0 : i32
    %c0_i32_3 = arith.constant 0 : i32
    return %c0_i32, %c0_i32_0, %c0_i32_1, %c0_i32_2 : i32, i32, i32, i32
  }
  func.func @transform_6(%arg0: i32) -> (i32, i32, i32, i32) {
    %c0_i32 = arith.constant 0 : i32
    %c0_i32_0 = arith.constant 0 : i32
    %c0_i32_1 = arith.constant 0 : i32
    %c0_i32_2 = arith.constant 0 : i32
    %c0_i32_3 = arith.constant 0 : i32
    return %c0_i32, %c0_i32_0, %c0_i32_1, %c0_i32_2 : i32, i32, i32, i32
  }
  func.func @transform_7(%arg0: i32) -> (i32, i32, i32, i32) {
    %c0_i32 = arith.constant 0 : i32
    %c0_i32_0 = arith.constant 0 : i32
    %c0_i32_1 = arith.constant 0 : i32
    %c0_i32_2 = arith.constant 0 : i32
    %c0_i32_3 = arith.constant 0 : i32
    return %c0_i32, %c0_i32_0, %c0_i32_1, %c0_i32_2 : i32, i32, i32, i32
  }
  func.func @transform_8(%arg0: i32) -> (i32, i32, i32, i32) {
    %c0_i32 = arith.constant 0 : i32
    %c0_i32_0 = arith.constant 0 : i32
    %c0_i32_1 = arith.constant 0 : i32
    %c0_i32_2 = arith.constant 0 : i32
    %c0_i32_3 = arith.constant 0 : i32
    return %c0_i32, %c0_i32_0, %c0_i32_1, %c0_i32_2 : i32, i32, i32, i32
  }
  func.func @transform_9(%arg0: i32) -> (i32, i32, i32, i32) {
    %c0_i32 = arith.constant 0 : i32
    %c0_i32_0 = arith.constant 0 : i32
    %c0_i32_1 = arith.constant 0 : i32
    %c0_i32_2 = arith.constant 0 : i32
    %c0_i32_3 = arith.constant 0 : i32
    return %c0_i32, %c0_i32_0, %c0_i32_1, %c0_i32_2 : i32, i32, i32, i32
  }
  func.func @transform_10(%arg0: i32) -> (i32, i32, i32, i32) {
    %c0_i32 = arith.constant 0 : i32
    %c0_i32_0 = arith.constant 0 : i32
    %c0_i32_1 = arith.constant 0 : i32
    %c0_i32_2 = arith.constant 0 : i32
    %c0_i32_3 = arith.constant 0 : i32
    return %c0_i32, %c0_i32_0, %c0_i32_1, %c0_i32_2 : i32, i32, i32, i32
  }
  func.func @transform_11(%arg0: i32) -> (i32, i32, i32) {
    %c0_i32 = arith.constant 0 : i32
    %c0_i32_0 = arith.constant 0 : i32
    %c0_i32_1 = arith.constant 0 : i32
    %c0_i32_2 = arith.constant 0 : i32
    return %c0_i32, %c0_i32_0, %c0_i32_1 : i32, i32, i32
  }
  func.func @transform_12(%arg0: i32) -> (i32, i32, i32) {
    %c0_i32 = arith.constant 0 : i32
    %c0_i32_0 = arith.constant 0 : i32
    %c0_i32_1 = arith.constant 0 : i32
    %c0_i32_2 = arith.constant 0 : i32
    return %c0_i32, %c0_i32_0, %c0_i32_1 : i32, i32, i32
  }
  func.func @transform_13(%arg0: i32) -> (i32, i32, i32) {
    %c0_i32 = arith.constant 0 : i32
    %c0_i32_0 = arith.constant 0 : i32
    %c0_i32_1 = arith.constant 0 : i32
    %c0_i32_2 = arith.constant 0 : i32
    return %c0_i32, %c0_i32_0, %c0_i32_1 : i32, i32, i32
  }
  func.func @transform_14(%arg0: i32) -> (i32, i32, i32) {
    %c0_i32 = arith.constant 0 : i32
    %c0_i32_0 = arith.constant 0 : i32
    %c0_i32_1 = arith.constant 0 : i32
    %c0_i32_2 = arith.constant 0 : i32
    return %c0_i32, %c0_i32_0, %c0_i32_1 : i32, i32, i32
  }
  func.func @transform_15(%arg0: i32) -> (i32, i32, i32) {
    %c0_i32 = arith.constant 0 : i32
    %c0_i32_0 = arith.constant 0 : i32
    %c0_i32_1 = arith.constant 0 : i32
    %c0_i32_2 = arith.constant 0 : i32
    return %c0_i32, %c0_i32_0, %c0_i32_1 : i32, i32, i32
  }
  func.func @transform_16(%arg0: i32) -> (i32, i32, i32) {
    %c0_i32 = arith.constant 0 : i32
    %c0_i32_0 = arith.constant 0 : i32
    %c0_i32_1 = arith.constant 0 : i32
    %c0_i32_2 = arith.constant 0 : i32
    return %c0_i32, %c0_i32_0, %c0_i32_1 : i32, i32, i32
  }
  func.func @transform_17(%arg0: i32) -> (i32, i32, i32) {
    %c0_i32 = arith.constant 0 : i32
    %c0_i32_0 = arith.constant 0 : i32
    %c0_i32_1 = arith.constant 0 : i32
    %c0_i32_2 = arith.constant 0 : i32
    return %c0_i32, %c0_i32_0, %c0_i32_1 : i32, i32, i32
  }
  func.func @transform_18(%arg0: i32) -> (i32, i32, i32) {
    %c0_i32 = arith.constant 0 : i32
    %c0_i32_0 = arith.constant 0 : i32
    %c0_i32_1 = arith.constant 0 : i32
    %c0_i32_2 = arith.constant 0 : i32
    return %c0_i32, %c0_i32_0, %c0_i32_1 : i32, i32, i32
  }
  func.func @transform_19(%arg0: i32) -> (i32, i32, i32) {
    %c0_i32 = arith.constant 0 : i32
    %c0_i32_0 = arith.constant 0 : i32
    %c0_i32_1 = arith.constant 0 : i32
    %c0_i32_2 = arith.constant 0 : i32
    return %c0_i32, %c0_i32_0, %c0_i32_1 : i32, i32, i32
  }
  func.func @transform_20(%arg0: i32) -> (i32, i32) {
    %c0_i32 = arith.constant 0 : i32
    %c0_i32_0 = arith.constant 0 : i32
    %c0_i32_1 = arith.constant 0 : i32
    return %c0_i32, %c0_i32_0 : i32, i32
  }
  func.func @transform_21(%arg0: i32) -> (i32, i32) {
    %c0_i32 = arith.constant 0 : i32
    %c0_i32_0 = arith.constant 0 : i32
    %c0_i32_1 = arith.constant 0 : i32
    return %c0_i32, %c0_i32_0 : i32, i32
  }
  func.func @transform_22(%arg0: i32) -> (i32, i32) {
    %c0_i32 = arith.constant 0 : i32
    %c0_i32_0 = arith.constant 0 : i32
    %c0_i32_1 = arith.constant 0 : i32
    return %c0_i32, %c0_i32_0 : i32, i32
  }
  func.func @transform_23(%arg0: i32) -> (i32, i32) {
    %c0_i32 = arith.constant 0 : i32
    %c0_i32_0 = arith.constant 0 : i32
    %c0_i32_1 = arith.constant 0 : i32
    return %c0_i32, %c0_i32_0 : i32, i32
  }
  func.func @transform_24(%arg0: i32) -> (i32, i32, i32) {
    %c0_i32 = arith.constant 0 : i32
    %c0_i32_0 = arith.constant 0 : i32
    %c0_i32_1 = arith.constant 0 : i32
    return %arg0, %c0_i32, %c0_i32_0 : i32, i32, i32
  }
}

</mosaic_0001>

<llo_original>
// kernel: deit_forward.1
$region0: #{deit_forward.1}
  #allocation0 [shape = 'u32[]', space=smem, size = 0x4, offset = 0x4, fixed_abs, tag = 'smem constant byte address 0x4 - core index']
  #allocation1 [shape = 'u32[144,128]{1,0:T(1,128)}', space=vmem, size = 0x12000, scoped, tag = 'internal scratch']
  #allocation2 [shape = 'f32[5,64]{1,0:T(8,128)}', space=vmem, size = 0x1000, scoped, tag = 'scratch operand']
  %s0 = inlined_call_operand.vmem [shape: f32[2,4,192], index: 0, kind: input, shape index: {}]
  %s1 = inlined_call_operand.vmem [shape: f32[192,64], index: 1, kind: input, shape index: {}]
  %s2 = inlined_call_operand.vmem [shape: f32[1,64], index: 2, kind: input, shape index: {}]
  %s3 = inlined_call_operand.vmem [shape: f32[4,64], index: 3, kind: input, shape index: {}]
  %s4 = inlined_call_operand.vmem [shape: f32[2,4,64,16], index: 4, kind: input, shape index: {}]
  %s5 = inlined_call_operand.vmem [shape: f32[2,4,1,16], index: 5, kind: input, shape index: {}]
  %s6 = inlined_call_operand.vmem [shape: f32[2,4,64,16], index: 6, kind: input, shape index: {}]
  %s7 = inlined_call_operand.vmem [shape: f32[2,4,1,16], index: 7, kind: input, shape index: {}]
  %s8 = inlined_call_operand.vmem [shape: f32[2,4,64,16], index: 8, kind: input, shape index: {}]
  %s9 = inlined_call_operand.vmem [shape: f32[2,4,1,16], index: 9, kind: input, shape index: {}]
  %s10 = inlined_call_operand.vmem [shape: f32[2,4,16,64], index: 10, kind: input, shape index: {}]
  %s11 = inlined_call_operand.vmem [shape: f32[2,1,64], index: 11, kind: input, shape index: {}]
  %s12 = inlined_call_operand.vmem [shape: f32[2,1,64], index: 12, kind: input, shape index: {}]
  %s13 = inlined_call_operand.vmem [shape: f32[2,1,64], index: 13, kind: input, shape index: {}]
  %s14 = inlined_call_operand.vmem [shape: f32[2,1,64], index: 14, kind: input, shape index: {}]
  %s15 = inlined_call_operand.vmem [shape: f32[2,1,64], index: 15, kind: input, shape index: {}]
  %s16 = inlined_call_operand.vmem [shape: f32[2,64,256], index: 16, kind: input, shape index: {}]
  %s17 = inlined_call_operand.vmem [shape: f32[2,1,256], index: 17, kind: input, shape index: {}]
  %s18 = inlined_call_operand.vmem [shape: f32[2,256,64], index: 18, kind: input, shape index: {}]
  %s19 = inlined_call_operand.vmem [shape: f32[2,1,64], index: 19, kind: input, shape index: {}]
  %s20 = inlined_call_operand.vmem [shape: f32[1,64], index: 20, kind: input, shape index: {}]
  %s21 = inlined_call_operand.vmem [shape: f32[1,64], index: 21, kind: input, shape index: {}]
  %s22 = inlined_call_operand.vmem [shape: f32[64,16], index: 22, kind: input, shape index: {}]
  %s23 = inlined_call_operand.vmem [shape: f32[1,16], index: 23, kind: input, shape index: {}]
  %s24 = inlined_call_operand.hbm [shape: f32[2,1,16], index: 24, kind: output, shape index: {}]
  %s25 = sld [smem:[#allocation0]]
  $region129: #{deit_forward.1} parent=0
    _
  %s27 = ssub.s32 1, %s25
  %s28 = scalar_select 0, %s27, %s25
  $region1: #{deit_forward.1} parent=0
    #allocation3 [shape = 'u8[1024]{0}', space=vmem, size = 0x400, scoped, tag = 'output window, operand 0']
    #allocation4 [shape = 's32[2]{0}', space=sflag, size = 0x8, scoped, tag = 'scoped memory for deit_forward.1']
    %29 = vsyncpa [#allocation4], 0
    %s30 = scalar_lea.sflag [#allocation4], 1
    %31 = vsyncpa %s30, 0
    loop: start=0, step=1, limit=4
    $region2: #{deit_forward.1} parent=1 // loop_pre_header
      _
    $region3: #{deit_forward.1} parent=1 // loop_header
      %s33 = sphi 0, %s37
      %p34 = scmp.ge.s32.totalorder %s33, 4
      %s43 = sphi 0, %s45
      %s46 = sphi 0, %s43
      %s47 = sphi 0, %s46
      %s63 = sphi 0, %s47
      %s67 = sphi 0, %s67
      %s69 = sphi 0, %s67
      %s70 = sphi 0, %s69
      %s84 = sphi 0, %s70
      %s88 = sphi 0, %s88
      %s90 = sphi 0, %s88
      %s91 = sphi 0, %s90
      %s105 = sphi 0, %s91
      %s109 = sphi 0, %s109
      %s111 = sphi 0, %s109
      %s112 = sphi 0, %s111
      %s126 = sphi 0, %s112
      %s130 = sphi 0, %s130
      %s132 = sphi 0, %s130
      %s133 = sphi 0, %s132
      %s147 = sphi 0, %s133
      %s151 = sphi 0, %s151
      %s153 = sphi 0, %s151
      %s154 = sphi 0, %s153
      %s168 = sphi 0, %s154
      %s172 = sphi 0, %s172
      %s174 = sphi 0, %s172
      %s175 = sphi 0, %s174
      %s189 = sphi 0, %s175
      %s193 = sphi 0, %s193
      %s195 = sphi 0, %s193
      %s196 = sphi 0, %s195
      %s210 = sphi 0, %s196
      %s214 = sphi 0, %s214
      %s216 = sphi 0, %s214
      %s217 = sphi 0, %s216
      %s231 = sphi 0, %s217
      %s235 = sphi 0, %s235
      %s237 = sphi 0, %s235
      %s238 = sphi 0, %s237
      %s252 = sphi 0, %s238
      %s256 = sphi 0, %s256
      %s258 = sphi 0, %s256
      %s259 = sphi 0, %s258
      %s273 = sphi 0, %s259
      %s277 = sphi 0, %s277
      %s279 = sphi 0, %s277
      %s280 = sphi 0, %s279
      %s294 = sphi 0, %s280
      %s298 = sphi 0, %s298
      %s300 = sphi 0, %s298
      %s301 = sphi 0, %s300
      %s315 = sphi 0, %s301
      %s319 = sphi 0, %s319
      %s321 = sphi 0, %s319
      %s322 = sphi 0, %s321
      %s336 = sphi 0, %s322
      %s340 = sphi 0, %s340
      %s342 = sphi 0, %s340
      %s343 = sphi 0, %s342
      %s357 = sphi 0, %s343
      %s361 = sphi 0, %s361
      %s363 = sphi 0, %s361
      %s364 = sphi 0, %s363
      %s378 = sphi 0, %s364
      %s382 = sphi 0, %s382
      %s384 = sphi 0, %s382
      %s385 = sphi 0, %s384
      %s399 = sphi 0, %s385
      %s403 = sphi 0, %s403
      %s405 = sphi 0, %s403
      %s406 = sphi 0, %s405
      %s420 = sphi 0, %s406
      %s424 = sphi 0, %s424
      %s426 = sphi 0, %s424
      %s427 = sphi 0, %s426
      %s441 = sphi 0, %s427
      %s445 = sphi 0, %s445
      %s447 = sphi 0, %s445
      %s448 = sphi 0, %s447
      %s462 = sphi 0, %s448
      %s466 = sphi 0, %s466
      %s468 = sphi 0, %s466
      %s469 = sphi 0, %s468
      %s483 = sphi 0, %s469
      %s487 = sphi 0, %s487
      %s489 = sphi 0, %s487
      %s490 = sphi 0, %s489
      %s504 = sphi 0, %s490
      %s508 = sphi 0, %s508
      %s510 = sphi 0, %s508
      %s511 = sphi 0, %s510
      %s525 = sphi 0, %s511
      %s529 = sphi 0, %s529
      %s531 = sphi 0, %s529
      %s532 = sphi 0, %s531
      %s546 = sphi 0, %s532
      %s552 = sphi 0, %s554
      %s555 = sphi 0, %s552
      %s556 = sphi 0, %s555
      %s572 = sphi 0, %s556
    $region4: #{deit_forward.1} parent=1 // loop_header_branch
      %36 = sbr.rel (%p34) target = $region8
    $region5: #{deit_forward.1} parent=1 // loop_body
      %s38 = ssub.s32 %s33, 1
      %s39 = ssub.s32 %s33, 2
      %s40 = sadd.s32 %s33, 1
      %s41 = ssub.s32 %s33, %s40
      %p42 = scmp.eq.s32.totalorder %s41, 0
      %s44 = sadd.s32 %s43, 1
      %s45 = scalar_select %p42, %s43, %s44
      %p48 = pneg %p42
      %p49 = scmp.eq.s32.totalorder %s33, 1
      %p50 = por %p48, %p49
      %p51 = scmp.ne.s32.totalorder %s43, %s46
      %p52 = scmp.eq.s32.totalorder %s33, 0
      %p53 = por %p51, %p52
      %p54 = scmp.ne.s32.totalorder %s43, %s46
      %p55 = scmp.eq.s32.totalorder %s38, 1
      %p56 = por %p54, %p55
      %p57 = scmp.ne.s32.totalorder %s46, %s47
      %p58 = scmp.eq.s32.totalorder %s38, 0
      %p59 = por %p57, %p58
      %p60 = scmp.ne.s32.totalorder %s46, %s47
      %p61 = scmp.eq.s32.totalorder %s39, 1
      %p62 = por %p60, %p61
      %p64 = scmp.ne.s32.totalorder %s47, %s63
      %p65 = scmp.eq.s32.totalorder %s39, 0
      %p66 = por %p64, %p65
      %s68 = sadd.s32 %s67, 1
      %p71 = scmp.eq.s32.totalorder %s33, 1
      %p72 = scmp.ne.s32.totalorder %s67, %s69
      %p73 = scmp.eq.s32.totalorder %s33, 0
      %p74 = por %p72, %p73
      %p75 = scmp.ne.s32.totalorder %s67, %s69
      %p76 = scmp.eq.s32.totalorder %s38, 1
      %p77 = por %p75, %p76
      %p78 = scmp.ne.s32.totalorder %s69, %s70
      %p79 = scmp.eq.s32.totalorder %s38, 0
      %p80 = por %p78, %p79
      %p81 = scmp.ne.s32.totalorder %s69, %s70
      %p82 = scmp.eq.s32.totalorder %s39, 1
      %p83 = por %p81, %p82
      %p85 = scmp.ne.s32.totalorder %s70, %s84
      %p86 = scmp.eq.s32.totalorder %s39, 0
      %p87 = por %p85, %p86
      %s89 = sadd.s32 %s88, 1
      %p92 = scmp.eq.s32.totalorder %s33, 1
      %p93 = scmp.ne.s32.totalorder %s88, %s90
      %p94 = scmp.eq.s32.totalorder %s33, 0
      %p95 = por %p93, %p94
      %p96 = scmp.ne.s32.totalorder %s88, %s90
      %p97 = scmp.eq.s32.totalorder %s38, 1
      %p98 = por %p96, %p97
      %p99 = scmp.ne.s32.totalorder %s90, %s91
      %p100 = scmp.eq.s32.totalorder %s38, 0
      %p101 = por %p99, %p100
      %p102 = scmp.ne.s32.totalorder %s90, %s91
      %p103 = scmp.eq.s32.totalorder %s39, 1
      %p104 = por %p102, %p103
      %p106 = scmp.ne.s32.totalorder %s91, %s105
      %p107 = scmp.eq.s32.totalorder %s39, 0
      %p108 = por %p106, %p107
      %s110 = sadd.s32 %s109, 1
      %p113 = scmp.eq.s32.totalorder %s33, 1
      %p114 = scmp.ne.s32.totalorder %s109, %s111
      %p115 = scmp.eq.s32.totalorder %s33, 0
      %p116 = por %p114, %p115
      %p117 = scmp.ne.s32.totalorder %s109, %s111
      %p118 = scmp.eq.s32.totalorder %s38, 1
      %p119 = por %p117, %p118
      %p120 = scmp.ne.s32.totalorder %s111, %s112
      %p121 = scmp.eq.s32.totalorder %s38, 0
      %p122 = por %p120, %p121
      %p123 = scmp.ne.s32.totalorder %s111, %s112
      %p124 = scmp.eq.s32.totalorder %s39, 1
      %p125 = por %p123, %p124
      %p127 = scmp.ne.s32.totalorder %s112, %s126
      %p128 = scmp.eq.s32.totalorder %s39, 0
      %p129 = por %p127, %p128
      %s131 = sadd.s32 %s130, 1
      %p134 = scmp.eq.s32.totalorder %s33, 1
      %p135 = scmp.ne.s32.totalorder %s130, %s132
      %p136 = scmp.eq.s32.totalorder %s33, 0
      %p137 = por %p135, %p136
      %p138 = scmp.ne.s32.totalorder %s130, %s132
      %p139 = scmp.eq.s32.totalorder %s38, 1
      %p140 = por %p138, %p139
      %p141 = scmp.ne.s32.totalorder %s132, %s133
      %p142 = scmp.eq.s32.totalorder %s38, 0
      %p143 = por %p141, %p142
      %p144 = scmp.ne.s32.totalorder %s132, %s133
      %p145 = scmp.eq.s32.totalorder %s39, 1
      %p146 = por %p144, %p145
      %p148 = scmp.ne.s32.totalorder %s133, %s147
      %p149 = scmp.eq.s32.totalorder %s39, 0
      %p150 = por %p148, %p149
      %s152 = sadd.s32 %s151, 1
      %p155 = scmp.eq.s32.totalorder %s33, 1
      %p156 = scmp.ne.s32.totalorder %s151, %s153
      %p157 = scmp.eq.s32.totalorder %s33, 0
      %p158 = por %p156, %p157
      %p159 = scmp.ne.s32.totalorder %s151, %s153
      %p160 = scmp.eq.s32.totalorder %s38, 1
      %p161 = por %p159, %p160
      %p162 = scmp.ne.s32.totalorder %s153, %s154
      %p163 = scmp.eq.s32.totalorder %s38, 0
      %p164 = por %p162, %p163
      %p165 = scmp.ne.s32.totalorder %s153, %s154
      %p166 = scmp.eq.s32.totalorder %s39, 1
      %p167 = por %p165, %p166
      %p169 = scmp.ne.s32.totalorder %s154, %s168
      %p170 = scmp.eq.s32.totalorder %s39, 0
      %p171 = por %p169, %p170
      %s173 = sadd.s32 %s172, 1
      %p176 = scmp.eq.s32.totalorder %s33, 1
      %p177 = scmp.ne.s32.totalorder %s172, %s174
      %p178 = scmp.eq.s32.totalorder %s33, 0
      %p179 = por %p177, %p178
      %p180 = scmp.ne.s32.totalorder %s172, %s174
      %p181 = scmp.eq.s32.totalorder %s38, 1
      %p182 = por %p180, %p181
      %p183 = scmp.ne.s32.totalorder %s174, %s175
      %p184 = scmp.eq.s32.totalorder %s38, 0
      %p185 = por %p183, %p184
      %p186 = scmp.ne.s32.totalorder %s174, %s175
      %p187 = scmp.eq.s32.totalorder %s39, 1
      %p188 = por %p186, %p187
      %p190 = scmp.ne.s32.totalorder %s175, %s189
      %p191 = scmp.eq.s32.totalorder %s39, 0
      %p192 = por %p190, %p191
      %s194 = sadd.s32 %s193, 1
      %p197 = scmp.eq.s32.totalorder %s33, 1
      %p198 = scmp.ne.s32.totalorder %s193, %s195
      %p199 = scmp.eq.s32.totalorder %s33, 0
      %p200 = por %p198, %p199
      %p201 = scmp.ne.s32.totalorder %s193, %s195
      %p202 = scmp.eq.s32.totalorder %s38, 1
      %p203 = por %p201, %p202
      %p204 = scmp.ne.s32.totalorder %s195, %s196
      %p205 = scmp.eq.s32.totalorder %s38, 0
      %p206 = por %p204, %p205
      %p207 = scmp.ne.s32.totalorder %s195, %s196
      %p208 = scmp.eq.s32.totalorder %s39, 1
      %p209 = por %p207, %p208
      %p211 = scmp.ne.s32.totalorder %s196, %s210
      %p212 = scmp.eq.s32.totalorder %s39, 0
      %p213 = por %p211, %p212
      %s215 = sadd.s32 %s214, 1
      %p218 = scmp.eq.s32.totalorder %s33, 1
      %p219 = scmp.ne.s32.totalorder %s214, %s216
      %p220 = scmp.eq.s32.totalorder %s33, 0
      %p221 = por %p219, %p220
      %p222 = scmp.ne.s32.totalorder %s214, %s216
      %p223 = scmp.eq.s32.totalorder %s38, 1
      %p224 = por %p222, %p223
      %p225 = scmp.ne.s32.totalorder %s216, %s217
      %p226 = scmp.eq.s32.totalorder %s38, 0
      %p227 = por %p225, %p226
      %p228 = scmp.ne.s32.totalorder %s216, %s217
      %p229 = scmp.eq.s32.totalorder %s39, 1
      %p230 = por %p228, %p229
      %p232 = scmp.ne.s32.totalorder %s217, %s231
      %p233 = scmp.eq.s32.totalorder %s39, 0
      %p234 = por %p232, %p233
      %s236 = sadd.s32 %s235, 1
      %p239 = scmp.eq.s32.totalorder %s33, 1
      %p240 = scmp.ne.s32.totalorder %s235, %s237
      %p241 = scmp.eq.s32.totalorder %s33, 0
      %p242 = por %p240, %p241
      %p243 = scmp.ne.s32.totalorder %s235, %s237
      %p244 = scmp.eq.s32.totalorder %s38, 1
      %p245 = por %p243, %p244
      %p246 = scmp.ne.s32.totalorder %s237, %s238
      %p247 = scmp.eq.s32.totalorder %s38, 0
      %p248 = por %p246, %p247
      %p249 = scmp.ne.s32.totalorder %s237, %s238
      %p250 = scmp.eq.s32.totalorder %s39, 1
      %p251 = por %p249, %p250
      %p253 = scmp.ne.s32.totalorder %s238, %s252
      %p254 = scmp.eq.s32.totalorder %s39, 0
      %p255 = por %p253, %p254
      %s257 = sadd.s32 %s256, 1
      %p260 = scmp.eq.s32.totalorder %s33, 1
      %p261 = scmp.ne.s32.totalorder %s256, %s258
      %p262 = scmp.eq.s32.totalorder %s33, 0
      %p263 = por %p261, %p262
      %p264 = scmp.ne.s32.totalorder %s256, %s258
      %p265 = scmp.eq.s32.totalorder %s38, 1
      %p266 = por %p264, %p265
      %p267 = scmp.ne.s32.totalorder %s258, %s259
      %p268 = scmp.eq.s32.totalorder %s38, 0
      %p269 = por %p267, %p268
      %p270 = scmp.ne.s32.totalorder %s258, %s259
      %p271 = scmp.eq.s32.totalorder %s39, 1
      %p272 = por %p270, %p271
      %p274 = scmp.ne.s32.totalorder %s259, %s273
      %p275 = scmp.eq.s32.totalorder %s39, 0
      %p276 = por %p274, %p275
      %s278 = sadd.s32 %s277, 1
      %p281 = scmp.eq.s32.totalorder %s33, 1
      %p282 = scmp.ne.s32.totalorder %s277, %s279
      %p283 = scmp.eq.s32.totalorder %s33, 0
      %p284 = por %p282, %p283
      %p285 = scmp.ne.s32.totalorder %s277, %s279
      %p286 = scmp.eq.s32.totalorder %s38, 1
      %p287 = por %p285, %p286
      %p288 = scmp.ne.s32.totalorder %s279, %s280
      %p289 = scmp.eq.s32.totalorder %s38, 0
      %p290 = por %p288, %p289
      %p291 = scmp.ne.s32.totalorder %s279, %s280
      %p292 = scmp.eq.s32.totalorder %s39, 1
      %p293 = por %p291, %p292
      %p295 = scmp.ne.s32.totalorder %s280, %s294
      %p296 = scmp.eq.s32.totalorder %s39, 0
      %p297 = por %p295, %p296
      %s299 = sadd.s32 %s298, 1
      %p302 = scmp.eq.s32.totalorder %s33, 1
      %p303 = scmp.ne.s32.totalorder %s298, %s300
      %p304 = scmp.eq.s32.totalorder %s33, 0
      %p305 = por %p303, %p304
      %p306 = scmp.ne.s32.totalorder %s298, %s300
      %p307 = scmp.eq.s32.totalorder %s38, 1
      %p308 = por %p306, %p307
      %p309 = scmp.ne.s32.totalorder %s300, %s301
      %p310 = scmp.eq.s32.totalorder %s38, 0
      %p311 = por %p309, %p310
      %p312 = scmp.ne.s32.totalorder %s300, %s301
      %p313 = scmp.eq.s32.totalorder %s39, 1
      %p314 = por %p312, %p313
      %p316 = scmp.ne.s32.totalorder %s301, %s315
      %p317 = scmp.eq.s32.totalorder %s39, 0
      %p318 = por %p316, %p317
      %s320 = sadd.s32 %s319, 1
      %p323 = scmp.eq.s32.totalorder %s33, 1
      %p324 = scmp.ne.s32.totalorder %s319, %s321
      %p325 = scmp.eq.s32.totalorder %s33, 0
      %p326 = por %p324, %p325
      %p327 = scmp.ne.s32.totalorder %s319, %s321
      %p328 = scmp.eq.s32.totalorder %s38, 1
      %p329 = por %p327, %p328
      %p330 = scmp.ne.s32.totalorder %s321, %s322
      %p331 = scmp.eq.s32.totalorder %s38, 0
      %p332 = por %p330, %p331
      %p333 = scmp.ne.s32.totalorder %s321, %s322
      %p334 = scmp.eq.s32.totalorder %s39, 1
      %p335 = por %p333, %p334
      %p337 = scmp.ne.s32.totalorder %s322, %s336
      %p338 = scmp.eq.s32.totalorder %s39, 0
      %p339 = por %p337, %p338
      %s341 = sadd.s32 %s340, 1
      %p344 = scmp.eq.s32.totalorder %s33, 1
      %p345 = scmp.ne.s32.totalorder %s340, %s342
      %p346 = scmp.eq.s32.totalorder %s33, 0
      %p347 = por %p345, %p346
      %p348 = scmp.ne.s32.totalorder %s340, %s342
      %p349 = scmp.eq.s32.totalorder %s38, 1
      %p350 = por %p348, %p349
      %p351 = scmp.ne.s32.totalorder %s342, %s343
      %p352 = scmp.eq.s32.totalorder %s38, 0
      %p353 = por %p351, %p352
      %p354 = scmp.ne.s32.totalorder %s342, %s343
      %p355 = scmp.eq.s32.totalorder %s39, 1
      %p356 = por %p354, %p355
      %p358 = scmp.ne.s32.totalorder %s343, %s357
      %p359 = scmp.eq.s32.totalorder %s39, 0
      %p360 = por %p358, %p359
      %s362 = sadd.s32 %s361, 1
      %p365 = scmp.eq.s32.totalorder %s33, 1
      %p366 = scmp.ne.s32.totalorder %s361, %s363
      %p367 = scmp.eq.s32.totalorder %s33, 0
      %p368 = por %p366, %p367
      %p369 = scmp.ne.s32.totalorder %s361, %s363
      %p370 = scmp.eq.s32.totalorder %s38, 1
      %p371 = por %p369, %p370
      %p372 = scmp.ne.s32.totalorder %s363, %s364
      %p373 = scmp.eq.s32.totalorder %s38, 0
      %p374 = por %p372, %p373
      %p375 = scmp.ne.s32.totalorder %s363, %s364
      %p376 = scmp.eq.s32.totalorder %s39, 1
      %p377 = por %p375, %p376
      %p379 = scmp.ne.s32.totalorder %s364, %s378
      %p380 = scmp.eq.s32.totalorder %s39, 0
      %p381 = por %p379, %p380
      %s383 = sadd.s32 %s382, 1
      %p386 = scmp.eq.s32.totalorder %s33, 1
      %p387 = scmp.ne.s32.totalorder %s382, %s384
      %p388 = scmp.eq.s32.totalorder %s33, 0
      %p389 = por %p387, %p388
      %p390 = scmp.ne.s32.totalorder %s382, %s384
      %p391 = scmp.eq.s32.totalorder %s38, 1
      %p392 = por %p390, %p391
      %p393 = scmp.ne.s32.totalorder %s384, %s385
      %p394 = scmp.eq.s32.totalorder %s38, 0
      %p395 = por %p393, %p394
      %p396 = scmp.ne.s32.totalorder %s384, %s385
      %p397 = scmp.eq.s32.totalorder %s39, 1
      %p398 = por %p396, %p397
      %p400 = scmp.ne.s32.totalorder %s385, %s399
      %p401 = scmp.eq.s32.totalorder %s39, 0
      %p402 = por %p400, %p401
      %s404 = sadd.s32 %s403, 1
      %p407 = scmp.eq.s32.totalorder %s33, 1
      %p408 = scmp.ne.s32.totalorder %s403, %s405
      %p409 = scmp.eq.s32.totalorder %s33, 0
      %p410 = por %p408, %p409
      %p411 = scmp.ne.s32.totalorder %s403, %s405
      %p412 = scmp.eq.s32.totalorder %s38, 1
      %p413 = por %p411, %p412
      %p414 = scmp.ne.s32.totalorder %s405, %s406
      %p415 = scmp.eq.s32.totalorder %s38, 0
      %p416 = por %p414, %p415
      %p417 = scmp.ne.s32.totalorder %s405, %s406
      %p418 = scmp.eq.s32.totalorder %s39, 1
      %p419 = por %p417, %p418
      %p421 = scmp.ne.s32.totalorder %s406, %s420
      %p422 = scmp.eq.s32.totalorder %s39, 0
      %p423 = por %p421, %p422
      %s425 = sadd.s32 %s424, 1
      %p428 = scmp.eq.s32.totalorder %s33, 1
      %p429 = scmp.ne.s32.totalorder %s424, %s426
      %p430 = scmp.eq.s32.totalorder %s33, 0
      %p431 = por %p429, %p430
      %p432 = scmp.ne.s32.totalorder %s424, %s426
      %p433 = scmp.eq.s32.totalorder %s38, 1
      %p434 = por %p432, %p433
      %p435 = scmp.ne.s32.totalorder %s426, %s427
      %p436 = scmp.eq.s32.totalorder %s38, 0
      %p437 = por %p435, %p436
      %p438 = scmp.ne.s32.totalorder %s426, %s427
      %p439 = scmp.eq.s32.totalorder %s39, 1
      %p440 = por %p438, %p439
      %p442 = scmp.ne.s32.totalorder %s427, %s441
      %p443 = scmp.eq.s32.totalorder %s39, 0
      %p444 = por %p442, %p443
      %s446 = sadd.s32 %s445, 1
      %p449 = scmp.eq.s32.totalorder %s33, 1
      %p450 = scmp.ne.s32.totalorder %s445, %s447
      %p451 = scmp.eq.s32.totalorder %s33, 0
      %p452 = por %p450, %p451
      %p453 = scmp.ne.s32.totalorder %s445, %s447
      %p454 = scmp.eq.s32.totalorder %s38, 1
      %p455 = por %p453, %p454
      %p456 = scmp.ne.s32.totalorder %s447, %s448
      %p457 = scmp.eq.s32.totalorder %s38, 0
      %p458 = por %p456, %p457
      %p459 = scmp.ne.s32.totalorder %s447, %s448
      %p460 = scmp.eq.s32.totalorder %s39, 1
      %p461 = por %p459, %p460
      %p463 = scmp.ne.s32.totalorder %s448, %s462
      %p464 = scmp.eq.s32.totalorder %s39, 0
      %p465 = por %p463, %p464
      %s467 = sadd.s32 %s466, 1
      %p470 = scmp.eq.s32.totalorder %s33, 1
      %p471 = scmp.ne.s32.totalorder %s466, %s468
      %p472 = scmp.eq.s32.totalorder %s33, 0
      %p473 = por %p471, %p472
      %p474 = scmp.ne.s32.totalorder %s466, %s468
      %p475 = scmp.eq.s32.totalorder %s38, 1
      %p476 = por %p474, %p475
      %p477 = scmp.ne.s32.totalorder %s468, %s469
      %p478 = scmp.eq.s32.totalorder %s38, 0
      %p479 = por %p477, %p478
      %p480 = scmp.ne.s32.totalorder %s468, %s469
      %p481 = scmp.eq.s32.totalorder %s39, 1
      %p482 = por %p480, %p481
      %p484 = scmp.ne.s32.totalorder %s469, %s483
      %p485 = scmp.eq.s32.totalorder %s39, 0
      %p486 = por %p484, %p485
      %s488 = sadd.s32 %s487, 1
      %p491 = scmp.eq.s32.totalorder %s33, 1
      %p492 = scmp.ne.s32.totalorder %s487, %s489
      %p493 = scmp.eq.s32.totalorder %s33, 0
      %p494 = por %p492, %p493
      %p495 = scmp.ne.s32.totalorder %s487, %s489
      %p496 = scmp.eq.s32.totalorder %s38, 1
      %p497 = por %p495, %p496
      %p498 = scmp.ne.s32.totalorder %s489, %s490
      %p499 = scmp.eq.s32.totalorder %s38, 0
      %p500 = por %p498, %p499
      %p501 = scmp.ne.s32.totalorder %s489, %s490
      %p502 = scmp.eq.s32.totalorder %s39, 1
      %p503 = por %p501, %p502
      %p505 = scmp.ne.s32.totalorder %s490, %s504
      %p506 = scmp.eq.s32.totalorder %s39, 0
      %p507 = por %p505, %p506
      %s509 = sadd.s32 %s508, 1
      %p512 = scmp.eq.s32.totalorder %s33, 1
      %p513 = scmp.ne.s32.totalorder %s508, %s510
      %p514 = scmp.eq.s32.totalorder %s33, 0
      %p515 = por %p513, %p514
      %p516 = scmp.ne.s32.totalorder %s508, %s510
      %p517 = scmp.eq.s32.totalorder %s38, 1
      %p518 = por %p516, %p517
      %p519 = scmp.ne.s32.totalorder %s510, %s511
      %p520 = scmp.eq.s32.totalorder %s38, 0
      %p521 = por %p519, %p520
      %p522 = scmp.ne.s32.totalorder %s510, %s511
      %p523 = scmp.eq.s32.totalorder %s39, 1
      %p524 = por %p522, %p523
      %p526 = scmp.ne.s32.totalorder %s511, %s525
      %p527 = scmp.eq.s32.totalorder %s39, 0
      %p528 = por %p526, %p527
      %s530 = sadd.s32 %s529, 1
      %p533 = scmp.eq.s32.totalorder %s33, 1
      %p534 = scmp.ne.s32.totalorder %s529, %s531
      %p535 = scmp.eq.s32.totalorder %s33, 0
      %p536 = por %p534, %p535
      %p537 = scmp.ne.s32.totalorder %s529, %s531
      %p538 = scmp.eq.s32.totalorder %s38, 1
      %p539 = por %p537, %p538
      %p540 = scmp.ne.s32.totalorder %s531, %s532
      %p541 = scmp.eq.s32.totalorder %s38, 0
      %p542 = por %p540, %p541
      %p543 = scmp.ne.s32.totalorder %s531, %s532
      %p544 = scmp.eq.s32.totalorder %s39, 1
      %p545 = por %p543, %p544
      %p547 = scmp.ne.s32.totalorder %s532, %s546
      %p548 = scmp.eq.s32.totalorder %s39, 0
      %p549 = por %p547, %p548
      %s550 = ssub.s32 %s33, %s40
      %p551 = scmp.eq.s32.totalorder %s550, 0
      %s553 = sadd.s32 %s552, 1
      %s554 = scalar_select %p551, %s552, %s553
      %p557 = pneg %p551
      %p558 = scmp.eq.s32.totalorder %s33, 1
      %p559 = por %p557, %p558
      %p560 = scmp.ne.s32.totalorder %s552, %s555
      %p561 = scmp.eq.s32.totalorder %s33, 0
      %p562 = por %p560, %p561
      %p563 = scmp.ne.s32.totalorder %s552, %s555
      %p564 = scmp.eq.s32.totalorder %s38, 1
      %p565 = por %p563, %p564
      %p566 = scmp.ne.s32.totalorder %s555, %s556
      %p567 = scmp.eq.s32.totalorder %s38, 0
      %p568 = por %p566, %p567
      %p569 = scmp.ne.s32.totalorder %s555, %s556
      %p570 = scmp.eq.s32.totalorder %s39, 1
      %p571 = por %p569, %p570
      %p573 = scmp.ne.s32.totalorder %s556, %s572
      %p574 = scmp.eq.s32.totalorder %s39, 0
      %p575 = por %p573, %p574
      %p576 = scmp.le.s32.totalorder 1, %s33
      %p577 = scmp.lt.s32.totalorder %s33, 3
      %p578 = pnand %p576, %p577
      %p579 = pneg %p578
      // Predicated region
      $region9: #{deit_forward.1} parent=5 // pred_check
        _
      $region10: #{deit_forward.1} parent=5 // pred_check_branch
        %581 = sbr.rel (%p578) target = $region12
      $region11: #{deit_forward.1} parent=5 // pred_region
        %s582 = ssub.s32 %s33, 1
        // Predicated region
        $region13: #{deit_forward.1} parent=11 // pred_check
          %p583 = pneg %p80
        $region14: #{deit_forward.1} parent=11 // pred_check_branch
          %585 = sbr.rel (%p583) target = $region16
        $region15: #{deit_forward.1} parent=11 // pred_region
          _
        $region16: #{deit_forward.1} parent=11 // pred_fallthru
          _
        // Predicated region
        $region17: #{deit_forward.1} parent=11 // pred_check
          %p586 = pneg %p101
        $region18: #{deit_forward.1} parent=11 // pred_check_branch
          %588 = sbr.rel (%p586) target = $region20
        $region19: #{deit_forward.1} parent=11 // pred_region
          _
        $region20: #{deit_forward.1} parent=11 // pred_fallthru
          _
        // Predicated region
        $region21: #{deit_forward.1} parent=11 // pred_check
          %p589 = pneg %p122
        $region22: #{deit_forward.1} parent=11 // pred_check_branch
          %591 = sbr.rel (%p589) target = $region24
        $region23: #{deit_forward.1} parent=11 // pred_region
          _
        $region24: #{deit_forward.1} parent=11 // pred_fallthru
          _
        // Predicated region
        $region25: #{deit_forward.1} parent=11 // pred_check
          %p592 = pneg %p143
        $region26: #{deit_forward.1} parent=11 // pred_check_branch
          %594 = sbr.rel (%p592) target = $region28
        $region27: #{deit_forward.1} parent=11 // pred_region
          _
        $region28: #{deit_forward.1} parent=11 // pred_fallthru
          _
        // Predicated region
        $region29: #{deit_forward.1} parent=11 // pred_check
          %p595 = pneg %p164
        $region30: #{deit_forward.1} parent=11 // pred_check_branch
          %597 = sbr.rel (%p595) target = $region32
        $region31: #{deit_forward.1} parent=11 // pred_region
          _
        $region32: #{deit_forward.1} parent=11 // pred_fallthru
          _
        // Predicated region
        $region33: #{deit_forward.1} parent=11 // pred_check
          %p598 = pneg %p185
        $region34: #{deit_forward.1} parent=11 // pred_check_branch
          %600 = sbr.rel (%p598) target = $region36
        $region35: #{deit_forward.1} parent=11 // pred_region
          _
        $region36: #{deit_forward.1} parent=11 // pred_fallthru
          _
        // Predicated region
        $region37: #{deit_forward.1} parent=11 // pred_check
          %p601 = pneg %p206
        $region38: #{deit_forward.1} parent=11 // pred_check_branch
          %603 = sbr.rel (%p601) target = $region40
        $region39: #{deit_forward.1} parent=11 // pred_region
          _
        $region40: #{deit_forward.1} parent=11 // pred_fallthru
          _
        // Predicated region
        $region41: #{deit_forward.1} parent=11 // pred_check
          %p604 = pneg %p227
        $region42: #{deit_forward.1} parent=11 // pred_check_branch
          %606 = sbr.rel (%p604) target = $region44
        $region43: #{deit_forward.1} parent=11 // pred_region
          _
        $region44: #{deit_forward.1} parent=11 // pred_fallthru
          _
        // Predicated region
        $region45: #{deit_forward.1} parent=11 // pred_check
          %p607 = pneg %p248
        $region46: #{deit_forward.1} parent=11 // pred_check_branch
          %609 = sbr.rel (%p607) target = $region48
        $region47: #{deit_forward.1} parent=11 // pred_region
          _
        $region48: #{deit_forward.1} parent=11 // pred_fallthru
          _
        // Predicated region
        $region49: #{deit_forward.1} parent=11 // pred_check
          %p610 = pneg %p269
        $region50: #{deit_forward.1} parent=11 // pred_check_branch
          %612 = sbr.rel (%p610) target = $region52
        $region51: #{deit_forward.1} parent=11 // pred_region
          _
        $region52: #{deit_forward.1} parent=11 // pred_fallthru
          _
        // Predicated region
        $region53: #{deit_forward.1} parent=11 // pred_check
          %p613 = pneg %p290
        $region54: #{deit_forward.1} parent=11 // pred_check_branch
          %615 = sbr.rel (%p613) target = $region56
        $region55: #{deit_forward.1} parent=11 // pred_region
          _
        $region56: #{deit_forward.1} parent=11 // pred_fallthru
          _
        // Predicated region
        $region57: #{deit_forward.1} parent=11 // pred_check
          %p616 = pneg %p311
        $region58: #{deit_forward.1} parent=11 // pred_check_branch
          %618 = sbr.rel (%p616) target = $region60
        $region59: #{deit_forward.1} parent=11 // pred_region
          _
        $region60: #{deit_forward.1} parent=11 // pred_fallthru
          _
        // Predicated region
        $region61: #{deit_forward.1} parent=11 // pred_check
          %p619 = pneg %p332
        $region62: #{deit_forward.1} parent=11 // pred_check_branch
          %621 = sbr.rel (%p619) target = $region64
        $region63: #{deit_forward.1} parent=11 // pred_region
          _
        $region64: #{deit_forward.1} parent=11 // pred_fallthru
          _
        // Predicated region
        $region65: #{deit_forward.1} parent=11 // pred_check
          %p622 = pneg %p353
        $region66: #{deit_forward.1} parent=11 // pred_check_branch
          %624 = sbr.rel (%p622) target = $region68
        $region67: #{deit_forward.1} parent=11 // pred_region
          _
        $region68: #{deit_forward.1} parent=11 // pred_fallthru
          _
        // Predicated region
        $region69: #{deit_forward.1} parent=11 // pred_check
          %p625 = pneg %p374
        $region70: #{deit_forward.1} parent=11 // pred_check_branch
          %627 = sbr.rel (%p625) target = $region72
        $region71: #{deit_forward.1} parent=11 // pred_region
          _
        $region72: #{deit_forward.1} parent=11 // pred_fallthru
          _
        // Predicated region
        $region73: #{deit_forward.1} parent=11 // pred_check
          %p628 = pneg %p395
        $region74: #{deit_forward.1} parent=11 // pred_check_branch
          %630 = sbr.rel (%p628) target = $region76
        $region75: #{deit_forward.1} parent=11 // pred_region
          _
        $region76: #{deit_forward.1} parent=11 // pred_fallthru
          _
        // Predicated region
        $region77: #{deit_forward.1} parent=11 // pred_check
          %p631 = pneg %p416
        $region78: #{deit_forward.1} parent=11 // pred_check_branch
          %633 = sbr.rel (%p631) target = $region80
        $region79: #{deit_forward.1} parent=11 // pred_region
          _
        $region80: #{deit_forward.1} parent=11 // pred_fallthru
          _
        // Predicated region
        $region81: #{deit_forward.1} parent=11 // pred_check
          %p634 = pneg %p437
        $region82: #{deit_forward.1} parent=11 // pred_check_branch
          %636 = sbr.rel (%p634) target = $region84
        $region83: #{deit_forward.1} parent=11 // pred_region
          _
        $region84: #{deit_forward.1} parent=11 // pred_fallthru
          _
        // Predicated region
        $region85: #{deit_forward.1} parent=11 // pred_check
          %p637 = pneg %p458
        $region86: #{deit_forward.1} parent=11 // pred_check_branch
          %639 = sbr.rel (%p637) target = $region88
        $region87: #{deit_forward.1} parent=11 // pred_region
          _
        $region88: #{deit_forward.1} parent=11 // pred_fallthru
          _
        // Predicated region
        $region89: #{deit_forward.1} parent=11 // pred_check
          %p640 = pneg %p479
        $region90: #{deit_forward.1} parent=11 // pred_check_branch
          %642 = sbr.rel (%p640) target = $region92
        $region91: #{deit_forward.1} parent=11 // pred_region
          _
        $region92: #{deit_forward.1} parent=11 // pred_fallthru
          _
        // Predicated region
        $region93: #{deit_forward.1} parent=11 // pred_check
          %p643 = pneg %p500
        $region94: #{deit_forward.1} parent=11 // pred_check_branch
          %645 = sbr.rel (%p643) target = $region96
        $region95: #{deit_forward.1} parent=11 // pred_region
          _
        $region96: #{deit_forward.1} parent=11 // pred_fallthru
          _
        // Predicated region
        $region97: #{deit_forward.1} parent=11 // pred_check
          %p646 = pneg %p521
        $region98: #{deit_forward.1} parent=11 // pred_check_branch
          %648 = sbr.rel (%p646) target = $region100
        $region99: #{deit_forward.1} parent=11 // pred_region
          _
        $region100: #{deit_forward.1} parent=11 // pred_fallthru
          _
        // Predicated region
        $region101: #{deit_forward.1} parent=11 // pred_check
          %p649 = pneg %p542
        $region102: #{deit_forward.1} parent=11 // pred_check_branch
          %651 = sbr.rel (%p649) target = $region104
        $region103: #{deit_forward.1} parent=11 // pred_region
          _
        $region104: #{deit_forward.1} parent=11 // pred_fallthru
          _
      $region12: #{deit_forward.1} parent=5 // pred_fallthru
        _
      %p652 = scmp.lt.s32.totalorder %s33, 2
      // Predicated region
      $region105: #{deit_forward.1} parent=5 // pred_check
        %p653 = pneg %p652
      $region106: #{deit_forward.1} parent=5 // pred_check_branch
        %655 = sbr.rel (%p653) target = $region108
      $region107: #{deit_forward.1} parent=5 // pred_region
        // Predicated region
        $region109: #{deit_forward.1} parent=107 // pred_check
          %p656 = pneg %p53
        $region110: #{deit_forward.1} parent=107 // pred_check_branch
          %658 = sbr.rel (%p656) target = $region112
        $region111: #{deit_forward.1} parent=107 // pred_region
          %p659 = scmp.lt.s32.totalorder %s33, 1
          %s660 = scalar_select %p659, %s33, 1
          %s661 = smul.addr %s660, 2
          %s662 = smul.addr %s661, 4
          %s663 = scalar_lea.vmem %s0, %s662
        $region112: #{deit_forward.1} parent=107 // pred_fallthru
          _
      $region108: #{deit_forward.1} parent=5 // pred_fallthru
        _
      %p664 = scmp.le.s32.totalorder 1, %s33
      %p665 = scmp.lt.s32.totalorder %s33, 3
      %p666 = pnand %p664, %p665
      %p667 = pneg %p666
      // Predicated region
      $region113: #{deit_forward.1} parent=5 // pred_check
        _
      $region114: #{deit_forward.1} parent=5 // pred_check_branch
        %669 = sbr.rel (%p666) target = $region116
      $region115: #{deit_forward.1} parent=5 // pred_region
        %s670 = ssub.s32 %s33, 1
        %p671 = scmp.lt.s32.totalorder %s38, 1
        %s672 = scalar_select %p671, %s38, 1
        %s673 = smul.addr %s672, 2
        %s674 = smul.addr %s673, 4
        %s675 = scalar_lea.vmem %s0, %s674
        %p676 = pneg %p59
        %p677 = pneg %p56
        %p678 = pneg %p80
        %p679 = pneg %p77
        %p680 = pneg %p101
        %p681 = pneg %p98
        %p682 = pneg %p122
        %p683 = pneg %p119
        %p684 = pneg %p143
        %p685 = pneg %p140
        %p686 = pneg %p164
        %p687 = pneg %p161
        %p688 = pneg %p185
        %p689 = pneg %p182
        %p690 = pneg %p206
        %p691 = pneg %p203
        %p692 = pneg %p227
        %p693 = pneg %p224
        %p694 = pneg %p248
        %p695 = pneg %p245
        %p696 = pneg %p269
        %p697 = pneg %p266
        %p698 = pneg %p290
        %p699 = pneg %p287
        %p700 = pneg %p311
        %p701 = pneg %p308
        %p702 = pneg %p332
        %p703 = pneg %p329
        %p704 = pneg %p353
        %p705 = pneg %p350
        %p706 = pneg %p374
        %p707 = pneg %p371
        %p708 = pneg %p395
        %p709 = pneg %p392
        %p710 = pneg %p416
        %p711 = pneg %p413
        %p712 = pneg %p437
        %p713 = pneg %p434
        %p714 = pneg %p458
        %p715 = pneg %p455
        %p716 = pneg %p479
        %p717 = pneg %p476
        %p718 = pneg %p500
        %p719 = pneg %p497
        %p720 = pneg %p521
        %p721 = pneg %p518
        %p722 = pneg %p542
        %p723 = pneg %p539
        %p724 = pneg %p568
        %p725 = pneg %p565
        %s726 = sand.u32 %s555, 1
        %s727 = scalar_lea.sflag [#allocation4], %s726
        %s728 = sand.u32 %s555, 1
        %s729 = scalar_lea.vmem [#allocation3], %s728
        %p730 = scmp.lt.s32.totalorder %s38, 1
        %s731 = scalar_select %p730, %s38, 1
        %s732 = smul.addr %s731, 2
        %s733 = smul.addr %s732, 4
        %s734 = scalar_lea.vmem %s0, %s733
        %v735 = vld [vmem:[%s734] sm:$0xff]
        %v736 = vld [vmem:[%s1] sm:$0xff]
        %v737 = vld [vmem:[%s1 + $0x8] sm:$0xff]
        %v738 = vld [vmem:[%s1 + $0x10] sm:$0xff]
        %v739 = vld [vmem:[%s1 + $0x18] sm:$0xff]
        %v740 = vld [vmem:[%s1 + $0x20] sm:$0xff]
        %v741 = vld [vmem:[%s1 + $0x28] sm:$0xff]
        %v742 = vld [vmem:[%s1 + $0x30] sm:$0xff]
        %v743 = vld [vmem:[%s1 + $0x38] sm:$0xff]
        %v744 = vld [vmem:[%s1 + $0x40] sm:$0xff]
        %v745 = vld [vmem:[%s1 + $0x48] sm:$0xff]
        %v746 = vld [vmem:[%s1 + $0x50] sm:$0xff]
        %v747 = vld [vmem:[%s1 + $0x58] sm:$0xff]
        %v748 = vld [vmem:[%s1 + $0x60] sm:$0xff]
        %v749 = vld [vmem:[%s1 + $0x68] sm:$0xff]
        %v750 = vld [vmem:[%s1 + $0x70] sm:$0xff]
        %v751 = vld [vmem:[%s1 + $0x78] sm:$0xff]
        %v752 = vld [vmem:[%s1 + $0x80] sm:$0xff]
        %v753 = vld [vmem:[%s1 + $0x88] sm:$0xff]
        %v754 = vld [vmem:[%s1 + $0x90] sm:$0xff]
        %v755 = vld [vmem:[%s1 + $0x98] sm:$0xff]
        %v756 = vld [vmem:[%s1 + $0xa0] sm:$0xff]
        %v757 = vld [vmem:[%s1 + $0xa8] sm:$0xff]
        %v758 = vld [vmem:[%s1 + $0xb0] sm:$0xff]
        %v759 = vld [vmem:[%s1 + $0xb8] sm:$0xff]
        %v760 = vld [vmem:[%s2] sm:$0x1]
        %vm761 = vcmask 516096
        %762 = vst.msk [vmem:[#allocation2] sm:$0x1] %vm761, %v760
        %v763 = vld [vmem:[%s3] sm:$0xf]
        %v765 = vcombine.high %v735, %v735
        %vm766 = vcmask 523264
        %v767 = vsel %vm766, %v765, 0
        %769 = vmatprep.subr.mxu0 0.0
        %770 = vmatpush1.msra.mxu0 %v751
        %771 = vmatprep.subr.mxu0 0.0
        %772 = vmatpush1.msra.mxu0 %v750
        %773 = vmatprep.subr.mxu0 0.0
        %774 = vmatpush1.msra.mxu0 %v749
        %775 = vmatprep.subr.mxu0 0.0
        %776 = vmatpush1.msra.mxu0 %v748
        %777 = vmatprep.subr.mxu0 0.0
        %778 = vmatpush1.msra.mxu0 %v747
        %779 = vmatprep.subr.mxu0 0.0
        %780 = vmatpush1.msra.mxu0 %v746
        %781 = vmatprep.subr.mxu0 0.0
        %782 = vmatpush1.msra.mxu0 %v745
        %783 = vmatprep.subr.mxu0 0.0
        %784 = vmatpush1.msra.mxu0 %v744
        %785 = vmatprep.subr.mxu0 0.0
        %786 = vmatpush1.msra.mxu0 %v743
        %787 = vmatprep.subr.mxu0 0.0
        %788 = vmatpush1.msra.mxu0 %v742
        %789 = vmatprep.subr.mxu0 0.0
        %790 = vmatpush1.msra.mxu0 %v741
        %791 = vmatprep.subr.mxu0 0.0
        %792 = vmatpush1.msra.mxu0 %v740
        %793 = vmatprep.subr.mxu0 0.0
        %794 = vmatpush1.msra.mxu0 %v739
        %795 = vmatprep.subr.mxu0 0.0
        %796 = vmatpush1.msra.mxu0 %v738
        %797 = vmatprep.subr.mxu0 0.0
        %798 = vmatpush1.msra.mxu0 %v737
        %799 = vmatprep.subr.mxu0 0.0
        %800 = vmatpush1.msra.mxu0 %v736
        %801 = vmatprep.subr.mxu0 0.0
        %802 = vmatpush2.msra.mxu0 0.0
        %803 = vmatprep.subr.mxu0 0.0
        %804 = vmatpush2.msra.mxu0 0.0
        %805 = vmatprep.subr.mxu0 0.0
        %806 = vmatpush2.msra.mxu0 0.0
        %807 = vmatprep.subr.mxu0 0.0
        %808 = vmatpush2.msra.mxu0 0.0
        %809 = vmatprep.subr.mxu0 0.0
        %810 = vmatpush2.msra.mxu0 0.0
        %811 = vmatprep.subr.mxu0 0.0
        %812 = vmatpush2.msra.mxu0 0.0
        %813 = vmatprep.subr.mxu0 0.0
        %814 = vmatpush2.msra.mxu0 0.0
        %815 = vmatprep.subr.mxu0 0.0
        %816 = vmatpush2.msra.mxu0 0.0
        %817 = vmatprep.subr.mxu0 0.0
        %818 = vmatpush2.msra.mxu0 %v759
        %819 = vmatprep.subr.mxu0 0.0
        %820 = vmatpush2.msra.mxu0 %v758
        %821 = vmatprep.subr.mxu0 0.0
        %822 = vmatpush2.msra.mxu0 %v757
        %823 = vmatprep.subr.mxu0 0.0
        %824 = vmatpush2.msra.mxu0 %v756
        %825 = vmatprep.subr.mxu0 0.0
        %826 = vmatpush2.msra.mxu0 %v755
        %827 = vmatprep.subr.mxu0 0.0
        %828 = vmatpush2.msra.mxu0 %v754
        %829 = vmatprep.subr.mxu0 0.0
        %830 = vmatpush2.msra.mxu0 %v753
        %831 = vmatprep.subr.mxu0 0.0
        %832 = vmatpush2.msra.mxu0 %v752
        %833 = vmatprep.mubr.f32.mxu0 %v767
        %834 = vmatmul.mubr.f32.gmra.mxu0 %v735
        %v835 = vpop.f32.mrf.mxu0
        %v836 = vadd.f32 %v763, %v835
        %v837 = vpop.f32.mrf.mxu0
        %838 = vdwg.mxu0
        %vm839 = vcmask 519168
        %840 = vst.msk [vmem:[#allocation2 + $0x1] sm:$0xf] %vm839, %v836
        %v841 = vld [vmem:[#allocation2] sm:$0x1f]
        %v842 = vld [vmem:[%s12] sm:$0x1]
        %v843 = vld [vmem:[%s13] sm:$0x1]
        %vm844 = vcmask 520192
        %v845 = vsel %vm844, %v841, 0.0
        %846 = vadd.xlane.f32.xlu0 %v845
        %v847 = vpop.xlane.xlu0 %846
        %v848 = vrcp.pop 64.0
        %v849 = vmul.f32 %v847, %v848
        %v850 = vsub.f32 %v841, %v849
        %v851 = vmul.f32 %v850, %v850
        %v852 = vsel %vm844, %v851, 0.0
        %853 = vadd.xlane.f32.xlu0 %v852
        %v854 = vpop.xlane.xlu0 %853
        %v855 = vmul.f32 %v854, %v848
        %v856 = vadd.f32 %v855, 1e-06
        %v857 = vrsqrt.pop %v856
        %v858 = vmul.f32 %v850, %v857
        %v860 = vlaneseq
        %v861 = vshrl.u32 %v860, 7
        %v862 = vsub.s32 0, %v861
        %v863 = vrot.slane %v842, %v862
        %v865 = vmul.f32 %v858, %v863
        %v867 = vlaneseq
        %v868 = vshrl.u32 %v867, 7
        %v869 = vsub.s32 0, %v868
        %v870 = vrot.slane %v843, %v869
        %v872 = vadd.f32 %v865, %v870
        %v873 = vld [vmem:[%s11] sm:$0x1]
        %v875 = vlaneseq
        %v876 = vshrl.u32 %v875, 7
        %v877 = vsub.s32 0, %v876
        %v878 = vrot.slane %v873, %v877
        %v880 = vadd.f32 %v878, 0.0
        %v881 = vld [vmem:[%s4] sm:$0xff]
        %v882 = vld [vmem:[%s4 + $0x8] sm:$0xff]
        %v883 = vld [vmem:[%s4 + $0x10] sm:$0xff]
        %v884 = vld [vmem:[%s4 + $0x18] sm:$0xff]
        %v885 = vld [vmem:[%s4 + $0x20] sm:$0xff]
        %v886 = vld [vmem:[%s4 + $0x28] sm:$0xff]
        %v887 = vld [vmem:[%s4 + $0x30] sm:$0xff]
        %v888 = vld [vmem:[%s4 + $0x38] sm:$0xff]
        %v889 = vld [vmem:[%s5] sm:$0x1]
        %v891 = vlaneseq
        %v892 = vshrl.u32 %v891, 7
        %v893 = vsub.s32 0, %v892
        %v894 = vrot.slane %v889, %v893
        %v897 = vsel %vm766, %v872, 0
        %899 = vmatprep.subr.mxu0 0.0
        %900 = vmatpush1.msra.mxu0 0.0
        %901 = vmatprep.subr.mxu0 0.0
        %902 = vmatpush1.msra.mxu0 0.0
        %903 = vmatprep.subr.mxu0 0.0
        %904 = vmatpush1.msra.mxu0 0.0
        %905 = vmatprep.subr.mxu0 0.0
        %906 = vmatpush1.msra.mxu0 0.0
        %907 = vmatprep.subr.mxu0 0.0
        %908 = vmatpush1.msra.mxu0 0.0
        %909 = vmatprep.subr.mxu0 0.0
        %910 = vmatpush1.msra.mxu0 0.0
        %911 = vmatprep.subr.mxu0 0.0
        %912 = vmatpush1.msra.mxu0 0.0
        %913 = vmatprep.subr.mxu0 0.0
        %914 = vmatpush1.msra.mxu0 0.0
        %915 = vmatprep.subr.mxu0 0.0
        %916 = vmatpush1.msra.mxu0 %v888
        %917 = vmatprep.subr.mxu0 0.0
        %918 = vmatpush1.msra.mxu0 %v887
        %919 = vmatprep.subr.mxu0 0.0
        %920 = vmatpush1.msra.mxu0 %v886
        %921 = vmatprep.subr.mxu0 0.0
        %922 = vmatpush1.msra.mxu0 %v885
        %923 = vmatprep.subr.mxu0 0.0
        %924 = vmatpush1.msra.mxu0 %v884
        %925 = vmatprep.subr.mxu0 0.0
        %926 = vmatpush1.msra.mxu0 %v883
        %927 = vmatprep.subr.mxu0 0.0
        %928 = vmatpush1.msra.mxu0 %v882
        %929 = vmatprep.subr.mxu0 0.0
        %930 = vmatpush1.msra.mxu0 %v881
        %931 = vmatprep.subr.mxu0 0.0
        %932 = vmatpush2.msra.mxu0 0.0
        %933 = vmatprep.subr.mxu0 0.0
        %934 = vmatpush2.msra.mxu0 0.0
        %935 = vmatprep.subr.mxu0 0.0
        %936 = vmatpush2.msra.mxu0 0.0
        %937 = vmatprep.subr.mxu0 0.0
        %938 = vmatpush2.msra.mxu0 0.0
        %939 = vmatprep.subr.mxu0 0.0
        %940 = vmatpush2.msra.mxu0 0.0
        %941 = vmatprep.subr.mxu0 0.0
        %942 = vmatpush2.msra.mxu0 0.0
        %943 = vmatprep.subr.mxu0 0.0
        %944 = vmatpush2.msra.mxu0 0.0
        %945 = vmatprep.subr.mxu0 0.0
        %946 = vmatpush2.msra.mxu0 0.0
        %947 = vmatprep.subr.mxu0 0.0
        %948 = vmatpush2.msra.mxu0 0.0
        %949 = vmatprep.subr.mxu0 0.0
        %950 = vmatpush2.msra.mxu0 0.0
        %951 = vmatprep.subr.mxu0 0.0
        %952 = vmatpush2.msra.mxu0 0.0
        %953 = vmatprep.subr.mxu0 0.0
        %954 = vmatpush2.msra.mxu0 0.0
        %955 = vmatprep.subr.mxu0 0.0
        %956 = vmatpush2.msra.mxu0 0.0
        %957 = vmatprep.subr.mxu0 0.0
        %958 = vmatpush2.msra.mxu0 0.0
        %959 = vmatprep.subr.mxu0 0.0
        %960 = vmatpush2.msra.mxu0 0.0
        %961 = vmatprep.subr.mxu0 0.0
        %962 = vmatpush2.msra.mxu0 0.0
        %963 = vmatprep.mubr.f32.mxu0 0.0
        %964 = vmatmul.mubr.f32.gmra.mxu0 %v897
        %v965 = vpop.f32.mrf.mxu0
        %v966 = vadd.f32 %v894, %v965
        %v967 = vpop.f32.mrf.mxu0
        %968 = vdwg.mxu0
        %v969 = vld [vmem:[%s6] sm:$0xff]
        %v970 = vld [vmem:[%s6 + $0x8] sm:$0xff]
        %v971 = vld [vmem:[%s6 + $0x10] sm:$0xff]
        %v972 = vld [vmem:[%s6 + $0x18] sm:$0xff]
        %v973 = vld [vmem:[%s6 + $0x20] sm:$0xff]
        %v974 = vld [vmem:[%s6 + $0x28] sm:$0xff]
        %v975 = vld [vmem:[%s6 + $0x30] sm:$0xff]
        %v976 = vld [vmem:[%s6 + $0x38] sm:$0xff]
        %v977 = vld [vmem:[%s7] sm:$0x1]
        %v979 = vlaneseq
        %v980 = vshrl.u32 %v979, 7
        %v981 = vsub.s32 0, %v980
        %v982 = vrot.slane %v977, %v981
        %984 = vmatprep.subr.mxu0 0.0
        %985 = vmatpush1.msra.mxu0 0.0
        %986 = vmatprep.subr.mxu0 0.0
        %987 = vmatpush1.msra.mxu0 0.0
        %988 = vmatprep.subr.mxu0 0.0
        %989 = vmatpush1.msra.mxu0 0.0
        %990 = vmatprep.subr.mxu0 0.0
        %991 = vmatpush1.msra.mxu0 0.0
        %992 = vmatprep.subr.mxu0 0.0
        %993 = vmatpush1.msra.mxu0 0.0
        %994 = vmatprep.subr.mxu0 0.0
        %995 = vmatpush1.msra.mxu0 0.0
        %996 = vmatprep.subr.mxu0 0.0
        %997 = vmatpush1.msra.mxu0 0.0
        %998 = vmatprep.subr.mxu0 0.0
        %999 = vmatpush1.msra.mxu0 0.0
        %1000 = vmatprep.subr.mxu0 0.0
        %1001 = vmatpush1.msra.mxu0 %v976
        %1002 = vmatprep.subr.mxu0 0.0
        %1003 = vmatpush1.msra.mxu0 %v975
        %1004 = vmatprep.subr.mxu0 0.0
        %1005 = vmatpush1.msra.mxu0 %v974
        %1006 = vmatprep.subr.mxu0 0.0
        %1007 = vmatpush1.msra.mxu0 %v973
        %1008 = vmatprep.subr.mxu0 0.0
        %1009 = vmatpush1.msra.mxu0 %v972
        %1010 = vmatprep.subr.mxu0 0.0
        %1011 = vmatpush1.msra.mxu0 %v971
        %1012 = vmatprep.subr.mxu0 0.0
        %1013 = vmatpush1.msra.mxu0 %v970
        %1014 = vmatprep.subr.mxu0 0.0
        %1015 = vmatpush1.msra.mxu0 %v969
        %1016 = vmatprep.subr.mxu0 0.0
        %1017 = vmatpush2.msra.mxu0 0.0
        %1018 = vmatprep.subr.mxu0 0.0
        %1019 = vmatpush2.msra.mxu0 0.0
        %1020 = vmatprep.subr.mxu0 0.0
        %1021 = vmatpush2.msra.mxu0 0.0
        %1022 = vmatprep.subr.mxu0 0.0
        %1023 = vmatpush2.msra.mxu0 0.0
        %1024 = vmatprep.subr.mxu0 0.0
        %1025 = vmatpush2.msra.mxu0 0.0
        %1026 = vmatprep.subr.mxu0 0.0
        %1027 = vmatpush2.msra.mxu0 0.0
        %1028 = vmatprep.subr.mxu0 0.0
        %1029 = vmatpush2.msra.mxu0 0.0
        %1030 = vmatprep.subr.mxu0 0.0
        %1031 = vmatpush2.msra.mxu0 0.0
        %1032 = vmatprep.subr.mxu0 0.0
        %1033 = vmatpush2.msra.mxu0 0.0
        %1034 = vmatprep.subr.mxu0 0.0
        %1035 = vmatpush2.msra.mxu0 0.0
        %1036 = vmatprep.subr.mxu0 0.0
        %1037 = vmatpush2.msra.mxu0 0.0
        %1038 = vmatprep.subr.mxu0 0.0
        %1039 = vmatpush2.msra.mxu0 0.0
        %1040 = vmatprep.subr.mxu0 0.0
        %1041 = vmatpush2.msra.mxu0 0.0
        %1042 = vmatprep.subr.mxu0 0.0
        %1043 = vmatpush2.msra.mxu0 0.0
        %1044 = vmatprep.subr.mxu0 0.0
        %1045 = vmatpush2.msra.mxu0 0.0
        %1046 = vmatprep.subr.mxu0 0.0
        %1047 = vmatpush2.msra.mxu0 0.0
        %1048 = vmatprep.mubr.f32.mxu0 0.0
        %1049 = vmatmul.mubr.f32.gmra.mxu0 %v897
        %v1050 = vpop.f32.mrf.mxu0
        %v1051 = vadd.f32 %v982, %v1050
        %v1052 = vpop.f32.mrf.mxu0
        %1053 = vdwg.mxu0
        %v1054 = vld [vmem:[%s8] sm:$0xff]
        %v1055 = vld [vmem:[%s8 + $0x8] sm:$0xff]
        %v1056 = vld [vmem:[%s8 + $0x10] sm:$0xff]
        %v1057 = vld [vmem:[%s8 + $0x18] sm:$0xff]
        %v1058 = vld [vmem:[%s8 + $0x20] sm:$0xff]
        %v1059 = vld [vmem:[%s8 + $0x28] sm:$0xff]
        %v1060 = vld [vmem:[%s8 + $0x30] sm:$0xff]
        %v1061 = vld [vmem:[%s8 + $0x38] sm:$0xff]
        %v1062 = vld [vmem:[%s9] sm:$0x1]
        %v1064 = vlaneseq
        %v1065 = vshrl.u32 %v1064, 7
        %v1066 = vsub.s32 0, %v1065
        %v1067 = vrot.slane %v1062, %v1066
        %1069 = vmatprep.subr.mxu0 0.0
        %1070 = vmatpush1.msra.mxu0 0.0
        %1071 = vmatprep.subr.mxu0 0.0
        %1072 = vmatpush1.msra.mxu0 0.0
        %1073 = vmatprep.subr.mxu0 0.0
        %1074 = vmatpush1.msra.mxu0 0.0
        %1075 = vmatprep.subr.mxu0 0.0
        %1076 = vmatpush1.msra.mxu0 0.0
        %1077 = vmatprep.subr.mxu0 0.0
        %1078 = vmatpush1.msra.mxu0 0.0
        %1079 = vmatprep.subr.mxu0 0.0
        %1080 = vmatpush1.msra.mxu0 0.0
        %1081 = vmatprep.subr.mxu0 0.0
        %1082 = vmatpush1.msra.mxu0 0.0
        %1083 = vmatprep.subr.mxu0 0.0
        %1084 = vmatpush1.msra.mxu0 0.0
        %1085 = vmatprep.subr.mxu0 0.0
        %1086 = vmatpush1.msra.mxu0 %v1061
        %1087 = vmatprep.subr.mxu0 0.0
        %1088 = vmatpush1.msra.mxu0 %v1060
        %1089 = vmatprep.subr.mxu0 0.0
        %1090 = vmatpush1.msra.mxu0 %v1059
        %1091 = vmatprep.subr.mxu0 0.0
        %1092 = vmatpush1.msra.mxu0 %v1058
        %1093 = vmatprep.subr.mxu0 0.0
        %1094 = vmatpush1.msra.mxu0 %v1057
        %1095 = vmatprep.subr.mxu0 0.0
        %1096 = vmatpush1.msra.mxu0 %v1056
        %1097 = vmatprep.subr.mxu0 0.0
        %1098 = vmatpush1.msra.mxu0 %v1055
        %1099 = vmatprep.subr.mxu0 0.0
        %1100 = vmatpush1.msra.mxu0 %v1054
        %1101 = vmatprep.subr.mxu0 0.0
        %1102 = vmatpush2.msra.mxu0 0.0
        %1103 = vmatprep.subr.mxu0 0.0
        %1104 = vmatpush2.msra.mxu0 0.0
        %1105 = vmatprep.subr.mxu0 0.0
        %1106 = vmatpush2.msra.mxu0 0.0
        %1107 = vmatprep.subr.mxu0 0.0
        %1108 = vmatpush2.msra.mxu0 0.0
        %1109 = vmatprep.subr.mxu0 0.0
        %1110 = vmatpush2.msra.mxu0 0.0
        %1111 = vmatprep.subr.mxu0 0.0
        %1112 = vmatpush2.msra.mxu0 0.0
        %1113 = vmatprep.subr.mxu0 0.0
        %1114 = vmatpush2.msra.mxu0 0.0
        %1115 = vmatprep.subr.mxu0 0.0
        %1116 = vmatpush2.msra.mxu0 0.0
        %1117 = vmatprep.subr.mxu0 0.0
        %1118 = vmatpush2.msra.mxu0 0.0
        %1119 = vmatprep.subr.mxu0 0.0
        %1120 = vmatpush2.msra.mxu0 0.0
        %1121 = vmatprep.subr.mxu0 0.0
        %1122 = vmatpush2.msra.mxu0 0.0
        %1123 = vmatprep.subr.mxu0 0.0
        %1124 = vmatpush2.msra.mxu0 0.0
        %1125 = vmatprep.subr.mxu0 0.0
        %1126 = vmatpush2.msra.mxu0 0.0
        %1127 = vmatprep.subr.mxu0 0.0
        %1128 = vmatpush2.msra.mxu0 0.0
        %1129 = vmatprep.subr.mxu0 0.0
        %1130 = vmatpush2.msra.mxu0 0.0
        %1131 = vmatprep.subr.mxu0 0.0
        %1132 = vmatpush2.msra.mxu0 0.0
        %1133 = vmatprep.mubr.f32.mxu0 0.0
        %1134 = vmatmul.mubr.f32.gmra.mxu0 %v897
        %v1135 = vpop.f32.mrf.mxu0
        %v1136 = vadd.f32 %v1067, %v1135
        %v1137 = vpop.f32.mrf.mxu0
        %1138 = vdwg.mxu0
        %vm1139 = vcmask 130048
        %v1141 = vsel %vm1139, %v966, 0
        %v1144 = vsel %vm1139, %v1051, 0
        %1146 = vmatprep.subr.mxu0 0.0
        %1147 = vmatpush1.xpose.msra.mxu0 0.0
        %1148 = vmatprep.subr.mxu0 0.0
        %1149 = vmatpush1.xpose.msra.mxu0 0.0
        %1150 = vmatprep.subr.mxu0 0.0
        %1151 = vmatpush1.xpose.msra.mxu0 0.0
        %1152 = vmatprep.subr.mxu0 0.0
        %1153 = vmatpush1.xpose.msra.mxu0 0.0
        %1154 = vmatprep.subr.mxu0 0.0
        %1155 = vmatpush1.xpose.msra.mxu0 0.0
        %1156 = vmatprep.subr.mxu0 0.0
        %1157 = vmatpush1.xpose.msra.mxu0 0.0
        %1158 = vmatprep.subr.mxu0 0.0
        %1159 = vmatpush1.xpose.msra.mxu0 0.0
        %1160 = vmatprep.subr.mxu0 0.0
        %1161 = vmatpush1.xpose.msra.mxu0 0.0
        %1162 = vmatprep.subr.mxu0 0.0
        %1163 = vmatpush1.xpose.msra.mxu0 0.0
        %1164 = vmatprep.subr.mxu0 0.0
        %1165 = vmatpush1.xpose.msra.mxu0 0.0
        %1166 = vmatprep.subr.mxu0 0.0
        %1167 = vmatpush1.xpose.msra.mxu0 0.0
        %1168 = vmatprep.subr.mxu0 0.0
        %1169 = vmatpush1.xpose.msra.mxu0 0.0
        %1170 = vmatprep.subr.mxu0 0.0
        %1171 = vmatpush1.xpose.msra.mxu0 0.0
        %1172 = vmatprep.subr.mxu0 0.0
        %1173 = vmatpush1.xpose.msra.mxu0 0.0
        %1174 = vmatprep.subr.mxu0 0.0
        %1175 = vmatpush1.xpose.msra.mxu0 0.0
        %1176 = vmatprep.subr.mxu0 0.0
        %1177 = vmatpush1.xpose.msra.mxu0 %v1144
        %1178 = vmatprep.subr.mxu0 0.0
        %1179 = vmatpush2.xpose.msra.mxu0 0.0
        %1180 = vmatprep.subr.mxu0 0.0
        %1181 = vmatpush2.xpose.msra.mxu0 0.0
        %1182 = vmatprep.subr.mxu0 0.0
        %1183 = vmatpush2.xpose.msra.mxu0 0.0
        %1184 = vmatprep.subr.mxu0 0.0
        %1185 = vmatpush2.xpose.msra.mxu0 0.0
        %1186 = vmatprep.subr.mxu0 0.0
        %1187 = vmatpush2.xpose.msra.mxu0 0.0
        %1188 = vmatprep.subr.mxu0 0.0
        %1189 = vmatpush2.xpose.msra.mxu0 0.0
        %1190 = vmatprep.subr.mxu0 0.0
        %1191 = vmatpush2.xpose.msra.mxu0 0.0
        %1192 = vmatprep.subr.mxu0 0.0
        %1193 = vmatpush2.xpose.msra.mxu0 0.0
        %1194 = vmatprep.subr.mxu0 0.0
        %1195 = vmatpush2.xpose.msra.mxu0 0.0
        %1196 = vmatprep.subr.mxu0 0.0
        %1197 = vmatpush2.xpose.msra.mxu0 0.0
        %1198 = vmatprep.subr.mxu0 0.0
        %1199 = vmatpush2.xpose.msra.mxu0 0.0
        %1200 = vmatprep.subr.mxu0 0.0
        %1201 = vmatpush2.xpose.msra.mxu0 0.0
        %1202 = vmatprep.subr.mxu0 0.0
        %1203 = vmatpush2.xpose.msra.mxu0 0.0
        %1204 = vmatprep.subr.mxu0 0.0
        %1205 = vmatpush2.xpose.msra.mxu0 0.0
        %1206 = vmatprep.subr.mxu0 0.0
        %1207 = vmatpush2.xpose.msra.mxu0 0.0
        %1208 = vmatprep.subr.mxu0 0.0
        %1209 = vmatpush2.xpose.msra.mxu0 0.0
        %1210 = vmatprep.mubr.f32.mxu0 0.0
        %1211 = vmatmul.mubr.f32.gmra.mxu0 %v1141
        %v1212 = vpop.f32.mrf.mxu0
        %v1213 = vadd.f32 0.0, %v1212
        %v1214 = vpop.f32.mrf.mxu0
        %1215 = vdwg.mxu0
        %vm1216 = vcmask 36864
        %v1217 = vsel %vm1216, %v1213, -inf
        %1218 = vmax.xlane.f32.xlu0 %v1217
        %v1219 = vpop.xlane.xlu0 %1218
        %v1220 = vsub.f32 %v1213, %v1219
        %v1221 = vmul.f32 %v1220, 1.442695
        %v1222 = vpow.pop %v1221
        %v1223 = vsel %vm1216, %v1222, 0.0
        %1224 = vadd.xlane.f32.xlu0 %v1223
        %v1225 = vpop.xlane.xlu0 %1224
        %v1226 = vrcp.pop %v1225
        %v1227 = vmul.f32 %v1222, %v1226
        %vm1228 = vcmask 39936
        %v1230 = vsel %vm1228, %v1227, 0
        %vm1232 = vcmask 1044480
        %v1234 = vsel %vm1232, %v1136, 0
        %1236 = vmatprep.subr.mxu0 0.0
        %1237 = vmatpush1.msra.mxu0 0.0
        %1238 = vmatprep.subr.mxu0 0.0
        %1239 = vmatpush1.msra.mxu0 0.0
        %1240 = vmatprep.subr.mxu0 0.0
        %1241 = vmatpush1.msra.mxu0 0.0
        %1242 = vmatprep.subr.mxu0 0.0
        %1243 = vmatpush1.msra.mxu0 0.0
        %1244 = vmatprep.subr.mxu0 0.0
        %1245 = vmatpush1.msra.mxu0 0.0
        %1246 = vmatprep.subr.mxu0 0.0
        %1247 = vmatpush1.msra.mxu0 0.0
        %1248 = vmatprep.subr.mxu0 0.0
        %1249 = vmatpush1.msra.mxu0 0.0
        %1250 = vmatprep.subr.mxu0 0.0
        %1251 = vmatpush1.msra.mxu0 0.0
        %1252 = vmatprep.subr.mxu0 0.0
        %1253 = vmatpush1.msra.mxu0 0.0
        %1254 = vmatprep.subr.mxu0 0.0
        %1255 = vmatpush1.msra.mxu0 0.0
        %1256 = vmatprep.subr.mxu0 0.0
        %1257 = vmatpush1.msra.mxu0 0.0
        %1258 = vmatprep.subr.mxu0 0.0
        %1259 = vmatpush1.msra.mxu0 0.0
        %1260 = vmatprep.subr.mxu0 0.0
        %1261 = vmatpush1.msra.mxu0 0.0
        %1262 = vmatprep.subr.mxu0 0.0
        %1263 = vmatpush1.msra.mxu0 0.0
        %1264 = vmatprep.subr.mxu0 0.0
        %1265 = vmatpush1.msra.mxu0 0.0
        %1266 = vmatprep.subr.mxu0 0.0
        %1267 = vmatpush1.msra.mxu0 %v1234
        %1268 = vmatprep.subr.mxu0 0.0
        %1269 = vmatpush2.msra.mxu0 0.0
        %1270 = vmatprep.subr.mxu0 0.0
        %1271 = vmatpush2.msra.mxu0 0.0
        %1272 = vmatprep.subr.mxu0 0.0
        %1273 = vmatpush2.msra.mxu0 0.0
        %1274 = vmatprep.subr.mxu0 0.0
        %1275 = vmatpush2.msra.mxu0 0.0
        %1276 = vmatprep.subr.mxu0 0.0
        %1277 = vmatpush2.msra.mxu0 0.0
        %1278 = vmatprep.subr.mxu0 0.0
        %1279 = vmatpush2.msra.mxu0 0.0
        %1280 = vmatprep.subr.mxu0 0.0
        %1281 = vmatpush2.msra.mxu0 0.0
        %1282 = vmatprep.subr.mxu0 0.0
        %1283 = vmatpush2.msra.mxu0 0.0
        %1284 = vmatprep.subr.mxu0 0.0
        %1285 = vmatpush2.msra.mxu0 0.0
        %1286 = vmatprep.subr.mxu0 0.0
        %1287 = vmatpush2.msra.mxu0 0.0
        %1288 = vmatprep.subr.mxu0 0.0
        %1289 = vmatpush2.msra.mxu0 0.0
        %1290 = vmatprep.subr.mxu0 0.0
        %1291 = vmatpush2.msra.mxu0 0.0
        %1292 = vmatprep.subr.mxu0 0.0
        %1293 = vmatpush2.msra.mxu0 0.0
        %1294 = vmatprep.subr.mxu0 0.0
        %1295 = vmatpush2.msra.mxu0 0.0
        %1296 = vmatprep.subr.mxu0 0.0
        %1297 = vmatpush2.msra.mxu0 0.0
        %1298 = vmatprep.subr.mxu0 0.0
        %1299 = vmatpush2.msra.mxu0 0.0
        %1300 = vmatprep.mubr.f32.mxu0 0.0
        %1301 = vmatmul.mubr.f32.gmra.mxu0 %v1230
        %v1302 = vpop.f32.mrf.mxu0
        %v1303 = vadd.f32 0.0, %v1302
        %v1304 = vpop.f32.mrf.mxu0
        %1305 = vdwg.mxu0
        %v1306 = vld [vmem:[%s10] sm:$0xff]
        %v1307 = vld [vmem:[%s10 + $0x8] sm:$0xff]
        %v1309 = vsel %vm1139, %v1303, 0
        %1311 = vmatprep.subr.mxu0 0.0
        %1312 = vmatpush1.msra.mxu0 0.0
        %1313 = vmatprep.subr.mxu0 0.0
        %1314 = vmatpush1.msra.mxu0 0.0
        %1315 = vmatprep.subr.mxu0 0.0
        %1316 = vmatpush1.msra.mxu0 0.0
        %1317 = vmatprep.subr.mxu0 0.0
        %1318 = vmatpush1.msra.mxu0 0.0
        %1319 = vmatprep.subr.mxu0 0.0
        %1320 = vmatpush1.msra.mxu0 0.0
        %1321 = vmatprep.subr.mxu0 0.0
        %1322 = vmatpush1.msra.mxu0 0.0
        %1323 = vmatprep.subr.mxu0 0.0
        %1324 = vmatpush1.msra.mxu0 0.0
        %1325 = vmatprep.subr.mxu0 0.0
        %1326 = vmatpush1.msra.mxu0 0.0
        %1327 = vmatprep.subr.mxu0 0.0
        %1328 = vmatpush1.msra.mxu0 0.0
        %1329 = vmatprep.subr.mxu0 0.0
        %1330 = vmatpush1.msra.mxu0 0.0
        %1331 = vmatprep.subr.mxu0 0.0
        %1332 = vmatpush1.msra.mxu0 0.0
        %1333 = vmatprep.subr.mxu0 0.0
        %1334 = vmatpush1.msra.mxu0 0.0
        %1335 = vmatprep.subr.mxu0 0.0
        %1336 = vmatpush1.msra.mxu0 0.0
        %1337 = vmatprep.subr.mxu0 0.0
        %1338 = vmatpush1.msra.mxu0 0.0
        %1339 = vmatprep.subr.mxu0 0.0
        %1340 = vmatpush1.msra.mxu0 %v1307
        %1341 = vmatprep.subr.mxu0 0.0
        %1342 = vmatpush1.msra.mxu0 %v1306
        %1343 = vmatprep.subr.mxu0 0.0
        %1344 = vmatpush2.msra.mxu0 0.0
        %1345 = vmatprep.subr.mxu0 0.0
        %1346 = vmatpush2.msra.mxu0 0.0
        %1347 = vmatprep.subr.mxu0 0.0
        %1348 = vmatpush2.msra.mxu0 0.0
        %1349 = vmatprep.subr.mxu0 0.0
        %1350 = vmatpush2.msra.mxu0 0.0
        %1351 = vmatprep.subr.mxu0 0.0
        %1352 = vmatpush2.msra.mxu0 0.0
        %1353 = vmatprep.subr.mxu0 0.0
        %1354 = vmatpush2.msra.mxu0 0.0
        %1355 = vmatprep.subr.mxu0 0.0
        %1356 = vmatpush2.msra.mxu0 0.0
        %1357 = vmatprep.subr.mxu0 0.0
        %1358 = vmatpush2.msra.mxu0 0.0
        %1359 = vmatprep.subr.mxu0 0.0
        %1360 = vmatpush2.msra.mxu0 0.0
        %1361 = vmatprep.subr.mxu0 0.0
        %1362 = vmatpush2.msra.mxu0 0.0
        %1363 = vmatprep.subr.mxu0 0.0
        %1364 = vmatpush2.msra.mxu0 0.0
        %1365 = vmatprep.subr.mxu0 0.0
        %1366 = vmatpush2.msra.mxu0 0.0
        %1367 = vmatprep.subr.mxu0 0.0
        %1368 = vmatpush2.msra.mxu0 0.0
        %1369 = vmatprep.subr.mxu0 0.0
        %1370 = vmatpush2.msra.mxu0 0.0
        %1371 = vmatprep.subr.mxu0 0.0
        %1372 = vmatpush2.msra.mxu0 0.0
        %1373 = vmatprep.subr.mxu0 0.0
        %1374 = vmatpush2.msra.mxu0 0.0
        %1375 = vmatprep.mubr.f32.mxu0 0.0
        %1376 = vmatmul.mubr.f32.gmra.mxu0 %v1309
        %v1377 = vpop.f32.mrf.mxu0
        %v1378 = vadd.f32 0.0, %v1377
        %v1379 = vpop.f32.mrf.mxu0
        %1380 = vdwg.mxu0
        %v1381 = vadd.f32 %v880, %v1378
        %s1382 = scalar_lea.vmem %s4, 64
        %v1383 = vld [vmem:[%s1382] sm:$0xff]
        %v1384 = vld [vmem:[%s1382 + $0x8] sm:$0xff]
        %v1385 = vld [vmem:[%s1382 + $0x10] sm:$0xff]
        %v1386 = vld [vmem:[%s1382 + $0x18] sm:$0xff]
        %v1387 = vld [vmem:[%s1382 + $0x20] sm:$0xff]
        %v1388 = vld [vmem:[%s1382 + $0x28] sm:$0xff]
        %v1389 = vld [vmem:[%s1382 + $0x30] sm:$0xff]
        %v1390 = vld [vmem:[%s1382 + $0x38] sm:$0xff]
        %s1391 = scalar_lea.vmem %s5, 1
        %v1392 = vld [vmem:[%s1391] sm:$0x1]
        %v1394 = vlaneseq
        %v1395 = vshrl.u32 %v1394, 7
        %v1396 = vsub.s32 0, %v1395
        %v1397 = vrot.slane %v1392, %v1396
        %1399 = vmatprep.subr.mxu0 0.0
        %1400 = vmatpush1.msra.mxu0 0.0
        %1401 = vmatprep.subr.mxu0 0.0
        %1402 = vmatpush1.msra.mxu0 0.0
        %1403 = vmatprep.subr.mxu0 0.0
        %1404 = vmatpush1.msra.mxu0 0.0
        %1405 = vmatprep.subr.mxu0 0.0
        %1406 = vmatpush1.msra.mxu0 0.0
        %1407 = vmatprep.subr.mxu0 0.0
        %1408 = vmatpush1.msra.mxu0 0.0
        %1409 = vmatprep.subr.mxu0 0.0
        %1410 = vmatpush1.msra.mxu0 0.0
        %1411 = vmatprep.subr.mxu0 0.0
        %1412 = vmatpush1.msra.mxu0 0.0
        %1413 = vmatprep.subr.mxu0 0.0
        %1414 = vmatpush1.msra.mxu0 0.0
        %1415 = vmatprep.subr.mxu0 0.0
        %1416 = vmatpush1.msra.mxu0 %v1390
        %1417 = vmatprep.subr.mxu0 0.0
        %1418 = vmatpush1.msra.mxu0 %v1389
        %1419 = vmatprep.subr.mxu0 0.0
        %1420 = vmatpush1.msra.mxu0 %v1388
        %1421 = vmatprep.subr.mxu0 0.0
        %1422 = vmatpush1.msra.mxu0 %v1387
        %1423 = vmatprep.subr.mxu0 0.0
        %1424 = vmatpush1.msra.mxu0 %v1386
        %1425 = vmatprep.subr.mxu0 0.0
        %1426 = vmatpush1.msra.mxu0 %v1385
        %1427 = vmatprep.subr.mxu0 0.0
        %1428 = vmatpush1.msra.mxu0 %v1384
        %1429 = vmatprep.subr.mxu0 0.0
        %1430 = vmatpush1.msra.mxu0 %v1383
        %1431 = vmatprep.subr.mxu0 0.0
        %1432 = vmatpush2.msra.mxu0 0.0
        %1433 = vmatprep.subr.mxu0 0.0
        %1434 = vmatpush2.msra.mxu0 0.0
        %1435 = vmatprep.subr.mxu0 0.0
        %1436 = vmatpush2.msra.mxu0 0.0
        %1437 = vmatprep.subr.mxu0 0.0
        %1438 = vmatpush2.msra.mxu0 0.0
        %1439 = vmatprep.subr.mxu0 0.0
        %1440 = vmatpush2.msra.mxu0 0.0
        %1441 = vmatprep.subr.mxu0 0.0
        %1442 = vmatpush2.msra.mxu0 0.0
        %1443 = vmatprep.subr.mxu0 0.0
        %1444 = vmatpush2.msra.mxu0 0.0
        %1445 = vmatprep.subr.mxu0 0.0
        %1446 = vmatpush2.msra.mxu0 0.0
        %1447 = vmatprep.subr.mxu0 0.0
        %1448 = vmatpush2.msra.mxu0 0.0
        %1449 = vmatprep.subr.mxu0 0.0
        %1450 = vmatpush2.msra.mxu0 0.0
        %1451 = vmatprep.subr.mxu0 0.0
        %1452 = vmatpush2.msra.mxu0 0.0
        %1453 = vmatprep.subr.mxu0 0.0
        %1454 = vmatpush2.msra.mxu0 0.0
        %1455 = vmatprep.subr.mxu0 0.0
        %1456 = vmatpush2.msra.mxu0 0.0
        %1457 = vmatprep.subr.mxu0 0.0
        %1458 = vmatpush2.msra.mxu0 0.0
        %1459 = vmatprep.subr.mxu0 0.0
        %1460 = vmatpush2.msra.mxu0 0.0
        %1461 = vmatprep.subr.mxu0 0.0
        %1462 = vmatpush2.msra.mxu0 0.0
        %1463 = vmatprep.mubr.f32.mxu0 0.0
        %1464 = vmatmul.mubr.f32.gmra.mxu0 %v897
        %v1465 = vpop.f32.mrf.mxu0
        %v1466 = vadd.f32 %v1397, %v1465
        %v1467 = vpop.f32.mrf.mxu0
        %1468 = vdwg.mxu0
        %s1469 = scalar_lea.vmem %s6, 64
        %v1470 = vld [vmem:[%s1469] sm:$0xff]
        %v1471 = vld [vmem:[%s1469 + $0x8] sm:$0xff]
        %v1472 = vld [vmem:[%s1469 + $0x10] sm:$0xff]
        %v1473 = vld [vmem:[%s1469 + $0x18] sm:$0xff]
        %v1474 = vld [vmem:[%s1469 + $0x20] sm:$0xff]
        %v1475 = vld [vmem:[%s1469 + $0x28] sm:$0xff]
        %v1476 = vld [vmem:[%s1469 + $0x30] sm:$0xff]
        %v1477 = vld [vmem:[%s1469 + $0x38] sm:$0xff]
        %s1478 = scalar_lea.vmem %s7, 1
        %v1479 = vld [vmem:[%s1478] sm:$0x1]
        %v1481 = vlaneseq
        %v1482 = vshrl.u32 %v1481, 7
        %v1483 = vsub.s32 0, %v1482
        %v1484 = vrot.slane %v1479, %v1483
        %1486 = vmatprep.subr.mxu0 0.0
        %1487 = vmatpush1.msra.mxu0 0.0
        %1488 = vmatprep.subr.mxu0 0.0
        %1489 = vmatpush1.msra.mxu0 0.0
        %1490 = vmatprep.subr.mxu0 0.0
        %1491 = vmatpush1.msra.mxu0 0.0
        %1492 = vmatprep.subr.mxu0 0.0
        %1493 = vmatpush1.msra.mxu0 0.0
        %1494 = vmatprep.subr.mxu0 0.0
        %1495 = vmatpush1.msra.mxu0 0.0
        %1496 = vmatprep.subr.mxu0 0.0
        %1497 = vmatpush1.msra.mxu0 0.0
        %1498 = vmatprep.subr.mxu0 0.0
        %1499 = vmatpush1.msra.mxu0 0.0
        %1500 = vmatprep.subr.mxu0 0.0
        %1501 = vmatpush1.msra.mxu0 0.0
        %1502 = vmatprep.subr.mxu0 0.0
        %1503 = vmatpush1.msra.mxu0 %v1477
        %1504 = vmatprep.subr.mxu0 0.0
        %1505 = vmatpush1.msra.mxu0 %v1476
        %1506 = vmatprep.subr.mxu0 0.0
        %1507 = vmatpush1.msra.mxu0 %v1475
        %1508 = vmatprep.subr.mxu0 0.0
        %1509 = vmatpush1.msra.mxu0 %v1474
        %1510 = vmatprep.subr.mxu0 0.0
        %1511 = vmatpush1.msra.mxu0 %v1473
        %1512 = vmatprep.subr.mxu0 0.0
        %1513 = vmatpush1.msra.mxu0 %v1472
        %1514 = vmatprep.subr.mxu0 0.0
        %1515 = vmatpush1.msra.mxu0 %v1471
        %1516 = vmatprep.subr.mxu0 0.0
        %1517 = vmatpush1.msra.mxu0 %v1470
        %1518 = vmatprep.subr.mxu0 0.0
        %1519 = vmatpush2.msra.mxu0 0.0
        %1520 = vmatprep.subr.mxu0 0.0
        %1521 = vmatpush2.msra.mxu0 0.0
        %1522 = vmatprep.subr.mxu0 0.0
        %1523 = vmatpush2.msra.mxu0 0.0
        %1524 = vmatprep.subr.mxu0 0.0
        %1525 = vmatpush2.msra.mxu0 0.0
        %1526 = vmatprep.subr.mxu0 0.0
        %1527 = vmatpush2.msra.mxu0 0.0
        %1528 = vmatprep.subr.mxu0 0.0
        %1529 = vmatpush2.msra.mxu0 0.0
        %1530 = vmatprep.subr.mxu0 0.0
        %1531 = vmatpush2.msra.mxu0 0.0
        %1532 = vmatprep.subr.mxu0 0.0
        %1533 = vmatpush2.msra.mxu0 0.0
        %1534 = vmatprep.subr.mxu0 0.0
        %1535 = vmatpush2.msra.mxu0 0.0
        %1536 = vmatprep.subr.mxu0 0.0
        %1537 = vmatpush2.msra.mxu0 0.0
        %1538 = vmatprep.subr.mxu0 0.0
        %1539 = vmatpush2.msra.mxu0 0.0
        %1540 = vmatprep.subr.mxu0 0.0
        %1541 = vmatpush2.msra.mxu0 0.0
        %1542 = vmatprep.subr.mxu0 0.0
        %1543 = vmatpush2.msra.mxu0 0.0
        %1544 = vmatprep.subr.mxu0 0.0
        %1545 = vmatpush2.msra.mxu0 0.0
        %1546 = vmatprep.subr.mxu0 0.0
        %1547 = vmatpush2.msra.mxu0 0.0
        %1548 = vmatprep.subr.mxu0 0.0
        %1549 = vmatpush2.msra.mxu0 0.0
        %1550 = vmatprep.mubr.f32.mxu0 0.0
        %1551 = vmatmul.mubr.f32.gmra.mxu0 %v897
        %v1552 = vpop.f32.mrf.mxu0
        %v1553 = vadd.f32 %v1484, %v1552
        %v1554 = vpop.f32.mrf.mxu0
        %1555 = vdwg.mxu0
        %s1556 = scalar_lea.vmem %s8, 64
        %v1557 = vld [vmem:[%s1556] sm:$0xff]
        %v1558 = vld [vmem:[%s1556 + $0x8] sm:$0xff]
        %v1559 = vld [vmem:[%s1556 + $0x10] sm:$0xff]
        %v1560 = vld [vmem:[%s1556 + $0x18] sm:$0xff]
        %v1561 = vld [vmem:[%s1556 + $0x20] sm:$0xff]
        %v1562 = vld [vmem:[%s1556 + $0x28] sm:$0xff]
        %v1563 = vld [vmem:[%s1556 + $0x30] sm:$0xff]
        %v1564 = vld [vmem:[%s1556 + $0x38] sm:$0xff]
        %s1565 = scalar_lea.vmem %s9, 1
        %v1566 = vld [vmem:[%s1565] sm:$0x1]
        %v1568 = vlaneseq
        %v1569 = vshrl.u32 %v1568, 7
        %v1570 = vsub.s32 0, %v1569
        %v1571 = vrot.slane %v1566, %v1570
        %1573 = vmatprep.subr.mxu0 0.0
        %1574 = vmatpush1.msra.mxu0 0.0
        %1575 = vmatprep.subr.mxu0 0.0
        %1576 = vmatpush1.msra.mxu0 0.0
        %1577 = vmatprep.subr.mxu0 0.0
        %1578 = vmatpush1.msra.mxu0 0.0
        %1579 = vmatprep.subr.mxu0 0.0
        %1580 = vmatpush1.msra.mxu0 0.0
        %1581 = vmatprep.subr.mxu0 0.0
        %1582 = vmatpush1.msra.mxu0 0.0
        %1583 = vmatprep.subr.mxu0 0.0
        %1584 = vmatpush1.msra.mxu0 0.0
        %1585 = vmatprep.subr.mxu0 0.0
        %1586 = vmatpush1.msra.mxu0 0.0
        %1587 = vmatprep.subr.mxu0 0.0
        %1588 = vmatpush1.msra.mxu0 0.0
        %1589 = vmatprep.subr.mxu0 0.0
        %1590 = vmatpush1.msra.mxu0 %v1564
        %1591 = vmatprep.subr.mxu0 0.0
        %1592 = vmatpush1.msra.mxu0 %v1563
        %1593 = vmatprep.subr.mxu0 0.0
        %1594 = vmatpush1.msra.mxu0 %v1562
        %1595 = vmatprep.subr.mxu0 0.0
        %1596 = vmatpush1.msra.mxu0 %v1561
        %1597 = vmatprep.subr.mxu0 0.0
        %1598 = vmatpush1.msra.mxu0 %v1560
        %1599 = vmatprep.subr.mxu0 0.0
        %1600 = vmatpush1.msra.mxu0 %v1559
        %1601 = vmatprep.subr.mxu0 0.0
        %1602 = vmatpush1.msra.mxu0 %v1558
        %1603 = vmatprep.subr.mxu0 0.0
        %1604 = vmatpush1.msra.mxu0 %v1557
        %1605 = vmatprep.subr.mxu0 0.0
        %1606 = vmatpush2.msra.mxu0 0.0
        %1607 = vmatprep.subr.mxu0 0.0
        %1608 = vmatpush2.msra.mxu0 0.0
        %1609 = vmatprep.subr.mxu0 0.0
        %1610 = vmatpush2.msra.mxu0 0.0
        %1611 = vmatprep.subr.mxu0 0.0
        %1612 = vmatpush2.msra.mxu0 0.0
        %1613 = vmatprep.subr.mxu0 0.0
        %1614 = vmatpush2.msra.mxu0 0.0
        %1615 = vmatprep.subr.mxu0 0.0
        %1616 = vmatpush2.msra.mxu0 0.0
        %1617 = vmatprep.subr.mxu0 0.0
        %1618 = vmatpush2.msra.mxu0 0.0
        %1619 = vmatprep.subr.mxu0 0.0
        %1620 = vmatpush2.msra.mxu0 0.0
        %1621 = vmatprep.subr.mxu0 0.0
        %1622 = vmatpush2.msra.mxu0 0.0
        %1623 = vmatprep.subr.mxu0 0.0
        %1624 = vmatpush2.msra.mxu0 0.0
        %1625 = vmatprep.subr.mxu0 0.0
        %1626 = vmatpush2.msra.mxu0 0.0
        %1627 = vmatprep.subr.mxu0 0.0
        %1628 = vmatpush2.msra.mxu0 0.0
        %1629 = vmatprep.subr.mxu0 0.0
        %1630 = vmatpush2.msra.mxu0 0.0
        %1631 = vmatprep.subr.mxu0 0.0
        %1632 = vmatpush2.msra.mxu0 0.0
        %1633 = vmatprep.subr.mxu0 0.0
        %1634 = vmatpush2.msra.mxu0 0.0
        %1635 = vmatprep.subr.mxu0 0.0
        %1636 = vmatpush2.msra.mxu0 0.0
        %1637 = vmatprep.mubr.f32.mxu0 0.0
        %1638 = vmatmul.mubr.f32.gmra.mxu0 %v897
        %v1639 = vpop.f32.mrf.mxu0
        %v1640 = vadd.f32 %v1571, %v1639
        %v1641 = vpop.f32.mrf.mxu0
        %1642 = vdwg.mxu0
        %v1644 = vsel %vm1139, %v1466, 0
        %v1647 = vsel %vm1139, %v1553, 0
        %1649 = vmatprep.subr.mxu0 0.0
        %1650 = vmatpush1.xpose.msra.mxu0 0.0
        %1651 = vmatprep.subr.mxu0 0.0
        %1652 = vmatpush1.xpose.msra.mxu0 0.0
        %1653 = vmatprep.subr.mxu0 0.0
        %1654 = vmatpush1.xpose.msra.mxu0 0.0
        %1655 = vmatprep.subr.mxu0 0.0
        %1656 = vmatpush1.xpose.msra.mxu0 0.0
        %1657 = vmatprep.subr.mxu0 0.0
        %1658 = vmatpush1.xpose.msra.mxu0 0.0
        %1659 = vmatprep.subr.mxu0 0.0
        %1660 = vmatpush1.xpose.msra.mxu0 0.0
        %1661 = vmatprep.subr.mxu0 0.0
        %1662 = vmatpush1.xpose.msra.mxu0 0.0
        %1663 = vmatprep.subr.mxu0 0.0
        %1664 = vmatpush1.xpose.msra.mxu0 0.0
        %1665 = vmatprep.subr.mxu0 0.0
        %1666 = vmatpush1.xpose.msra.mxu0 0.0
        %1667 = vmatprep.subr.mxu0 0.0
        %1668 = vmatpush1.xpose.msra.mxu0 0.0
        %1669 = vmatprep.subr.mxu0 0.0
        %1670 = vmatpush1.xpose.msra.mxu0 0.0
        %1671 = vmatprep.subr.mxu0 0.0
        %1672 = vmatpush1.xpose.msra.mxu0 0.0
        %1673 = vmatprep.subr.mxu0 0.0
        %1674 = vmatpush1.xpose.msra.mxu0 0.0
        %1675 = vmatprep.subr.mxu0 0.0
        %1676 = vmatpush1.xpose.msra.mxu0 0.0
        %1677 = vmatprep.subr.mxu0 0.0
        %1678 = vmatpush1.xpose.msra.mxu0 0.0
        %1679 = vmatprep.subr.mxu0 0.0
        %1680 = vmatpush1.xpose.msra.mxu0 %v1647
        %1681 = vmatprep.subr.mxu0 0.0
        %1682 = vmatpush2.xpose.msra.mxu0 0.0
        %1683 = vmatprep.subr.mxu0 0.0
        %1684 = vmatpush2.xpose.msra.mxu0 0.0
        %1685 = vmatprep.subr.mxu0 0.0
        %1686 = vmatpush2.xpose.msra.mxu0 0.0
        %1687 = vmatprep.subr.mxu0 0.0
        %1688 = vmatpush2.xpose.msra.mxu0 0.0
        %1689 = vmatprep.subr.mxu0 0.0
        %1690 = vmatpush2.xpose.msra.mxu0 0.0
        %1691 = vmatprep.subr.mxu0 0.0
        %1692 = vmatpush2.xpose.msra.mxu0 0.0
        %1693 = vmatprep.subr.mxu0 0.0
        %1694 = vmatpush2.xpose.msra.mxu0 0.0
        %1695 = vmatprep.subr.mxu0 0.0
        %1696 = vmatpush2.xpose.msra.mxu0 0.0
        %1697 = vmatprep.subr.mxu0 0.0
        %1698 = vmatpush2.xpose.msra.mxu0 0.0
        %1699 = vmatprep.subr.mxu0 0.0
        %1700 = vmatpush2.xpose.msra.mxu0 0.0
        %1701 = vmatprep.subr.mxu0 0.0
        %1702 = vmatpush2.xpose.msra.mxu0 0.0
        %1703 = vmatprep.subr.mxu0 0.0
        %1704 = vmatpush2.xpose.msra.mxu0 0.0
        %1705 = vmatprep.subr.mxu0 0.0
        %1706 = vmatpush2.xpose.msra.mxu0 0.0
        %1707 = vmatprep.subr.mxu0 0.0
        %1708 = vmatpush2.xpose.msra.mxu0 0.0
        %1709 = vmatprep.subr.mxu0 0.0
        %1710 = vmatpush2.xpose.msra.mxu0 0.0
        %1711 = vmatprep.subr.mxu0 0.0
        %1712 = vmatpush2.xpose.msra.mxu0 0.0
        %1713 = vmatprep.mubr.f32.mxu0 0.0
        %1714 = vmatmul.mubr.f32.gmra.mxu0 %v1644
        %v1715 = vpop.f32.mrf.mxu0
        %v1716 = vadd.f32 0.0, %v1715
        %v1717 = vpop.f32.mrf.mxu0
        %1718 = vdwg.mxu0
        %v1719 = vsel %vm1216, %v1716, -inf
        %1720 = vmax.xlane.f32.xlu0 %v1719
        %v1721 = vpop.xlane.xlu0 %1720
        %v1722 = vsub.f32 %v1716, %v1721
        %v1723 = vmul.f32 %v1722, 1.442695
        %v1724 = vpow.pop %v1723
        %v1725 = vsel %vm1216, %v1724, 0.0
        %1726 = vadd.xlane.f32.xlu0 %v1725
        %v1727 = vpop.xlane.xlu0 %1726
        %v1728 = vrcp.pop %v1727
        %v1729 = vmul.f32 %v1724, %v1728
        %v1731 = vsel %vm1228, %v1729, 0
        %v1734 = vsel %vm1232, %v1640, 0
        %1736 = vmatprep.subr.mxu0 0.0
        %1737 = vmatpush1.msra.mxu0 0.0
        %1738 = vmatprep.subr.mxu0 0.0
        %1739 = vmatpush1.msra.mxu0 0.0
        %1740 = vmatprep.subr.mxu0 0.0
        %1741 = vmatpush1.msra.mxu0 0.0
        %1742 = vmatprep.subr.mxu0 0.0
        %1743 = vmatpush1.msra.mxu0 0.0
        %1744 = vmatprep.subr.mxu0 0.0
        %1745 = vmatpush1.msra.mxu0 0.0
        %1746 = vmatprep.subr.mxu0 0.0
        %1747 = vmatpush1.msra.mxu0 0.0
        %1748 = vmatprep.subr.mxu0 0.0
        %1749 = vmatpush1.msra.mxu0 0.0
        %1750 = vmatprep.subr.mxu0 0.0
        %1751 = vmatpush1.msra.mxu0 0.0
        %1752 = vmatprep.subr.mxu0 0.0
        %1753 = vmatpush1.msra.mxu0 0.0
        %1754 = vmatprep.subr.mxu0 0.0
        %1755 = vmatpush1.msra.mxu0 0.0
        %1756 = vmatprep.subr.mxu0 0.0
        %1757 = vmatpush1.msra.mxu0 0.0
        %1758 = vmatprep.subr.mxu0 0.0
        %1759 = vmatpush1.msra.mxu0 0.0
        %1760 = vmatprep.subr.mxu0 0.0
        %1761 = vmatpush1.msra.mxu0 0.0
        %1762 = vmatprep.subr.mxu0 0.0
        %1763 = vmatpush1.msra.mxu0 0.0
        %1764 = vmatprep.subr.mxu0 0.0
        %1765 = vmatpush1.msra.mxu0 0.0
        %1766 = vmatprep.subr.mxu0 0.0
        %1767 = vmatpush1.msra.mxu0 %v1734
        %1768 = vmatprep.subr.mxu0 0.0
        %1769 = vmatpush2.msra.mxu0 0.0
        %1770 = vmatprep.subr.mxu0 0.0
        %1771 = vmatpush2.msra.mxu0 0.0
        %1772 = vmatprep.subr.mxu0 0.0
        %1773 = vmatpush2.msra.mxu0 0.0
        %1774 = vmatprep.subr.mxu0 0.0
        %1775 = vmatpush2.msra.mxu0 0.0
        %1776 = vmatprep.subr.mxu0 0.0
        %1777 = vmatpush2.msra.mxu0 0.0
        %1778 = vmatprep.subr.mxu0 0.0
        %1779 = vmatpush2.msra.mxu0 0.0
        %1780 = vmatprep.subr.mxu0 0.0
        %1781 = vmatpush2.msra.mxu0 0.0
        %1782 = vmatprep.subr.mxu0 0.0
        %1783 = vmatpush2.msra.mxu0 0.0
        %1784 = vmatprep.subr.mxu0 0.0
        %1785 = vmatpush2.msra.mxu0 0.0
        %1786 = vmatprep.subr.mxu0 0.0
        %1787 = vmatpush2.msra.mxu0 0.0
        %1788 = vmatprep.subr.mxu0 0.0
        %1789 = vmatpush2.msra.mxu0 0.0
        %1790 = vmatprep.subr.mxu0 0.0
        %1791 = vmatpush2.msra.mxu0 0.0
        %1792 = vmatprep.subr.mxu0 0.0
        %1793 = vmatpush2.msra.mxu0 0.0
        %1794 = vmatprep.subr.mxu0 0.0
        %1795 = vmatpush2.msra.mxu0 0.0
        %1796 = vmatprep.subr.mxu0 0.0
        %1797 = vmatpush2.msra.mxu0 0.0
        %1798 = vmatprep.subr.mxu0 0.0
        %1799 = vmatpush2.msra.mxu0 0.0
        %1800 = vmatprep.mubr.f32.mxu0 0.0
        %1801 = vmatmul.mubr.f32.gmra.mxu0 %v1731
        %v1802 = vpop.f32.mrf.mxu0
        %v1803 = vadd.f32 0.0, %v1802
        %v1804 = vpop.f32.mrf.mxu0
        %1805 = vdwg.mxu0
        %s1806 = scalar_lea.vmem %s10, 16
        %v1807 = vld [vmem:[%s1806] sm:$0xff]
        %v1808 = vld [vmem:[%s1806 + $0x8] sm:$0xff]
        %v1810 = vsel %vm1139, %v1803, 0
        %1812 = vmatprep.subr.mxu0 0.0
        %1813 = vmatpush1.msra.mxu0 0.0
        %1814 = vmatprep.subr.mxu0 0.0
        %1815 = vmatpush1.msra.mxu0 0.0
        %1816 = vmatprep.subr.mxu0 0.0
        %1817 = vmatpush1.msra.mxu0 0.0
        %1818 = vmatprep.subr.mxu0 0.0
        %1819 = vmatpush1.msra.mxu0 0.0
        %1820 = vmatprep.subr.mxu0 0.0
        %1821 = vmatpush1.msra.mxu0 0.0
        %1822 = vmatprep.subr.mxu0 0.0
        %1823 = vmatpush1.msra.mxu0 0.0
        %1824 = vmatprep.subr.mxu0 0.0
        %1825 = vmatpush1.msra.mxu0 0.0
        %1826 = vmatprep.subr.mxu0 0.0
        %1827 = vmatpush1.msra.mxu0 0.0
        %1828 = vmatprep.subr.mxu0 0.0
        %1829 = vmatpush1.msra.mxu0 0.0
        %1830 = vmatprep.subr.mxu0 0.0
        %1831 = vmatpush1.msra.mxu0 0.0
        %1832 = vmatprep.subr.mxu0 0.0
        %1833 = vmatpush1.msra.mxu0 0.0
        %1834 = vmatprep.subr.mxu0 0.0
        %1835 = vmatpush1.msra.mxu0 0.0
        %1836 = vmatprep.subr.mxu0 0.0
        %1837 = vmatpush1.msra.mxu0 0.0
        %1838 = vmatprep.subr.mxu0 0.0
        %1839 = vmatpush1.msra.mxu0 0.0
        %1840 = vmatprep.subr.mxu0 0.0
        %1841 = vmatpush1.msra.mxu0 %v1808
        %1842 = vmatprep.subr.mxu0 0.0
        %1843 = vmatpush1.msra.mxu0 %v1807
        %1844 = vmatprep.subr.mxu0 0.0
        %1845 = vmatpush2.msra.mxu0 0.0
        %1846 = vmatprep.subr.mxu0 0.0
        %1847 = vmatpush2.msra.mxu0 0.0
        %1848 = vmatprep.subr.mxu0 0.0
        %1849 = vmatpush2.msra.mxu0 0.0
        %1850 = vmatprep.subr.mxu0 0.0
        %1851 = vmatpush2.msra.mxu0 0.0
        %1852 = vmatprep.subr.mxu0 0.0
        %1853 = vmatpush2.msra.mxu0 0.0
        %1854 = vmatprep.subr.mxu0 0.0
        %1855 = vmatpush2.msra.mxu0 0.0
        %1856 = vmatprep.subr.mxu0 0.0
        %1857 = vmatpush2.msra.mxu0 0.0
        %1858 = vmatprep.subr.mxu0 0.0
        %1859 = vmatpush2.msra.mxu0 0.0
        %1860 = vmatprep.subr.mxu0 0.0
        %1861 = vmatpush2.msra.mxu0 0.0
        %1862 = vmatprep.subr.mxu0 0.0
        %1863 = vmatpush2.msra.mxu0 0.0
        %1864 = vmatprep.subr.mxu0 0.0
        %1865 = vmatpush2.msra.mxu0 0.0
        %1866 = vmatprep.subr.mxu0 0.0
        %1867 = vmatpush2.msra.mxu0 0.0
        %1868 = vmatprep.subr.mxu0 0.0
        %1869 = vmatpush2.msra.mxu0 0.0
        %1870 = vmatprep.subr.mxu0 0.0
        %1871 = vmatpush2.msra.mxu0 0.0
        %1872 = vmatprep.subr.mxu0 0.0
        %1873 = vmatpush2.msra.mxu0 0.0
        %1874 = vmatprep.subr.mxu0 0.0
        %1875 = vmatpush2.msra.mxu0 0.0
        %1876 = vmatprep.mubr.f32.mxu0 0.0
        %1877 = vmatmul.mubr.f32.gmra.mxu0 %v1810
        %v1878 = vpop.f32.mrf.mxu0
        %v1879 = vadd.f32 0.0, %v1878
        %v1880 = vpop.f32.mrf.mxu0
        %1881 = vdwg.mxu0
        %v1882 = vadd.f32 %v1381, %v1879
        %s1883 = scalar_lea.vmem %s4, 128
        %v1884 = vld [vmem:[%s1883] sm:$0xff]
        %v1885 = vld [vmem:[%s1883 + $0x8] sm:$0xff]
        %v1886 = vld [vmem:[%s1883 + $0x10] sm:$0xff]
        %v1887 = vld [vmem:[%s1883 + $0x18] sm:$0xff]
        %v1888 = vld [vmem:[%s1883 + $0x20] sm:$0xff]
        %v1889 = vld [vmem:[%s1883 + $0x28] sm:$0xff]
        %v1890 = vld [vmem:[%s1883 + $0x30] sm:$0xff]
        %v1891 = vld [vmem:[%s1883 + $0x38] sm:$0xff]
        %s1892 = scalar_lea.vmem %s5, 2
        %v1893 = vld [vmem:[%s1892] sm:$0x1]
        %v1895 = vlaneseq
        %v1896 = vshrl.u32 %v1895, 7
        %v1897 = vsub.s32 0, %v1896
        %v1898 = vrot.slane %v1893, %v1897
        %1900 = vmatprep.subr.mxu0 0.0
        %1901 = vmatpush1.msra.mxu0 0.0
        %1902 = vmatprep.subr.mxu0 0.0
        %1903 = vmatpush1.msra.mxu0 0.0
        %1904 = vmatprep.subr.mxu0 0.0
        %1905 = vmatpush1.msra.mxu0 0.0
        %1906 = vmatprep.subr.mxu0 0.0
        %1907 = vmatpush1.msra.mxu0 0.0
        %1908 = vmatprep.subr.mxu0 0.0
        %1909 = vmatpush1.msra.mxu0 0.0
        %1910 = vmatprep.subr.mxu0 0.0
        %1911 = vmatpush1.msra.mxu0 0.0
        %1912 = vmatprep.subr.mxu0 0.0
        %1913 = vmatpush1.msra.mxu0 0.0
        %1914 = vmatprep.subr.mxu0 0.0
        %1915 = vmatpush1.msra.mxu0 0.0
        %1916 = vmatprep.subr.mxu0 0.0
        %1917 = vmatpush1.msra.mxu0 %v1891
        %1918 = vmatprep.subr.mxu0 0.0
        %1919 = vmatpush1.msra.mxu0 %v1890
        %1920 = vmatprep.subr.mxu0 0.0
        %1921 = vmatpush1.msra.mxu0 %v1889
        %1922 = vmatprep.subr.mxu0 0.0
        %1923 = vmatpush1.msra.mxu0 %v1888
        %1924 = vmatprep.subr.mxu0 0.0
        %1925 = vmatpush1.msra.mxu0 %v1887
        %1926 = vmatprep.subr.mxu0 0.0
        %1927 = vmatpush1.msra.mxu0 %v1886
        %1928 = vmatprep.subr.mxu0 0.0
        %1929 = vmatpush1.msra.mxu0 %v1885
        %1930 = vmatprep.subr.mxu0 0.0
        %1931 = vmatpush1.msra.mxu0 %v1884
        %1932 = vmatprep.subr.mxu0 0.0
        %1933 = vmatpush2.msra.mxu0 0.0
        %1934 = vmatprep.subr.mxu0 0.0
        %1935 = vmatpush2.msra.mxu0 0.0
        %1936 = vmatprep.subr.mxu0 0.0
        %1937 = vmatpush2.msra.mxu0 0.0
        %1938 = vmatprep.subr.mxu0 0.0
        %1939 = vmatpush2.msra.mxu0 0.0
        %1940 = vmatprep.subr.mxu0 0.0
        %1941 = vmatpush2.msra.mxu0 0.0
        %1942 = vmatprep.subr.mxu0 0.0
        %1943 = vmatpush2.msra.mxu0 0.0
        %1944 = vmatprep.subr.mxu0 0.0
        %1945 = vmatpush2.msra.mxu0 0.0
        %1946 = vmatprep.subr.mxu0 0.0
        %1947 = vmatpush2.msra.mxu0 0.0
        %1948 = vmatprep.subr.mxu0 0.0
        %1949 = vmatpush2.msra.mxu0 0.0
        %1950 = vmatprep.subr.mxu0 0.0
        %1951 = vmatpush2.msra.mxu0 0.0
        %1952 = vmatprep.subr.mxu0 0.0
        %1953 = vmatpush2.msra.mxu0 0.0
        %1954 = vmatprep.subr.mxu0 0.0
        %1955 = vmatpush2.msra.mxu0 0.0
        %1956 = vmatprep.subr.mxu0 0.0
        %1957 = vmatpush2.msra.mxu0 0.0
        %1958 = vmatprep.subr.mxu0 0.0
        %1959 = vmatpush2.msra.mxu0 0.0
        %1960 = vmatprep.subr.mxu0 0.0
        %1961 = vmatpush2.msra.mxu0 0.0
        %1962 = vmatprep.subr.mxu0 0.0
        %1963 = vmatpush2.msra.mxu0 0.0
        %1964 = vmatprep.mubr.f32.mxu0 0.0
        %1965 = vmatmul.mubr.f32.gmra.mxu0 %v897
        %v1966 = vpop.f32.mrf.mxu0
        %v1967 = vadd.f32 %v1898, %v1966
        %v1968 = vpop.f32.mrf.mxu0
        %1969 = vdwg.mxu0
        %s1970 = scalar_lea.vmem %s6, 128
        %v1971 = vld [vmem:[%s1970] sm:$0xff]
        %v1972 = vld [vmem:[%s1970 + $0x8] sm:$0xff]
        %v1973 = vld [vmem:[%s1970 + $0x10] sm:$0xff]
        %v1974 = vld [vmem:[%s1970 + $0x18] sm:$0xff]
        %v1975 = vld [vmem:[%s1970 + $0x20] sm:$0xff]
        %v1976 = vld [vmem:[%s1970 + $0x28] sm:$0xff]
        %v1977 = vld [vmem:[%s1970 + $0x30] sm:$0xff]
        %v1978 = vld [vmem:[%s1970 + $0x38] sm:$0xff]
        %s1979 = scalar_lea.vmem %s7, 2
        %v1980 = vld [vmem:[%s1979] sm:$0x1]
        %v1982 = vlaneseq
        %v1983 = vshrl.u32 %v1982, 7
        %v1984 = vsub.s32 0, %v1983
        %v1985 = vrot.slane %v1980, %v1984
        %1987 = vmatprep.subr.mxu0 0.0
        %1988 = vmatpush1.msra.mxu0 0.0
        %1989 = vmatprep.subr.mxu0 0.0
        %1990 = vmatpush1.msra.mxu0 0.0
        %1991 = vmatprep.subr.mxu0 0.0
        %1992 = vmatpush1.msra.mxu0 0.0
        %1993 = vmatprep.subr.mxu0 0.0
        %1994 = vmatpush1.msra.mxu0 0.0
        %1995 = vmatprep.subr.mxu0 0.0
        %1996 = vmatpush1.msra.mxu0 0.0
        %1997 = vmatprep.subr.mxu0 0.0
        %1998 = vmatpush1.msra.mxu0 0.0
        %1999 = vmatprep.subr.mxu0 0.0
        %2000 = vmatpush1.msra.mxu0 0.0
        %2001 = vmatprep.subr.mxu0 0.0
        %2002 = vmatpush1.msra.mxu0 0.0
        %2003 = vmatprep.subr.mxu0 0.0
        %2004 = vmatpush1.msra.mxu0 %v1978
        %2005 = vmatprep.subr.mxu0 0.0
        %2006 = vmatpush1.msra.mxu0 %v1977
        %2007 = vmatprep.subr.mxu0 0.0
        %2008 = vmatpush1.msra.mxu0 %v1976
        %2009 = vmatprep.subr.mxu0 0.0
        %2010 = vmatpush1.msra.mxu0 %v1975
        %2011 = vmatprep.subr.mxu0 0.0
        %2012 = vmatpush1.msra.mxu0 %v1974
        %2013 = vmatprep.subr.mxu0 0.0
        %2014 = vmatpush1.msra.mxu0 %v1973
        %2015 = vmatprep.subr.mxu0 0.0
        %2016 = vmatpush1.msra.mxu0 %v1972
        %2017 = vmatprep.subr.mxu0 0.0
        %2018 = vmatpush1.msra.mxu0 %v1971
        %2019 = vmatprep.subr.mxu0 0.0
        %2020 = vmatpush2.msra.mxu0 0.0
        %2021 = vmatprep.subr.mxu0 0.0
        %2022 = vmatpush2.msra.mxu0 0.0
        %2023 = vmatprep.subr.mxu0 0.0
        %2024 = vmatpush2.msra.mxu0 0.0
        %2025 = vmatprep.subr.mxu0 0.0
        %2026 = vmatpush2.msra.mxu0 0.0
        %2027 = vmatprep.subr.mxu0 0.0
        %2028 = vmatpush2.msra.mxu0 0.0
        %2029 = vmatprep.subr.mxu0 0.0
        %2030 = vmatpush2.msra.mxu0 0.0
        %2031 = vmatprep.subr.mxu0 0.0
        %2032 = vmatpush2.msra.mxu0 0.0
        %2033 = vmatprep.subr.mxu0 0.0
        %2034 = vmatpush2.msra.mxu0 0.0
        %2035 = vmatprep.subr.mxu0 0.0
        %2036 = vmatpush2.msra.mxu0 0.0
        %2037 = vmatprep.subr.mxu0 0.0
        %2038 = vmatpush2.msra.mxu0 0.0
        %2039 = vmatprep.subr.mxu0 0.0
        %2040 = vmatpush2.msra.mxu0 0.0
        %2041 = vmatprep.subr.mxu0 0.0
        %2042 = vmatpush2.msra.mxu0 0.0
        %2043 = vmatprep.subr.mxu0 0.0
        %2044 = vmatpush2.msra.mxu0 0.0
        %2045 = vmatprep.subr.mxu0 0.0
        %2046 = vmatpush2.msra.mxu0 0.0
        %2047 = vmatprep.subr.mxu0 0.0
        %2048 = vmatpush2.msra.mxu0 0.0
        %2049 = vmatprep.subr.mxu0 0.0
        %2050 = vmatpush2.msra.mxu0 0.0
        %2051 = vmatprep.mubr.f32.mxu0 0.0
        %2052 = vmatmul.mubr.f32.gmra.mxu0 %v897
        %v2053 = vpop.f32.mrf.mxu0
        %v2054 = vadd.f32 %v1985, %v2053
        %v2055 = vpop.f32.mrf.mxu0
        %2056 = vdwg.mxu0
        %s2057 = scalar_lea.vmem %s8, 128
        %v2058 = vld [vmem:[%s2057] sm:$0xff]
        %v2059 = vld [vmem:[%s2057 + $0x8] sm:$0xff]
        %v2060 = vld [vmem:[%s2057 + $0x10] sm:$0xff]
        %v2061 = vld [vmem:[%s2057 + $0x18] sm:$0xff]
        %v2062 = vld [vmem:[%s2057 + $0x20] sm:$0xff]
        %v2063 = vld [vmem:[%s2057 + $0x28] sm:$0xff]
        %v2064 = vld [vmem:[%s2057 + $0x30] sm:$0xff]
        %v2065 = vld [vmem:[%s2057 + $0x38] sm:$0xff]
        %s2066 = scalar_lea.vmem %s9, 2
        %v2067 = vld [vmem:[%s2066] sm:$0x1]
        %v2069 = vlaneseq
        %v2070 = vshrl.u32 %v2069, 7
        %v2071 = vsub.s32 0, %v2070
        %v2072 = vrot.slane %v2067, %v2071
        %2074 = vmatprep.subr.mxu0 0.0
        %2075 = vmatpush1.msra.mxu0 0.0
        %2076 = vmatprep.subr.mxu0 0.0
        %2077 = vmatpush1.msra.mxu0 0.0
        %2078 = vmatprep.subr.mxu0 0.0
        %2079 = vmatpush1.msra.mxu0 0.0
        %2080 = vmatprep.subr.mxu0 0.0
        %2081 = vmatpush1.msra.mxu0 0.0
        %2082 = vmatprep.subr.mxu0 0.0
        %2083 = vmatpush1.msra.mxu0 0.0
        %2084 = vmatprep.subr.mxu0 0.0
        %2085 = vmatpush1.msra.mxu0 0.0
        %2086 = vmatprep.subr.mxu0 0.0
        %2087 = vmatpush1.msra.mxu0 0.0
        %2088 = vmatprep.subr.mxu0 0.0
        %2089 = vmatpush1.msra.mxu0 0.0
        %2090 = vmatprep.subr.mxu0 0.0
        %2091 = vmatpush1.msra.mxu0 %v2065
        %2092 = vmatprep.subr.mxu0 0.0
        %2093 = vmatpush1.msra.mxu0 %v2064
        %2094 = vmatprep.subr.mxu0 0.0
        %2095 = vmatpush1.msra.mxu0 %v2063
        %2096 = vmatprep.subr.mxu0 0.0
        %2097 = vmatpush1.msra.mxu0 %v2062
        %2098 = vmatprep.subr.mxu0 0.0
        %2099 = vmatpush1.msra.mxu0 %v2061
        %2100 = vmatprep.subr.mxu0 0.0
        %2101 = vmatpush1.msra.mxu0 %v2060
        %2102 = vmatprep.subr.mxu0 0.0
        %2103 = vmatpush1.msra.mxu0 %v2059
        %2104 = vmatprep.subr.mxu0 0.0
        %2105 = vmatpush1.msra.mxu0 %v2058
        %2106 = vmatprep.subr.mxu0 0.0
        %2107 = vmatpush2.msra.mxu0 0.0
        %2108 = vmatprep.subr.mxu0 0.0
        %2109 = vmatpush2.msra.mxu0 0.0
        %2110 = vmatprep.subr.mxu0 0.0
        %2111 = vmatpush2.msra.mxu0 0.0
        %2112 = vmatprep.subr.mxu0 0.0
        %2113 = vmatpush2.msra.mxu0 0.0
        %2114 = vmatprep.subr.mxu0 0.0
        %2115 = vmatpush2.msra.mxu0 0.0
        %2116 = vmatprep.subr.mxu0 0.0
        %2117 = vmatpush2.msra.mxu0 0.0
        %2118 = vmatprep.subr.mxu0 0.0
        %2119 = vmatpush2.msra.mxu0 0.0
        %2120 = vmatprep.subr.mxu0 0.0
        %2121 = vmatpush2.msra.mxu0 0.0
        %2122 = vmatprep.subr.mxu0 0.0
        %2123 = vmatpush2.msra.mxu0 0.0
        %2124 = vmatprep.subr.mxu0 0.0
        %2125 = vmatpush2.msra.mxu0 0.0
        %2126 = vmatprep.subr.mxu0 0.0
        %2127 = vmatpush2.msra.mxu0 0.0
        %2128 = vmatprep.subr.mxu0 0.0
        %2129 = vmatpush2.msra.mxu0 0.0
        %2130 = vmatprep.subr.mxu0 0.0
        %2131 = vmatpush2.msra.mxu0 0.0
        %2132 = vmatprep.subr.mxu0 0.0
        %2133 = vmatpush2.msra.mxu0 0.0
        %2134 = vmatprep.subr.mxu0 0.0
        %2135 = vmatpush2.msra.mxu0 0.0
        %2136 = vmatprep.subr.mxu0 0.0
        %2137 = vmatpush2.msra.mxu0 0.0
        %2138 = vmatprep.mubr.f32.mxu0 0.0
        %2139 = vmatmul.mubr.f32.gmra.mxu0 %v897
        %v2140 = vpop.f32.mrf.mxu0
        %v2141 = vadd.f32 %v2072, %v2140
        %v2142 = vpop.f32.mrf.mxu0
        %2143 = vdwg.mxu0
        %v2145 = vsel %vm1139, %v1967, 0
        %v2148 = vsel %vm1139, %v2054, 0
        %2150 = vmatprep.subr.mxu0 0.0
        %2151 = vmatpush1.xpose.msra.mxu0 0.0
        %2152 = vmatprep.subr.mxu0 0.0
        %2153 = vmatpush1.xpose.msra.mxu0 0.0
        %2154 = vmatprep.subr.mxu0 0.0
        %2155 = vmatpush1.xpose.msra.mxu0 0.0
        %2156 = vmatprep.subr.mxu0 0.0
        %2157 = vmatpush1.xpose.msra.mxu0 0.0
        %2158 = vmatprep.subr.mxu0 0.0
        %2159 = vmatpush1.xpose.msra.mxu0 0.0
        %2160 = vmatprep.subr.mxu0 0.0
        %2161 = vmatpush1.xpose.msra.mxu0 0.0
        %2162 = vmatprep.subr.mxu0 0.0
        %2163 = vmatpush1.xpose.msra.mxu0 0.0
        %2164 = vmatprep.subr.mxu0 0.0
        %2165 = vmatpush1.xpose.msra.mxu0 0.0
        %2166 = vmatprep.subr.mxu0 0.0
        %2167 = vmatpush1.xpose.msra.mxu0 0.0
        %2168 = vmatprep.subr.mxu0 0.0
        %2169 = vmatpush1.xpose.msra.mxu0 0.0
        %2170 = vmatprep.subr.mxu0 0.0
        %2171 = vmatpush1.xpose.msra.mxu0 0.0
        %2172 = vmatprep.subr.mxu0 0.0
        %2173 = vmatpush1.xpose.msra.mxu0 0.0
        %2174 = vmatprep.subr.mxu0 0.0
        %2175 = vmatpush1.xpose.msra.mxu0 0.0
        %2176 = vmatprep.subr.mxu0 0.0
        %2177 = vmatpush1.xpose.msra.mxu0 0.0
        %2178 = vmatprep.subr.mxu0 0.0
        %2179 = vmatpush1.xpose.msra.mxu0 0.0
        %2180 = vmatprep.subr.mxu0 0.0
        %2181 = vmatpush1.xpose.msra.mxu0 %v2148
        %2182 = vmatprep.subr.mxu0 0.0
        %2183 = vmatpush2.xpose.msra.mxu0 0.0
        %2184 = vmatprep.subr.mxu0 0.0
        %2185 = vmatpush2.xpose.msra.mxu0 0.0
        %2186 = vmatprep.subr.mxu0 0.0
        %2187 = vmatpush2.xpose.msra.mxu0 0.0
        %2188 = vmatprep.subr.mxu0 0.0
        %2189 = vmatpush2.xpose.msra.mxu0 0.0
        %2190 = vmatprep.subr.mxu0 0.0
        %2191 = vmatpush2.xpose.msra.mxu0 0.0
        %2192 = vmatprep.subr.mxu0 0.0
        %2193 = vmatpush2.xpose.msra.mxu0 0.0
        %2194 = vmatprep.subr.mxu0 0.0
        %2195 = vmatpush2.xpose.msra.mxu0 0.0
        %2196 = vmatprep.subr.mxu0 0.0
        %2197 = vmatpush2.xpose.msra.mxu0 0.0
        %2198 = vmatprep.subr.mxu0 0.0
        %2199 = vmatpush2.xpose.msra.mxu0 0.0
        %2200 = vmatprep.subr.mxu0 0.0
        %2201 = vmatpush2.xpose.msra.mxu0 0.0
        %2202 = vmatprep.subr.mxu0 0.0
        %2203 = vmatpush2.xpose.msra.mxu0 0.0
        %2204 = vmatprep.subr.mxu0 0.0
        %2205 = vmatpush2.xpose.msra.mxu0 0.0
        %2206 = vmatprep.subr.mxu0 0.0
        %2207 = vmatpush2.xpose.msra.mxu0 0.0
        %2208 = vmatprep.subr.mxu0 0.0
        %2209 = vmatpush2.xpose.msra.mxu0 0.0
        %2210 = vmatprep.subr.mxu0 0.0
        %2211 = vmatpush2.xpose.msra.mxu0 0.0
        %2212 = vmatprep.subr.mxu0 0.0
        %2213 = vmatpush2.xpose.msra.mxu0 0.0
        %2214 = vmatprep.mubr.f32.mxu0 0.0
        %2215 = vmatmul.mubr.f32.gmra.mxu0 %v2145
        %v2216 = vpop.f32.mrf.mxu0
        %v2217 = vadd.f32 0.0, %v2216
        %v2218 = vpop.f32.mrf.mxu0
        %2219 = vdwg.mxu0
        %v2220 = vsel %vm1216, %v2217, -inf
        %2221 = vmax.xlane.f32.xlu0 %v2220
        %v2222 = vpop.xlane.xlu0 %2221
        %v2223 = vsub.f32 %v2217, %v2222
        %v2224 = vmul.f32 %v2223, 1.442695
        %v2225 = vpow.pop %v2224
        %v2226 = vsel %vm1216, %v2225, 0.0
        %2227 = vadd.xlane.f32.xlu0 %v2226
        %v2228 = vpop.xlane.xlu0 %2227
        %v2229 = vrcp.pop %v2228
        %v2230 = vmul.f32 %v2225, %v2229
        %v2232 = vsel %vm1228, %v2230, 0
        %v2235 = vsel %vm1232, %v2141, 0
        %2237 = vmatprep.subr.mxu0 0.0
        %2238 = vmatpush1.msra.mxu0 0.0
        %2239 = vmatprep.subr.mxu0 0.0
        %2240 = vmatpush1.msra.mxu0 0.0
        %2241 = vmatprep.subr.mxu0 0.0
        %2242 = vmatpush1.msra.mxu0 0.0
        %2243 = vmatprep.subr.mxu0 0.0
        %2244 = vmatpush1.msra.mxu0 0.0
        %2245 = vmatprep.subr.mxu0 0.0
        %2246 = vmatpush1.msra.mxu0 0.0
        %2247 = vmatprep.subr.mxu0 0.0
        %2248 = vmatpush1.msra.mxu0 0.0
        %2249 = vmatprep.subr.mxu0 0.0
        %2250 = vmatpush1.msra.mxu0 0.0
        %2251 = vmatprep.subr.mxu0 0.0
        %2252 = vmatpush1.msra.mxu0 0.0
        %2253 = vmatprep.subr.mxu0 0.0
        %2254 = vmatpush1.msra.mxu0 0.0
        %2255 = vmatprep.subr.mxu0 0.0
        %2256 = vmatpush1.msra.mxu0 0.0
        %2257 = vmatprep.subr.mxu0 0.0
        %2258 = vmatpush1.msra.mxu0 0.0
        %2259 = vmatprep.subr.mxu0 0.0
        %2260 = vmatpush1.msra.mxu0 0.0
        %2261 = vmatprep.subr.mxu0 0.0
        %2262 = vmatpush1.msra.mxu0 0.0
        %2263 = vmatprep.subr.mxu0 0.0
        %2264 = vmatpush1.msra.mxu0 0.0
        %2265 = vmatprep.subr.mxu0 0.0
        %2266 = vmatpush1.msra.mxu0 0.0
        %2267 = vmatprep.subr.mxu0 0.0
        %2268 = vmatpush1.msra.mxu0 %v2235
        %2269 = vmatprep.subr.mxu0 0.0
        %2270 = vmatpush2.msra.mxu0 0.0
        %2271 = vmatprep.subr.mxu0 0.0
        %2272 = vmatpush2.msra.mxu0 0.0
        %2273 = vmatprep.subr.mxu0 0.0
        %2274 = vmatpush2.msra.mxu0 0.0
        %2275 = vmatprep.subr.mxu0 0.0
        %2276 = vmatpush2.msra.mxu0 0.0
        %2277 = vmatprep.subr.mxu0 0.0
        %2278 = vmatpush2.msra.mxu0 0.0
        %2279 = vmatprep.subr.mxu0 0.0
        %2280 = vmatpush2.msra.mxu0 0.0
        %2281 = vmatprep.subr.mxu0 0.0
        %2282 = vmatpush2.msra.mxu0 0.0
        %2283 = vmatprep.subr.mxu0 0.0
        %2284 = vmatpush2.msra.mxu0 0.0
        %2285 = vmatprep.subr.mxu0 0.0
        %2286 = vmatpush2.msra.mxu0 0.0
        %2287 = vmatprep.subr.mxu0 0.0
        %2288 = vmatpush2.msra.mxu0 0.0
        %2289 = vmatprep.subr.mxu0 0.0
        %2290 = vmatpush2.msra.mxu0 0.0
        %2291 = vmatprep.subr.mxu0 0.0
        %2292 = vmatpush2.msra.mxu0 0.0
        %2293 = vmatprep.subr.mxu0 0.0
        %2294 = vmatpush2.msra.mxu0 0.0
        %2295 = vmatprep.subr.mxu0 0.0
        %2296 = vmatpush2.msra.mxu0 0.0
        %2297 = vmatprep.subr.mxu0 0.0
        %2298 = vmatpush2.msra.mxu0 0.0
        %2299 = vmatprep.subr.mxu0 0.0
        %2300 = vmatpush2.msra.mxu0 0.0
        %2301 = vmatprep.mubr.f32.mxu0 0.0
        %2302 = vmatmul.mubr.f32.gmra.mxu0 %v2232
        %v2303 = vpop.f32.mrf.mxu0
        %v2304 = vadd.f32 0.0, %v2303
        %v2305 = vpop.f32.mrf.mxu0
        %2306 = vdwg.mxu0
        %s2307 = scalar_lea.vmem %s10, 32
        %v2308 = vld [vmem:[%s2307] sm:$0xff]
        %v2309 = vld [vmem:[%s2307 + $0x8] sm:$0xff]
        %v2311 = vsel %vm1139, %v2304, 0
        %2313 = vmatprep.subr.mxu0 0.0
        %2314 = vmatpush1.msra.mxu0 0.0
        %2315 = vmatprep.subr.mxu0 0.0
        %2316 = vmatpush1.msra.mxu0 0.0
        %2317 = vmatprep.subr.mxu0 0.0
        %2318 = vmatpush1.msra.mxu0 0.0
        %2319 = vmatprep.subr.mxu0 0.0
        %2320 = vmatpush1.msra.mxu0 0.0
        %2321 = vmatprep.subr.mxu0 0.0
        %2322 = vmatpush1.msra.mxu0 0.0
        %2323 = vmatprep.subr.mxu0 0.0
        %2324 = vmatpush1.msra.mxu0 0.0
        %2325 = vmatprep.subr.mxu0 0.0
        %2326 = vmatpush1.msra.mxu0 0.0
        %2327 = vmatprep.subr.mxu0 0.0
        %2328 = vmatpush1.msra.mxu0 0.0
        %2329 = vmatprep.subr.mxu0 0.0
        %2330 = vmatpush1.msra.mxu0 0.0
        %2331 = vmatprep.subr.mxu0 0.0
        %2332 = vmatpush1.msra.mxu0 0.0
        %2333 = vmatprep.subr.mxu0 0.0
        %2334 = vmatpush1.msra.mxu0 0.0
        %2335 = vmatprep.subr.mxu0 0.0
        %2336 = vmatpush1.msra.mxu0 0.0
        %2337 = vmatprep.subr.mxu0 0.0
        %2338 = vmatpush1.msra.mxu0 0.0
        %2339 = vmatprep.subr.mxu0 0.0
        %2340 = vmatpush1.msra.mxu0 0.0
        %2341 = vmatprep.subr.mxu0 0.0
        %2342 = vmatpush1.msra.mxu0 %v2309
        %2343 = vmatprep.subr.mxu0 0.0
        %2344 = vmatpush1.msra.mxu0 %v2308
        %2345 = vmatprep.subr.mxu0 0.0
        %2346 = vmatpush2.msra.mxu0 0.0
        %2347 = vmatprep.subr.mxu0 0.0
        %2348 = vmatpush2.msra.mxu0 0.0
        %2349 = vmatprep.subr.mxu0 0.0
        %2350 = vmatpush2.msra.mxu0 0.0
        %2351 = vmatprep.subr.mxu0 0.0
        %2352 = vmatpush2.msra.mxu0 0.0
        %2353 = vmatprep.subr.mxu0 0.0
        %2354 = vmatpush2.msra.mxu0 0.0
        %2355 = vmatprep.subr.mxu0 0.0
        %2356 = vmatpush2.msra.mxu0 0.0
        %2357 = vmatprep.subr.mxu0 0.0
        %2358 = vmatpush2.msra.mxu0 0.0
        %2359 = vmatprep.subr.mxu0 0.0
        %2360 = vmatpush2.msra.mxu0 0.0
        %2361 = vmatprep.subr.mxu0 0.0
        %2362 = vmatpush2.msra.mxu0 0.0
        %2363 = vmatprep.subr.mxu0 0.0
        %2364 = vmatpush2.msra.mxu0 0.0
        %2365 = vmatprep.subr.mxu0 0.0
        %2366 = vmatpush2.msra.mxu0 0.0
        %2367 = vmatprep.subr.mxu0 0.0
        %2368 = vmatpush2.msra.mxu0 0.0
        %2369 = vmatprep.subr.mxu0 0.0
        %2370 = vmatpush2.msra.mxu0 0.0
        %2371 = vmatprep.subr.mxu0 0.0
        %2372 = vmatpush2.msra.mxu0 0.0
        %2373 = vmatprep.subr.mxu0 0.0
        %2374 = vmatpush2.msra.mxu0 0.0
        %2375 = vmatprep.subr.mxu0 0.0
        %2376 = vmatpush2.msra.mxu0 0.0
        %2377 = vmatprep.mubr.f32.mxu0 0.0
        %2378 = vmatmul.mubr.f32.gmra.mxu0 %v2311
        %v2379 = vpop.f32.mrf.mxu0
        %v2380 = vadd.f32 0.0, %v2379
        %v2381 = vpop.f32.mrf.mxu0
        %2382 = vdwg.mxu0
        %v2383 = vadd.f32 %v1882, %v2380
        %s2384 = scalar_lea.vmem %s4, 192
        %v2385 = vld [vmem:[%s2384] sm:$0xff]
        %v2386 = vld [vmem:[%s2384 + $0x8] sm:$0xff]
        %v2387 = vld [vmem:[%s2384 + $0x10] sm:$0xff]
        %v2388 = vld [vmem:[%s2384 + $0x18] sm:$0xff]
        %v2389 = vld [vmem:[%s2384 + $0x20] sm:$0xff]
        %v2390 = vld [vmem:[%s2384 + $0x28] sm:$0xff]
        %v2391 = vld [vmem:[%s2384 + $0x30] sm:$0xff]
        %v2392 = vld [vmem:[%s2384 + $0x38] sm:$0xff]
        %s2393 = scalar_lea.vmem %s5, 3
        %v2394 = vld [vmem:[%s2393] sm:$0x1]
        %v2396 = vlaneseq
        %v2397 = vshrl.u32 %v2396, 7
        %v2398 = vsub.s32 0, %v2397
        %v2399 = vrot.slane %v2394, %v2398
        %2401 = vmatprep.subr.mxu0 0.0
        %2402 = vmatpush1.msra.mxu0 0.0
        %2403 = vmatprep.subr.mxu0 0.0
        %2404 = vmatpush1.msra.mxu0 0.0
        %2405 = vmatprep.subr.mxu0 0.0
        %2406 = vmatpush1.msra.mxu0 0.0
        %2407 = vmatprep.subr.mxu0 0.0
        %2408 = vmatpush1.msra.mxu0 0.0
        %2409 = vmatprep.subr.mxu0 0.0
        %2410 = vmatpush1.msra.mxu0 0.0
        %2411 = vmatprep.subr.mxu0 0.0
        %2412 = vmatpush1.msra.mxu0 0.0
        %2413 = vmatprep.subr.mxu0 0.0
        %2414 = vmatpush1.msra.mxu0 0.0
        %2415 = vmatprep.subr.mxu0 0.0
        %2416 = vmatpush1.msra.mxu0 0.0
        %2417 = vmatprep.subr.mxu0 0.0
        %2418 = vmatpush1.msra.mxu0 %v2392
        %2419 = vmatprep.subr.mxu0 0.0
        %2420 = vmatpush1.msra.mxu0 %v2391
        %2421 = vmatprep.subr.mxu0 0.0
        %2422 = vmatpush1.msra.mxu0 %v2390
        %2423 = vmatprep.subr.mxu0 0.0
        %2424 = vmatpush1.msra.mxu0 %v2389
        %2425 = vmatprep.subr.mxu0 0.0
        %2426 = vmatpush1.msra.mxu0 %v2388
        %2427 = vmatprep.subr.mxu0 0.0
        %2428 = vmatpush1.msra.mxu0 %v2387
        %2429 = vmatprep.subr.mxu0 0.0
        %2430 = vmatpush1.msra.mxu0 %v2386
        %2431 = vmatprep.subr.mxu0 0.0
        %2432 = vmatpush1.msra.mxu0 %v2385
        %2433 = vmatprep.subr.mxu0 0.0
        %2434 = vmatpush2.msra.mxu0 0.0
        %2435 = vmatprep.subr.mxu0 0.0
        %2436 = vmatpush2.msra.mxu0 0.0
        %2437 = vmatprep.subr.mxu0 0.0
        %2438 = vmatpush2.msra.mxu0 0.0
        %2439 = vmatprep.subr.mxu0 0.0
        %2440 = vmatpush2.msra.mxu0 0.0
        %2441 = vmatprep.subr.mxu0 0.0
        %2442 = vmatpush2.msra.mxu0 0.0
        %2443 = vmatprep.subr.mxu0 0.0
        %2444 = vmatpush2.msra.mxu0 0.0
        %2445 = vmatprep.subr.mxu0 0.0
        %2446 = vmatpush2.msra.mxu0 0.0
        %2447 = vmatprep.subr.mxu0 0.0
        %2448 = vmatpush2.msra.mxu0 0.0
        %2449 = vmatprep.subr.mxu0 0.0
        %2450 = vmatpush2.msra.mxu0 0.0
        %2451 = vmatprep.subr.mxu0 0.0
        %2452 = vmatpush2.msra.mxu0 0.0
        %2453 = vmatprep.subr.mxu0 0.0
        %2454 = vmatpush2.msra.mxu0 0.0
        %2455 = vmatprep.subr.mxu0 0.0
        %2456 = vmatpush2.msra.mxu0 0.0
        %2457 = vmatprep.subr.mxu0 0.0
        %2458 = vmatpush2.msra.mxu0 0.0
        %2459 = vmatprep.subr.mxu0 0.0
        %2460 = vmatpush2.msra.mxu0 0.0
        %2461 = vmatprep.subr.mxu0 0.0
        %2462 = vmatpush2.msra.mxu0 0.0
        %2463 = vmatprep.subr.mxu0 0.0
        %2464 = vmatpush2.msra.mxu0 0.0
        %2465 = vmatprep.mubr.f32.mxu0 0.0
        %2466 = vmatmul.mubr.f32.gmra.mxu0 %v897
        %v2467 = vpop.f32.mrf.mxu0
        %v2468 = vadd.f32 %v2399, %v2467
        %v2469 = vpop.f32.mrf.mxu0
        %2470 = vdwg.mxu0
        %s2471 = scalar_lea.vmem %s6, 192
        %v2472 = vld [vmem:[%s2471] sm:$0xff]
        %v2473 = vld [vmem:[%s2471 + $0x8] sm:$0xff]
        %v2474 = vld [vmem:[%s2471 + $0x10] sm:$0xff]
        %v2475 = vld [vmem:[%s2471 + $0x18] sm:$0xff]
        %v2476 = vld [vmem:[%s2471 + $0x20] sm:$0xff]
        %v2477 = vld [vmem:[%s2471 + $0x28] sm:$0xff]
        %v2478 = vld [vmem:[%s2471 + $0x30] sm:$0xff]
        %v2479 = vld [vmem:[%s2471 + $0x38] sm:$0xff]
        %s2480 = scalar_lea.vmem %s7, 3
        %v2481 = vld [vmem:[%s2480] sm:$0x1]
        %v2483 = vlaneseq
        %v2484 = vshrl.u32 %v2483, 7
        %v2485 = vsub.s32 0, %v2484
        %v2486 = vrot.slane %v2481, %v2485
        %2488 = vmatprep.subr.mxu0 0.0
        %2489 = vmatpush1.msra.mxu0 0.0
        %2490 = vmatprep.subr.mxu0 0.0
        %2491 = vmatpush1.msra.mxu0 0.0
        %2492 = vmatprep.subr.mxu0 0.0
        %2493 = vmatpush1.msra.mxu0 0.0
        %2494 = vmatprep.subr.mxu0 0.0
        %2495 = vmatpush1.msra.mxu0 0.0
        %2496 = vmatprep.subr.mxu0 0.0
        %2497 = vmatpush1.msra.mxu0 0.0
        %2498 = vmatprep.subr.mxu0 0.0
        %2499 = vmatpush1.msra.mxu0 0.0
        %2500 = vmatprep.subr.mxu0 0.0
        %2501 = vmatpush1.msra.mxu0 0.0
        %2502 = vmatprep.subr.mxu0 0.0
        %2503 = vmatpush1.msra.mxu0 0.0
        %2504 = vmatprep.subr.mxu0 0.0
        %2505 = vmatpush1.msra.mxu0 %v2479
        %2506 = vmatprep.subr.mxu0 0.0
        %2507 = vmatpush1.msra.mxu0 %v2478
        %2508 = vmatprep.subr.mxu0 0.0
        %2509 = vmatpush1.msra.mxu0 %v2477
        %2510 = vmatprep.subr.mxu0 0.0
        %2511 = vmatpush1.msra.mxu0 %v2476
        %2512 = vmatprep.subr.mxu0 0.0
        %2513 = vmatpush1.msra.mxu0 %v2475
        %2514 = vmatprep.subr.mxu0 0.0
        %2515 = vmatpush1.msra.mxu0 %v2474
        %2516 = vmatprep.subr.mxu0 0.0
        %2517 = vmatpush1.msra.mxu0 %v2473
        %2518 = vmatprep.subr.mxu0 0.0
        %2519 = vmatpush1.msra.mxu0 %v2472
        %2520 = vmatprep.subr.mxu0 0.0
        %2521 = vmatpush2.msra.mxu0 0.0
        %2522 = vmatprep.subr.mxu0 0.0
        %2523 = vmatpush2.msra.mxu0 0.0
        %2524 = vmatprep.subr.mxu0 0.0
        %2525 = vmatpush2.msra.mxu0 0.0
        %2526 = vmatprep.subr.mxu0 0.0
        %2527 = vmatpush2.msra.mxu0 0.0
        %2528 = vmatprep.subr.mxu0 0.0
        %2529 = vmatpush2.msra.mxu0 0.0
        %2530 = vmatprep.subr.mxu0 0.0
        %2531 = vmatpush2.msra.mxu0 0.0
        %2532 = vmatprep.subr.mxu0 0.0
        %2533 = vmatpush2.msra.mxu0 0.0
        %2534 = vmatprep.subr.mxu0 0.0
        %2535 = vmatpush2.msra.mxu0 0.0
        %2536 = vmatprep.subr.mxu0 0.0
        %2537 = vmatpush2.msra.mxu0 0.0
        %2538 = vmatprep.subr.mxu0 0.0
        %2539 = vmatpush2.msra.mxu0 0.0
        %2540 = vmatprep.subr.mxu0 0.0
        %2541 = vmatpush2.msra.mxu0 0.0
        %2542 = vmatprep.subr.mxu0 0.0
        %2543 = vmatpush2.msra.mxu0 0.0
        %2544 = vmatprep.subr.mxu0 0.0
        %2545 = vmatpush2.msra.mxu0 0.0
        %2546 = vmatprep.subr.mxu0 0.0
        %2547 = vmatpush2.msra.mxu0 0.0
        %2548 = vmatprep.subr.mxu0 0.0
        %2549 = vmatpush2.msra.mxu0 0.0
        %2550 = vmatprep.subr.mxu0 0.0
        %2551 = vmatpush2.msra.mxu0 0.0
        %2552 = vmatprep.mubr.f32.mxu0 0.0
        %2553 = vmatmul.mubr.f32.gmra.mxu0 %v897
        %v2554 = vpop.f32.mrf.mxu0
        %v2555 = vadd.f32 %v2486, %v2554
        %v2556 = vpop.f32.mrf.mxu0
        %2557 = vdwg.mxu0
        %s2558 = scalar_lea.vmem %s8, 192
        %v2559 = vld [vmem:[%s2558] sm:$0xff]
        %v2560 = vld [vmem:[%s2558 + $0x8] sm:$0xff]
        %v2561 = vld [vmem:[%s2558 + $0x10] sm:$0xff]
        %v2562 = vld [vmem:[%s2558 + $0x18] sm:$0xff]
        %v2563 = vld [vmem:[%s2558 + $0x20] sm:$0xff]
        %v2564 = vld [vmem:[%s2558 + $0x28] sm:$0xff]
        %v2565 = vld [vmem:[%s2558 + $0x30] sm:$0xff]
        %v2566 = vld [vmem:[%s2558 + $0x38] sm:$0xff]
        %s2567 = scalar_lea.vmem %s9, 3
        %v2568 = vld [vmem:[%s2567] sm:$0x1]
        %v2570 = vlaneseq
        %v2571 = vshrl.u32 %v2570, 7
        %v2572 = vsub.s32 0, %v2571
        %v2573 = vrot.slane %v2568, %v2572
        %2575 = vmatprep.subr.mxu0 0.0
        %2576 = vmatpush1.msra.mxu0 0.0
        %2577 = vmatprep.subr.mxu0 0.0
        %2578 = vmatpush1.msra.mxu0 0.0
        %2579 = vmatprep.subr.mxu0 0.0
        %2580 = vmatpush1.msra.mxu0 0.0
        %2581 = vmatprep.subr.mxu0 0.0
        %2582 = vmatpush1.msra.mxu0 0.0
        %2583 = vmatprep.subr.mxu0 0.0
        %2584 = vmatpush1.msra.mxu0 0.0
        %2585 = vmatprep.subr.mxu0 0.0
        %2586 = vmatpush1.msra.mxu0 0.0
        %2587 = vmatprep.subr.mxu0 0.0
        %2588 = vmatpush1.msra.mxu0 0.0
        %2589 = vmatprep.subr.mxu0 0.0
        %2590 = vmatpush1.msra.mxu0 0.0
        %2591 = vmatprep.subr.mxu0 0.0
        %2592 = vmatpush1.msra.mxu0 %v2566
        %2593 = vmatprep.subr.mxu0 0.0
        %2594 = vmatpush1.msra.mxu0 %v2565
        %2595 = vmatprep.subr.mxu0 0.0
        %2596 = vmatpush1.msra.mxu0 %v2564
        %2597 = vmatprep.subr.mxu0 0.0
        %2598 = vmatpush1.msra.mxu0 %v2563
        %2599 = vmatprep.subr.mxu0 0.0
        %2600 = vmatpush1.msra.mxu0 %v2562
        %2601 = vmatprep.subr.mxu0 0.0
        %2602 = vmatpush1.msra.mxu0 %v2561
        %2603 = vmatprep.subr.mxu0 0.0
        %2604 = vmatpush1.msra.mxu0 %v2560
        %2605 = vmatprep.subr.mxu0 0.0
        %2606 = vmatpush1.msra.mxu0 %v2559
        %2607 = vmatprep.subr.mxu0 0.0
        %2608 = vmatpush2.msra.mxu0 0.0
        %2609 = vmatprep.subr.mxu0 0.0
        %2610 = vmatpush2.msra.mxu0 0.0
        %2611 = vmatprep.subr.mxu0 0.0
        %2612 = vmatpush2.msra.mxu0 0.0
        %2613 = vmatprep.subr.mxu0 0.0
        %2614 = vmatpush2.msra.mxu0 0.0
        %2615 = vmatprep.subr.mxu0 0.0
        %2616 = vmatpush2.msra.mxu0 0.0
        %2617 = vmatprep.subr.mxu0 0.0
        %2618 = vmatpush2.msra.mxu0 0.0
        %2619 = vmatprep.subr.mxu0 0.0
        %2620 = vmatpush2.msra.mxu0 0.0
        %2621 = vmatprep.subr.mxu0 0.0
        %2622 = vmatpush2.msra.mxu0 0.0
        %2623 = vmatprep.subr.mxu0 0.0
        %2624 = vmatpush2.msra.mxu0 0.0
        %2625 = vmatprep.subr.mxu0 0.0
        %2626 = vmatpush2.msra.mxu0 0.0
        %2627 = vmatprep.subr.mxu0 0.0
        %2628 = vmatpush2.msra.mxu0 0.0
        %2629 = vmatprep.subr.mxu0 0.0
        %2630 = vmatpush2.msra.mxu0 0.0
        %2631 = vmatprep.subr.mxu0 0.0
        %2632 = vmatpush2.msra.mxu0 0.0
        %2633 = vmatprep.subr.mxu0 0.0
        %2634 = vmatpush2.msra.mxu0 0.0
        %2635 = vmatprep.subr.mxu0 0.0
        %2636 = vmatpush2.msra.mxu0 0.0
        %2637 = vmatprep.subr.mxu0 0.0
        %2638 = vmatpush2.msra.mxu0 0.0
        %2639 = vmatprep.mubr.f32.mxu0 0.0
        %2640 = vmatmul.mubr.f32.gmra.mxu0 %v897
        %v2641 = vpop.f32.mrf.mxu0
        %v2642 = vadd.f32 %v2573, %v2641
        %v2643 = vpop.f32.mrf.mxu0
        %2644 = vdwg.mxu0
        %v2646 = vsel %vm1139, %v2468, 0
        %v2649 = vsel %vm1139, %v2555, 0
        %2651 = vmatprep.subr.mxu0 0.0
        %2652 = vmatpush1.xpose.msra.mxu0 0.0
        %2653 = vmatprep.subr.mxu0 0.0
        %2654 = vmatpush1.xpose.msra.mxu0 0.0
        %2655 = vmatprep.subr.mxu0 0.0
        %2656 = vmatpush1.xpose.msra.mxu0 0.0
        %2657 = vmatprep.subr.mxu0 0.0
        %2658 = vmatpush1.xpose.msra.mxu0 0.0
        %2659 = vmatprep.subr.mxu0 0.0
        %2660 = vmatpush1.xpose.msra.mxu0 0.0
        %2661 = vmatprep.subr.mxu0 0.0
        %2662 = vmatpush1.xpose.msra.mxu0 0.0
        %2663 = vmatprep.subr.mxu0 0.0
        %2664 = vmatpush1.xpose.msra.mxu0 0.0
        %2665 = vmatprep.subr.mxu0 0.0
        %2666 = vmatpush1.xpose.msra.mxu0 0.0
        %2667 = vmatprep.subr.mxu0 0.0
        %2668 = vmatpush1.xpose.msra.mxu0 0.0
        %2669 = vmatprep.subr.mxu0 0.0
        %2670 = vmatpush1.xpose.msra.mxu0 0.0
        %2671 = vmatprep.subr.mxu0 0.0
        %2672 = vmatpush1.xpose.msra.mxu0 0.0
        %2673 = vmatprep.subr.mxu0 0.0
        %2674 = vmatpush1.xpose.msra.mxu0 0.0
        %2675 = vmatprep.subr.mxu0 0.0
        %2676 = vmatpush1.xpose.msra.mxu0 0.0
        %2677 = vmatprep.subr.mxu0 0.0
        %2678 = vmatpush1.xpose.msra.mxu0 0.0
        %2679 = vmatprep.subr.mxu0 0.0
        %2680 = vmatpush1.xpose.msra.mxu0 0.0
        %2681 = vmatprep.subr.mxu0 0.0
        %2682 = vmatpush1.xpose.msra.mxu0 %v2649
        %2683 = vmatprep.subr.mxu0 0.0
        %2684 = vmatpush2.xpose.msra.mxu0 0.0
        %2685 = vmatprep.subr.mxu0 0.0
        %2686 = vmatpush2.xpose.msra.mxu0 0.0
        %2687 = vmatprep.subr.mxu0 0.0
        %2688 = vmatpush2.xpose.msra.mxu0 0.0
        %2689 = vmatprep.subr.mxu0 0.0
        %2690 = vmatpush2.xpose.msra.mxu0 0.0
        %2691 = vmatprep.subr.mxu0 0.0
        %2692 = vmatpush2.xpose.msra.mxu0 0.0
        %2693 = vmatprep.subr.mxu0 0.0
        %2694 = vmatpush2.xpose.msra.mxu0 0.0
        %2695 = vmatprep.subr.mxu0 0.0
        %2696 = vmatpush2.xpose.msra.mxu0 0.0
        %2697 = vmatprep.subr.mxu0 0.0
        %2698 = vmatpush2.xpose.msra.mxu0 0.0
        %2699 = vmatprep.subr.mxu0 0.0
        %2700 = vmatpush2.xpose.msra.mxu0 0.0
        %2701 = vmatprep.subr.mxu0 0.0
        %2702 = vmatpush2.xpose.msra.mxu0 0.0
        %2703 = vmatprep.subr.mxu0 0.0
        %2704 = vmatpush2.xpose.msra.mxu0 0.0
        %2705 = vmatprep.subr.mxu0 0.0
        %2706 = vmatpush2.xpose.msra.mxu0 0.0
        %2707 = vmatprep.subr.mxu0 0.0
        %2708 = vmatpush2.xpose.msra.mxu0 0.0
        %2709 = vmatprep.subr.mxu0 0.0
        %2710 = vmatpush2.xpose.msra.mxu0 0.0
        %2711 = vmatprep.subr.mxu0 0.0
        %2712 = vmatpush2.xpose.msra.mxu0 0.0
        %2713 = vmatprep.subr.mxu0 0.0
        %2714 = vmatpush2.xpose.msra.mxu0 0.0
        %2715 = vmatprep.mubr.f32.mxu0 0.0
        %2716 = vmatmul.mubr.f32.gmra.mxu0 %v2646
        %v2717 = vpop.f32.mrf.mxu0
        %v2718 = vadd.f32 0.0, %v2717
        %v2719 = vpop.f32.mrf.mxu0
        %2720 = vdwg.mxu0
        %v2721 = vsel %vm1216, %v2718, -inf
        %2722 = vmax.xlane.f32.xlu0 %v2721
        %v2723 = vpop.xlane.xlu0 %2722
        %v2724 = vsub.f32 %v2718, %v2723
        %v2725 = vmul.f32 %v2724, 1.442695
        %v2726 = vpow.pop %v2725
        %v2727 = vsel %vm1216, %v2726, 0.0
        %2728 = vadd.xlane.f32.xlu0 %v2727
        %v2729 = vpop.xlane.xlu0 %2728
        %v2730 = vrcp.pop %v2729
        %v2731 = vmul.f32 %v2726, %v2730
        %v2733 = vsel %vm1228, %v2731, 0
        %v2736 = vsel %vm1232, %v2642, 0
        %2738 = vmatprep.subr.mxu0 0.0
        %2739 = vmatpush1.msra.mxu0 0.0
        %2740 = vmatprep.subr.mxu0 0.0
        %2741 = vmatpush1.msra.mxu0 0.0
        %2742 = vmatprep.subr.mxu0 0.0
        %2743 = vmatpush1.msra.mxu0 0.0
        %2744 = vmatprep.subr.mxu0 0.0
        %2745 = vmatpush1.msra.mxu0 0.0
        %2746 = vmatprep.subr.mxu0 0.0
        %2747 = vmatpush1.msra.mxu0 0.0
        %2748 = vmatprep.subr.mxu0 0.0
        %2749 = vmatpush1.msra.mxu0 0.0
        %2750 = vmatprep.subr.mxu0 0.0
        %2751 = vmatpush1.msra.mxu0 0.0
        %2752 = vmatprep.subr.mxu0 0.0
        %2753 = vmatpush1.msra.mxu0 0.0
        %2754 = vmatprep.subr.mxu0 0.0
        %2755 = vmatpush1.msra.mxu0 0.0
        %2756 = vmatprep.subr.mxu0 0.0
        %2757 = vmatpush1.msra.mxu0 0.0
        %2758 = vmatprep.subr.mxu0 0.0
        %2759 = vmatpush1.msra.mxu0 0.0
        %2760 = vmatprep.subr.mxu0 0.0
        %2761 = vmatpush1.msra.mxu0 0.0
        %2762 = vmatprep.subr.mxu0 0.0
        %2763 = vmatpush1.msra.mxu0 0.0
        %2764 = vmatprep.subr.mxu0 0.0
        %2765 = vmatpush1.msra.mxu0 0.0
        %2766 = vmatprep.subr.mxu0 0.0
        %2767 = vmatpush1.msra.mxu0 0.0
        %2768 = vmatprep.subr.mxu0 0.0
        %2769 = vmatpush1.msra.mxu0 %v2736
        %2770 = vmatprep.subr.mxu0 0.0
        %2771 = vmatpush2.msra.mxu0 0.0
        %2772 = vmatprep.subr.mxu0 0.0
        %2773 = vmatpush2.msra.mxu0 0.0
        %2774 = vmatprep.subr.mxu0 0.0
        %2775 = vmatpush2.msra.mxu0 0.0
        %2776 = vmatprep.subr.mxu0 0.0
        %2777 = vmatpush2.msra.mxu0 0.0
        %2778 = vmatprep.subr.mxu0 0.0
        %2779 = vmatpush2.msra.mxu0 0.0
        %2780 = vmatprep.subr.mxu0 0.0
        %2781 = vmatpush2.msra.mxu0 0.0
        %2782 = vmatprep.subr.mxu0 0.0
        %2783 = vmatpush2.msra.mxu0 0.0
        %2784 = vmatprep.subr.mxu0 0.0
        %2785 = vmatpush2.msra.mxu0 0.0
        %2786 = vmatprep.subr.mxu0 0.0
        %2787 = vmatpush2.msra.mxu0 0.0
        %2788 = vmatprep.subr.mxu0 0.0
        %2789 = vmatpush2.msra.mxu0 0.0
        %2790 = vmatprep.subr.mxu0 0.0
        %2791 = vmatpush2.msra.mxu0 0.0
        %2792 = vmatprep.subr.mxu0 0.0
        %2793 = vmatpush2.msra.mxu0 0.0
        %2794 = vmatprep.subr.mxu0 0.0
        %2795 = vmatpush2.msra.mxu0 0.0
        %2796 = vmatprep.subr.mxu0 0.0
        %2797 = vmatpush2.msra.mxu0 0.0
        %2798 = vmatprep.subr.mxu0 0.0
        %2799 = vmatpush2.msra.mxu0 0.0
        %2800 = vmatprep.subr.mxu0 0.0
        %2801 = vmatpush2.msra.mxu0 0.0
        %2802 = vmatprep.mubr.f32.mxu0 0.0
        %2803 = vmatmul.mubr.f32.gmra.mxu0 %v2733
        %v2804 = vpop.f32.mrf.mxu0
        %v2805 = vadd.f32 0.0, %v2804
        %v2806 = vpop.f32.mrf.mxu0
        %2807 = vdwg.mxu0
        %s2808 = scalar_lea.vmem %s10, 48
        %v2809 = vld [vmem:[%s2808] sm:$0xff]
        %v2810 = vld [vmem:[%s2808 + $0x8] sm:$0xff]
        %v2812 = vsel %vm1139, %v2805, 0
        %2814 = vmatprep.subr.mxu0 0.0
        %2815 = vmatpush1.msra.mxu0 0.0
        %2816 = vmatprep.subr.mxu0 0.0
        %2817 = vmatpush1.msra.mxu0 0.0
        %2818 = vmatprep.subr.mxu0 0.0
        %2819 = vmatpush1.msra.mxu0 0.0
        %2820 = vmatprep.subr.mxu0 0.0
        %2821 = vmatpush1.msra.mxu0 0.0
        %2822 = vmatprep.subr.mxu0 0.0
        %2823 = vmatpush1.msra.mxu0 0.0
        %2824 = vmatprep.subr.mxu0 0.0
        %2825 = vmatpush1.msra.mxu0 0.0
        %2826 = vmatprep.subr.mxu0 0.0
        %2827 = vmatpush1.msra.mxu0 0.0
        %2828 = vmatprep.subr.mxu0 0.0
        %2829 = vmatpush1.msra.mxu0 0.0
        %2830 = vmatprep.subr.mxu0 0.0
        %2831 = vmatpush1.msra.mxu0 0.0
        %2832 = vmatprep.subr.mxu0 0.0
        %2833 = vmatpush1.msra.mxu0 0.0
        %2834 = vmatprep.subr.mxu0 0.0
        %2835 = vmatpush1.msra.mxu0 0.0
        %2836 = vmatprep.subr.mxu0 0.0
        %2837 = vmatpush1.msra.mxu0 0.0
        %2838 = vmatprep.subr.mxu0 0.0
        %2839 = vmatpush1.msra.mxu0 0.0
        %2840 = vmatprep.subr.mxu0 0.0
        %2841 = vmatpush1.msra.mxu0 0.0
        %2842 = vmatprep.subr.mxu0 0.0
        %2843 = vmatpush1.msra.mxu0 %v2810
        %2844 = vmatprep.subr.mxu0 0.0
        %2845 = vmatpush1.msra.mxu0 %v2809
        %2846 = vmatprep.subr.mxu0 0.0
        %2847 = vmatpush2.msra.mxu0 0.0
        %2848 = vmatprep.subr.mxu0 0.0
        %2849 = vmatpush2.msra.mxu0 0.0
        %2850 = vmatprep.subr.mxu0 0.0
        %2851 = vmatpush2.msra.mxu0 0.0
        %2852 = vmatprep.subr.mxu0 0.0
        %2853 = vmatpush2.msra.mxu0 0.0
        %2854 = vmatprep.subr.mxu0 0.0
        %2855 = vmatpush2.msra.mxu0 0.0
        %2856 = vmatprep.subr.mxu0 0.0
        %2857 = vmatpush2.msra.mxu0 0.0
        %2858 = vmatprep.subr.mxu0 0.0
        %2859 = vmatpush2.msra.mxu0 0.0
        %2860 = vmatprep.subr.mxu0 0.0
        %2861 = vmatpush2.msra.mxu0 0.0
        %2862 = vmatprep.subr.mxu0 0.0
        %2863 = vmatpush2.msra.mxu0 0.0
        %2864 = vmatprep.subr.mxu0 0.0
        %2865 = vmatpush2.msra.mxu0 0.0
        %2866 = vmatprep.subr.mxu0 0.0
        %2867 = vmatpush2.msra.mxu0 0.0
        %2868 = vmatprep.subr.mxu0 0.0
        %2869 = vmatpush2.msra.mxu0 0.0
        %2870 = vmatprep.subr.mxu0 0.0
        %2871 = vmatpush2.msra.mxu0 0.0
        %2872 = vmatprep.subr.mxu0 0.0
        %2873 = vmatpush2.msra.mxu0 0.0
        %2874 = vmatprep.subr.mxu0 0.0
        %2875 = vmatpush2.msra.mxu0 0.0
        %2876 = vmatprep.subr.mxu0 0.0
        %2877 = vmatpush2.msra.mxu0 0.0
        %2878 = vmatprep.mubr.f32.mxu0 0.0
        %2879 = vmatmul.mubr.f32.gmra.mxu0 %v2812
        %v2880 = vpop.f32.mrf.mxu0
        %v2881 = vadd.f32 0.0, %v2880
        %v2882 = vpop.f32.mrf.mxu0
        %2883 = vdwg.mxu0
        %v2884 = vadd.f32 %v2383, %v2881
        %v2885 = vadd.f32 %v841, %v2884
        %v2886 = vld [vmem:[%s14] sm:$0x1]
        %v2887 = vld [vmem:[%s15] sm:$0x1]
        %v2888 = vsel %vm844, %v2885, 0.0
        %2889 = vadd.xlane.f32.xlu0 %v2888
        %v2890 = vpop.xlane.xlu0 %2889
        %v2891 = vmul.f32 %v2890, %v848
        %v2892 = vsub.f32 %v2885, %v2891
        %v2893 = vmul.f32 %v2892, %v2892
        %v2894 = vsel %vm844, %v2893, 0.0
        %2895 = vadd.xlane.f32.xlu0 %v2894
        %v2896 = vpop.xlane.xlu0 %2895
        %v2897 = vmul.f32 %v2896, %v848
        %v2898 = vadd.f32 %v2897, 1e-06
        %v2899 = vrsqrt.pop %v2898
        %v2900 = vmul.f32 %v2892, %v2899
        %v2902 = vlaneseq
        %v2903 = vshrl.u32 %v2902, 7
        %v2904 = vsub.s32 0, %v2903
        %v2905 = vrot.slane %v2886, %v2904
        %v2907 = vmul.f32 %v2900, %v2905
        %v2909 = vlaneseq
        %v2910 = vshrl.u32 %v2909, 7
        %v2911 = vsub.s32 0, %v2910
        %v2912 = vrot.slane %v2887, %v2911
        %v2914 = vadd.f32 %v2907, %v2912
        %v2915 = vld [vmem:[%s16] sm:$0xff]
        %v2916 = vld [vmem:[%s16 + $0x8] sm:$0xff]
        %v2917 = vld [vmem:[%s16 + $0x10] sm:$0xff]
        %v2918 = vld [vmem:[%s16 + $0x18] sm:$0xff]
        %v2919 = vld [vmem:[%s16 + $0x20] sm:$0xff]
        %v2920 = vld [vmem:[%s16 + $0x28] sm:$0xff]
        %v2921 = vld [vmem:[%s16 + $0x30] sm:$0xff]
        %v2922 = vld [vmem:[%s16 + $0x38] sm:$0xff]
        %v2923 = vld [vmem:[%s16 + $0x40] sm:$0xff]
        %v2924 = vld [vmem:[%s16 + $0x48] sm:$0xff]
        %v2925 = vld [vmem:[%s16 + $0x50] sm:$0xff]
        %v2926 = vld [vmem:[%s16 + $0x58] sm:$0xff]
        %v2927 = vld [vmem:[%s16 + $0x60] sm:$0xff]
        %v2928 = vld [vmem:[%s16 + $0x68] sm:$0xff]
        %v2929 = vld [vmem:[%s16 + $0x70] sm:$0xff]
        %v2930 = vld [vmem:[%s16 + $0x78] sm:$0xff]
        %v2931 = vld [vmem:[%s17] sm:$0x3]
        %v2933 = vlaneseq
        %v2934 = vshrl.u32 %v2933, 7
        %v2935 = vsub.s32 0, %v2934
        %v2936 = vrot.slane %v2931, %v2935
        %v2937 = vlaneseq
        %v2938 = vshrl.u32 %v2937, 7
        %v2939 = vsub.s32 1, %v2938
        %v2940 = vrot.slane %v2931, %v2939
        %v2944 = vsel %vm766, %v2914, 0
        %2946 = vmatprep.subr.mxu0 0.0
        %2947 = vmatpush1.msra.mxu0 0.0
        %2948 = vmatprep.subr.mxu0 0.0
        %2949 = vmatpush1.msra.mxu0 0.0
        %2950 = vmatprep.subr.mxu0 0.0
        %2951 = vmatpush1.msra.mxu0 0.0
        %2952 = vmatprep.subr.mxu0 0.0
        %2953 = vmatpush1.msra.mxu0 0.0
        %2954 = vmatprep.subr.mxu0 0.0
        %2955 = vmatpush1.msra.mxu0 0.0
        %2956 = vmatprep.subr.mxu0 0.0
        %2957 = vmatpush1.msra.mxu0 0.0
        %2958 = vmatprep.subr.mxu0 0.0
        %2959 = vmatpush1.msra.mxu0 0.0
        %2960 = vmatprep.subr.mxu0 0.0
        %2961 = vmatpush1.msra.mxu0 0.0
        %2962 = vmatprep.subr.mxu0 %v2930
        %2963 = vmatpush1.msra.mxu0 %v2929
        %2964 = vmatprep.subr.mxu0 %v2928
        %2965 = vmatpush1.msra.mxu0 %v2927
        %2966 = vmatprep.subr.mxu0 %v2926
        %2967 = vmatpush1.msra.mxu0 %v2925
        %2968 = vmatprep.subr.mxu0 %v2924
        %2969 = vmatpush1.msra.mxu0 %v2923
        %2970 = vmatprep.subr.mxu0 %v2922
        %2971 = vmatpush1.msra.mxu0 %v2921
        %2972 = vmatprep.subr.mxu0 %v2920
        %2973 = vmatpush1.msra.mxu0 %v2919
        %2974 = vmatprep.subr.mxu0 %v2918
        %2975 = vmatpush1.msra.mxu0 %v2917
        %2976 = vmatprep.subr.mxu0 %v2916
        %2977 = vmatpush1.msra.mxu0 %v2915
        %2978 = vmatprep.subr.mxu0 0.0
        %2979 = vmatpush2.msra.mxu0 0.0
        %2980 = vmatprep.subr.mxu0 0.0
        %2981 = vmatpush2.msra.mxu0 0.0
        %2982 = vmatprep.subr.mxu0 0.0
        %2983 = vmatpush2.msra.mxu0 0.0
        %2984 = vmatprep.subr.mxu0 0.0
        %2985 = vmatpush2.msra.mxu0 0.0
        %2986 = vmatprep.subr.mxu0 0.0
        %2987 = vmatpush2.msra.mxu0 0.0
        %2988 = vmatprep.subr.mxu0 0.0
        %2989 = vmatpush2.msra.mxu0 0.0
        %2990 = vmatprep.subr.mxu0 0.0
        %2991 = vmatpush2.msra.mxu0 0.0
        %2992 = vmatprep.subr.mxu0 0.0
        %2993 = vmatpush2.msra.mxu0 0.0
        %2994 = vmatprep.subr.mxu0 0.0
        %2995 = vmatpush2.msra.mxu0 0.0
        %2996 = vmatprep.subr.mxu0 0.0
        %2997 = vmatpush2.msra.mxu0 0.0
        %2998 = vmatprep.subr.mxu0 0.0
        %2999 = vmatpush2.msra.mxu0 0.0
        %3000 = vmatprep.subr.mxu0 0.0
        %3001 = vmatpush2.msra.mxu0 0.0
        %3002 = vmatprep.subr.mxu0 0.0
        %3003 = vmatpush2.msra.mxu0 0.0
        %3004 = vmatprep.subr.mxu0 0.0
        %3005 = vmatpush2.msra.mxu0 0.0
        %3006 = vmatprep.subr.mxu0 0.0
        %3007 = vmatpush2.msra.mxu0 0.0
        %3008 = vmatprep.subr.mxu0 0.0
        %3009 = vmatpush2.msra.mxu0 0.0
        %3010 = vmatprep.mubr.f32.mxu0 0.0
        %3011 = vmatmul.mubr.f32.gmra.mxu0 %v2944
        %v3012 = vpop.f32.mrf.mxu0
        %v3013 = vadd.f32 %v2936, %v3012
        %v3014 = vpop.f32.mrf.mxu0
        %v3015 = vadd.f32 %v2940, %v3014
        %3016 = vdwg.mxu0
        %v3017 = vmul.f32 %v3013, 0.5
        %v3018 = vmul.f32 %v3015, 0.5
        %v3019 = vmul.f32 %v3013, 0.044715
        %v3020 = vmul.f32 %v3015, 0.044715
        %v3021 = vmul.f32 %v3019, %v3013
        %v3022 = vmul.f32 %v3020, %v3015
        %v3023 = vmul.f32 %v3021, %v3013
        %v3024 = vmul.f32 %v3022, %v3015
        %v3025 = vadd.f32 %v3013, %v3023
        %v3026 = vadd.f32 %v3015, %v3024
        %v3027 = vmul.f32 %v3025, 0.7978846
        %v3028 = vmul.f32 %v3026, 0.7978846
        %v3029 = vtanh.pop %v3027
        %v3030 = vtanh.pop %v3028
        %v3031 = vadd.f32 %v3029, 1.0
        %v3032 = vadd.f32 %v3030, 1.0
        %v3033 = vmul.f32 %v3017, %v3031
        %v3034 = vmul.f32 %v3018, %v3032
        %v3035 = vld [vmem:[%s18] sm:$0xff]
        %v3036 = vld [vmem:[%s18 + $0x8] sm:$0xff]
        %v3037 = vld [vmem:[%s18 + $0x10] sm:$0xff]
        %v3038 = vld [vmem:[%s18 + $0x18] sm:$0xff]
        %v3039 = vld [vmem:[%s18 + $0x20] sm:$0xff]
        %v3040 = vld [vmem:[%s18 + $0x28] sm:$0xff]
        %v3041 = vld [vmem:[%s18 + $0x30] sm:$0xff]
        %v3042 = vld [vmem:[%s18 + $0x38] sm:$0xff]
        %v3043 = vld [vmem:[%s18 + $0x40] sm:$0xff]
        %v3044 = vld [vmem:[%s18 + $0x48] sm:$0xff]
        %v3045 = vld [vmem:[%s18 + $0x50] sm:$0xff]
        %v3046 = vld [vmem:[%s18 + $0x58] sm:$0xff]
        %v3047 = vld [vmem:[%s18 + $0x60] sm:$0xff]
        %v3048 = vld [vmem:[%s18 + $0x68] sm:$0xff]
        %v3049 = vld [vmem:[%s18 + $0x70] sm:$0xff]
        %v3050 = vld [vmem:[%s18 + $0x78] sm:$0xff]
        %v3051 = vld [vmem:[%s18 + $0x80] sm:$0xff]
        %v3052 = vld [vmem:[%s18 + $0x88] sm:$0xff]
        %v3053 = vld [vmem:[%s18 + $0x90] sm:$0xff]
        %v3054 = vld [vmem:[%s18 + $0x98] sm:$0xff]
        %v3055 = vld [vmem:[%s18 + $0xa0] sm:$0xff]
        %v3056 = vld [vmem:[%s18 + $0xa8] sm:$0xff]
        %v3057 = vld [vmem:[%s18 + $0xb0] sm:$0xff]
        %v3058 = vld [vmem:[%s18 + $0xb8] sm:$0xff]
        %v3059 = vld [vmem:[%s18 + $0xc0] sm:$0xff]
        %v3060 = vld [vmem:[%s18 + $0xc8] sm:$0xff]
        %v3061 = vld [vmem:[%s18 + $0xd0] sm:$0xff]
        %v3062 = vld [vmem:[%s18 + $0xd8] sm:$0xff]
        %v3063 = vld [vmem:[%s18 + $0xe0] sm:$0xff]
        %v3064 = vld [vmem:[%s18 + $0xe8] sm:$0xff]
        %v3065 = vld [vmem:[%s18 + $0xf0] sm:$0xff]
        %v3066 = vld [vmem:[%s18 + $0xf8] sm:$0xff]
        %v3067 = vld [vmem:[%s19] sm:$0x1]
        %v3069 = vlaneseq
        %v3070 = vshrl.u32 %v3069, 7
        %v3071 = vsub.s32 0, %v3070
        %v3072 = vrot.slane %v3067, %v3071
        %3074 = vmatprep.subr.mxu0 0.0
        %3075 = vmatpush1.msra.mxu0 %v3050
        %3076 = vmatprep.subr.mxu0 0.0
        %3077 = vmatpush1.msra.mxu0 %v3049
        %3078 = vmatprep.subr.mxu0 0.0
        %3079 = vmatpush1.msra.mxu0 %v3048
        %3080 = vmatprep.subr.mxu0 0.0
        %3081 = vmatpush1.msra.mxu0 %v3047
        %3082 = vmatprep.subr.mxu0 0.0
        %3083 = vmatpush1.msra.mxu0 %v3046
        %3084 = vmatprep.subr.mxu0 0.0
        %3085 = vmatpush1.msra.mxu0 %v3045
        %3086 = vmatprep.subr.mxu0 0.0
        %3087 = vmatpush1.msra.mxu0 %v3044
        %3088 = vmatprep.subr.mxu0 0.0
        %3089 = vmatpush1.msra.mxu0 %v3043
        %3090 = vmatprep.subr.mxu0 0.0
        %3091 = vmatpush1.msra.mxu0 %v3042
        %3092 = vmatprep.subr.mxu0 0.0
        %3093 = vmatpush1.msra.mxu0 %v3041
        %3094 = vmatprep.subr.mxu0 0.0
        %3095 = vmatpush1.msra.mxu0 %v3040
        %3096 = vmatprep.subr.mxu0 0.0
        %3097 = vmatpush1.msra.mxu0 %v3039
        %3098 = vmatprep.subr.mxu0 0.0
        %3099 = vmatpush1.msra.mxu0 %v3038
        %3100 = vmatprep.subr.mxu0 0.0
        %3101 = vmatpush1.msra.mxu0 %v3037
        %3102 = vmatprep.subr.mxu0 0.0
        %3103 = vmatpush1.msra.mxu0 %v3036
        %3104 = vmatprep.subr.mxu0 0.0
        %3105 = vmatpush1.msra.mxu0 %v3035
        %3106 = vmatprep.subr.mxu0 0.0
        %3107 = vmatpush2.msra.mxu0 %v3066
        %3108 = vmatprep.subr.mxu0 0.0
        %3109 = vmatpush2.msra.mxu0 %v3065
        %3110 = vmatprep.subr.mxu0 0.0
        %3111 = vmatpush2.msra.mxu0 %v3064
        %3112 = vmatprep.subr.mxu0 0.0
        %3113 = vmatpush2.msra.mxu0 %v3063
        %3114 = vmatprep.subr.mxu0 0.0
        %3115 = vmatpush2.msra.mxu0 %v3062
        %3116 = vmatprep.subr.mxu0 0.0
        %3117 = vmatpush2.msra.mxu0 %v3061
        %3118 = vmatprep.subr.mxu0 0.0
        %3119 = vmatpush2.msra.mxu0 %v3060
        %3120 = vmatprep.subr.mxu0 0.0
        %3121 = vmatpush2.msra.mxu0 %v3059
        %3122 = vmatprep.subr.mxu0 0.0
        %3123 = vmatpush2.msra.mxu0 %v3058
        %3124 = vmatprep.subr.mxu0 0.0
        %3125 = vmatpush2.msra.mxu0 %v3057
        %3126 = vmatprep.subr.mxu0 0.0
        %3127 = vmatpush2.msra.mxu0 %v3056
        %3128 = vmatprep.subr.mxu0 0.0
        %3129 = vmatpush2.msra.mxu0 %v3055
        %3130 = vmatprep.subr.mxu0 0.0
        %3131 = vmatpush2.msra.mxu0 %v3054
        %3132 = vmatprep.subr.mxu0 0.0
        %3133 = vmatpush2.msra.mxu0 %v3053
        %3134 = vmatprep.subr.mxu0 0.0
        %3135 = vmatpush2.msra.mxu0 %v3052
        %3136 = vmatprep.subr.mxu0 0.0
        %3137 = vmatpush2.msra.mxu0 %v3051
        %3138 = vmatprep.mubr.f32.mxu0 %v3034
        %3139 = vmatmul.mubr.f32.gmra.mxu0 %v3033
        %v3140 = vpop.f32.mrf.mxu0
        %v3141 = vadd.f32 %v3072, %v3140
        %v3142 = vpop.f32.mrf.mxu0
        %3143 = vdwg.mxu0
        %v3144 = vadd.f32 %v2885, %v3141
        %s3145 = scalar_lea.vmem %s12, 1
        %v3146 = vld [vmem:[%s3145] sm:$0x1]
        %s3147 = scalar_lea.vmem %s13, 1
        %v3148 = vld [vmem:[%s3147] sm:$0x1]
        %v3149 = vsel %vm844, %v3144, 0.0
        %3150 = vadd.xlane.f32.xlu0 %v3149
        %v3151 = vpop.xlane.xlu0 %3150
        %v3152 = vmul.f32 %v3151, %v848
        %v3153 = vsub.f32 %v3144, %v3152
        %v3154 = vmul.f32 %v3153, %v3153
        %v3155 = vsel %vm844, %v3154, 0.0
        %3156 = vadd.xlane.f32.xlu0 %v3155
        %v3157 = vpop.xlane.xlu0 %3156
        %v3158 = vmul.f32 %v3157, %v848
        %v3159 = vadd.f32 %v3158, 1e-06
        %v3160 = vrsqrt.pop %v3159
        %v3161 = vmul.f32 %v3153, %v3160
        %v3163 = vlaneseq
        %v3164 = vshrl.u32 %v3163, 7
        %v3165 = vsub.s32 0, %v3164
        %v3166 = vrot.slane %v3146, %v3165
        %v3168 = vmul.f32 %v3161, %v3166
        %v3170 = vlaneseq
        %v3171 = vshrl.u32 %v3170, 7
        %v3172 = vsub.s32 0, %v3171
        %v3173 = vrot.slane %v3148, %v3172
        %v3175 = vadd.f32 %v3168, %v3173
        %s3176 = scalar_lea.vmem %s11, 1
        %v3177 = vld [vmem:[%s3176] sm:$0x1]
        %v3179 = vlaneseq
        %v3180 = vshrl.u32 %v3179, 7
        %v3181 = vsub.s32 0, %v3180
        %v3182 = vrot.slane %v3177, %v3181
        %v3184 = vadd.f32 %v3182, 0.0
        %s3185 = scalar_lea.vmem %s4, 256
        %v3186 = vld [vmem:[%s3185] sm:$0xff]
        %v3187 = vld [vmem:[%s3185 + $0x8] sm:$0xff]
        %v3188 = vld [vmem:[%s3185 + $0x10] sm:$0xff]
        %v3189 = vld [vmem:[%s3185 + $0x18] sm:$0xff]
        %v3190 = vld [vmem:[%s3185 + $0x20] sm:$0xff]
        %v3191 = vld [vmem:[%s3185 + $0x28] sm:$0xff]
        %v3192 = vld [vmem:[%s3185 + $0x30] sm:$0xff]
        %v3193 = vld [vmem:[%s3185 + $0x38] sm:$0xff]
        %s3194 = scalar_lea.vmem %s5, 4
        %v3195 = vld [vmem:[%s3194] sm:$0x1]
        %v3197 = vlaneseq
        %v3198 = vshrl.u32 %v3197, 7
        %v3199 = vsub.s32 0, %v3198
        %v3200 = vrot.slane %v3195, %v3199
        %v3203 = vsel %vm766, %v3175, 0
        %3205 = vmatprep.subr.mxu0 0.0
        %3206 = vmatpush1.msra.mxu0 0.0
        %3207 = vmatprep.subr.mxu0 0.0
        %3208 = vmatpush1.msra.mxu0 0.0
        %3209 = vmatprep.subr.mxu0 0.0
        %3210 = vmatpush1.msra.mxu0 0.0
        %3211 = vmatprep.subr.mxu0 0.0
        %3212 = vmatpush1.msra.mxu0 0.0
        %3213 = vmatprep.subr.mxu0 0.0
        %3214 = vmatpush1.msra.mxu0 0.0
        %3215 = vmatprep.subr.mxu0 0.0
        %3216 = vmatpush1.msra.mxu0 0.0
        %3217 = vmatprep.subr.mxu0 0.0
        %3218 = vmatpush1.msra.mxu0 0.0
        %3219 = vmatprep.subr.mxu0 0.0
        %3220 = vmatpush1.msra.mxu0 0.0
        %3221 = vmatprep.subr.mxu0 0.0
        %3222 = vmatpush1.msra.mxu0 %v3193
        %3223 = vmatprep.subr.mxu0 0.0
        %3224 = vmatpush1.msra.mxu0 %v3192
        %3225 = vmatprep.subr.mxu0 0.0
        %3226 = vmatpush1.msra.mxu0 %v3191
        %3227 = vmatprep.subr.mxu0 0.0
        %3228 = vmatpush1.msra.mxu0 %v3190
        %3229 = vmatprep.subr.mxu0 0.0
        %3230 = vmatpush1.msra.mxu0 %v3189
        %3231 = vmatprep.subr.mxu0 0.0
        %3232 = vmatpush1.msra.mxu0 %v3188
        %3233 = vmatprep.subr.mxu0 0.0
        %3234 = vmatpush1.msra.mxu0 %v3187
        %3235 = vmatprep.subr.mxu0 0.0
        %3236 = vmatpush1.msra.mxu0 %v3186
        %3237 = vmatprep.subr.mxu0 0.0
        %3238 = vmatpush2.msra.mxu0 0.0
        %3239 = vmatprep.subr.mxu0 0.0
        %3240 = vmatpush2.msra.mxu0 0.0
        %3241 = vmatprep.subr.mxu0 0.0
        %3242 = vmatpush2.msra.mxu0 0.0
        %3243 = vmatprep.subr.mxu0 0.0
        %3244 = vmatpush2.msra.mxu0 0.0
        %3245 = vmatprep.subr.mxu0 0.0
        %3246 = vmatpush2.msra.mxu0 0.0
        %3247 = vmatprep.subr.mxu0 0.0
        %3248 = vmatpush2.msra.mxu0 0.0
        %3249 = vmatprep.subr.mxu0 0.0
        %3250 = vmatpush2.msra.mxu0 0.0
        %3251 = vmatprep.subr.mxu0 0.0
        %3252 = vmatpush2.msra.mxu0 0.0
        %3253 = vmatprep.subr.mxu0 0.0
        %3254 = vmatpush2.msra.mxu0 0.0
        %3255 = vmatprep.subr.mxu0 0.0
        %3256 = vmatpush2.msra.mxu0 0.0
        %3257 = vmatprep.subr.mxu0 0.0
        %3258 = vmatpush2.msra.mxu0 0.0
        %3259 = vmatprep.subr.mxu0 0.0
        %3260 = vmatpush2.msra.mxu0 0.0
        %3261 = vmatprep.subr.mxu0 0.0
        %3262 = vmatpush2.msra.mxu0 0.0
        %3263 = vmatprep.subr.mxu0 0.0
        %3264 = vmatpush2.msra.mxu0 0.0
        %3265 = vmatprep.subr.mxu0 0.0
        %3266 = vmatpush2.msra.mxu0 0.0
        %3267 = vmatprep.subr.mxu0 0.0
        %3268 = vmatpush2.msra.mxu0 0.0
        %3269 = vmatprep.mubr.f32.mxu0 0.0
        %3270 = vmatmul.mubr.f32.gmra.mxu0 %v3203
        %v3271 = vpop.f32.mrf.mxu0
        %v3272 = vadd.f32 %v3200, %v3271
        %v3273 = vpop.f32.mrf.mxu0
        %3274 = vdwg.mxu0
        %s3275 = scalar_lea.vmem %s6, 256
        %v3276 = vld [vmem:[%s3275] sm:$0xff]
        %v3277 = vld [vmem:[%s3275 + $0x8] sm:$0xff]
        %v3278 = vld [vmem:[%s3275 + $0x10] sm:$0xff]
        %v3279 = vld [vmem:[%s3275 + $0x18] sm:$0xff]
        %v3280 = vld [vmem:[%s3275 + $0x20] sm:$0xff]
        %v3281 = vld [vmem:[%s3275 + $0x28] sm:$0xff]
        %v3282 = vld [vmem:[%s3275 + $0x30] sm:$0xff]
        %v3283 = vld [vmem:[%s3275 + $0x38] sm:$0xff]
        %s3284 = scalar_lea.vmem %s7, 4
        %v3285 = vld [vmem:[%s3284] sm:$0x1]
        %v3287 = vlaneseq
        %v3288 = vshrl.u32 %v3287, 7
        %v3289 = vsub.s32 0, %v3288
        %v3290 = vrot.slane %v3285, %v3289
        %3292 = vmatprep.subr.mxu0 0.0
        %3293 = vmatpush1.msra.mxu0 0.0
        %3294 = vmatprep.subr.mxu0 0.0
        %3295 = vmatpush1.msra.mxu0 0.0
        %3296 = vmatprep.subr.mxu0 0.0
        %3297 = vmatpush1.msra.mxu0 0.0
        %3298 = vmatprep.subr.mxu0 0.0
        %3299 = vmatpush1.msra.mxu0 0.0
        %3300 = vmatprep.subr.mxu0 0.0
        %3301 = vmatpush1.msra.mxu0 0.0
        %3302 = vmatprep.subr.mxu0 0.0
        %3303 = vmatpush1.msra.mxu0 0.0
        %3304 = vmatprep.subr.mxu0 0.0
        %3305 = vmatpush1.msra.mxu0 0.0
        %3306 = vmatprep.subr.mxu0 0.0
        %3307 = vmatpush1.msra.mxu0 0.0
        %3308 = vmatprep.subr.mxu0 0.0
        %3309 = vmatpush1.msra.mxu0 %v3283
        %3310 = vmatprep.subr.mxu0 0.0
        %3311 = vmatpush1.msra.mxu0 %v3282
        %3312 = vmatprep.subr.mxu0 0.0
        %3313 = vmatpush1.msra.mxu0 %v3281
        %3314 = vmatprep.subr.mxu0 0.0
        %3315 = vmatpush1.msra.mxu0 %v3280
        %3316 = vmatprep.subr.mxu0 0.0
        %3317 = vmatpush1.msra.mxu0 %v3279
        %3318 = vmatprep.subr.mxu0 0.0
        %3319 = vmatpush1.msra.mxu0 %v3278
        %3320 = vmatprep.subr.mxu0 0.0
        %3321 = vmatpush1.msra.mxu0 %v3277
        %3322 = vmatprep.subr.mxu0 0.0
        %3323 = vmatpush1.msra.mxu0 %v3276
        %3324 = vmatprep.subr.mxu0 0.0
        %3325 = vmatpush2.msra.mxu0 0.0
        %3326 = vmatprep.subr.mxu0 0.0
        %3327 = vmatpush2.msra.mxu0 0.0
        %3328 = vmatprep.subr.mxu0 0.0
        %3329 = vmatpush2.msra.mxu0 0.0
        %3330 = vmatprep.subr.mxu0 0.0
        %3331 = vmatpush2.msra.mxu0 0.0
        %3332 = vmatprep.subr.mxu0 0.0
        %3333 = vmatpush2.msra.mxu0 0.0
        %3334 = vmatprep.subr.mxu0 0.0
        %3335 = vmatpush2.msra.mxu0 0.0
        %3336 = vmatprep.subr.mxu0 0.0
        %3337 = vmatpush2.msra.mxu0 0.0
        %3338 = vmatprep.subr.mxu0 0.0
        %3339 = vmatpush2.msra.mxu0 0.0
        %3340 = vmatprep.subr.mxu0 0.0
        %3341 = vmatpush2.msra.mxu0 0.0
        %3342 = vmatprep.subr.mxu0 0.0
        %3343 = vmatpush2.msra.mxu0 0.0
        %3344 = vmatprep.subr.mxu0 0.0
        %3345 = vmatpush2.msra.mxu0 0.0
        %3346 = vmatprep.subr.mxu0 0.0
        %3347 = vmatpush2.msra.mxu0 0.0
        %3348 = vmatprep.subr.mxu0 0.0
        %3349 = vmatpush2.msra.mxu0 0.0
        %3350 = vmatprep.subr.mxu0 0.0
        %3351 = vmatpush2.msra.mxu0 0.0
        %3352 = vmatprep.subr.mxu0 0.0
        %3353 = vmatpush2.msra.mxu0 0.0
        %3354 = vmatprep.subr.mxu0 0.0
        %3355 = vmatpush2.msra.mxu0 0.0
        %3356 = vmatprep.mubr.f32.mxu0 0.0
        %3357 = vmatmul.mubr.f32.gmra.mxu0 %v3203
        %v3358 = vpop.f32.mrf.mxu0
        %v3359 = vadd.f32 %v3290, %v3358
        %v3360 = vpop.f32.mrf.mxu0
        %3361 = vdwg.mxu0
        %s3362 = scalar_lea.vmem %s8, 256
        %v3363 = vld [vmem:[%s3362] sm:$0xff]
        %v3364 = vld [vmem:[%s3362 + $0x8] sm:$0xff]
        %v3365 = vld [vmem:[%s3362 + $0x10] sm:$0xff]
        %v3366 = vld [vmem:[%s3362 + $0x18] sm:$0xff]
        %v3367 = vld [vmem:[%s3362 + $0x20] sm:$0xff]
        %v3368 = vld [vmem:[%s3362 + $0x28] sm:$0xff]
        %v3369 = vld [vmem:[%s3362 + $0x30] sm:$0xff]
        %v3370 = vld [vmem:[%s3362 + $0x38] sm:$0xff]
        %s3371 = scalar_lea.vmem %s9, 4
        %v3372 = vld [vmem:[%s3371] sm:$0x1]
        %v3374 = vlaneseq
        %v3375 = vshrl.u32 %v3374, 7
        %v3376 = vsub.s32 0, %v3375
        %v3377 = vrot.slane %v3372, %v3376
        %3379 = vmatprep.subr.mxu0 0.0
        %3380 = vmatpush1.msra.mxu0 0.0
        %3381 = vmatprep.subr.mxu0 0.0
        %3382 = vmatpush1.msra.mxu0 0.0
        %3383 = vmatprep.subr.mxu0 0.0
        %3384 = vmatpush1.msra.mxu0 0.0
        %3385 = vmatprep.subr.mxu0 0.0
        %3386 = vmatpush1.msra.mxu0 0.0
        %3387 = vmatprep.subr.mxu0 0.0
        %3388 = vmatpush1.msra.mxu0 0.0
        %3389 = vmatprep.subr.mxu0 0.0
        %3390 = vmatpush1.msra.mxu0 0.0
        %3391 = vmatprep.subr.mxu0 0.0
        %3392 = vmatpush1.msra.mxu0 0.0
        %3393 = vmatprep.subr.mxu0 0.0
        %3394 = vmatpush1.msra.mxu0 0.0
        %3395 = vmatprep.subr.mxu0 0.0
        %3396 = vmatpush1.msra.mxu0 %v3370
        %3397 = vmatprep.subr.mxu0 0.0
        %3398 = vmatpush1.msra.mxu0 %v3369
        %3399 = vmatprep.subr.mxu0 0.0
        %3400 = vmatpush1.msra.mxu0 %v3368
        %3401 = vmatprep.subr.mxu0 0.0
        %3402 = vmatpush1.msra.mxu0 %v3367
        %3403 = vmatprep.subr.mxu0 0.0
        %3404 = vmatpush1.msra.mxu0 %v3366
        %3405 = vmatprep.subr.mxu0 0.0
        %3406 = vmatpush1.msra.mxu0 %v3365
        %3407 = vmatprep.subr.mxu0 0.0
        %3408 = vmatpush1.msra.mxu0 %v3364
        %3409 = vmatprep.subr.mxu0 0.0
        %3410 = vmatpush1.msra.mxu0 %v3363
        %3411 = vmatprep.subr.mxu0 0.0
        %3412 = vmatpush2.msra.mxu0 0.0
        %3413 = vmatprep.subr.mxu0 0.0
        %3414 = vmatpush2.msra.mxu0 0.0
        %3415 = vmatprep.subr.mxu0 0.0
        %3416 = vmatpush2.msra.mxu0 0.0
        %3417 = vmatprep.subr.mxu0 0.0
        %3418 = vmatpush2.msra.mxu0 0.0
        %3419 = vmatprep.subr.mxu0 0.0
        %3420 = vmatpush2.msra.mxu0 0.0
        %3421 = vmatprep.subr.mxu0 0.0
        %3422 = vmatpush2.msra.mxu0 0.0
        %3423 = vmatprep.subr.mxu0 0.0
        %3424 = vmatpush2.msra.mxu0 0.0
        %3425 = vmatprep.subr.mxu0 0.0
        %3426 = vmatpush2.msra.mxu0 0.0
        %3427 = vmatprep.subr.mxu0 0.0
        %3428 = vmatpush2.msra.mxu0 0.0
        %3429 = vmatprep.subr.mxu0 0.0
        %3430 = vmatpush2.msra.mxu0 0.0
        %3431 = vmatprep.subr.mxu0 0.0
        %3432 = vmatpush2.msra.mxu0 0.0
        %3433 = vmatprep.subr.mxu0 0.0
        %3434 = vmatpush2.msra.mxu0 0.0
        %3435 = vmatprep.subr.mxu0 0.0
        %3436 = vmatpush2.msra.mxu0 0.0
        %3437 = vmatprep.subr.mxu0 0.0
        %3438 = vmatpush2.msra.mxu0 0.0
        %3439 = vmatprep.subr.mxu0 0.0
        %3440 = vmatpush2.msra.mxu0 0.0
        %3441 = vmatprep.subr.mxu0 0.0
        %3442 = vmatpush2.msra.mxu0 0.0
        %3443 = vmatprep.mubr.f32.mxu0 0.0
        %3444 = vmatmul.mubr.f32.gmra.mxu0 %v3203
        %v3445 = vpop.f32.mrf.mxu0
        %v3446 = vadd.f32 %v3377, %v3445
        %v3447 = vpop.f32.mrf.mxu0
        %3448 = vdwg.mxu0
        %v3450 = vsel %vm1139, %v3272, 0
        %v3453 = vsel %vm1139, %v3359, 0
        %3455 = vmatprep.subr.mxu0 0.0
        %3456 = vmatpush1.xpose.msra.mxu0 0.0
        %3457 = vmatprep.subr.mxu0 0.0
        %3458 = vmatpush1.xpose.msra.mxu0 0.0
        %3459 = vmatprep.subr.mxu0 0.0
        %3460 = vmatpush1.xpose.msra.mxu0 0.0
        %3461 = vmatprep.subr.mxu0 0.0
        %3462 = vmatpush1.xpose.msra.mxu0 0.0
        %3463 = vmatprep.subr.mxu0 0.0
        %3464 = vmatpush1.xpose.msra.mxu0 0.0
        %3465 = vmatprep.subr.mxu0 0.0
        %3466 = vmatpush1.xpose.msra.mxu0 0.0
        %3467 = vmatprep.subr.mxu0 0.0
        %3468 = vmatpush1.xpose.msra.mxu0 0.0
        %3469 = vmatprep.subr.mxu0 0.0
        %3470 = vmatpush1.xpose.msra.mxu0 0.0
        %3471 = vmatprep.subr.mxu0 0.0
        %3472 = vmatpush1.xpose.msra.mxu0 0.0
        %3473 = vmatprep.subr.mxu0 0.0
        %3474 = vmatpush1.xpose.msra.mxu0 0.0
        %3475 = vmatprep.subr.mxu0 0.0
        %3476 = vmatpush1.xpose.msra.mxu0 0.0
        %3477 = vmatprep.subr.mxu0 0.0
        %3478 = vmatpush1.xpose.msra.mxu0 0.0
        %3479 = vmatprep.subr.mxu0 0.0
        %3480 = vmatpush1.xpose.msra.mxu0 0.0
        %3481 = vmatprep.subr.mxu0 0.0
        %3482 = vmatpush1.xpose.msra.mxu0 0.0
        %3483 = vmatprep.subr.mxu0 0.0
        %3484 = vmatpush1.xpose.msra.mxu0 0.0
        %3485 = vmatprep.subr.mxu0 0.0
        %3486 = vmatpush1.xpose.msra.mxu0 %v3453
        %3487 = vmatprep.subr.mxu0 0.0
        %3488 = vmatpush2.xpose.msra.mxu0 0.0
        %3489 = vmatprep.subr.mxu0 0.0
        %3490 = vmatpush2.xpose.msra.mxu0 0.0
        %3491 = vmatprep.subr.mxu0 0.0
        %3492 = vmatpush2.xpose.msra.mxu0 0.0
        %3493 = vmatprep.subr.mxu0 0.0
        %3494 = vmatpush2.xpose.msra.mxu0 0.0
        %3495 = vmatprep.subr.mxu0 0.0
        %3496 = vmatpush2.xpose.msra.mxu0 0.0
        %3497 = vmatprep.subr.mxu0 0.0
        %3498 = vmatpush2.xpose.msra.mxu0 0.0
        %3499 = vmatprep.subr.mxu0 0.0
        %3500 = vmatpush2.xpose.msra.mxu0 0.0
        %3501 = vmatprep.subr.mxu0 0.0
        %3502 = vmatpush2.xpose.msra.mxu0 0.0
        %3503 = vmatprep.subr.mxu0 0.0
        %3504 = vmatpush2.xpose.msra.mxu0 0.0
        %3505 = vmatprep.subr.mxu0 0.0
        %3506 = vmatpush2.xpose.msra.mxu0 0.0
        %3507 = vmatprep.subr.mxu0 0.0
        %3508 = vmatpush2.xpose.msra.mxu0 0.0
        %3509 = vmatprep.subr.mxu0 0.0
        %3510 = vmatpush2.xpose.msra.mxu0 0.0
        %3511 = vmatprep.subr.mxu0 0.0
        %3512 = vmatpush2.xpose.msra.mxu0 0.0
        %3513 = vmatprep.subr.mxu0 0.0
        %3514 = vmatpush2.xpose.msra.mxu0 0.0
        %3515 = vmatprep.subr.mxu0 0.0
        %3516 = vmatpush2.xpose.msra.mxu0 0.0
        %3517 = vmatprep.subr.mxu0 0.0
        %3518 = vmatpush2.xpose.msra.mxu0 0.0
        %3519 = vmatprep.mubr.f32.mxu0 0.0
        %3520 = vmatmul.mubr.f32.gmra.mxu0 %v3450
        %v3521 = vpop.f32.mrf.mxu0
        %v3522 = vadd.f32 0.0, %v3521
        %v3523 = vpop.f32.mrf.mxu0
        %3524 = vdwg.mxu0
        %v3525 = vsel %vm1216, %v3522, -inf
        %3526 = vmax.xlane.f32.xlu0 %v3525
        %v3527 = vpop.xlane.xlu0 %3526
        %v3528 = vsub.f32 %v3522, %v3527
        %v3529 = vmul.f32 %v3528, 1.442695
        %v3530 = vpow.pop %v3529
        %v3531 = vsel %vm1216, %v3530, 0.0
        %3532 = vadd.xlane.f32.xlu0 %v3531
        %v3533 = vpop.xlane.xlu0 %3532
        %v3534 = vrcp.pop %v3533
        %v3535 = vmul.f32 %v3530, %v3534
        %v3537 = vsel %vm1228, %v3535, 0
        %v3540 = vsel %vm1232, %v3446, 0
        %3542 = vmatprep.subr.mxu0 0.0
        %3543 = vmatpush1.msra.mxu0 0.0
        %3544 = vmatprep.subr.mxu0 0.0
        %3545 = vmatpush1.msra.mxu0 0.0
        %3546 = vmatprep.subr.mxu0 0.0
        %3547 = vmatpush1.msra.mxu0 0.0
        %3548 = vmatprep.subr.mxu0 0.0
        %3549 = vmatpush1.msra.mxu0 0.0
        %3550 = vmatprep.subr.mxu0 0.0
        %3551 = vmatpush1.msra.mxu0 0.0
        %3552 = vmatprep.subr.mxu0 0.0
        %3553 = vmatpush1.msra.mxu0 0.0
        %3554 = vmatprep.subr.mxu0 0.0
        %3555 = vmatpush1.msra.mxu0 0.0
        %3556 = vmatprep.subr.mxu0 0.0
        %3557 = vmatpush1.msra.mxu0 0.0
        %3558 = vmatprep.subr.mxu0 0.0
        %3559 = vmatpush1.msra.mxu0 0.0
        %3560 = vmatprep.subr.mxu0 0.0
        %3561 = vmatpush1.msra.mxu0 0.0
        %3562 = vmatprep.subr.mxu0 0.0
        %3563 = vmatpush1.msra.mxu0 0.0
        %3564 = vmatprep.subr.mxu0 0.0
        %3565 = vmatpush1.msra.mxu0 0.0
        %3566 = vmatprep.subr.mxu0 0.0
        %3567 = vmatpush1.msra.mxu0 0.0
        %3568 = vmatprep.subr.mxu0 0.0
        %3569 = vmatpush1.msra.mxu0 0.0
        %3570 = vmatprep.subr.mxu0 0.0
        %3571 = vmatpush1.msra.mxu0 0.0
        %3572 = vmatprep.subr.mxu0 0.0
        %3573 = vmatpush1.msra.mxu0 %v3540
        %3574 = vmatprep.subr.mxu0 0.0
        %3575 = vmatpush2.msra.mxu0 0.0
        %3576 = vmatprep.subr.mxu0 0.0
        %3577 = vmatpush2.msra.mxu0 0.0
        %3578 = vmatprep.subr.mxu0 0.0
        %3579 = vmatpush2.msra.mxu0 0.0
        %3580 = vmatprep.subr.mxu0 0.0
        %3581 = vmatpush2.msra.mxu0 0.0
        %3582 = vmatprep.subr.mxu0 0.0
        %3583 = vmatpush2.msra.mxu0 0.0
        %3584 = vmatprep.subr.mxu0 0.0
        %3585 = vmatpush2.msra.mxu0 0.0
        %3586 = vmatprep.subr.mxu0 0.0
        %3587 = vmatpush2.msra.mxu0 0.0
        %3588 = vmatprep.subr.mxu0 0.0
        %3589 = vmatpush2.msra.mxu0 0.0
        %3590 = vmatprep.subr.mxu0 0.0
        %3591 = vmatpush2.msra.mxu0 0.0
        %3592 = vmatprep.subr.mxu0 0.0
        %3593 = vmatpush2.msra.mxu0 0.0
        %3594 = vmatprep.subr.mxu0 0.0
        %3595 = vmatpush2.msra.mxu0 0.0
        %3596 = vmatprep.subr.mxu0 0.0
        %3597 = vmatpush2.msra.mxu0 0.0
        %3598 = vmatprep.subr.mxu0 0.0
        %3599 = vmatpush2.msra.mxu0 0.0
        %3600 = vmatprep.subr.mxu0 0.0
        %3601 = vmatpush2.msra.mxu0 0.0
        %3602 = vmatprep.subr.mxu0 0.0
        %3603 = vmatpush2.msra.mxu0 0.0
        %3604 = vmatprep.subr.mxu0 0.0
        %3605 = vmatpush2.msra.mxu0 0.0
        %3606 = vmatprep.mubr.f32.mxu0 0.0
        %3607 = vmatmul.mubr.f32.gmra.mxu0 %v3537
        %v3608 = vpop.f32.mrf.mxu0
        %v3609 = vadd.f32 0.0, %v3608
        %v3610 = vpop.f32.mrf.mxu0
        %3611 = vdwg.mxu0
        %s3612 = scalar_lea.vmem %s10, 64
        %v3613 = vld [vmem:[%s3612] sm:$0xff]
        %v3614 = vld [vmem:[%s3612 + $0x8] sm:$0xff]
        %v3616 = vsel %vm1139, %v3609, 0
        %3618 = vmatprep.subr.mxu0 0.0
        %3619 = vmatpush1.msra.mxu0 0.0
        %3620 = vmatprep.subr.mxu0 0.0
        %3621 = vmatpush1.msra.mxu0 0.0
        %3622 = vmatprep.subr.mxu0 0.0
        %3623 = vmatpush1.msra.mxu0 0.0
        %3624 = vmatprep.subr.mxu0 0.0
        %3625 = vmatpush1.msra.mxu0 0.0
        %3626 = vmatprep.subr.mxu0 0.0
        %3627 = vmatpush1.msra.mxu0 0.0
        %3628 = vmatprep.subr.mxu0 0.0
        %3629 = vmatpush1.msra.mxu0 0.0
        %3630 = vmatprep.subr.mxu0 0.0
        %3631 = vmatpush1.msra.mxu0 0.0
        %3632 = vmatprep.subr.mxu0 0.0
        %3633 = vmatpush1.msra.mxu0 0.0
        %3634 = vmatprep.subr.mxu0 0.0
        %3635 = vmatpush1.msra.mxu0 0.0
        %3636 = vmatprep.subr.mxu0 0.0
        %3637 = vmatpush1.msra.mxu0 0.0
        %3638 = vmatprep.subr.mxu0 0.0
        %3639 = vmatpush1.msra.mxu0 0.0
        %3640 = vmatprep.subr.mxu0 0.0
        %3641 = vmatpush1.msra.mxu0 0.0
        %3642 = vmatprep.subr.mxu0 0.0
        %3643 = vmatpush1.msra.mxu0 0.0
        %3644 = vmatprep.subr.mxu0 0.0
        %3645 = vmatpush1.msra.mxu0 0.0
        %3646 = vmatprep.subr.mxu0 0.0
        %3647 = vmatpush1.msra.mxu0 %v3614
        %3648 = vmatprep.subr.mxu0 0.0
        %3649 = vmatpush1.msra.mxu0 %v3613
        %3650 = vmatprep.subr.mxu0 0.0
        %3651 = vmatpush2.msra.mxu0 0.0
        %3652 = vmatprep.subr.mxu0 0.0
        %3653 = vmatpush2.msra.mxu0 0.0
        %3654 = vmatprep.subr.mxu0 0.0
        %3655 = vmatpush2.msra.mxu0 0.0
        %3656 = vmatprep.subr.mxu0 0.0
        %3657 = vmatpush2.msra.mxu0 0.0
        %3658 = vmatprep.subr.mxu0 0.0
        %3659 = vmatpush2.msra.mxu0 0.0
        %3660 = vmatprep.subr.mxu0 0.0
        %3661 = vmatpush2.msra.mxu0 0.0
        %3662 = vmatprep.subr.mxu0 0.0
        %3663 = vmatpush2.msra.mxu0 0.0
        %3664 = vmatprep.subr.mxu0 0.0
        %3665 = vmatpush2.msra.mxu0 0.0
        %3666 = vmatprep.subr.mxu0 0.0
        %3667 = vmatpush2.msra.mxu0 0.0
        %3668 = vmatprep.subr.mxu0 0.0
        %3669 = vmatpush2.msra.mxu0 0.0
        %3670 = vmatprep.subr.mxu0 0.0
        %3671 = vmatpush2.msra.mxu0 0.0
        %3672 = vmatprep.subr.mxu0 0.0
        %3673 = vmatpush2.msra.mxu0 0.0
        %3674 = vmatprep.subr.mxu0 0.0
        %3675 = vmatpush2.msra.mxu0 0.0
        %3676 = vmatprep.subr.mxu0 0.0
        %3677 = vmatpush2.msra.mxu0 0.0
        %3678 = vmatprep.subr.mxu0 0.0
        %3679 = vmatpush2.msra.mxu0 0.0
        %3680 = vmatprep.subr.mxu0 0.0
        %3681 = vmatpush2.msra.mxu0 0.0
        %3682 = vmatprep.mubr.f32.mxu0 0.0
        %3683 = vmatmul.mubr.f32.gmra.mxu0 %v3616
        %v3684 = vpop.f32.mrf.mxu0
        %v3685 = vadd.f32 0.0, %v3684
        %v3686 = vpop.f32.mrf.mxu0
        %3687 = vdwg.mxu0
        %v3688 = vadd.f32 %v3184, %v3685
        %s3689 = scalar_lea.vmem %s4, 320
        %v3690 = vld [vmem:[%s3689] sm:$0xff]
        %v3691 = vld [vmem:[%s3689 + $0x8] sm:$0xff]
        %v3692 = vld [vmem:[%s3689 + $0x10] sm:$0xff]
        %v3693 = vld [vmem:[%s3689 + $0x18] sm:$0xff]
        %v3694 = vld [vmem:[%s3689 + $0x20] sm:$0xff]
        %v3695 = vld [vmem:[%s3689 + $0x28] sm:$0xff]
        %v3696 = vld [vmem:[%s3689 + $0x30] sm:$0xff]
        %v3697 = vld [vmem:[%s3689 + $0x38] sm:$0xff]
        %s3698 = scalar_lea.vmem %s5, 5
        %v3699 = vld [vmem:[%s3698] sm:$0x1]
        %v3701 = vlaneseq
        %v3702 = vshrl.u32 %v3701, 7
        %v3703 = vsub.s32 0, %v3702
        %v3704 = vrot.slane %v3699, %v3703
        %3706 = vmatprep.subr.mxu0 0.0
        %3707 = vmatpush1.msra.mxu0 0.0
        %3708 = vmatprep.subr.mxu0 0.0
        %3709 = vmatpush1.msra.mxu0 0.0
        %3710 = vmatprep.subr.mxu0 0.0
        %3711 = vmatpush1.msra.mxu0 0.0
        %3712 = vmatprep.subr.mxu0 0.0
        %3713 = vmatpush1.msra.mxu0 0.0
        %3714 = vmatprep.subr.mxu0 0.0
        %3715 = vmatpush1.msra.mxu0 0.0
        %3716 = vmatprep.subr.mxu0 0.0
        %3717 = vmatpush1.msra.mxu0 0.0
        %3718 = vmatprep.subr.mxu0 0.0
        %3719 = vmatpush1.msra.mxu0 0.0
        %3720 = vmatprep.subr.mxu0 0.0
        %3721 = vmatpush1.msra.mxu0 0.0
        %3722 = vmatprep.subr.mxu0 0.0
        %3723 = vmatpush1.msra.mxu0 %v3697
        %3724 = vmatprep.subr.mxu0 0.0
        %3725 = vmatpush1.msra.mxu0 %v3696
        %3726 = vmatprep.subr.mxu0 0.0
        %3727 = vmatpush1.msra.mxu0 %v3695
        %3728 = vmatprep.subr.mxu0 0.0
        %3729 = vmatpush1.msra.mxu0 %v3694
        %3730 = vmatprep.subr.mxu0 0.0
        %3731 = vmatpush1.msra.mxu0 %v3693
        %3732 = vmatprep.subr.mxu0 0.0
        %3733 = vmatpush1.msra.mxu0 %v3692
        %3734 = vmatprep.subr.mxu0 0.0
        %3735 = vmatpush1.msra.mxu0 %v3691
        %3736 = vmatprep.subr.mxu0 0.0
        %3737 = vmatpush1.msra.mxu0 %v3690
        %3738 = vmatprep.subr.mxu0 0.0
        %3739 = vmatpush2.msra.mxu0 0.0
        %3740 = vmatprep.subr.mxu0 0.0
        %3741 = vmatpush2.msra.mxu0 0.0
        %3742 = vmatprep.subr.mxu0 0.0
        %3743 = vmatpush2.msra.mxu0 0.0
        %3744 = vmatprep.subr.mxu0 0.0
        %3745 = vmatpush2.msra.mxu0 0.0
        %3746 = vmatprep.subr.mxu0 0.0
        %3747 = vmatpush2.msra.mxu0 0.0
        %3748 = vmatprep.subr.mxu0 0.0
        %3749 = vmatpush2.msra.mxu0 0.0
        %3750 = vmatprep.subr.mxu0 0.0
        %3751 = vmatpush2.msra.mxu0 0.0
        %3752 = vmatprep.subr.mxu0 0.0
        %3753 = vmatpush2.msra.mxu0 0.0
        %3754 = vmatprep.subr.mxu0 0.0
        %3755 = vmatpush2.msra.mxu0 0.0
        %3756 = vmatprep.subr.mxu0 0.0
        %3757 = vmatpush2.msra.mxu0 0.0
        %3758 = vmatprep.subr.mxu0 0.0
        %3759 = vmatpush2.msra.mxu0 0.0
        %3760 = vmatprep.subr.mxu0 0.0
        %3761 = vmatpush2.msra.mxu0 0.0
        %3762 = vmatprep.subr.mxu0 0.0
        %3763 = vmatpush2.msra.mxu0 0.0
        %3764 = vmatprep.subr.mxu0 0.0
        %3765 = vmatpush2.msra.mxu0 0.0
        %3766 = vmatprep.subr.mxu0 0.0
        %3767 = vmatpush2.msra.mxu0 0.0
        %3768 = vmatprep.subr.mxu0 0.0
        %3769 = vmatpush2.msra.mxu0 0.0
        %3770 = vmatprep.mubr.f32.mxu0 0.0
        %3771 = vmatmul.mubr.f32.gmra.mxu0 %v3203
        %v3772 = vpop.f32.mrf.mxu0
        %v3773 = vadd.f32 %v3704, %v3772
        %v3774 = vpop.f32.mrf.mxu0
        %3775 = vdwg.mxu0
        %s3776 = scalar_lea.vmem %s6, 320
        %v3777 = vld [vmem:[%s3776] sm:$0xff]
        %v3778 = vld [vmem:[%s3776 + $0x8] sm:$0xff]
        %v3779 = vld [vmem:[%s3776 + $0x10] sm:$0xff]
        %v3780 = vld [vmem:[%s3776 + $0x18] sm:$0xff]
        %v3781 = vld [vmem:[%s3776 + $0x20] sm:$0xff]
        %v3782 = vld [vmem:[%s3776 + $0x28] sm:$0xff]
        %v3783 = vld [vmem:[%s3776 + $0x30] sm:$0xff]
        %v3784 = vld [vmem:[%s3776 + $0x38] sm:$0xff]
        %s3785 = scalar_lea.vmem %s7, 5
        %v3786 = vld [vmem:[%s3785] sm:$0x1]
        %v3788 = vlaneseq
        %v3789 = vshrl.u32 %v3788, 7
        %v3790 = vsub.s32 0, %v3789
        %v3791 = vrot.slane %v3786, %v3790
        %3793 = vmatprep.subr.mxu0 0.0
        %3794 = vmatpush1.msra.mxu0 0.0
        %3795 = vmatprep.subr.mxu0 0.0
        %3796 = vmatpush1.msra.mxu0 0.0
        %3797 = vmatprep.subr.mxu0 0.0
        %3798 = vmatpush1.msra.mxu0 0.0
        %3799 = vmatprep.subr.mxu0 0.0
        %3800 = vmatpush1.msra.mxu0 0.0
        %3801 = vmatprep.subr.mxu0 0.0
        %3802 = vmatpush1.msra.mxu0 0.0
        %3803 = vmatprep.subr.mxu0 0.0
        %3804 = vmatpush1.msra.mxu0 0.0
        %3805 = vmatprep.subr.mxu0 0.0
        %3806 = vmatpush1.msra.mxu0 0.0
        %3807 = vmatprep.subr.mxu0 0.0
        %3808 = vmatpush1.msra.mxu0 0.0
        %3809 = vmatprep.subr.mxu0 0.0
        %3810 = vmatpush1.msra.mxu0 %v3784
        %3811 = vmatprep.subr.mxu0 0.0
        %3812 = vmatpush1.msra.mxu0 %v3783
        %3813 = vmatprep.subr.mxu0 0.0
        %3814 = vmatpush1.msra.mxu0 %v3782
        %3815 = vmatprep.subr.mxu0 0.0
        %3816 = vmatpush1.msra.mxu0 %v3781
        %3817 = vmatprep.subr.mxu0 0.0
        %3818 = vmatpush1.msra.mxu0 %v3780
        %3819 = vmatprep.subr.mxu0 0.0
        %3820 = vmatpush1.msra.mxu0 %v3779
        %3821 = vmatprep.subr.mxu0 0.0
        %3822 = vmatpush1.msra.mxu0 %v3778
        %3823 = vmatprep.subr.mxu0 0.0
        %3824 = vmatpush1.msra.mxu0 %v3777
        %3825 = vmatprep.subr.mxu0 0.0
        %3826 = vmatpush2.msra.mxu0 0.0
        %3827 = vmatprep.subr.mxu0 0.0
        %3828 = vmatpush2.msra.mxu0 0.0
        %3829 = vmatprep.subr.mxu0 0.0
        %3830 = vmatpush2.msra.mxu0 0.0
        %3831 = vmatprep.subr.mxu0 0.0
        %3832 = vmatpush2.msra.mxu0 0.0
        %3833 = vmatprep.subr.mxu0 0.0
        %3834 = vmatpush2.msra.mxu0 0.0
        %3835 = vmatprep.subr.mxu0 0.0
        %3836 = vmatpush2.msra.mxu0 0.0
        %3837 = vmatprep.subr.mxu0 0.0
        %3838 = vmatpush2.msra.mxu0 0.0
        %3839 = vmatprep.subr.mxu0 0.0
        %3840 = vmatpush2.msra.mxu0 0.0
        %3841 = vmatprep.subr.mxu0 0.0
        %3842 = vmatpush2.msra.mxu0 0.0
        %3843 = vmatprep.subr.mxu0 0.0
        %3844 = vmatpush2.msra.mxu0 0.0
        %3845 = vmatprep.subr.mxu0 0.0
        %3846 = vmatpush2.msra.mxu0 0.0
        %3847 = vmatprep.subr.mxu0 0.0
        %3848 = vmatpush2.msra.mxu0 0.0
        %3849 = vmatprep.subr.mxu0 0.0
        %3850 = vmatpush2.msra.mxu0 0.0
        %3851 = vmatprep.subr.mxu0 0.0
        %3852 = vmatpush2.msra.mxu0 0.0
        %3853 = vmatprep.subr.mxu0 0.0
        %3854 = vmatpush2.msra.mxu0 0.0
        %3855 = vmatprep.subr.mxu0 0.0
        %3856 = vmatpush2.msra.mxu0 0.0
        %3857 = vmatprep.mubr.f32.mxu0 0.0
        %3858 = vmatmul.mubr.f32.gmra.mxu0 %v3203
        %v3859 = vpop.f32.mrf.mxu0
        %v3860 = vadd.f32 %v3791, %v3859
        %v3861 = vpop.f32.mrf.mxu0
        %3862 = vdwg.mxu0
        %s3863 = scalar_lea.vmem %s8, 320
        %v3864 = vld [vmem:[%s3863] sm:$0xff]
        %v3865 = vld [vmem:[%s3863 + $0x8] sm:$0xff]
        %v3866 = vld [vmem:[%s3863 + $0x10] sm:$0xff]
        %v3867 = vld [vmem:[%s3863 + $0x18] sm:$0xff]
        %v3868 = vld [vmem:[%s3863 + $0x20] sm:$0xff]
        %v3869 = vld [vmem:[%s3863 + $0x28] sm:$0xff]
        %v3870 = vld [vmem:[%s3863 + $0x30] sm:$0xff]
        %v3871 = vld [vmem:[%s3863 + $0x38] sm:$0xff]
        %s3872 = scalar_lea.vmem %s9, 5
        %v3873 = vld [vmem:[%s3872] sm:$0x1]
        %v3875 = vlaneseq
        %v3876 = vshrl.u32 %v3875, 7
        %v3877 = vsub.s32 0, %v3876
        %v3878 = vrot.slane %v3873, %v3877
        %3880 = vmatprep.subr.mxu0 0.0
        %3881 = vmatpush1.msra.mxu0 0.0
        %3882 = vmatprep.subr.mxu0 0.0
        %3883 = vmatpush1.msra.mxu0 0.0
        %3884 = vmatprep.subr.mxu0 0.0
        %3885 = vmatpush1.msra.mxu0 0.0
        %3886 = vmatprep.subr.mxu0 0.0
        %3887 = vmatpush1.msra.mxu0 0.0
        %3888 = vmatprep.subr.mxu0 0.0
        %3889 = vmatpush1.msra.mxu0 0.0
        %3890 = vmatprep.subr.mxu0 0.0
        %3891 = vmatpush1.msra.mxu0 0.0
        %3892 = vmatprep.subr.mxu0 0.0
        %3893 = vmatpush1.msra.mxu0 0.0
        %3894 = vmatprep.subr.mxu0 0.0
        %3895 = vmatpush1.msra.mxu0 0.0
        %3896 = vmatprep.subr.mxu0 0.0
        %3897 = vmatpush1.msra.mxu0 %v3871
        %3898 = vmatprep.subr.mxu0 0.0
        %3899 = vmatpush1.msra.mxu0 %v3870
        %3900 = vmatprep.subr.mxu0 0.0
        %3901 = vmatpush1.msra.mxu0 %v3869
        %3902 = vmatprep.subr.mxu0 0.0
        %3903 = vmatpush1.msra.mxu0 %v3868
        %3904 = vmatprep.subr.mxu0 0.0
        %3905 = vmatpush1.msra.mxu0 %v3867
        %3906 = vmatprep.subr.mxu0 0.0
        %3907 = vmatpush1.msra.mxu0 %v3866
        %3908 = vmatprep.subr.mxu0 0.0
        %3909 = vmatpush1.msra.mxu0 %v3865
        %3910 = vmatprep.subr.mxu0 0.0
        %3911 = vmatpush1.msra.mxu0 %v3864
        %3912 = vmatprep.subr.mxu0 0.0
        %3913 = vmatpush2.msra.mxu0 0.0
        %3914 = vmatprep.subr.mxu0 0.0
        %3915 = vmatpush2.msra.mxu0 0.0
        %3916 = vmatprep.subr.mxu0 0.0
        %3917 = vmatpush2.msra.mxu0 0.0
        %3918 = vmatprep.subr.mxu0 0.0
        %3919 = vmatpush2.msra.mxu0 0.0
        %3920 = vmatprep.subr.mxu0 0.0
        %3921 = vmatpush2.msra.mxu0 0.0
        %3922 = vmatprep.subr.mxu0 0.0
        %3923 = vmatpush2.msra.mxu0 0.0
        %3924 = vmatprep.subr.mxu0 0.0
        %3925 = vmatpush2.msra.mxu0 0.0
        %3926 = vmatprep.subr.mxu0 0.0
        %3927 = vmatpush2.msra.mxu0 0.0
        %3928 = vmatprep.subr.mxu0 0.0
        %3929 = vmatpush2.msra.mxu0 0.0
        %3930 = vmatprep.subr.mxu0 0.0
        %3931 = vmatpush2.msra.mxu0 0.0
        %3932 = vmatprep.subr.mxu0 0.0
        %3933 = vmatpush2.msra.mxu0 0.0
        %3934 = vmatprep.subr.mxu0 0.0
        %3935 = vmatpush2.msra.mxu0 0.0
        %3936 = vmatprep.subr.mxu0 0.0
        %3937 = vmatpush2.msra.mxu0 0.0
        %3938 = vmatprep.subr.mxu0 0.0
        %3939 = vmatpush2.msra.mxu0 0.0
        %3940 = vmatprep.subr.mxu0 0.0
        %3941 = vmatpush2.msra.mxu0 0.0
        %3942 = vmatprep.subr.mxu0 0.0
        %3943 = vmatpush2.msra.mxu0 0.0
        %3944 = vmatprep.mubr.f32.mxu0 0.0
        %3945 = vmatmul.mubr.f32.gmra.mxu0 %v3203
        %v3946 = vpop.f32.mrf.mxu0
        %v3947 = vadd.f32 %v3878, %v3946
        %v3948 = vpop.f32.mrf.mxu0
        %3949 = vdwg.mxu0
        %v3951 = vsel %vm1139, %v3773, 0
        %v3954 = vsel %vm1139, %v3860, 0
        %3956 = vmatprep.subr.mxu0 0.0
        %3957 = vmatpush1.xpose.msra.mxu0 0.0
        %3958 = vmatprep.subr.mxu0 0.0
        %3959 = vmatpush1.xpose.msra.mxu0 0.0
        %3960 = vmatprep.subr.mxu0 0.0
        %3961 = vmatpush1.xpose.msra.mxu0 0.0
        %3962 = vmatprep.subr.mxu0 0.0
        %3963 = vmatpush1.xpose.msra.mxu0 0.0
        %3964 = vmatprep.subr.mxu0 0.0
        %3965 = vmatpush1.xpose.msra.mxu0 0.0
        %3966 = vmatprep.subr.mxu0 0.0
        %3967 = vmatpush1.xpose.msra.mxu0 0.0
        %3968 = vmatprep.subr.mxu0 0.0
        %3969 = vmatpush1.xpose.msra.mxu0 0.0
        %3970 = vmatprep.subr.mxu0 0.0
        %3971 = vmatpush1.xpose.msra.mxu0 0.0
        %3972 = vmatprep.subr.mxu0 0.0
        %3973 = vmatpush1.xpose.msra.mxu0 0.0
        %3974 = vmatprep.subr.mxu0 0.0
        %3975 = vmatpush1.xpose.msra.mxu0 0.0
        %3976 = vmatprep.subr.mxu0 0.0
        %3977 = vmatpush1.xpose.msra.mxu0 0.0
        %3978 = vmatprep.subr.mxu0 0.0
        %3979 = vmatpush1.xpose.msra.mxu0 0.0
        %3980 = vmatprep.subr.mxu0 0.0
        %3981 = vmatpush1.xpose.msra.mxu0 0.0
        %3982 = vmatprep.subr.mxu0 0.0
        %3983 = vmatpush1.xpose.msra.mxu0 0.0
        %3984 = vmatprep.subr.mxu0 0.0
        %3985 = vmatpush1.xpose.msra.mxu0 0.0
        %3986 = vmatprep.subr.mxu0 0.0
        %3987 = vmatpush1.xpose.msra.mxu0 %v3954
        %3988 = vmatprep.subr.mxu0 0.0
        %3989 = vmatpush2.xpose.msra.mxu0 0.0
        %3990 = vmatprep.subr.mxu0 0.0
        %3991 = vmatpush2.xpose.msra.mxu0 0.0
        %3992 = vmatprep.subr.mxu0 0.0
        %3993 = vmatpush2.xpose.msra.mxu0 0.0
        %3994 = vmatprep.subr.mxu0 0.0
        %3995 = vmatpush2.xpose.msra.mxu0 0.0
        %3996 = vmatprep.subr.mxu0 0.0
        %3997 = vmatpush2.xpose.msra.mxu0 0.0
        %3998 = vmatprep.subr.mxu0 0.0
        %3999 = vmatpush2.xpose.msra.mxu0 0.0
        %4000 = vmatprep.subr.mxu0 0.0
        %4001 = vmatpush2.xpose.msra.mxu0 0.0
        %4002 = vmatprep.subr.mxu0 0.0
        %4003 = vmatpush2.xpose.msra.mxu0 0.0
        %4004 = vmatprep.subr.mxu0 0.0
        %4005 = vmatpush2.xpose.msra.mxu0 0.0
        %4006 = vmatprep.subr.mxu0 0.0
        %4007 = vmatpush2.xpose.msra.mxu0 0.0
        %4008 = vmatprep.subr.mxu0 0.0
        %4009 = vmatpush2.xpose.msra.mxu0 0.0
        %4010 = vmatprep.subr.mxu0 0.0
        %4011 = vmatpush2.xpose.msra.mxu0 0.0
        %4012 = vmatprep.subr.mxu0 0.0
        %4013 = vmatpush2.xpose.msra.mxu0 0.0
        %4014 = vmatprep.subr.mxu0 0.0
        %4015 = vmatpush2.xpose.msra.mxu0 0.0
        %4016 = vmatprep.subr.mxu0 0.0
        %4017 = vmatpush2.xpose.msra.mxu0 0.0
        %4018 = vmatprep.subr.mxu0 0.0
        %4019 = vmatpush2.xpose.msra.mxu0 0.0
        %4020 = vmatprep.mubr.f32.mxu0 0.0
        %4021 = vmatmul.mubr.f32.gmra.mxu0 %v3951
        %v4022 = vpop.f32.mrf.mxu0
        %v4023 = vadd.f32 0.0, %v4022
        %v4024 = vpop.f32.mrf.mxu0
        %4025 = vdwg.mxu0
        %v4026 = vsel %vm1216, %v4023, -inf
        %4027 = vmax.xlane.f32.xlu0 %v4026
        %v4028 = vpop.xlane.xlu0 %4027
        %v4029 = vsub.f32 %v4023, %v4028
        %v4030 = vmul.f32 %v4029, 1.442695
        %v4031 = vpow.pop %v4030
        %v4032 = vsel %vm1216, %v4031, 0.0
        %4033 = vadd.xlane.f32.xlu0 %v4032
        %v4034 = vpop.xlane.xlu0 %4033
        %v4035 = vrcp.pop %v4034
        %v4036 = vmul.f32 %v4031, %v4035
        %v4038 = vsel %vm1228, %v4036, 0
        %v4041 = vsel %vm1232, %v3947, 0
        %4043 = vmatprep.subr.mxu0 0.0
        %4044 = vmatpush1.msra.mxu0 0.0
        %4045 = vmatprep.subr.mxu0 0.0
        %4046 = vmatpush1.msra.mxu0 0.0
        %4047 = vmatprep.subr.mxu0 0.0
        %4048 = vmatpush1.msra.mxu0 0.0
        %4049 = vmatprep.subr.mxu0 0.0
        %4050 = vmatpush1.msra.mxu0 0.0
        %4051 = vmatprep.subr.mxu0 0.0
        %4052 = vmatpush1.msra.mxu0 0.0
        %4053 = vmatprep.subr.mxu0 0.0
        %4054 = vmatpush1.msra.mxu0 0.0
        %4055 = vmatprep.subr.mxu0 0.0
        %4056 = vmatpush1.msra.mxu0 0.0
        %4057 = vmatprep.subr.mxu0 0.0
        %4058 = vmatpush1.msra.mxu0 0.0
        %4059 = vmatprep.subr.mxu0 0.0
        %4060 = vmatpush1.msra.mxu0 0.0
        %4061 = vmatprep.subr.mxu0 0.0
        %4062 = vmatpush1.msra.mxu0 0.0
        %4063 = vmatprep.subr.mxu0 0.0
        %4064 = vmatpush1.msra.mxu0 0.0
        %4065 = vmatprep.subr.mxu0 0.0
        %4066 = vmatpush1.msra.mxu0 0.0
        %4067 = vmatprep.subr.mxu0 0.0
        %4068 = vmatpush1.msra.mxu0 0.0
        %4069 = vmatprep.subr.mxu0 0.0
        %4070 = vmatpush1.msra.mxu0 0.0
        %4071 = vmatprep.subr.mxu0 0.0
        %4072 = vmatpush1.msra.mxu0 0.0
        %4073 = vmatprep.subr.mxu0 0.0
        %4074 = vmatpush1.msra.mxu0 %v4041
        %4075 = vmatprep.subr.mxu0 0.0
        %4076 = vmatpush2.msra.mxu0 0.0
        %4077 = vmatprep.subr.mxu0 0.0
        %4078 = vmatpush2.msra.mxu0 0.0
        %4079 = vmatprep.subr.mxu0 0.0
        %4080 = vmatpush2.msra.mxu0 0.0
        %4081 = vmatprep.subr.mxu0 0.0
        %4082 = vmatpush2.msra.mxu0 0.0
        %4083 = vmatprep.subr.mxu0 0.0
        %4084 = vmatpush2.msra.mxu0 0.0
        %4085 = vmatprep.subr.mxu0 0.0
        %4086 = vmatpush2.msra.mxu0 0.0
        %4087 = vmatprep.subr.mxu0 0.0
        %4088 = vmatpush2.msra.mxu0 0.0
        %4089 = vmatprep.subr.mxu0 0.0
        %4090 = vmatpush2.msra.mxu0 0.0
        %4091 = vmatprep.subr.mxu0 0.0
        %4092 = vmatpush2.msra.mxu0 0.0
        %4093 = vmatprep.subr.mxu0 0.0
        %4094 = vmatpush2.msra.mxu0 0.0
        %4095 = vmatprep.subr.mxu0 0.0
        %4096 = vmatpush2.msra.mxu0 0.0
        %4097 = vmatprep.subr.mxu0 0.0
        %4098 = vmatpush2.msra.mxu0 0.0
        %4099 = vmatprep.subr.mxu0 0.0
        %4100 = vmatpush2.msra.mxu0 0.0
        %4101 = vmatprep.subr.mxu0 0.0
        %4102 = vmatpush2.msra.mxu0 0.0
        %4103 = vmatprep.subr.mxu0 0.0
        %4104 = vmatpush2.msra.mxu0 0.0
        %4105 = vmatprep.subr.mxu0 0.0
        %4106 = vmatpush2.msra.mxu0 0.0
        %4107 = vmatprep.mubr.f32.mxu0 0.0
        %4108 = vmatmul.mubr.f32.gmra.mxu0 %v4038
        %v4109 = vpop.f32.mrf.mxu0
        %v4110 = vadd.f32 0.0, %v4109
        %v4111 = vpop.f32.mrf.mxu0
        %4112 = vdwg.mxu0
        %s4113 = scalar_lea.vmem %s10, 80
        %v4114 = vld [vmem:[%s4113] sm:$0xff]
        %v4115 = vld [vmem:[%s4113 + $0x8] sm:$0xff]
        %v4117 = vsel %vm1139, %v4110, 0
        %4119 = vmatprep.subr.mxu0 0.0
        %4120 = vmatpush1.msra.mxu0 0.0
        %4121 = vmatprep.subr.mxu0 0.0
        %4122 = vmatpush1.msra.mxu0 0.0
        %4123 = vmatprep.subr.mxu0 0.0
        %4124 = vmatpush1.msra.mxu0 0.0
        %4125 = vmatprep.subr.mxu0 0.0
        %4126 = vmatpush1.msra.mxu0 0.0
        %4127 = vmatprep.subr.mxu0 0.0
        %4128 = vmatpush1.msra.mxu0 0.0
        %4129 = vmatprep.subr.mxu0 0.0
        %4130 = vmatpush1.msra.mxu0 0.0
        %4131 = vmatprep.subr.mxu0 0.0
        %4132 = vmatpush1.msra.mxu0 0.0
        %4133 = vmatprep.subr.mxu0 0.0
        %4134 = vmatpush1.msra.mxu0 0.0
        %4135 = vmatprep.subr.mxu0 0.0
        %4136 = vmatpush1.msra.mxu0 0.0
        %4137 = vmatprep.subr.mxu0 0.0
        %4138 = vmatpush1.msra.mxu0 0.0
        %4139 = vmatprep.subr.mxu0 0.0
        %4140 = vmatpush1.msra.mxu0 0.0
        %4141 = vmatprep.subr.mxu0 0.0
        %4142 = vmatpush1.msra.mxu0 0.0
        %4143 = vmatprep.subr.mxu0 0.0
        %4144 = vmatpush1.msra.mxu0 0.0
        %4145 = vmatprep.subr.mxu0 0.0
        %4146 = vmatpush1.msra.mxu0 0.0
        %4147 = vmatprep.subr.mxu0 0.0
        %4148 = vmatpush1.msra.mxu0 %v4115
        %4149 = vmatprep.subr.mxu0 0.0
        %4150 = vmatpush1.msra.mxu0 %v4114
        %4151 = vmatprep.subr.mxu0 0.0
        %4152 = vmatpush2.msra.mxu0 0.0
        %4153 = vmatprep.subr.mxu0 0.0
        %4154 = vmatpush2.msra.mxu0 0.0
        %4155 = vmatprep.subr.mxu0 0.0
        %4156 = vmatpush2.msra.mxu0 0.0
        %4157 = vmatprep.subr.mxu0 0.0
        %4158 = vmatpush2.msra.mxu0 0.0
        %4159 = vmatprep.subr.mxu0 0.0
        %4160 = vmatpush2.msra.mxu0 0.0
        %4161 = vmatprep.subr.mxu0 0.0
        %4162 = vmatpush2.msra.mxu0 0.0
        %4163 = vmatprep.subr.mxu0 0.0
        %4164 = vmatpush2.msra.mxu0 0.0
        %4165 = vmatprep.subr.mxu0 0.0
        %4166 = vmatpush2.msra.mxu0 0.0
        %4167 = vmatprep.subr.mxu0 0.0
        %4168 = vmatpush2.msra.mxu0 0.0
        %4169 = vmatprep.subr.mxu0 0.0
        %4170 = vmatpush2.msra.mxu0 0.0
        %4171 = vmatprep.subr.mxu0 0.0
        %4172 = vmatpush2.msra.mxu0 0.0
        %4173 = vmatprep.subr.mxu0 0.0
        %4174 = vmatpush2.msra.mxu0 0.0
        %4175 = vmatprep.subr.mxu0 0.0
        %4176 = vmatpush2.msra.mxu0 0.0
        %4177 = vmatprep.subr.mxu0 0.0
        %4178 = vmatpush2.msra.mxu0 0.0
        %4179 = vmatprep.subr.mxu0 0.0
        %4180 = vmatpush2.msra.mxu0 0.0
        %4181 = vmatprep.subr.mxu0 0.0
        %4182 = vmatpush2.msra.mxu0 0.0
        %4183 = vmatprep.mubr.f32.mxu0 0.0
        %4184 = vmatmul.mubr.f32.gmra.mxu0 %v4117
        %v4185 = vpop.f32.mrf.mxu0
        %v4186 = vadd.f32 0.0, %v4185
        %v4187 = vpop.f32.mrf.mxu0
        %4188 = vdwg.mxu0
        %v4189 = vadd.f32 %v3688, %v4186
        %s4190 = scalar_lea.vmem %s4, 384
        %v4191 = vld [vmem:[%s4190] sm:$0xff]
        %v4192 = vld [vmem:[%s4190 + $0x8] sm:$0xff]
        %v4193 = vld [vmem:[%s4190 + $0x10] sm:$0xff]
        %v4194 = vld [vmem:[%s4190 + $0x18] sm:$0xff]
        %v4195 = vld [vmem:[%s4190 + $0x20] sm:$0xff]
        %v4196 = vld [vmem:[%s4190 + $0x28] sm:$0xff]
        %v4197 = vld [vmem:[%s4190 + $0x30] sm:$0xff]
        %v4198 = vld [vmem:[%s4190 + $0x38] sm:$0xff]
        %s4199 = scalar_lea.vmem %s5, 6
        %v4200 = vld [vmem:[%s4199] sm:$0x1]
        %v4202 = vlaneseq
        %v4203 = vshrl.u32 %v4202, 7
        %v4204 = vsub.s32 0, %v4203
        %v4205 = vrot.slane %v4200, %v4204
        %4207 = vmatprep.subr.mxu0 0.0
        %4208 = vmatpush1.msra.mxu0 0.0
        %4209 = vmatprep.subr.mxu0 0.0
        %4210 = vmatpush1.msra.mxu0 0.0
        %4211 = vmatprep.subr.mxu0 0.0
        %4212 = vmatpush1.msra.mxu0 0.0
        %4213 = vmatprep.subr.mxu0 0.0
        %4214 = vmatpush1.msra.mxu0 0.0
        %4215 = vmatprep.subr.mxu0 0.0
        %4216 = vmatpush1.msra.mxu0 0.0
        %4217 = vmatprep.subr.mxu0 0.0
        %4218 = vmatpush1.msra.mxu0 0.0
        %4219 = vmatprep.subr.mxu0 0.0
        %4220 = vmatpush1.msra.mxu0 0.0
        %4221 = vmatprep.subr.mxu0 0.0
        %4222 = vmatpush1.msra.mxu0 0.0
        %4223 = vmatprep.subr.mxu0 0.0
        %4224 = vmatpush1.msra.mxu0 %v4198
        %4225 = vmatprep.subr.mxu0 0.0
        %4226 = vmatpush1.msra.mxu0 %v4197
        %4227 = vmatprep.subr.mxu0 0.0
        %4228 = vmatpush1.msra.mxu0 %v4196
        %4229 = vmatprep.subr.mxu0 0.0
        %4230 = vmatpush1.msra.mxu0 %v4195
        %4231 = vmatprep.subr.mxu0 0.0
        %4232 = vmatpush1.msra.mxu0 %v4194
        %4233 = vmatprep.subr.mxu0 0.0
        %4234 = vmatpush1.msra.mxu0 %v4193
        %4235 = vmatprep.subr.mxu0 0.0
        %4236 = vmatpush1.msra.mxu0 %v4192
        %4237 = vmatprep.subr.mxu0 0.0
        %4238 = vmatpush1.msra.mxu0 %v4191
        %4239 = vmatprep.subr.mxu0 0.0
        %4240 = vmatpush2.msra.mxu0 0.0
        %4241 = vmatprep.subr.mxu0 0.0
        %4242 = vmatpush2.msra.mxu0 0.0
        %4243 = vmatprep.subr.mxu0 0.0
        %4244 = vmatpush2.msra.mxu0 0.0
        %4245 = vmatprep.subr.mxu0 0.0
        %4246 = vmatpush2.msra.mxu0 0.0
        %4247 = vmatprep.subr.mxu0 0.0
        %4248 = vmatpush2.msra.mxu0 0.0
        %4249 = vmatprep.subr.mxu0 0.0
        %4250 = vmatpush2.msra.mxu0 0.0
        %4251 = vmatprep.subr.mxu0 0.0
        %4252 = vmatpush2.msra.mxu0 0.0
        %4253 = vmatprep.subr.mxu0 0.0
        %4254 = vmatpush2.msra.mxu0 0.0
        %4255 = vmatprep.subr.mxu0 0.0
        %4256 = vmatpush2.msra.mxu0 0.0
        %4257 = vmatprep.subr.mxu0 0.0
        %4258 = vmatpush2.msra.mxu0 0.0
        %4259 = vmatprep.subr.mxu0 0.0
        %4260 = vmatpush2.msra.mxu0 0.0
        %4261 = vmatprep.subr.mxu0 0.0
        %4262 = vmatpush2.msra.mxu0 0.0
        %4263 = vmatprep.subr.mxu0 0.0
        %4264 = vmatpush2.msra.mxu0 0.0
        %4265 = vmatprep.subr.mxu0 0.0
        %4266 = vmatpush2.msra.mxu0 0.0
        %4267 = vmatprep.subr.mxu0 0.0
        %4268 = vmatpush2.msra.mxu0 0.0
        %4269 = vmatprep.subr.mxu0 0.0
        %4270 = vmatpush2.msra.mxu0 0.0
        %4271 = vmatprep.mubr.f32.mxu0 0.0
        %4272 = vmatmul.mubr.f32.gmra.mxu0 %v3203
        %v4273 = vpop.f32.mrf.mxu0
        %v4274 = vadd.f32 %v4205, %v4273
        %v4275 = vpop.f32.mrf.mxu0
        %4276 = vdwg.mxu0
        %s4277 = scalar_lea.vmem %s6, 384
        %v4278 = vld [vmem:[%s4277] sm:$0xff]
        %v4279 = vld [vmem:[%s4277 + $0x8] sm:$0xff]
        %v4280 = vld [vmem:[%s4277 + $0x10] sm:$0xff]
        %v4281 = vld [vmem:[%s4277 + $0x18] sm:$0xff]
        %v4282 = vld [vmem:[%s4277 + $0x20] sm:$0xff]
        %v4283 = vld [vmem:[%s4277 + $0x28] sm:$0xff]
        %v4284 = vld [vmem:[%s4277 + $0x30] sm:$0xff]
        %v4285 = vld [vmem:[%s4277 + $0x38] sm:$0xff]
        %s4286 = scalar_lea.vmem %s7, 6
        %v4287 = vld [vmem:[%s4286] sm:$0x1]
        %v4289 = vlaneseq
        %v4290 = vshrl.u32 %v4289, 7
        %v4291 = vsub.s32 0, %v4290
        %v4292 = vrot.slane %v4287, %v4291
        %4294 = vmatprep.subr.mxu0 0.0
        %4295 = vmatpush1.msra.mxu0 0.0
        %4296 = vmatprep.subr.mxu0 0.0
        %4297 = vmatpush1.msra.mxu0 0.0
        %4298 = vmatprep.subr.mxu0 0.0
        %4299 = vmatpush1.msra.mxu0 0.0
        %4300 = vmatprep.subr.mxu0 0.0
        %4301 = vmatpush1.msra.mxu0 0.0
        %4302 = vmatprep.subr.mxu0 0.0
        %4303 = vmatpush1.msra.mxu0 0.0
        %4304 = vmatprep.subr.mxu0 0.0
        %4305 = vmatpush1.msra.mxu0 0.0
        %4306 = vmatprep.subr.mxu0 0.0
        %4307 = vmatpush1.msra.mxu0 0.0
        %4308 = vmatprep.subr.mxu0 0.0
        %4309 = vmatpush1.msra.mxu0 0.0
        %4310 = vmatprep.subr.mxu0 0.0
        %4311 = vmatpush1.msra.mxu0 %v4285
        %4312 = vmatprep.subr.mxu0 0.0
        %4313 = vmatpush1.msra.mxu0 %v4284
        %4314 = vmatprep.subr.mxu0 0.0
        %4315 = vmatpush1.msra.mxu0 %v4283
        %4316 = vmatprep.subr.mxu0 0.0
        %4317 = vmatpush1.msra.mxu0 %v4282
        %4318 = vmatprep.subr.mxu0 0.0
        %4319 = vmatpush1.msra.mxu0 %v4281
        %4320 = vmatprep.subr.mxu0 0.0
        %4321 = vmatpush1.msra.mxu0 %v4280
        %4322 = vmatprep.subr.mxu0 0.0
        %4323 = vmatpush1.msra.mxu0 %v4279
        %4324 = vmatprep.subr.mxu0 0.0
        %4325 = vmatpush1.msra.mxu0 %v4278
        %4326 = vmatprep.subr.mxu0 0.0
        %4327 = vmatpush2.msra.mxu0 0.0
        %4328 = vmatprep.subr.mxu0 0.0
        %4329 = vmatpush2.msra.mxu0 0.0
        %4330 = vmatprep.subr.mxu0 0.0
        %4331 = vmatpush2.msra.mxu0 0.0
        %4332 = vmatprep.subr.mxu0 0.0
        %4333 = vmatpush2.msra.mxu0 0.0
        %4334 = vmatprep.subr.mxu0 0.0
        %4335 = vmatpush2.msra.mxu0 0.0
        %4336 = vmatprep.subr.mxu0 0.0
        %4337 = vmatpush2.msra.mxu0 0.0
        %4338 = vmatprep.subr.mxu0 0.0
        %4339 = vmatpush2.msra.mxu0 0.0
        %4340 = vmatprep.subr.mxu0 0.0
        %4341 = vmatpush2.msra.mxu0 0.0
        %4342 = vmatprep.subr.mxu0 0.0
        %4343 = vmatpush2.msra.mxu0 0.0
        %4344 = vmatprep.subr.mxu0 0.0
        %4345 = vmatpush2.msra.mxu0 0.0
        %4346 = vmatprep.subr.mxu0 0.0
        %4347 = vmatpush2.msra.mxu0 0.0
        %4348 = vmatprep.subr.mxu0 0.0
        %4349 = vmatpush2.msra.mxu0 0.0
        %4350 = vmatprep.subr.mxu0 0.0
        %4351 = vmatpush2.msra.mxu0 0.0
        %4352 = vmatprep.subr.mxu0 0.0
        %4353 = vmatpush2.msra.mxu0 0.0
        %4354 = vmatprep.subr.mxu0 0.0
        %4355 = vmatpush2.msra.mxu0 0.0
        %4356 = vmatprep.subr.mxu0 0.0
        %4357 = vmatpush2.msra.mxu0 0.0
        %4358 = vmatprep.mubr.f32.mxu0 0.0
        %4359 = vmatmul.mubr.f32.gmra.mxu0 %v3203
        %v4360 = vpop.f32.mrf.mxu0
        %v4361 = vadd.f32 %v4292, %v4360
        %v4362 = vpop.f32.mrf.mxu0
        %4363 = vdwg.mxu0
        %s4364 = scalar_lea.vmem %s8, 384
        %v4365 = vld [vmem:[%s4364] sm:$0xff]
        %v4366 = vld [vmem:[%s4364 + $0x8] sm:$0xff]
        %v4367 = vld [vmem:[%s4364 + $0x10] sm:$0xff]
        %v4368 = vld [vmem:[%s4364 + $0x18] sm:$0xff]
        %v4369 = vld [vmem:[%s4364 + $0x20] sm:$0xff]
        %v4370 = vld [vmem:[%s4364 + $0x28] sm:$0xff]
        %v4371 = vld [vmem:[%s4364 + $0x30] sm:$0xff]
        %v4372 = vld [vmem:[%s4364 + $0x38] sm:$0xff]
        %s4373 = scalar_lea.vmem %s9, 6
        %v4374 = vld [vmem:[%s4373] sm:$0x1]
        %v4376 = vlaneseq
        %v4377 = vshrl.u32 %v4376, 7
        %v4378 = vsub.s32 0, %v4377
        %v4379 = vrot.slane %v4374, %v4378
        %4381 = vmatprep.subr.mxu0 0.0
        %4382 = vmatpush1.msra.mxu0 0.0
        %4383 = vmatprep.subr.mxu0 0.0
        %4384 = vmatpush1.msra.mxu0 0.0
        %4385 = vmatprep.subr.mxu0 0.0
        %4386 = vmatpush1.msra.mxu0 0.0
        %4387 = vmatprep.subr.mxu0 0.0
        %4388 = vmatpush1.msra.mxu0 0.0
        %4389 = vmatprep.subr.mxu0 0.0
        %4390 = vmatpush1.msra.mxu0 0.0
        %4391 = vmatprep.subr.mxu0 0.0
        %4392 = vmatpush1.msra.mxu0 0.0
        %4393 = vmatprep.subr.mxu0 0.0
        %4394 = vmatpush1.msra.mxu0 0.0
        %4395 = vmatprep.subr.mxu0 0.0
        %4396 = vmatpush1.msra.mxu0 0.0
        %4397 = vmatprep.subr.mxu0 0.0
        %4398 = vmatpush1.msra.mxu0 %v4372
        %4399 = vmatprep.subr.mxu0 0.0
        %4400 = vmatpush1.msra.mxu0 %v4371
        %4401 = vmatprep.subr.mxu0 0.0
        %4402 = vmatpush1.msra.mxu0 %v4370
        %4403 = vmatprep.subr.mxu0 0.0
        %4404 = vmatpush1.msra.mxu0 %v4369
        %4405 = vmatprep.subr.mxu0 0.0
        %4406 = vmatpush1.msra.mxu0 %v4368
        %4407 = vmatprep.subr.mxu0 0.0
        %4408 = vmatpush1.msra.mxu0 %v4367
        %4409 = vmatprep.subr.mxu0 0.0
        %4410 = vmatpush1.msra.mxu0 %v4366
        %4411 = vmatprep.subr.mxu0 0.0
        %4412 = vmatpush1.msra.mxu0 %v4365
        %4413 = vmatprep.subr.mxu0 0.0
        %4414 = vmatpush2.msra.mxu0 0.0
        %4415 = vmatprep.subr.mxu0 0.0
        %4416 = vmatpush2.msra.mxu0 0.0
        %4417 = vmatprep.subr.mxu0 0.0
        %4418 = vmatpush2.msra.mxu0 0.0
        %4419 = vmatprep.subr.mxu0 0.0
        %4420 = vmatpush2.msra.mxu0 0.0
        %4421 = vmatprep.subr.mxu0 0.0
        %4422 = vmatpush2.msra.mxu0 0.0
        %4423 = vmatprep.subr.mxu0 0.0
        %4424 = vmatpush2.msra.mxu0 0.0
        %4425 = vmatprep.subr.mxu0 0.0
        %4426 = vmatpush2.msra.mxu0 0.0
        %4427 = vmatprep.subr.mxu0 0.0
        %4428 = vmatpush2.msra.mxu0 0.0
        %4429 = vmatprep.subr.mxu0 0.0
        %4430 = vmatpush2.msra.mxu0 0.0
        %4431 = vmatprep.subr.mxu0 0.0
        %4432 = vmatpush2.msra.mxu0 0.0
        %4433 = vmatprep.subr.mxu0 0.0
        %4434 = vmatpush2.msra.mxu0 0.0
        %4435 = vmatprep.subr.mxu0 0.0
        %4436 = vmatpush2.msra.mxu0 0.0
        %4437 = vmatprep.subr.mxu0 0.0
        %4438 = vmatpush2.msra.mxu0 0.0
        %4439 = vmatprep.subr.mxu0 0.0
        %4440 = vmatpush2.msra.mxu0 0.0
        %4441 = vmatprep.subr.mxu0 0.0
        %4442 = vmatpush2.msra.mxu0 0.0
        %4443 = vmatprep.subr.mxu0 0.0
        %4444 = vmatpush2.msra.mxu0 0.0
        %4445 = vmatprep.mubr.f32.mxu0 0.0
        %4446 = vmatmul.mubr.f32.gmra.mxu0 %v3203
        %v4447 = vpop.f32.mrf.mxu0
        %v4448 = vadd.f32 %v4379, %v4447
        %v4449 = vpop.f32.mrf.mxu0
        %4450 = vdwg.mxu0
        %v4452 = vsel %vm1139, %v4274, 0
        %v4455 = vsel %vm1139, %v4361, 0
        %4457 = vmatprep.subr.mxu0 0.0
        %4458 = vmatpush1.xpose.msra.mxu0 0.0
        %4459 = vmatprep.subr.mxu0 0.0
        %4460 = vmatpush1.xpose.msra.mxu0 0.0
        %4461 = vmatprep.subr.mxu0 0.0
        %4462 = vmatpush1.xpose.msra.mxu0 0.0
        %4463 = vmatprep.subr.mxu0 0.0
        %4464 = vmatpush1.xpose.msra.mxu0 0.0
        %4465 = vmatprep.subr.mxu0 0.0
        %4466 = vmatpush1.xpose.msra.mxu0 0.0
        %4467 = vmatprep.subr.mxu0 0.0
        %4468 = vmatpush1.xpose.msra.mxu0 0.0
        %4469 = vmatprep.subr.mxu0 0.0
        %4470 = vmatpush1.xpose.msra.mxu0 0.0
        %4471 = vmatprep.subr.mxu0 0.0
        %4472 = vmatpush1.xpose.msra.mxu0 0.0
        %4473 = vmatprep.subr.mxu0 0.0
        %4474 = vmatpush1.xpose.msra.mxu0 0.0
        %4475 = vmatprep.subr.mxu0 0.0
        %4476 = vmatpush1.xpose.msra.mxu0 0.0
        %4477 = vmatprep.subr.mxu0 0.0
        %4478 = vmatpush1.xpose.msra.mxu0 0.0
        %4479 = vmatprep.subr.mxu0 0.0
        %4480 = vmatpush1.xpose.msra.mxu0 0.0
        %4481 = vmatprep.subr.mxu0 0.0
        %4482 = vmatpush1.xpose.msra.mxu0 0.0
        %4483 = vmatprep.subr.mxu0 0.0
        %4484 = vmatpush1.xpose.msra.mxu0 0.0
        %4485 = vmatprep.subr.mxu0 0.0
        %4486 = vmatpush1.xpose.msra.mxu0 0.0
        %4487 = vmatprep.subr.mxu0 0.0
        %4488 = vmatpush1.xpose.msra.mxu0 %v4455
        %4489 = vmatprep.subr.mxu0 0.0
        %4490 = vmatpush2.xpose.msra.mxu0 0.0
        %4491 = vmatprep.subr.mxu0 0.0
        %4492 = vmatpush2.xpose.msra.mxu0 0.0
        %4493 = vmatprep.subr.mxu0 0.0
        %4494 = vmatpush2.xpose.msra.mxu0 0.0
        %4495 = vmatprep.subr.mxu0 0.0
        %4496 = vmatpush2.xpose.msra.mxu0 0.0
        %4497 = vmatprep.subr.mxu0 0.0
        %4498 = vmatpush2.xpose.msra.mxu0 0.0
        %4499 = vmatprep.subr.mxu0 0.0
        %4500 = vmatpush2.xpose.msra.mxu0 0.0
        %4501 = vmatprep.subr.mxu0 0.0
        %4502 = vmatpush2.xpose.msra.mxu0 0.0
        %4503 = vmatprep.subr.mxu0 0.0
        %4504 = vmatpush2.xpose.msra.mxu0 0.0
        %4505 = vmatprep.subr.mxu0 0.0
        %4506 = vmatpush2.xpose.msra.mxu0 0.0
        %4507 = vmatprep.subr.mxu0 0.0
        %4508 = vmatpush2.xpose.msra.mxu0 0.0
        %4509 = vmatprep.subr.mxu0 0.0
        %4510 = vmatpush2.xpose.msra.mxu0 0.0
        %4511 = vmatprep.subr.mxu0 0.0
        %4512 = vmatpush2.xpose.msra.mxu0 0.0
        %4513 = vmatprep.subr.mxu0 0.0
        %4514 = vmatpush2.xpose.msra.mxu0 0.0
        %4515 = vmatprep.subr.mxu0 0.0
        %4516 = vmatpush2.xpose.msra.mxu0 0.0
        %4517 = vmatprep.subr.mxu0 0.0
        %4518 = vmatpush2.xpose.msra.mxu0 0.0
        %4519 = vmatprep.subr.mxu0 0.0
        %4520 = vmatpush2.xpose.msra.mxu0 0.0
        %4521 = vmatprep.mubr.f32.mxu0 0.0
        %4522 = vmatmul.mubr.f32.gmra.mxu0 %v4452
        %v4523 = vpop.f32.mrf.mxu0
        %v4524 = vadd.f32 0.0, %v4523
        %v4525 = vpop.f32.mrf.mxu0
        %4526 = vdwg.mxu0
        %v4527 = vsel %vm1216, %v4524, -inf
        %4528 = vmax.xlane.f32.xlu0 %v4527
        %v4529 = vpop.xlane.xlu0 %4528
        %v4530 = vsub.f32 %v4524, %v4529
        %v4531 = vmul.f32 %v4530, 1.442695
        %v4532 = vpow.pop %v4531
        %v4533 = vsel %vm1216, %v4532, 0.0
        %4534 = vadd.xlane.f32.xlu0 %v4533
        %v4535 = vpop.xlane.xlu0 %4534
        %v4536 = vrcp.pop %v4535
        %v4537 = vmul.f32 %v4532, %v4536
        %v4539 = vsel %vm1228, %v4537, 0
        %v4542 = vsel %vm1232, %v4448, 0
        %4544 = vmatprep.subr.mxu0 0.0
        %4545 = vmatpush1.msra.mxu0 0.0
        %4546 = vmatprep.subr.mxu0 0.0
        %4547 = vmatpush1.msra.mxu0 0.0
        %4548 = vmatprep.subr.mxu0 0.0
        %4549 = vmatpush1.msra.mxu0 0.0
        %4550 = vmatprep.subr.mxu0 0.0
        %4551 = vmatpush1.msra.mxu0 0.0
        %4552 = vmatprep.subr.mxu0 0.0
        %4553 = vmatpush1.msra.mxu0 0.0
        %4554 = vmatprep.subr.mxu0 0.0
        %4555 = vmatpush1.msra.mxu0 0.0
        %4556 = vmatprep.subr.mxu0 0.0
        %4557 = vmatpush1.msra.mxu0 0.0
        %4558 = vmatprep.subr.mxu0 0.0
        %4559 = vmatpush1.msra.mxu0 0.0
        %4560 = vmatprep.subr.mxu0 0.0
        %4561 = vmatpush1.msra.mxu0 0.0
        %4562 = vmatprep.subr.mxu0 0.0
        %4563 = vmatpush1.msra.mxu0 0.0
        %4564 = vmatprep.subr.mxu0 0.0
        %4565 = vmatpush1.msra.mxu0 0.0
        %4566 = vmatprep.subr.mxu0 0.0
        %4567 = vmatpush1.msra.mxu0 0.0
        %4568 = vmatprep.subr.mxu0 0.0
        %4569 = vmatpush1.msra.mxu0 0.0
        %4570 = vmatprep.subr.mxu0 0.0
        %4571 = vmatpush1.msra.mxu0 0.0
        %4572 = vmatprep.subr.mxu0 0.0
        %4573 = vmatpush1.msra.mxu0 0.0
        %4574 = vmatprep.subr.mxu0 0.0
        %4575 = vmatpush1.msra.mxu0 %v4542
        %4576 = vmatprep.subr.mxu0 0.0
        %4577 = vmatpush2.msra.mxu0 0.0
        %4578 = vmatprep.subr.mxu0 0.0
        %4579 = vmatpush2.msra.mxu0 0.0
        %4580 = vmatprep.subr.mxu0 0.0
        %4581 = vmatpush2.msra.mxu0 0.0
        %4582 = vmatprep.subr.mxu0 0.0
        %4583 = vmatpush2.msra.mxu0 0.0
        %4584 = vmatprep.subr.mxu0 0.0
        %4585 = vmatpush2.msra.mxu0 0.0
        %4586 = vmatprep.subr.mxu0 0.0
        %4587 = vmatpush2.msra.mxu0 0.0
        %4588 = vmatprep.subr.mxu0 0.0
        %4589 = vmatpush2.msra.mxu0 0.0
        %4590 = vmatprep.subr.mxu0 0.0
        %4591 = vmatpush2.msra.mxu0 0.0
        %4592 = vmatprep.subr.mxu0 0.0
        %4593 = vmatpush2.msra.mxu0 0.0
        %4594 = vmatprep.subr.mxu0 0.0
        %4595 = vmatpush2.msra.mxu0 0.0
        %4596 = vmatprep.subr.mxu0 0.0
        %4597 = vmatpush2.msra.mxu0 0.0
        %4598 = vmatprep.subr.mxu0 0.0
        %4599 = vmatpush2.msra.mxu0 0.0
        %4600 = vmatprep.subr.mxu0 0.0
        %4601 = vmatpush2.msra.mxu0 0.0
        %4602 = vmatprep.subr.mxu0 0.0
        %4603 = vmatpush2.msra.mxu0 0.0
        %4604 = vmatprep.subr.mxu0 0.0
        %4605 = vmatpush2.msra.mxu0 0.0
        %4606 = vmatprep.subr.mxu0 0.0
        %4607 = vmatpush2.msra.mxu0 0.0
        %4608 = vmatprep.mubr.f32.mxu0 0.0
        %4609 = vmatmul.mubr.f32.gmra.mxu0 %v4539
        %v4610 = vpop.f32.mrf.mxu0
        %v4611 = vadd.f32 0.0, %v4610
        %v4612 = vpop.f32.mrf.mxu0
        %4613 = vdwg.mxu0
        %s4614 = scalar_lea.vmem %s10, 96
        %v4615 = vld [vmem:[%s4614] sm:$0xff]
        %v4616 = vld [vmem:[%s4614 + $0x8] sm:$0xff]
        %v4618 = vsel %vm1139, %v4611, 0
        %4620 = vmatprep.subr.mxu0 0.0
        %4621 = vmatpush1.msra.mxu0 0.0
        %4622 = vmatprep.subr.mxu0 0.0
        %4623 = vmatpush1.msra.mxu0 0.0
        %4624 = vmatprep.subr.mxu0 0.0
        %4625 = vmatpush1.msra.mxu0 0.0
        %4626 = vmatprep.subr.mxu0 0.0
        %4627 = vmatpush1.msra.mxu0 0.0
        %4628 = vmatprep.subr.mxu0 0.0
        %4629 = vmatpush1.msra.mxu0 0.0
        %4630 = vmatprep.subr.mxu0 0.0
        %4631 = vmatpush1.msra.mxu0 0.0
        %4632 = vmatprep.subr.mxu0 0.0
        %4633 = vmatpush1.msra.mxu0 0.0
        %4634 = vmatprep.subr.mxu0 0.0
        %4635 = vmatpush1.msra.mxu0 0.0
        %4636 = vmatprep.subr.mxu0 0.0
        %4637 = vmatpush1.msra.mxu0 0.0
        %4638 = vmatprep.subr.mxu0 0.0
        %4639 = vmatpush1.msra.mxu0 0.0
        %4640 = vmatprep.subr.mxu0 0.0
        %4641 = vmatpush1.msra.mxu0 0.0
        %4642 = vmatprep.subr.mxu0 0.0
        %4643 = vmatpush1.msra.mxu0 0.0
        %4644 = vmatprep.subr.mxu0 0.0
        %4645 = vmatpush1.msra.mxu0 0.0
        %4646 = vmatprep.subr.mxu0 0.0
        %4647 = vmatpush1.msra.mxu0 0.0
        %4648 = vmatprep.subr.mxu0 0.0
        %4649 = vmatpush1.msra.mxu0 %v4616
        %4650 = vmatprep.subr.mxu0 0.0
        %4651 = vmatpush1.msra.mxu0 %v4615
        %4652 = vmatprep.subr.mxu0 0.0
        %4653 = vmatpush2.msra.mxu0 0.0
        %4654 = vmatprep.subr.mxu0 0.0
        %4655 = vmatpush2.msra.mxu0 0.0
        %4656 = vmatprep.subr.mxu0 0.0
        %4657 = vmatpush2.msra.mxu0 0.0
        %4658 = vmatprep.subr.mxu0 0.0
        %4659 = vmatpush2.msra.mxu0 0.0
        %4660 = vmatprep.subr.mxu0 0.0
        %4661 = vmatpush2.msra.mxu0 0.0
        %4662 = vmatprep.subr.mxu0 0.0
        %4663 = vmatpush2.msra.mxu0 0.0
        %4664 = vmatprep.subr.mxu0 0.0
        %4665 = vmatpush2.msra.mxu0 0.0
        %4666 = vmatprep.subr.mxu0 0.0
        %4667 = vmatpush2.msra.mxu0 0.0
        %4668 = vmatprep.subr.mxu0 0.0
        %4669 = vmatpush2.msra.mxu0 0.0
        %4670 = vmatprep.subr.mxu0 0.0
        %4671 = vmatpush2.msra.mxu0 0.0
        %4672 = vmatprep.subr.mxu0 0.0
        %4673 = vmatpush2.msra.mxu0 0.0
        %4674 = vmatprep.subr.mxu0 0.0
        %4675 = vmatpush2.msra.mxu0 0.0
        %4676 = vmatprep.subr.mxu0 0.0
        %4677 = vmatpush2.msra.mxu0 0.0
        %4678 = vmatprep.subr.mxu0 0.0
        %4679 = vmatpush2.msra.mxu0 0.0
        %4680 = vmatprep.subr.mxu0 0.0
        %4681 = vmatpush2.msra.mxu0 0.0
        %4682 = vmatprep.subr.mxu0 0.0
        %4683 = vmatpush2.msra.mxu0 0.0
        %4684 = vmatprep.mubr.f32.mxu0 0.0
        %4685 = vmatmul.mubr.f32.gmra.mxu0 %v4618
        %v4686 = vpop.f32.mrf.mxu0
        %v4687 = vadd.f32 0.0, %v4686
        %v4688 = vpop.f32.mrf.mxu0
        %4689 = vdwg.mxu0
        %v4690 = vadd.f32 %v4189, %v4687
        %s4691 = scalar_lea.vmem %s4, 448
        %v4692 = vld [vmem:[%s4691] sm:$0xff]
        %v4693 = vld [vmem:[%s4691 + $0x8] sm:$0xff]
        %v4694 = vld [vmem:[%s4691 + $0x10] sm:$0xff]
        %v4695 = vld [vmem:[%s4691 + $0x18] sm:$0xff]
        %v4696 = vld [vmem:[%s4691 + $0x20] sm:$0xff]
        %v4697 = vld [vmem:[%s4691 + $0x28] sm:$0xff]
        %v4698 = vld [vmem:[%s4691 + $0x30] sm:$0xff]
        %v4699 = vld [vmem:[%s4691 + $0x38] sm:$0xff]
        %s4700 = scalar_lea.vmem %s5, 7
        %v4701 = vld [vmem:[%s4700] sm:$0x1]
        %v4703 = vlaneseq
        %v4704 = vshrl.u32 %v4703, 7
        %v4705 = vsub.s32 0, %v4704
        %v4706 = vrot.slane %v4701, %v4705
        %4708 = vmatprep.subr.mxu0 0.0
        %4709 = vmatpush1.msra.mxu0 0.0
        %4710 = vmatprep.subr.mxu0 0.0
        %4711 = vmatpush1.msra.mxu0 0.0
        %4712 = vmatprep.subr.mxu0 0.0
        %4713 = vmatpush1.msra.mxu0 0.0
        %4714 = vmatprep.subr.mxu0 0.0
        %4715 = vmatpush1.msra.mxu0 0.0
        %4716 = vmatprep.subr.mxu0 0.0
        %4717 = vmatpush1.msra.mxu0 0.0
        %4718 = vmatprep.subr.mxu0 0.0
        %4719 = vmatpush1.msra.mxu0 0.0
        %4720 = vmatprep.subr.mxu0 0.0
        %4721 = vmatpush1.msra.mxu0 0.0
        %4722 = vmatprep.subr.mxu0 0.0
        %4723 = vmatpush1.msra.mxu0 0.0
        %4724 = vmatprep.subr.mxu0 0.0
        %4725 = vmatpush1.msra.mxu0 %v4699
        %4726 = vmatprep.subr.mxu0 0.0
        %4727 = vmatpush1.msra.mxu0 %v4698
        %4728 = vmatprep.subr.mxu0 0.0
        %4729 = vmatpush1.msra.mxu0 %v4697
        %4730 = vmatprep.subr.mxu0 0.0
        %4731 = vmatpush1.msra.mxu0 %v4696
        %4732 = vmatprep.subr.mxu0 0.0
        %4733 = vmatpush1.msra.mxu0 %v4695
        %4734 = vmatprep.subr.mxu0 0.0
        %4735 = vmatpush1.msra.mxu0 %v4694
        %4736 = vmatprep.subr.mxu0 0.0
        %4737 = vmatpush1.msra.mxu0 %v4693
        %4738 = vmatprep.subr.mxu0 0.0
        %4739 = vmatpush1.msra.mxu0 %v4692
        %4740 = vmatprep.subr.mxu0 0.0
        %4741 = vmatpush2.msra.mxu0 0.0
        %4742 = vmatprep.subr.mxu0 0.0
        %4743 = vmatpush2.msra.mxu0 0.0
        %4744 = vmatprep.subr.mxu0 0.0
        %4745 = vmatpush2.msra.mxu0 0.0
        %4746 = vmatprep.subr.mxu0 0.0
        %4747 = vmatpush2.msra.mxu0 0.0
        %4748 = vmatprep.subr.mxu0 0.0
        %4749 = vmatpush2.msra.mxu0 0.0
        %4750 = vmatprep.subr.mxu0 0.0
        %4751 = vmatpush2.msra.mxu0 0.0
        %4752 = vmatprep.subr.mxu0 0.0
        %4753 = vmatpush2.msra.mxu0 0.0
        %4754 = vmatprep.subr.mxu0 0.0
        %4755 = vmatpush2.msra.mxu0 0.0
        %4756 = vmatprep.subr.mxu0 0.0
        %4757 = vmatpush2.msra.mxu0 0.0
        %4758 = vmatprep.subr.mxu0 0.0
        %4759 = vmatpush2.msra.mxu0 0.0
        %4760 = vmatprep.subr.mxu0 0.0
        %4761 = vmatpush2.msra.mxu0 0.0
        %4762 = vmatprep.subr.mxu0 0.0
        %4763 = vmatpush2.msra.mxu0 0.0
        %4764 = vmatprep.subr.mxu0 0.0
        %4765 = vmatpush2.msra.mxu0 0.0
        %4766 = vmatprep.subr.mxu0 0.0
        %4767 = vmatpush2.msra.mxu0 0.0
        %4768 = vmatprep.subr.mxu0 0.0
        %4769 = vmatpush2.msra.mxu0 0.0
        %4770 = vmatprep.subr.mxu0 0.0
        %4771 = vmatpush2.msra.mxu0 0.0
        %4772 = vmatprep.mubr.f32.mxu0 0.0
        %4773 = vmatmul.mubr.f32.gmra.mxu0 %v3203
        %v4774 = vpop.f32.mrf.mxu0
        %v4775 = vadd.f32 %v4706, %v4774
        %v4776 = vpop.f32.mrf.mxu0
        %4777 = vdwg.mxu0
        %s4778 = scalar_lea.vmem %s6, 448
        %v4779 = vld [vmem:[%s4778] sm:$0xff]
        %v4780 = vld [vmem:[%s4778 + $0x8] sm:$0xff]
        %v4781 = vld [vmem:[%s4778 + $0x10] sm:$0xff]
        %v4782 = vld [vmem:[%s4778 + $0x18] sm:$0xff]
        %v4783 = vld [vmem:[%s4778 + $0x20] sm:$0xff]
        %v4784 = vld [vmem:[%s4778 + $0x28] sm:$0xff]
        %v4785 = vld [vmem:[%s4778 + $0x30] sm:$0xff]
        %v4786 = vld [vmem:[%s4778 + $0x38] sm:$0xff]
        %s4787 = scalar_lea.vmem %s7, 7
        %v4788 = vld [vmem:[%s4787] sm:$0x1]
        %v4790 = vlaneseq
        %v4791 = vshrl.u32 %v4790, 7
        %v4792 = vsub.s32 0, %v4791
        %v4793 = vrot.slane %v4788, %v4792
        %4795 = vmatprep.subr.mxu0 0.0
        %4796 = vmatpush1.msra.mxu0 0.0
        %4797 = vmatprep.subr.mxu0 0.0
        %4798 = vmatpush1.msra.mxu0 0.0
        %4799 = vmatprep.subr.mxu0 0.0
        %4800 = vmatpush1.msra.mxu0 0.0
        %4801 = vmatprep.subr.mxu0 0.0
        %4802 = vmatpush1.msra.mxu0 0.0
        %4803 = vmatprep.subr.mxu0 0.0
        %4804 = vmatpush1.msra.mxu0 0.0
        %4805 = vmatprep.subr.mxu0 0.0
        %4806 = vmatpush1.msra.mxu0 0.0
        %4807 = vmatprep.subr.mxu0 0.0
        %4808 = vmatpush1.msra.mxu0 0.0
        %4809 = vmatprep.subr.mxu0 0.0
        %4810 = vmatpush1.msra.mxu0 0.0
        %4811 = vmatprep.subr.mxu0 0.0
        %4812 = vmatpush1.msra.mxu0 %v4786
        %4813 = vmatprep.subr.mxu0 0.0
        %4814 = vmatpush1.msra.mxu0 %v4785
        %4815 = vmatprep.subr.mxu0 0.0
        %4816 = vmatpush1.msra.mxu0 %v4784
        %4817 = vmatprep.subr.mxu0 0.0
        %4818 = vmatpush1.msra.mxu0 %v4783
        %4819 = vmatprep.subr.mxu0 0.0
        %4820 = vmatpush1.msra.mxu0 %v4782
        %4821 = vmatprep.subr.mxu0 0.0
        %4822 = vmatpush1.msra.mxu0 %v4781
        %4823 = vmatprep.subr.mxu0 0.0
        %4824 = vmatpush1.msra.mxu0 %v4780
        %4825 = vmatprep.subr.mxu0 0.0
        %4826 = vmatpush1.msra.mxu0 %v4779
        %4827 = vmatprep.subr.mxu0 0.0
        %4828 = vmatpush2.msra.mxu0 0.0
        %4829 = vmatprep.subr.mxu0 0.0
        %4830 = vmatpush2.msra.mxu0 0.0
        %4831 = vmatprep.subr.mxu0 0.0
        %4832 = vmatpush2.msra.mxu0 0.0
        %4833 = vmatprep.subr.mxu0 0.0
        %4834 = vmatpush2.msra.mxu0 0.0
        %4835 = vmatprep.subr.mxu0 0.0
        %4836 = vmatpush2.msra.mxu0 0.0
        %4837 = vmatprep.subr.mxu0 0.0
        %4838 = vmatpush2.msra.mxu0 0.0
        %4839 = vmatprep.subr.mxu0 0.0
        %4840 = vmatpush2.msra.mxu0 0.0
        %4841 = vmatprep.subr.mxu0 0.0
        %4842 = vmatpush2.msra.mxu0 0.0
        %4843 = vmatprep.subr.mxu0 0.0
        %4844 = vmatpush2.msra.mxu0 0.0
        %4845 = vmatprep.subr.mxu0 0.0
        %4846 = vmatpush2.msra.mxu0 0.0
        %4847 = vmatprep.subr.mxu0 0.0
        %4848 = vmatpush2.msra.mxu0 0.0
        %4849 = vmatprep.subr.mxu0 0.0
        %4850 = vmatpush2.msra.mxu0 0.0
        %4851 = vmatprep.subr.mxu0 0.0
        %4852 = vmatpush2.msra.mxu0 0.0
        %4853 = vmatprep.subr.mxu0 0.0
        %4854 = vmatpush2.msra.mxu0 0.0
        %4855 = vmatprep.subr.mxu0 0.0
        %4856 = vmatpush2.msra.mxu0 0.0
        %4857 = vmatprep.subr.mxu0 0.0
        %4858 = vmatpush2.msra.mxu0 0.0
        %4859 = vmatprep.mubr.f32.mxu0 0.0
        %4860 = vmatmul.mubr.f32.gmra.mxu0 %v3203
        %v4861 = vpop.f32.mrf.mxu0
        %v4862 = vadd.f32 %v4793, %v4861
        %v4863 = vpop.f32.mrf.mxu0
        %4864 = vdwg.mxu0
        %s4865 = scalar_lea.vmem %s8, 448
        %v4866 = vld [vmem:[%s4865] sm:$0xff]
        %v4867 = vld [vmem:[%s4865 + $0x8] sm:$0xff]
        %v4868 = vld [vmem:[%s4865 + $0x10] sm:$0xff]
        %v4869 = vld [vmem:[%s4865 + $0x18] sm:$0xff]
        %v4870 = vld [vmem:[%s4865 + $0x20] sm:$0xff]
        %v4871 = vld [vmem:[%s4865 + $0x28] sm:$0xff]
        %v4872 = vld [vmem:[%s4865 + $0x30] sm:$0xff]
        %v4873 = vld [vmem:[%s4865 + $0x38] sm:$0xff]
        %s4874 = scalar_lea.vmem %s9, 7
        %v4875 = vld [vmem:[%s4874] sm:$0x1]
        %v4877 = vlaneseq
        %v4878 = vshrl.u32 %v4877, 7
        %v4879 = vsub.s32 0, %v4878
        %v4880 = vrot.slane %v4875, %v4879
        %4882 = vmatprep.subr.mxu0 0.0
        %4883 = vmatpush1.msra.mxu0 0.0
        %4884 = vmatprep.subr.mxu0 0.0
        %4885 = vmatpush1.msra.mxu0 0.0
        %4886 = vmatprep.subr.mxu0 0.0
        %4887 = vmatpush1.msra.mxu0 0.0
        %4888 = vmatprep.subr.mxu0 0.0
        %4889 = vmatpush1.msra.mxu0 0.0
        %4890 = vmatprep.subr.mxu0 0.0
        %4891 = vmatpush1.msra.mxu0 0.0
        %4892 = vmatprep.subr.mxu0 0.0
        %4893 = vmatpush1.msra.mxu0 0.0
        %4894 = vmatprep.subr.mxu0 0.0
        %4895 = vmatpush1.msra.mxu0 0.0
        %4896 = vmatprep.subr.mxu0 0.0
        %4897 = vmatpush1.msra.mxu0 0.0
        %4898 = vmatprep.subr.mxu0 0.0
        %4899 = vmatpush1.msra.mxu0 %v4873
        %4900 = vmatprep.subr.mxu0 0.0
        %4901 = vmatpush1.msra.mxu0 %v4872
        %4902 = vmatprep.subr.mxu0 0.0
        %4903 = vmatpush1.msra.mxu0 %v4871
        %4904 = vmatprep.subr.mxu0 0.0
        %4905 = vmatpush1.msra.mxu0 %v4870
        %4906 = vmatprep.subr.mxu0 0.0
        %4907 = vmatpush1.msra.mxu0 %v4869
        %4908 = vmatprep.subr.mxu0 0.0
        %4909 = vmatpush1.msra.mxu0 %v4868
        %4910 = vmatprep.subr.mxu0 0.0
        %4911 = vmatpush1.msra.mxu0 %v4867
        %4912 = vmatprep.subr.mxu0 0.0
        %4913 = vmatpush1.msra.mxu0 %v4866
        %4914 = vmatprep.subr.mxu0 0.0
        %4915 = vmatpush2.msra.mxu0 0.0
        %4916 = vmatprep.subr.mxu0 0.0
        %4917 = vmatpush2.msra.mxu0 0.0
        %4918 = vmatprep.subr.mxu0 0.0
        %4919 = vmatpush2.msra.mxu0 0.0
        %4920 = vmatprep.subr.mxu0 0.0
        %4921 = vmatpush2.msra.mxu0 0.0
        %4922 = vmatprep.subr.mxu0 0.0
        %4923 = vmatpush2.msra.mxu0 0.0
        %4924 = vmatprep.subr.mxu0 0.0
        %4925 = vmatpush2.msra.mxu0 0.0
        %4926 = vmatprep.subr.mxu0 0.0
        %4927 = vmatpush2.msra.mxu0 0.0
        %4928 = vmatprep.subr.mxu0 0.0
        %4929 = vmatpush2.msra.mxu0 0.0
        %4930 = vmatprep.subr.mxu0 0.0
        %4931 = vmatpush2.msra.mxu0 0.0
        %4932 = vmatprep.subr.mxu0 0.0
        %4933 = vmatpush2.msra.mxu0 0.0
        %4934 = vmatprep.subr.mxu0 0.0
        %4935 = vmatpush2.msra.mxu0 0.0
        %4936 = vmatprep.subr.mxu0 0.0
        %4937 = vmatpush2.msra.mxu0 0.0
        %4938 = vmatprep.subr.mxu0 0.0
        %4939 = vmatpush2.msra.mxu0 0.0
        %4940 = vmatprep.subr.mxu0 0.0
        %4941 = vmatpush2.msra.mxu0 0.0
        %4942 = vmatprep.subr.mxu0 0.0
        %4943 = vmatpush2.msra.mxu0 0.0
        %4944 = vmatprep.subr.mxu0 0.0
        %4945 = vmatpush2.msra.mxu0 0.0
        %4946 = vmatprep.mubr.f32.mxu0 0.0
        %4947 = vmatmul.mubr.f32.gmra.mxu0 %v3203
        %v4948 = vpop.f32.mrf.mxu0
        %v4949 = vadd.f32 %v4880, %v4948
        %v4950 = vpop.f32.mrf.mxu0
        %4951 = vdwg.mxu0
        %v4953 = vsel %vm1139, %v4775, 0
        %v4956 = vsel %vm1139, %v4862, 0
        %4958 = vmatprep.subr.mxu0 0.0
        %4959 = vmatpush1.xpose.msra.mxu0 0.0
        %4960 = vmatprep.subr.mxu0 0.0
        %4961 = vmatpush1.xpose.msra.mxu0 0.0
        %4962 = vmatprep.subr.mxu0 0.0
        %4963 = vmatpush1.xpose.msra.mxu0 0.0
        %4964 = vmatprep.subr.mxu0 0.0
        %4965 = vmatpush1.xpose.msra.mxu0 0.0
        %4966 = vmatprep.subr.mxu0 0.0
        %4967 = vmatpush1.xpose.msra.mxu0 0.0
        %4968 = vmatprep.subr.mxu0 0.0
        %4969 = vmatpush1.xpose.msra.mxu0 0.0
        %4970 = vmatprep.subr.mxu0 0.0
        %4971 = vmatpush1.xpose.msra.mxu0 0.0
        %4972 = vmatprep.subr.mxu0 0.0
        %4973 = vmatpush1.xpose.msra.mxu0 0.0
        %4974 = vmatprep.subr.mxu0 0.0
        %4975 = vmatpush1.xpose.msra.mxu0 0.0
        %4976 = vmatprep.subr.mxu0 0.0
        %4977 = vmatpush1.xpose.msra.mxu0 0.0
        %4978 = vmatprep.subr.mxu0 0.0
        %4979 = vmatpush1.xpose.msra.mxu0 0.0
        %4980 = vmatprep.subr.mxu0 0.0
        %4981 = vmatpush1.xpose.msra.mxu0 0.0
        %4982 = vmatprep.subr.mxu0 0.0
        %4983 = vmatpush1.xpose.msra.mxu0 0.0
        %4984 = vmatprep.subr.mxu0 0.0
        %4985 = vmatpush1.xpose.msra.mxu0 0.0
        %4986 = vmatprep.subr.mxu0 0.0
        %4987 = vmatpush1.xpose.msra.mxu0 0.0
        %4988 = vmatprep.subr.mxu0 0.0
        %4989 = vmatpush1.xpose.msra.mxu0 %v4956
        %4990 = vmatprep.subr.mxu0 0.0
        %4991 = vmatpush2.xpose.msra.mxu0 0.0
        %4992 = vmatprep.subr.mxu0 0.0
        %4993 = vmatpush2.xpose.msra.mxu0 0.0
        %4994 = vmatprep.subr.mxu0 0.0
        %4995 = vmatpush2.xpose.msra.mxu0 0.0
        %4996 = vmatprep.subr.mxu0 0.0
        %4997 = vmatpush2.xpose.msra.mxu0 0.0
        %4998 = vmatprep.subr.mxu0 0.0
        %4999 = vmatpush2.xpose.msra.mxu0 0.0
        %5000 = vmatprep.subr.mxu0 0.0
        %5001 = vmatpush2.xpose.msra.mxu0 0.0
        %5002 = vmatprep.subr.mxu0 0.0
        %5003 = vmatpush2.xpose.msra.mxu0 0.0
        %5004 = vmatprep.subr.mxu0 0.0
        %5005 = vmatpush2.xpose.msra.mxu0 0.0
        %5006 = vmatprep.subr.mxu0 0.0
        %5007 = vmatpush2.xpose.msra.mxu0 0.0
        %5008 = vmatprep.subr.mxu0 0.0
        %5009 = vmatpush2.xpose.msra.mxu0 0.0
        %5010 = vmatprep.subr.mxu0 0.0
        %5011 = vmatpush2.xpose.msra.mxu0 0.0
        %5012 = vmatprep.subr.mxu0 0.0
        %5013 = vmatpush2.xpose.msra.mxu0 0.0
        %5014 = vmatprep.subr.mxu0 0.0
        %5015 = vmatpush2.xpose.msra.mxu0 0.0
        %5016 = vmatprep.subr.mxu0 0.0
        %5017 = vmatpush2.xpose.msra.mxu0 0.0
        %5018 = vmatprep.subr.mxu0 0.0
        %5019 = vmatpush2.xpose.msra.mxu0 0.0
        %5020 = vmatprep.subr.mxu0 0.0
        %5021 = vmatpush2.xpose.msra.mxu0 0.0
        %5022 = vmatprep.mubr.f32.mxu0 0.0
        %5023 = vmatmul.mubr.f32.gmra.mxu0 %v4953
        %v5024 = vpop.f32.mrf.mxu0
        %v5025 = vadd.f32 0.0, %v5024
        %v5026 = vpop.f32.mrf.mxu0
        %5027 = vdwg.mxu0
        %v5028 = vsel %vm1216, %v5025, -inf
        %5029 = vmax.xlane.f32.xlu0 %v5028
        %v5030 = vpop.xlane.xlu0 %5029
        %v5031 = vsub.f32 %v5025, %v5030
        %v5032 = vmul.f32 %v5031, 1.442695
        %v5033 = vpow.pop %v5032
        %v5034 = vsel %vm1216, %v5033, 0.0
        %5035 = vadd.xlane.f32.xlu0 %v5034
        %v5036 = vpop.xlane.xlu0 %5035
        %v5037 = vrcp.pop %v5036
        %v5038 = vmul.f32 %v5033, %v5037
        %v5040 = vsel %vm1228, %v5038, 0
        %v5043 = vsel %vm1232, %v4949, 0
        %5045 = vmatprep.subr.mxu0 0.0
        %5046 = vmatpush1.msra.mxu0 0.0
        %5047 = vmatprep.subr.mxu0 0.0
        %5048 = vmatpush1.msra.mxu0 0.0
        %5049 = vmatprep.subr.mxu0 0.0
        %5050 = vmatpush1.msra.mxu0 0.0
        %5051 = vmatprep.subr.mxu0 0.0
        %5052 = vmatpush1.msra.mxu0 0.0
        %5053 = vmatprep.subr.mxu0 0.0
        %5054 = vmatpush1.msra.mxu0 0.0
        %5055 = vmatprep.subr.mxu0 0.0
        %5056 = vmatpush1.msra.mxu0 0.0
        %5057 = vmatprep.subr.mxu0 0.0
        %5058 = vmatpush1.msra.mxu0 0.0
        %5059 = vmatprep.subr.mxu0 0.0
        %5060 = vmatpush1.msra.mxu0 0.0
        %5061 = vmatprep.subr.mxu0 0.0
        %5062 = vmatpush1.msra.mxu0 0.0
        %5063 = vmatprep.subr.mxu0 0.0
        %5064 = vmatpush1.msra.mxu0 0.0
        %5065 = vmatprep.subr.mxu0 0.0
        %5066 = vmatpush1.msra.mxu0 0.0
        %5067 = vmatprep.subr.mxu0 0.0
        %5068 = vmatpush1.msra.mxu0 0.0
        %5069 = vmatprep.subr.mxu0 0.0
        %5070 = vmatpush1.msra.mxu0 0.0
        %5071 = vmatprep.subr.mxu0 0.0
        %5072 = vmatpush1.msra.mxu0 0.0
        %5073 = vmatprep.subr.mxu0 0.0
        %5074 = vmatpush1.msra.mxu0 0.0
        %5075 = vmatprep.subr.mxu0 0.0
        %5076 = vmatpush1.msra.mxu0 %v5043
        %5077 = vmatprep.subr.mxu0 0.0
        %5078 = vmatpush2.msra.mxu0 0.0
        %5079 = vmatprep.subr.mxu0 0.0
        %5080 = vmatpush2.msra.mxu0 0.0
        %5081 = vmatprep.subr.mxu0 0.0
        %5082 = vmatpush2.msra.mxu0 0.0
        %5083 = vmatprep.subr.mxu0 0.0
        %5084 = vmatpush2.msra.mxu0 0.0
        %5085 = vmatprep.subr.mxu0 0.0
        %5086 = vmatpush2.msra.mxu0 0.0
        %5087 = vmatprep.subr.mxu0 0.0
        %5088 = vmatpush2.msra.mxu0 0.0
        %5089 = vmatprep.subr.mxu0 0.0
        %5090 = vmatpush2.msra.mxu0 0.0
        %5091 = vmatprep.subr.mxu0 0.0
        %5092 = vmatpush2.msra.mxu0 0.0
        %5093 = vmatprep.subr.mxu0 0.0
        %5094 = vmatpush2.msra.mxu0 0.0
        %5095 = vmatprep.subr.mxu0 0.0
        %5096 = vmatpush2.msra.mxu0 0.0
        %5097 = vmatprep.subr.mxu0 0.0
        %5098 = vmatpush2.msra.mxu0 0.0
        %5099 = vmatprep.subr.mxu0 0.0
        %5100 = vmatpush2.msra.mxu0 0.0
        %5101 = vmatprep.subr.mxu0 0.0
        %5102 = vmatpush2.msra.mxu0 0.0
        %5103 = vmatprep.subr.mxu0 0.0
        %5104 = vmatpush2.msra.mxu0 0.0
        %5105 = vmatprep.subr.mxu0 0.0
        %5106 = vmatpush2.msra.mxu0 0.0
        %5107 = vmatprep.subr.mxu0 0.0
        %5108 = vmatpush2.msra.mxu0 0.0
        %5109 = vmatprep.mubr.f32.mxu0 0.0
        %5110 = vmatmul.mubr.f32.gmra.mxu0 %v5040
        %v5111 = vpop.f32.mrf.mxu0
        %v5112 = vadd.f32 0.0, %v5111
        %v5113 = vpop.f32.mrf.mxu0
        %5114 = vdwg.mxu0
        %s5115 = scalar_lea.vmem %s10, 112
        %v5116 = vld [vmem:[%s5115] sm:$0xff]
        %v5117 = vld [vmem:[%s5115 + $0x8] sm:$0xff]
        %v5119 = vsel %vm1139, %v5112, 0
        %5121 = vmatprep.subr.mxu0 0.0
        %5122 = vmatpush1.msra.mxu0 0.0
        %5123 = vmatprep.subr.mxu0 0.0
        %5124 = vmatpush1.msra.mxu0 0.0
        %5125 = vmatprep.subr.mxu0 0.0
        %5126 = vmatpush1.msra.mxu0 0.0
        %5127 = vmatprep.subr.mxu0 0.0
        %5128 = vmatpush1.msra.mxu0 0.0
        %5129 = vmatprep.subr.mxu0 0.0
        %5130 = vmatpush1.msra.mxu0 0.0
        %5131 = vmatprep.subr.mxu0 0.0
        %5132 = vmatpush1.msra.mxu0 0.0
        %5133 = vmatprep.subr.mxu0 0.0
        %5134 = vmatpush1.msra.mxu0 0.0
        %5135 = vmatprep.subr.mxu0 0.0
        %5136 = vmatpush1.msra.mxu0 0.0
        %5137 = vmatprep.subr.mxu0 0.0
        %5138 = vmatpush1.msra.mxu0 0.0
        %5139 = vmatprep.subr.mxu0 0.0
        %5140 = vmatpush1.msra.mxu0 0.0
        %5141 = vmatprep.subr.mxu0 0.0
        %5142 = vmatpush1.msra.mxu0 0.0
        %5143 = vmatprep.subr.mxu0 0.0
        %5144 = vmatpush1.msra.mxu0 0.0
        %5145 = vmatprep.subr.mxu0 0.0
        %5146 = vmatpush1.msra.mxu0 0.0
        %5147 = vmatprep.subr.mxu0 0.0
        %5148 = vmatpush1.msra.mxu0 0.0
        %5149 = vmatprep.subr.mxu0 0.0
        %5150 = vmatpush1.msra.mxu0 %v5117
        %5151 = vmatprep.subr.mxu0 0.0
        %5152 = vmatpush1.msra.mxu0 %v5116
        %5153 = vmatprep.subr.mxu0 0.0
        %5154 = vmatpush2.msra.mxu0 0.0
        %5155 = vmatprep.subr.mxu0 0.0
        %5156 = vmatpush2.msra.mxu0 0.0
        %5157 = vmatprep.subr.mxu0 0.0
        %5158 = vmatpush2.msra.mxu0 0.0
        %5159 = vmatprep.subr.mxu0 0.0
        %5160 = vmatpush2.msra.mxu0 0.0
        %5161 = vmatprep.subr.mxu0 0.0
        %5162 = vmatpush2.msra.mxu0 0.0
        %5163 = vmatprep.subr.mxu0 0.0
        %5164 = vmatpush2.msra.mxu0 0.0
        %5165 = vmatprep.subr.mxu0 0.0
        %5166 = vmatpush2.msra.mxu0 0.0
        %5167 = vmatprep.subr.mxu0 0.0
        %5168 = vmatpush2.msra.mxu0 0.0
        %5169 = vmatprep.subr.mxu0 0.0
        %5170 = vmatpush2.msra.mxu0 0.0
        %5171 = vmatprep.subr.mxu0 0.0
        %5172 = vmatpush2.msra.mxu0 0.0
        %5173 = vmatprep.subr.mxu0 0.0
        %5174 = vmatpush2.msra.mxu0 0.0
        %5175 = vmatprep.subr.mxu0 0.0
        %5176 = vmatpush2.msra.mxu0 0.0
        %5177 = vmatprep.subr.mxu0 0.0
        %5178 = vmatpush2.msra.mxu0 0.0
        %5179 = vmatprep.subr.mxu0 0.0
        %5180 = vmatpush2.msra.mxu0 0.0
        %5181 = vmatprep.subr.mxu0 0.0
        %5182 = vmatpush2.msra.mxu0 0.0
        %5183 = vmatprep.subr.mxu0 0.0
        %5184 = vmatpush2.msra.mxu0 0.0
        %5185 = vmatprep.mubr.f32.mxu0 0.0
        %5186 = vmatmul.mubr.f32.gmra.mxu0 %v5119
        %v5187 = vpop.f32.mrf.mxu0
        %v5188 = vadd.f32 0.0, %v5187
        %v5189 = vpop.f32.mrf.mxu0
        %5190 = vdwg.mxu0
        %v5191 = vadd.f32 %v4690, %v5188
        %v5192 = vadd.f32 %v3144, %v5191
        %s5193 = scalar_lea.vmem %s14, 1
        %v5194 = vld [vmem:[%s5193] sm:$0x1]
        %s5195 = scalar_lea.vmem %s15, 1
        %v5196 = vld [vmem:[%s5195] sm:$0x1]
        %v5197 = vsel %vm844, %v5192, 0.0
        %5198 = vadd.xlane.f32.xlu0 %v5197
        %v5199 = vpop.xlane.xlu0 %5198
        %v5200 = vmul.f32 %v5199, %v848
        %v5201 = vsub.f32 %v5192, %v5200
        %v5202 = vmul.f32 %v5201, %v5201
        %v5203 = vsel %vm844, %v5202, 0.0
        %5204 = vadd.xlane.f32.xlu0 %v5203
        %v5205 = vpop.xlane.xlu0 %5204
        %v5206 = vmul.f32 %v5205, %v848
        %v5207 = vadd.f32 %v5206, 1e-06
        %v5208 = vrsqrt.pop %v5207
        %v5209 = vmul.f32 %v5201, %v5208
        %v5211 = vlaneseq
        %v5212 = vshrl.u32 %v5211, 7
        %v5213 = vsub.s32 0, %v5212
        %v5214 = vrot.slane %v5194, %v5213
        %v5216 = vmul.f32 %v5209, %v5214
        %v5218 = vlaneseq
        %v5219 = vshrl.u32 %v5218, 7
        %v5220 = vsub.s32 0, %v5219
        %v5221 = vrot.slane %v5196, %v5220
        %v5223 = vadd.f32 %v5216, %v5221
        %s5224 = scalar_lea.vmem %s16, 128
        %v5225 = vld [vmem:[%s5224] sm:$0xff]
        %v5226 = vld [vmem:[%s5224 + $0x8] sm:$0xff]
        %v5227 = vld [vmem:[%s5224 + $0x10] sm:$0xff]
        %v5228 = vld [vmem:[%s5224 + $0x18] sm:$0xff]
        %v5229 = vld [vmem:[%s5224 + $0x20] sm:$0xff]
        %v5230 = vld [vmem:[%s5224 + $0x28] sm:$0xff]
        %v5231 = vld [vmem:[%s5224 + $0x30] sm:$0xff]
        %v5232 = vld [vmem:[%s5224 + $0x38] sm:$0xff]
        %v5233 = vld [vmem:[%s5224 + $0x40] sm:$0xff]
        %v5234 = vld [vmem:[%s5224 + $0x48] sm:$0xff]
        %v5235 = vld [vmem:[%s5224 + $0x50] sm:$0xff]
        %v5236 = vld [vmem:[%s5224 + $0x58] sm:$0xff]
        %v5237 = vld [vmem:[%s5224 + $0x60] sm:$0xff]
        %v5238 = vld [vmem:[%s5224 + $0x68] sm:$0xff]
        %v5239 = vld [vmem:[%s5224 + $0x70] sm:$0xff]
        %v5240 = vld [vmem:[%s5224 + $0x78] sm:$0xff]
        %s5241 = scalar_lea.vmem %s17, 2
        %v5242 = vld [vmem:[%s5241] sm:$0x3]
        %v5244 = vlaneseq
        %v5245 = vshrl.u32 %v5244, 7
        %v5246 = vsub.s32 0, %v5245
        %v5247 = vrot.slane %v5242, %v5246
        %v5248 = vlaneseq
        %v5249 = vshrl.u32 %v5248, 7
        %v5250 = vsub.s32 1, %v5249
        %v5251 = vrot.slane %v5242, %v5250
        %v5255 = vsel %vm766, %v5223, 0
        %5257 = vmatprep.subr.mxu0 0.0
        %5258 = vmatpush1.msra.mxu0 0.0
        %5259 = vmatprep.subr.mxu0 0.0
        %5260 = vmatpush1.msra.mxu0 0.0
        %5261 = vmatprep.subr.mxu0 0.0
        %5262 = vmatpush1.msra.mxu0 0.0
        %5263 = vmatprep.subr.mxu0 0.0
        %5264 = vmatpush1.msra.mxu0 0.0
        %5265 = vmatprep.subr.mxu0 0.0
        %5266 = vmatpush1.msra.mxu0 0.0
        %5267 = vmatprep.subr.mxu0 0.0
        %5268 = vmatpush1.msra.mxu0 0.0
        %5269 = vmatprep.subr.mxu0 0.0
        %5270 = vmatpush1.msra.mxu0 0.0
        %5271 = vmatprep.subr.mxu0 0.0
        %5272 = vmatpush1.msra.mxu0 0.0
        %5273 = vmatprep.subr.mxu0 %v5240
        %5274 = vmatpush1.msra.mxu0 %v5239
        %5275 = vmatprep.subr.mxu0 %v5238
        %5276 = vmatpush1.msra.mxu0 %v5237
        %5277 = vmatprep.subr.mxu0 %v5236
        %5278 = vmatpush1.msra.mxu0 %v5235
        %5279 = vmatprep.subr.mxu0 %v5234
        %5280 = vmatpush1.msra.mxu0 %v5233
        %5281 = vmatprep.subr.mxu0 %v5232
        %5282 = vmatpush1.msra.mxu0 %v5231
        %5283 = vmatprep.subr.mxu0 %v5230
        %5284 = vmatpush1.msra.mxu0 %v5229
        %5285 = vmatprep.subr.mxu0 %v5228
        %5286 = vmatpush1.msra.mxu0 %v5227
        %5287 = vmatprep.subr.mxu0 %v5226
        %5288 = vmatpush1.msra.mxu0 %v5225
        %5289 = vmatprep.subr.mxu0 0.0
        %5290 = vmatpush2.msra.mxu0 0.0
        %5291 = vmatprep.subr.mxu0 0.0
        %5292 = vmatpush2.msra.mxu0 0.0
        %5293 = vmatprep.subr.mxu0 0.0
        %5294 = vmatpush2.msra.mxu0 0.0
        %5295 = vmatprep.subr.mxu0 0.0
        %5296 = vmatpush2.msra.mxu0 0.0
        %5297 = vmatprep.subr.mxu0 0.0
        %5298 = vmatpush2.msra.mxu0 0.0
        %5299 = vmatprep.subr.mxu0 0.0
        %5300 = vmatpush2.msra.mxu0 0.0
        %5301 = vmatprep.subr.mxu0 0.0
        %5302 = vmatpush2.msra.mxu0 0.0
        %5303 = vmatprep.subr.mxu0 0.0
        %5304 = vmatpush2.msra.mxu0 0.0
        %5305 = vmatprep.subr.mxu0 0.0
        %5306 = vmatpush2.msra.mxu0 0.0
        %5307 = vmatprep.subr.mxu0 0.0
        %5308 = vmatpush2.msra.mxu0 0.0
        %5309 = vmatprep.subr.mxu0 0.0
        %5310 = vmatpush2.msra.mxu0 0.0
        %5311 = vmatprep.subr.mxu0 0.0
        %5312 = vmatpush2.msra.mxu0 0.0
        %5313 = vmatprep.subr.mxu0 0.0
        %5314 = vmatpush2.msra.mxu0 0.0
        %5315 = vmatprep.subr.mxu0 0.0
        %5316 = vmatpush2.msra.mxu0 0.0
        %5317 = vmatprep.subr.mxu0 0.0
        %5318 = vmatpush2.msra.mxu0 0.0
        %5319 = vmatprep.subr.mxu0 0.0
        %5320 = vmatpush2.msra.mxu0 0.0
        %5321 = vmatprep.mubr.f32.mxu0 0.0
        %5322 = vmatmul.mubr.f32.gmra.mxu0 %v5255
        %v5323 = vpop.f32.mrf.mxu0
        %v5324 = vadd.f32 %v5247, %v5323
        %v5325 = vpop.f32.mrf.mxu0
        %v5326 = vadd.f32 %v5251, %v5325
        %5327 = vdwg.mxu0
        %v5328 = vmul.f32 %v5324, 0.5
        %v5329 = vmul.f32 %v5326, 0.5
        %v5330 = vmul.f32 %v5324, 0.044715
        %v5331 = vmul.f32 %v5326, 0.044715
        %v5332 = vmul.f32 %v5330, %v5324
        %v5333 = vmul.f32 %v5331, %v5326
        %v5334 = vmul.f32 %v5332, %v5324
        %v5335 = vmul.f32 %v5333, %v5326
        %v5336 = vadd.f32 %v5324, %v5334
        %v5337 = vadd.f32 %v5326, %v5335
        %v5338 = vmul.f32 %v5336, 0.7978846
        %v5339 = vmul.f32 %v5337, 0.7978846
        %v5340 = vtanh.pop %v5338
        %v5341 = vtanh.pop %v5339
        %v5342 = vadd.f32 %v5340, 1.0
        %v5343 = vadd.f32 %v5341, 1.0
        %v5344 = vmul.f32 %v5328, %v5342
        %v5345 = vmul.f32 %v5329, %v5343
        %s5346 = scalar_lea.vmem %s18, 256
        %v5347 = vld [vmem:[%s5346] sm:$0xff]
        %v5348 = vld [vmem:[%s5346 + $0x8] sm:$0xff]
        %v5349 = vld [vmem:[%s5346 + $0x10] sm:$0xff]
        %v5350 = vld [vmem:[%s5346 + $0x18] sm:$0xff]
        %v5351 = vld [vmem:[%s5346 + $0x20] sm:$0xff]
        %v5352 = vld [vmem:[%s5346 + $0x28] sm:$0xff]
        %v5353 = vld [vmem:[%s5346 + $0x30] sm:$0xff]
        %v5354 = vld [vmem:[%s5346 + $0x38] sm:$0xff]
        %v5355 = vld [vmem:[%s5346 + $0x40] sm:$0xff]
        %v5356 = vld [vmem:[%s5346 + $0x48] sm:$0xff]
        %v5357 = vld [vmem:[%s5346 + $0x50] sm:$0xff]
        %v5358 = vld [vmem:[%s5346 + $0x58] sm:$0xff]
        %v5359 = vld [vmem:[%s5346 + $0x60] sm:$0xff]
        %v5360 = vld [vmem:[%s5346 + $0x68] sm:$0xff]
        %v5361 = vld [vmem:[%s5346 + $0x70] sm:$0xff]
        %v5362 = vld [vmem:[%s5346 + $0x78] sm:$0xff]
        %v5363 = vld [vmem:[%s5346 + $0x80] sm:$0xff]
        %v5364 = vld [vmem:[%s5346 + $0x88] sm:$0xff]
        %v5365 = vld [vmem:[%s5346 + $0x90] sm:$0xff]
        %v5366 = vld [vmem:[%s5346 + $0x98] sm:$0xff]
        %v5367 = vld [vmem:[%s5346 + $0xa0] sm:$0xff]
        %v5368 = vld [vmem:[%s5346 + $0xa8] sm:$0xff]
        %v5369 = vld [vmem:[%s5346 + $0xb0] sm:$0xff]
        %v5370 = vld [vmem:[%s5346 + $0xb8] sm:$0xff]
        %v5371 = vld [vmem:[%s5346 + $0xc0] sm:$0xff]
        %v5372 = vld [vmem:[%s5346 + $0xc8] sm:$0xff]
        %v5373 = vld [vmem:[%s5346 + $0xd0] sm:$0xff]
        %v5374 = vld [vmem:[%s5346 + $0xd8] sm:$0xff]
        %v5375 = vld [vmem:[%s5346 + $0xe0] sm:$0xff]
        %v5376 = vld [vmem:[%s5346 + $0xe8] sm:$0xff]
        %v5377 = vld [vmem:[%s5346 + $0xf0] sm:$0xff]
        %v5378 = vld [vmem:[%s5346 + $0xf8] sm:$0xff]
        %s5379 = scalar_lea.vmem %s19, 1
        %v5380 = vld [vmem:[%s5379] sm:$0x1]
        %v5382 = vlaneseq
        %v5383 = vshrl.u32 %v5382, 7
        %v5384 = vsub.s32 0, %v5383
        %v5385 = vrot.slane %v5380, %v5384
        %5387 = vmatprep.subr.mxu0 0.0
        %5388 = vmatpush1.msra.mxu0 %v5362
        %5389 = vmatprep.subr.mxu0 0.0
        %5390 = vmatpush1.msra.mxu0 %v5361
        %5391 = vmatprep.subr.mxu0 0.0
        %5392 = vmatpush1.msra.mxu0 %v5360
        %5393 = vmatprep.subr.mxu0 0.0
        %5394 = vmatpush1.msra.mxu0 %v5359
        %5395 = vmatprep.subr.mxu0 0.0
        %5396 = vmatpush1.msra.mxu0 %v5358
        %5397 = vmatprep.subr.mxu0 0.0
        %5398 = vmatpush1.msra.mxu0 %v5357
        %5399 = vmatprep.subr.mxu0 0.0
        %5400 = vmatpush1.msra.mxu0 %v5356
        %5401 = vmatprep.subr.mxu0 0.0
        %5402 = vmatpush1.msra.mxu0 %v5355
        %5403 = vmatprep.subr.mxu0 0.0
        %5404 = vmatpush1.msra.mxu0 %v5354
        %5405 = vmatprep.subr.mxu0 0.0
        %5406 = vmatpush1.msra.mxu0 %v5353
        %5407 = vmatprep.subr.mxu0 0.0
        %5408 = vmatpush1.msra.mxu0 %v5352
        %5409 = vmatprep.subr.mxu0 0.0
        %5410 = vmatpush1.msra.mxu0 %v5351
        %5411 = vmatprep.subr.mxu0 0.0
        %5412 = vmatpush1.msra.mxu0 %v5350
        %5413 = vmatprep.subr.mxu0 0.0
        %5414 = vmatpush1.msra.mxu0 %v5349
        %5415 = vmatprep.subr.mxu0 0.0
        %5416 = vmatpush1.msra.mxu0 %v5348
        %5417 = vmatprep.subr.mxu0 0.0
        %5418 = vmatpush1.msra.mxu0 %v5347
        %5419 = vmatprep.subr.mxu0 0.0
        %5420 = vmatpush2.msra.mxu0 %v5378
        %5421 = vmatprep.subr.mxu0 0.0
        %5422 = vmatpush2.msra.mxu0 %v5377
        %5423 = vmatprep.subr.mxu0 0.0
        %5424 = vmatpush2.msra.mxu0 %v5376
        %5425 = vmatprep.subr.mxu0 0.0
        %5426 = vmatpush2.msra.mxu0 %v5375
        %5427 = vmatprep.subr.mxu0 0.0
        %5428 = vmatpush2.msra.mxu0 %v5374
        %5429 = vmatprep.subr.mxu0 0.0
        %5430 = vmatpush2.msra.mxu0 %v5373
        %5431 = vmatprep.subr.mxu0 0.0
        %5432 = vmatpush2.msra.mxu0 %v5372
        %5433 = vmatprep.subr.mxu0 0.0
        %5434 = vmatpush2.msra.mxu0 %v5371
        %5435 = vmatprep.subr.mxu0 0.0
        %5436 = vmatpush2.msra.mxu0 %v5370
        %5437 = vmatprep.subr.mxu0 0.0
        %5438 = vmatpush2.msra.mxu0 %v5369
        %5439 = vmatprep.subr.mxu0 0.0
        %5440 = vmatpush2.msra.mxu0 %v5368
        %5441 = vmatprep.subr.mxu0 0.0
        %5442 = vmatpush2.msra.mxu0 %v5367
        %5443 = vmatprep.subr.mxu0 0.0
        %5444 = vmatpush2.msra.mxu0 %v5366
        %5445 = vmatprep.subr.mxu0 0.0
        %5446 = vmatpush2.msra.mxu0 %v5365
        %5447 = vmatprep.subr.mxu0 0.0
        %5448 = vmatpush2.msra.mxu0 %v5364
        %5449 = vmatprep.subr.mxu0 0.0
        %5450 = vmatpush2.msra.mxu0 %v5363
        %5451 = vmatprep.mubr.f32.mxu0 %v5345
        %5452 = vmatmul.mubr.f32.gmra.mxu0 %v5344
        %v5453 = vpop.f32.mrf.mxu0
        %v5454 = vadd.f32 %v5385, %v5453
        %v5455 = vpop.f32.mrf.mxu0
        %5456 = vdwg.mxu0
        %v5457 = vadd.f32 %v5192, %v5454
        %v5458 = vld [vmem:[%s20] sm:$0x1]
        %v5459 = vld [vmem:[%s21] sm:$0x1]
        %v5460 = vsel %vm844, %v5457, 0.0
        %5461 = vadd.xlane.f32.xlu0 %v5460
        %v5462 = vpop.xlane.xlu0 %5461
        %v5463 = vmul.f32 %v5462, %v848
        %v5464 = vsub.f32 %v5457, %v5463
        %v5465 = vmul.f32 %v5464, %v5464
        %v5466 = vsel %vm844, %v5465, 0.0
        %5467 = vadd.xlane.f32.xlu0 %v5466
        %v5468 = vpop.xlane.xlu0 %5467
        %v5469 = vmul.f32 %v5468, %v848
        %v5470 = vadd.f32 %v5469, 1e-06
        %v5471 = vrsqrt.pop %v5470
        %v5472 = vmul.f32 %v5464, %v5471
        %v5474 = vlaneseq
        %v5475 = vshrl.u32 %v5474, 7
        %v5476 = vsub.s32 0, %v5475
        %v5477 = vrot.slane %v5458, %v5476
        %v5479 = vmul.f32 %v5472, %v5477
        %v5481 = vlaneseq
        %v5482 = vshrl.u32 %v5481, 7
        %v5483 = vsub.s32 0, %v5482
        %v5484 = vrot.slane %v5459, %v5483
        %v5486 = vadd.f32 %v5479, %v5484
        %v5487 = vld [vmem:[%s22] sm:$0xff]
        %v5488 = vld [vmem:[%s22 + $0x8] sm:$0xff]
        %v5489 = vld [vmem:[%s22 + $0x10] sm:$0xff]
        %v5490 = vld [vmem:[%s22 + $0x18] sm:$0xff]
        %v5491 = vld [vmem:[%s22 + $0x20] sm:$0xff]
        %v5492 = vld [vmem:[%s22 + $0x28] sm:$0xff]
        %v5493 = vld [vmem:[%s22 + $0x30] sm:$0xff]
        %v5494 = vld [vmem:[%s22 + $0x38] sm:$0xff]
        %v5495 = vld [vmem:[%s23] sm:$0x1]
        %v5497 = vsel %vm766, %v5486, 0
        %5499 = vmatprep.subr.mxu0 0.0
        %5500 = vmatpush1.msra.mxu0 0.0
        %5501 = vmatprep.subr.mxu0 0.0
        %5502 = vmatpush1.msra.mxu0 0.0
        %5503 = vmatprep.subr.mxu0 0.0
        %5504 = vmatpush1.msra.mxu0 0.0
        %5505 = vmatprep.subr.mxu0 0.0
        %5506 = vmatpush1.msra.mxu0 0.0
        %5507 = vmatprep.subr.mxu0 0.0
        %5508 = vmatpush1.msra.mxu0 0.0
        %5509 = vmatprep.subr.mxu0 0.0
        %5510 = vmatpush1.msra.mxu0 0.0
        %5511 = vmatprep.subr.mxu0 0.0
        %5512 = vmatpush1.msra.mxu0 0.0
        %5513 = vmatprep.subr.mxu0 0.0
        %5514 = vmatpush1.msra.mxu0 0.0
        %5515 = vmatprep.subr.mxu0 0.0
        %5516 = vmatpush1.msra.mxu0 %v5494
        %5517 = vmatprep.subr.mxu0 0.0
        %5518 = vmatpush1.msra.mxu0 %v5493
        %5519 = vmatprep.subr.mxu0 0.0
        %5520 = vmatpush1.msra.mxu0 %v5492
        %5521 = vmatprep.subr.mxu0 0.0
        %5522 = vmatpush1.msra.mxu0 %v5491
        %5523 = vmatprep.subr.mxu0 0.0
        %5524 = vmatpush1.msra.mxu0 %v5490
        %5525 = vmatprep.subr.mxu0 0.0
        %5526 = vmatpush1.msra.mxu0 %v5489
        %5527 = vmatprep.subr.mxu0 0.0
        %5528 = vmatpush1.msra.mxu0 %v5488
        %5529 = vmatprep.subr.mxu0 0.0
        %5530 = vmatpush1.msra.mxu0 %v5487
        %5531 = vmatprep.subr.mxu0 0.0
        %5532 = vmatpush2.msra.mxu0 0.0
        %5533 = vmatprep.subr.mxu0 0.0
        %5534 = vmatpush2.msra.mxu0 0.0
        %5535 = vmatprep.subr.mxu0 0.0
        %5536 = vmatpush2.msra.mxu0 0.0
        %5537 = vmatprep.subr.mxu0 0.0
        %5538 = vmatpush2.msra.mxu0 0.0
        %5539 = vmatprep.subr.mxu0 0.0
        %5540 = vmatpush2.msra.mxu0 0.0
        %5541 = vmatprep.subr.mxu0 0.0
        %5542 = vmatpush2.msra.mxu0 0.0
        %5543 = vmatprep.subr.mxu0 0.0
        %5544 = vmatpush2.msra.mxu0 0.0
        %5545 = vmatprep.subr.mxu0 0.0
        %5546 = vmatpush2.msra.mxu0 0.0
        %5547 = vmatprep.subr.mxu0 0.0
        %5548 = vmatpush2.msra.mxu0 0.0
        %5549 = vmatprep.subr.mxu0 0.0
        %5550 = vmatpush2.msra.mxu0 0.0
        %5551 = vmatprep.subr.mxu0 0.0
        %5552 = vmatpush2.msra.mxu0 0.0
        %5553 = vmatprep.subr.mxu0 0.0
        %5554 = vmatpush2.msra.mxu0 0.0
        %5555 = vmatprep.subr.mxu0 0.0
        %5556 = vmatpush2.msra.mxu0 0.0
        %5557 = vmatprep.subr.mxu0 0.0
        %5558 = vmatpush2.msra.mxu0 0.0
        %5559 = vmatprep.subr.mxu0 0.0
        %5560 = vmatpush2.msra.mxu0 0.0
        %5561 = vmatprep.subr.mxu0 0.0
        %5562 = vmatpush2.msra.mxu0 0.0
        %5563 = vmatprep.mubr.f32.mxu0 0.0
        %5564 = vmatmul.mubr.f32.gmra.mxu0 %v5497
        %v5565 = vpop.f32.mrf.mxu0
        %v5566 = vadd.f32 %v5495, %v5565
        %v5567 = vpop.f32.mrf.mxu0
        %5568 = vdwg.mxu0
        %vm5569 = vcmask 122880
        %5570 = vst.msk [vmem:[%s729] sm:$0x1] %vm5569, %v5566
        %s5571 = sand.u32 %s555, 1
        %s5572 = scalar_lea.sflag [#allocation4], %s5571
        %s5573 = sand.u32 %s555, 1
        %s5574 = scalar_lea.vmem [#allocation3], %s5573
        // Predicated region
        $region117: #{deit_forward.1} parent=115 // pred_check
          %p5575 = pneg %p565
        $region118: #{deit_forward.1} parent=115 // pred_check_branch
          %5577 = sbr.rel (%p5575) target = $region120
        $region119: #{deit_forward.1} parent=115 // pred_region
          %s5579 = ssub.s32 16, 16
          %5580 = vsyncadd %s5572, %s5579
          %s5581 = smul.addr %s38, 16
          %s5582 = scalar_lea.hbm %s24, %s5581
          %s5584 = sshll.u32 %s5574, 4
          %s5585 = int_to_ptr.vmem [resolvable:$true] %s5584
          %5587 = dma.vmem_to_hbm [thread:$0]  %s5585, 16, %s5582, %s5572
        $region120: #{deit_forward.1} parent=115 // pred_fallthru
          _
      $region116: #{deit_forward.1} parent=5 // pred_fallthru
        _
      %p5588 = scmp.le.s32.totalorder 2, %s33
      // Predicated region
      $region121: #{deit_forward.1} parent=5 // pred_check
        %p5589 = pneg %p5588
      $region122: #{deit_forward.1} parent=5 // pred_check_branch
        %5591 = sbr.rel (%p5589) target = $region124
      $region123: #{deit_forward.1} parent=5 // pred_region
        %s5592 = ssub.s32 %s33, 2
        // Predicated region
        $region125: #{deit_forward.1} parent=123 // pred_check
          %p5593 = pneg %p571
        $region126: #{deit_forward.1} parent=123 // pred_check_branch
          %5595 = sbr.rel (%p5593) target = $region128
        $region127: #{deit_forward.1} parent=123 // pred_region
          %s5596 = sand.u32 %s556, 1
          %s5597 = scalar_lea.sflag [#allocation4], %s5596
          %s5598 = sand.u32 %s556, 1
          %s5599 = scalar_lea.vmem [#allocation3], %s5598
          %5600 = dma.done %s5597, 16
        $region128: #{deit_forward.1} parent=123 // pred_fallthru
          _
      $region124: #{deit_forward.1} parent=5 // pred_fallthru
        _
    $region6: #{deit_forward.1} parent=1 // loop_footer
      %s37 = sadd.s32 1, %s33
    $region7: #{deit_forward.1} parent=1 // loop_footer_branch
      %32 = sbr.rel target = $region3
    $region8: #{deit_forward.1} parent=1 // loop_exit
      _
    %5601 = vsyncpa [#allocation4], 1
    %s5602 = scalar_lea.sflag [#allocation4], 1
    %5603 = vsyncpa %s5602, 1

</llo_original>
